<compile_context>
chip_gen: v5e
topology: v5e:2x2
jax: 0.10.0
libtpu: 0.0.40
codegen_flags: <defaults>
</compile_context>

<pallas_src>
import functools

import jax
import jax.numpy as jnp
from jax.experimental import pallas as pl
from jax.experimental.pallas import tpu as pltpu

_EPS = 1e-5
_LANE = 128   # lane tile: channels are zero-padded to this width
_PW = 16      # W-halo width of the staging scratch; multiple of the bf16
              # sublane tile (16) so interior stores are unmasked/aligned.


def _round_up(x, m):
    return (x + m - 1) // m * m


# ------------------------------ Pallas kernel --------------------------------
def _basic_block_kernel(x_ref, w1_ref, b1_ref, w2_ref, b2_ref, o_ref, buf_ref,
                        *, h, w, cp):
    """One image per grid step.

    x_ref  : (H, W, Cp)           bf16  NHWC interior, channels padded to 128
    w1_ref : (9, Cp, Cp)          bf16  conv1 taps, bn1 scale folded in
    b1_ref : (1, Cp)              f32   bn1 shift
    w2_ref : (9, Cp, Cp)          bf16  conv2 taps, 2*bn2 scale folded in
    b2_ref : (1, Cp)              f32   2*bn2 shift
    o_ref  : (H*W, Cp)            bf16  lane-dense output rows
    buf_ref: (H+2, W+2*_PW, Cp)   bf16  zero-haloed staging scratch, reused
                                        first for x, then for y1
    """
    # Zero ONLY the halo strips the shifted 3x3 windows read (rows 0 and H+1,
    # columns _PW-1 and _PW+W). Re-done every step: cheap, and correct however
    # the parallel grid is split across cores.
    zrow = jnp.zeros((1, w + 2 * _PW, cp), buf_ref.dtype)
    zcol = jnp.zeros((h + 2, 1, cp), buf_ref.dtype)
    buf_ref[0:1, :, :] = zrow
    buf_ref[h + 1:h + 2, :, :] = zrow
    buf_ref[:, _PW - 1:_PW, :] = zcol
    buf_ref[:, _PW + w:_PW + w + 1, :] = zcol

    # Stage the input interior; conv padding=1 becomes plain shifted slices.
    buf_ref[1:h + 1, _PW:_PW + w, :] = x_ref[...]

    def conv3x3_bias_relu(w_ref, b_ref):
        # 9 shifted (H*W, Cp) @ (Cp, Cp) MXU matmuls, f32 accumulation.
        acc = jnp.zeros((h * w, cp), jnp.float32)
        for dy in range(3):
            for dx in range(3):
                patch = buf_ref[dy:dy + h, _PW - 1 + dx:_PW - 1 + dx + w, :]
                acc = acc + jnp.dot(patch.reshape(h * w, cp),
                                    w_ref[dy * 3 + dx],
                                    preferred_element_type=jnp.float32)
        return jnp.maximum(acc + b_ref[...], 0.0)           # stays f32

    # conv1 + bn1 + relu
    y1 = conv3x3_bias_relu(w1_ref, b1_ref)
    # Reuse the same scratch for y1 (x is fully consumed); halo is still zero.
    buf_ref[1:h + 1, _PW:_PW + w, :] = y1.reshape(h, w, cp).astype(buf_ref.dtype)

    # conv2 + bn2 + (out += Identity(out)) + relu  (2x folded into w2/b2).
    o_ref[...] = conv3x3_bias_relu(w2_ref, b2_ref).astype(o_ref.dtype)


# -------------------------------- JAX glue -----------------------------------
def _fold_bn(gamma, beta, mean, var):
    scale = gamma / jnp.sqrt(var + _EPS)
    return scale, beta - mean * scale


def _fold_conv_bn(w_oihw, scale, cp):
    """(Cout, Cin, 3, 3) -> (9, Cp, Cp) bf16: per-output-channel BN scale
    folded into the taps, K/N zero-padded to the 128-lane tile."""
    cout, cin = w_oihw.shape[0], w_oihw.shape[1]
    wk = jnp.transpose(w_oihw, (2, 3, 1, 0)) * scale          # (3,3,Cin,Cout)
    wk = jnp.pad(wk, ((0, 0), (0, 0), (0, cp - cin), (0, cp - cout)))
    return wk.reshape(9, cp, cp).astype(jnp.bfloat16)


def basic_block_forward(x_nchw, params, stride=1):
    """Pallas-backed BasicBlock forward: (N, Cin, H, W) -> (N, Cout, H, W)."""
    if stride != 1:
        raise NotImplementedError(
            "fused BasicBlock kernel implements stride=1 (module default)")
    (w1, g1, b1, m1, v1, w2, g2, b2, m2, v2) = params
    cout, cin = w1.shape[0], w1.shape[1]
    n, _, h, w = x_nchw.shape
    cp = _round_up(max(cin, cout), _LANE)

    # NCHW -> NHWC, bf16, channels zero-padded to the lane tile. The spatial
    # halo is handled inside the kernel (no jnp.pad HBM pass for it). In a
    # stacked-block network you would keep this padded-NHWC/bf16 layout
    # between blocks and drop the transposes entirely.
    x = jnp.transpose(x_nchw, (0, 2, 3, 1)).astype(jnp.bfloat16)
    x = jnp.pad(x, ((0, 0), (0, 0), (0, 0), (0, cp - cin)))

    # Fold BN into the conv weights; fold the `out += Identity(out)` doubling
    # into conv2's affine so the kernel epilogue is just add + relu.
    s1, sh1 = _fold_bn(g1, b1, m1, v1)
    s2, sh2 = _fold_bn(g2, b2, m2, v2)
    w1m = _fold_conv_bn(w1, s1, cp)
    w2m = _fold_conv_bn(w2, 2.0 * s2, cp)
    b1m = jnp.pad(sh1, (0, cp - cout)).reshape(1, cp).astype(jnp.float32)
    b2m = jnp.pad(2.0 * sh2, (0, cp - cout)).reshape(1, cp).astype(jnp.float32)

    kernel = functools.partial(_basic_block_kernel, h=h, w=w, cp=cp)
    out = pl.pallas_call(
        kernel,
        out_shape=jax.ShapeDtypeStruct((n, h * w, cp), jnp.bfloat16),
        grid=(n,),
        in_specs=[
            pl.BlockSpec((None, h, w, cp), lambda i: (i, 0, 0, 0)),
            pl.BlockSpec((9, cp, cp), lambda i: (0, 0, 0)),
            pl.BlockSpec((1, cp), lambda i: (0, 0)),
            pl.BlockSpec((9, cp, cp), lambda i: (0, 0, 0)),
            pl.BlockSpec((1, cp), lambda i: (0, 0)),
        ],
        out_specs=pl.BlockSpec((None, h * w, cp), lambda i: (i, 0, 0)),
        scratch_shapes=[pltpu.VMEM((h + 2, w + 2 * _PW, cp), jnp.bfloat16)],
        compiler_params=pltpu.CompilerParams(
            dimension_semantics=("parallel",),
            vmem_limit_bytes=32 * 1024 * 1024),
    )(x, w1m, b1m, w2m, b2m)

    # Slice off the channel padding, back to NCHW f32 (API of the torch module).
    out = out.reshape(n, h, w, cp)[:, :, :, :cout]
    return jnp.transpose(out, (0, 3, 1, 2)).astype(jnp.float32)


# ----------------------------- pure-JAX reference ----------------------------
def _ref_forward(x, params, stride=1):
    (w1, g1, b1, m1, v1, w2, g2, b2, m2, v2) = params

    def conv(x, w, s):
        return jax.lax.conv_general_dilated(
            x, w, (s, s), ((1, 1), (1, 1)),
            dimension_numbers=("NCHW", "OIHW", "NCHW"),
            precision=jax.lax.Precision.HIGHEST)

    def bn(x, g, b, m, v):
        g, b, m, v = (t[None, :, None, None] for t in (g, b, m, v))
        return (x - m) / jnp.sqrt(v + _EPS) * g + b

    o = jax.nn.relu(bn(conv(x, w1, stride), g1, b1, m1, v1))
    o = bn(conv(o, w2, 1), g2, b2, m2, v2)
    o = o + o          # out += skip(out), skip = Identity
    return jax.nn.relu(o)


# ----------------------------------- main -------------------------------------
if __name__ == "__main__":
    N, Cin, H, W = 2, 4, 16, 16
    Cout = 8
    stride = 1

    key = jax.random.PRNGKey(0)
    kx, k1, k2, k3, k4, k5, k6 = jax.random.split(key, 7)

    x = jax.random.normal(kx, (N, Cin, H, W), jnp.float32)

    # Deterministic parameter init (shapes from BasicBlock.__init__, bias=False).
    w1 = 0.1 * jax.random.normal(k1, (Cout, Cin, 3, 3), jnp.float32)
    w2 = 0.1 * jax.random.normal(k2, (Cout, Cout, 3, 3), jnp.float32)
    g1 = 1.0 + 0.1 * jax.random.normal(k3, (Cout,), jnp.float32)
    b1 = 0.1 * jax.random.normal(k4, (Cout,), jnp.float32)
    g2 = 1.0 + 0.1 * jax.random.normal(k5, (Cout,), jnp.float32)
    b2 = 0.1 * jax.random.normal(k6, (Cout,), jnp.float32)
    m1 = jnp.zeros((Cout,), jnp.float32)  # fresh BatchNorm2d running_mean
    v1 = jnp.ones((Cout,), jnp.float32)   # fresh BatchNorm2d running_var
    m2 = jnp.zeros((Cout,), jnp.float32)
    v2 = jnp.ones((Cout,), jnp.float32)

    params = (w1, g1, b1, m1, v1, w2, g2, b2, m2, v2)

    out = basic_block_forward(x, params, stride=stride)
    out = jax.block_until_ready(out)

    ref = jax.block_until_ready(_ref_forward(x, params, stride=stride))
    assert out.shape == (N, Cout, H, W), out.shape
    # bf16 MXU operands, bf16 y1 stash and bf16 output (f32 accumulate/epilogue)
    # -> loose-ish tolerance vs. the f32 HIGHEST-precision reference.
    assert jnp.allclose(out, ref, atol=6e-2, rtol=6e-2), \
        float(jnp.max(jnp.abs(out - ref)))

    print("KERNEL_OK")
</pallas_src>

<mosaic_0001>
module attributes {stable_mosaic.version = 11 : i64} {
  func.func @_basic_block_kernel(%arg0: i32, %arg1: memref<1x16x16x128xbf16, #tpu.memory_space<vmem>>, %arg2: memref<9x128x128xbf16, #tpu.memory_space<vmem>>, %arg3: memref<1x128xf32, #tpu.memory_space<vmem>>, %arg4: memref<9x128x128xbf16, #tpu.memory_space<vmem>>, %arg5: memref<1x128xf32, #tpu.memory_space<vmem>>, %arg6: memref<1x256x128xbf16, #tpu.memory_space<vmem>>, %arg7: memref<18x48x128xbf16, #tpu.memory_space<vmem>>) attributes {dimension_semantics = [#tpu.dimension_semantics<parallel>], iteration_bounds = array<i64: 2>, scalar_prefetch = 0 : i64, scratch_operands = 1 : i64, tpu.core_type = #tpu.core_type<tc>, window_params = [{transform_indices = @transform_0, window_bounds = array<i64: 1, 16, 16, 128>}, {pipeline_mode = #tpu.pipeline_mode<synchronous>, transform_indices = @transform_1, window_bounds = array<i64: 9, 128, 128>}, {pipeline_mode = #tpu.pipeline_mode<synchronous>, transform_indices = @transform_2, window_bounds = array<i64: 1, 128>}, {pipeline_mode = #tpu.pipeline_mode<synchronous>, transform_indices = @transform_3, window_bounds = array<i64: 9, 128, 128>}, {pipeline_mode = #tpu.pipeline_mode<synchronous>, transform_indices = @transform_4, window_bounds = array<i64: 1, 128>}, {transform_indices = @transform_5, window_bounds = array<i64: 1, 256, 128>}]} {
    %cst = arith.constant 0.000000e+00 : bf16
    %0 = vector.broadcast %cst : bf16 to vector<1x48x128xbf16>
    %cst_0 = arith.constant 0.000000e+00 : bf16
    %1 = vector.broadcast %cst_0 : bf16 to vector<18x1x128xbf16>
    %c0 = arith.constant 0 : index
    %c0_1 = arith.constant 0 : index
    %c0_2 = arith.constant 0 : index
    %2 = vector.load %arg7[%c0, %c0_1, %c0_2] : memref<18x48x128xbf16, #tpu.memory_space<vmem>>, vector<1x48x128xbf16>
    tpu.vector_store %arg7[%c0, %c0_1, %c0_2], %0 {strides = array<i32>} : memref<18x48x128xbf16, #tpu.memory_space<vmem>>, vector<1x48x128xbf16>,
    %c17 = arith.constant 17 : index
    %c0_3 = arith.constant 0 : index
    %c0_4 = arith.constant 0 : index
    %3 = vector.load %arg7[%c17, %c0_3, %c0_4] : memref<18x48x128xbf16, #tpu.memory_space<vmem>>, vector<1x48x128xbf16>
    tpu.vector_store %arg7[%c17, %c0_3, %c0_4], %0 {strides = array<i32>} : memref<18x48x128xbf16, #tpu.memory_space<vmem>>, vector<1x48x128xbf16>,
    %c0_5 = arith.constant 0 : index
    %c15 = arith.constant 15 : index
    %c0_6 = arith.constant 0 : index
    %4 = vector.load %arg7[%c0_5, %c15, %c0_6] : memref<18x48x128xbf16, #tpu.memory_space<vmem>>, vector<18x1x128xbf16>
    tpu.vector_store %arg7[%c0_5, %c15, %c0_6], %1 {strides = array<i32>} : memref<18x48x128xbf16, #tpu.memory_space<vmem>>, vector<18x1x128xbf16>,
    %c0_7 = arith.constant 0 : index
    %c32 = arith.constant 32 : index
    %c0_8 = arith.constant 0 : index
    %5 = vector.load %arg7[%c0_7, %c32, %c0_8] : memref<18x48x128xbf16, #tpu.memory_space<vmem>>, vector<18x1x128xbf16>
    tpu.vector_store %arg7[%c0_7, %c32, %c0_8], %1 {strides = array<i32>} : memref<18x48x128xbf16, #tpu.memory_space<vmem>>, vector<18x1x128xbf16>,
    %c0_9 = arith.constant 0 : index
    %c0_10 = arith.constant 0 : index
    %c0_11 = arith.constant 0 : index
    %c0_12 = arith.constant 0 : index
    %6 = vector.load %arg1[%c0_9, %c0_10, %c0_11, %c0_12] : memref<1x16x16x128xbf16, #tpu.memory_space<vmem>>, vector<1x16x16x128xbf16>
    %7 = vector.shape_cast %6 : vector<1x16x16x128xbf16> to vector<16x16x128xbf16>
    %c1 = arith.constant 1 : index
    %c16 = arith.constant 16 : index
    %c0_13 = arith.constant 0 : index
    %8 = vector.load %arg7[%c1, %c16, %c0_13] : memref<18x48x128xbf16, #tpu.memory_space<vmem>>, vector<16x16x128xbf16>
    tpu.vector_store %arg7[%c1, %c16, %c0_13], %7 {strides = array<i32>} : memref<18x48x128xbf16, #tpu.memory_space<vmem>>, vector<16x16x128xbf16>,
    %cst_14 = arith.constant 0.000000e+00 : f32
    %9 = vector.broadcast %cst_14 : f32 to vector<256x128xf32>
    %c0_15 = arith.constant 0 : index
    %c15_16 = arith.constant 15 : index
    %c0_17 = arith.constant 0 : index
    %10 = vector.load %arg7[%c0_15, %c15_16, %c0_17] : memref<18x48x128xbf16, #tpu.memory_space<vmem>>, vector<16x16x128xbf16>
    %11 = vector.shape_cast %10 : vector<16x16x128xbf16> to vector<256x128xbf16>
    %c0_18 = arith.constant 0 : index
    %c0_19 = arith.constant 0 : index
    %c0_20 = arith.constant 0 : index
    %12 = vector.load %arg2[%c0_18, %c0_19, %c0_20] : memref<9x128x128xbf16, #tpu.memory_space<vmem>>, vector<1x128x128xbf16>
    %13 = vector.shape_cast %12 : vector<1x128x128xbf16> to vector<128x128xbf16>
    %cst_21 = arith.constant dense<0.000000e+00> : vector<256x128xf32>
    %14 = tpu.matmul %11, %13, %cst_21 {dimension_numbers = #tpu.dot_dimension_numbers<[1], [0], [0], [1], [0, 0, 1, 1], [], []>} : vector<256x128xbf16>, vector<128x128xbf16>, vector<256x128xf32> -> vector<256x128xf32>
    %15 = arith.addf %9, %14 : vector<256x128xf32>
    %c0_22 = arith.constant 0 : index
    %c16_23 = arith.constant 16 : index
    %c0_24 = arith.constant 0 : index
    %16 = vector.load %arg7[%c0_22, %c16_23, %c0_24] : memref<18x48x128xbf16, #tpu.memory_space<vmem>>, vector<16x16x128xbf16>
    %17 = vector.shape_cast %16 : vector<16x16x128xbf16> to vector<256x128xbf16>
    %c1_25 = arith.constant 1 : index
    %c0_26 = arith.constant 0 : index
    %c0_27 = arith.constant 0 : index
    %18 = vector.load %arg2[%c1_25, %c0_26, %c0_27] : memref<9x128x128xbf16, #tpu.memory_space<vmem>>, vector<1x128x128xbf16>
    %19 = vector.shape_cast %18 : vector<1x128x128xbf16> to vector<128x128xbf16>
    %cst_28 = arith.constant dense<0.000000e+00> : vector<256x128xf32>
    %20 = tpu.matmul %17, %19, %cst_28 {dimension_numbers = #tpu.dot_dimension_numbers<[1], [0], [0], [1], [0, 0, 1, 1], [], []>} : vector<256x128xbf16>, vector<128x128xbf16>, vector<256x128xf32> -> vector<256x128xf32>
    %21 = arith.addf %15, %20 : vector<256x128xf32>
    %c0_29 = arith.constant 0 : index
    %c17_30 = arith.constant 17 : index
    %c0_31 = arith.constant 0 : index
    %22 = vector.load %arg7[%c0_29, %c17_30, %c0_31] : memref<18x48x128xbf16, #tpu.memory_space<vmem>>, vector<16x16x128xbf16>
    %23 = vector.shape_cast %22 : vector<16x16x128xbf16> to vector<256x128xbf16>
    %c2 = arith.constant 2 : index
    %c0_32 = arith.constant 0 : index
    %c0_33 = arith.constant 0 : index
    %24 = vector.load %arg2[%c2, %c0_32, %c0_33] : memref<9x128x128xbf16, #tpu.memory_space<vmem>>, vector<1x128x128xbf16>
    %25 = vector.shape_cast %24 : vector<1x128x128xbf16> to vector<128x128xbf16>
    %cst_34 = arith.constant dense<0.000000e+00> : vector<256x128xf32>
    %26 = tpu.matmul %23, %25, %cst_34 {dimension_numbers = #tpu.dot_dimension_numbers<[1], [0], [0], [1], [0, 0, 1, 1], [], []>} : vector<256x128xbf16>, vector<128x128xbf16>, vector<256x128xf32> -> vector<256x128xf32>
    %27 = arith.addf %21, %26 : vector<256x128xf32>
    %c1_35 = arith.constant 1 : index
    %c15_36 = arith.constant 15 : index
    %c0_37 = arith.constant 0 : index
    %28 = vector.load %arg7[%c1_35, %c15_36, %c0_37] : memref<18x48x128xbf16, #tpu.memory_space<vmem>>, vector<16x16x128xbf16>
    %29 = vector.shape_cast %28 : vector<16x16x128xbf16> to vector<256x128xbf16>
    %c3 = arith.constant 3 : index
    %c0_38 = arith.constant 0 : index
    %c0_39 = arith.constant 0 : index
    %30 = vector.load %arg2[%c3, %c0_38, %c0_39] : memref<9x128x128xbf16, #tpu.memory_space<vmem>>, vector<1x128x128xbf16>
    %31 = vector.shape_cast %30 : vector<1x128x128xbf16> to vector<128x128xbf16>
    %cst_40 = arith.constant dense<0.000000e+00> : vector<256x128xf32>
    %32 = tpu.matmul %29, %31, %cst_40 {dimension_numbers = #tpu.dot_dimension_numbers<[1], [0], [0], [1], [0, 0, 1, 1], [], []>} : vector<256x128xbf16>, vector<128x128xbf16>, vector<256x128xf32> -> vector<256x128xf32>
    %33 = arith.addf %27, %32 : vector<256x128xf32>
    %c1_41 = arith.constant 1 : index
    %c16_42 = arith.constant 16 : index
    %c0_43 = arith.constant 0 : index
    %34 = vector.load %arg7[%c1_41, %c16_42, %c0_43] : memref<18x48x128xbf16, #tpu.memory_space<vmem>>, vector<16x16x128xbf16>
    %35 = vector.shape_cast %34 : vector<16x16x128xbf16> to vector<256x128xbf16>
    %c4 = arith.constant 4 : index
    %c0_44 = arith.constant 0 : index
    %c0_45 = arith.constant 0 : index
    %36 = vector.load %arg2[%c4, %c0_44, %c0_45] : memref<9x128x128xbf16, #tpu.memory_space<vmem>>, vector<1x128x128xbf16>
    %37 = vector.shape_cast %36 : vector<1x128x128xbf16> to vector<128x128xbf16>
    %cst_46 = arith.constant dense<0.000000e+00> : vector<256x128xf32>
    %38 = tpu.matmul %35, %37, %cst_46 {dimension_numbers = #tpu.dot_dimension_numbers<[1], [0], [0], [1], [0, 0, 1, 1], [], []>} : vector<256x128xbf16>, vector<128x128xbf16>, vector<256x128xf32> -> vector<256x128xf32>
    %39 = arith.addf %33, %38 : vector<256x128xf32>
    %c1_47 = arith.constant 1 : index
    %c17_48 = arith.constant 17 : index
    %c0_49 = arith.constant 0 : index
    %40 = vector.load %arg7[%c1_47, %c17_48, %c0_49] : memref<18x48x128xbf16, #tpu.memory_space<vmem>>, vector<16x16x128xbf16>
    %41 = vector.shape_cast %40 : vector<16x16x128xbf16> to vector<256x128xbf16>
    %c5 = arith.constant 5 : index
    %c0_50 = arith.constant 0 : index
    %c0_51 = arith.constant 0 : index
    %42 = vector.load %arg2[%c5, %c0_50, %c0_51] : memref<9x128x128xbf16, #tpu.memory_space<vmem>>, vector<1x128x128xbf16>
    %43 = vector.shape_cast %42 : vector<1x128x128xbf16> to vector<128x128xbf16>
    %cst_52 = arith.constant dense<0.000000e+00> : vector<256x128xf32>
    %44 = tpu.matmul %41, %43, %cst_52 {dimension_numbers = #tpu.dot_dimension_numbers<[1], [0], [0], [1], [0, 0, 1, 1], [], []>} : vector<256x128xbf16>, vector<128x128xbf16>, vector<256x128xf32> -> vector<256x128xf32>
    %45 = arith.addf %39, %44 : vector<256x128xf32>
    %c2_53 = arith.constant 2 : index
    %c15_54 = arith.constant 15 : index
    %c0_55 = arith.constant 0 : index
    %46 = vector.load %arg7[%c2_53, %c15_54, %c0_55] : memref<18x48x128xbf16, #tpu.memory_space<vmem>>, vector<16x16x128xbf16>
    %47 = vector.shape_cast %46 : vector<16x16x128xbf16> to vector<256x128xbf16>
    %c6 = arith.constant 6 : index
    %c0_56 = arith.constant 0 : index
    %c0_57 = arith.constant 0 : index
    %48 = vector.load %arg2[%c6, %c0_56, %c0_57] : memref<9x128x128xbf16, #tpu.memory_space<vmem>>, vector<1x128x128xbf16>
    %49 = vector.shape_cast %48 : vector<1x128x128xbf16> to vector<128x128xbf16>
    %cst_58 = arith.constant dense<0.000000e+00> : vector<256x128xf32>
    %50 = tpu.matmul %47, %49, %cst_58 {dimension_numbers = #tpu.dot_dimension_numbers<[1], [0], [0], [1], [0, 0, 1, 1], [], []>} : vector<256x128xbf16>, vector<128x128xbf16>, vector<256x128xf32> -> vector<256x128xf32>
    %51 = arith.addf %45, %50 : vector<256x128xf32>
    %c2_59 = arith.constant 2 : index
    %c16_60 = arith.constant 16 : index
    %c0_61 = arith.constant 0 : index
    %52 = vector.load %arg7[%c2_59, %c16_60, %c0_61] : memref<18x48x128xbf16, #tpu.memory_space<vmem>>, vector<16x16x128xbf16>
    %53 = vector.shape_cast %52 : vector<16x16x128xbf16> to vector<256x128xbf16>
    %c7 = arith.constant 7 : index
    %c0_62 = arith.constant 0 : index
    %c0_63 = arith.constant 0 : index
    %54 = vector.load %arg2[%c7, %c0_62, %c0_63] : memref<9x128x128xbf16, #tpu.memory_space<vmem>>, vector<1x128x128xbf16>
    %55 = vector.shape_cast %54 : vector<1x128x128xbf16> to vector<128x128xbf16>
    %cst_64 = arith.constant dense<0.000000e+00> : vector<256x128xf32>
    %56 = tpu.matmul %53, %55, %cst_64 {dimension_numbers = #tpu.dot_dimension_numbers<[1], [0], [0], [1], [0, 0, 1, 1], [], []>} : vector<256x128xbf16>, vector<128x128xbf16>, vector<256x128xf32> -> vector<256x128xf32>
    %57 = arith.addf %51, %56 : vector<256x128xf32>
    %c2_65 = arith.constant 2 : index
    %c17_66 = arith.constant 17 : index
    %c0_67 = arith.constant 0 : index
    %58 = vector.load %arg7[%c2_65, %c17_66, %c0_67] : memref<18x48x128xbf16, #tpu.memory_space<vmem>>, vector<16x16x128xbf16>
    %59 = vector.shape_cast %58 : vector<16x16x128xbf16> to vector<256x128xbf16>
    %c8 = arith.constant 8 : index
    %c0_68 = arith.constant 0 : index
    %c0_69 = arith.constant 0 : index
    %60 = vector.load %arg2[%c8, %c0_68, %c0_69] : memref<9x128x128xbf16, #tpu.memory_space<vmem>>, vector<1x128x128xbf16>
    %61 = vector.shape_cast %60 : vector<1x128x128xbf16> to vector<128x128xbf16>
    %cst_70 = arith.constant dense<0.000000e+00> : vector<256x128xf32>
    %62 = tpu.matmul %59, %61, %cst_70 {dimension_numbers = #tpu.dot_dimension_numbers<[1], [0], [0], [1], [0, 0, 1, 1], [], []>} : vector<256x128xbf16>, vector<128x128xbf16>, vector<256x128xf32> -> vector<256x128xf32>
    %63 = arith.addf %57, %62 : vector<256x128xf32>
    %c0_71 = arith.constant 0 : index
    %c0_72 = arith.constant 0 : index
    %64 = vector.load %arg3[%c0_71, %c0_72] : memref<1x128xf32, #tpu.memory_space<vmem>>, vector<1x128xf32>
    %65 = vector.broadcast %64 : vector<1x128xf32> to vector<256x128xf32>
    %66 = arith.addf %63, %65 : vector<256x128xf32>
    %cst_73 = arith.constant 0.000000e+00 : f32
    %67 = vector.broadcast %cst_73 : f32 to vector<256x128xf32>
    %68 = arith.maximumf %66, %67 : vector<256x128xf32>
    %69 = vector.shape_cast %68 : vector<256x128xf32> to vector<16x16x128xf32>
    %70 = arith.truncf %69 : vector<16x16x128xf32> to vector<16x16x128xbf16>
    %c1_74 = arith.constant 1 : index
    %c16_75 = arith.constant 16 : index
    %c0_76 = arith.constant 0 : index
    %71 = vector.load %arg7[%c1_74, %c16_75, %c0_76] : memref<18x48x128xbf16, #tpu.memory_space<vmem>>, vector<16x16x128xbf16>
    tpu.vector_store %arg7[%c1_74, %c16_75, %c0_76], %70 {strides = array<i32>} : memref<18x48x128xbf16, #tpu.memory_space<vmem>>, vector<16x16x128xbf16>,
    %cst_77 = arith.constant 0.000000e+00 : f32
    %72 = vector.broadcast %cst_77 : f32 to vector<256x128xf32>
    %c0_78 = arith.constant 0 : index
    %c15_79 = arith.constant 15 : index
    %c0_80 = arith.constant 0 : index
    %73 = vector.load %arg7[%c0_78, %c15_79, %c0_80] : memref<18x48x128xbf16, #tpu.memory_space<vmem>>, vector<16x16x128xbf16>
    %74 = vector.shape_cast %73 : vector<16x16x128xbf16> to vector<256x128xbf16>
    %c0_81 = arith.constant 0 : index
    %c0_82 = arith.constant 0 : index
    %c0_83 = arith.constant 0 : index
    %75 = vector.load %arg4[%c0_81, %c0_82, %c0_83] : memref<9x128x128xbf16, #tpu.memory_space<vmem>>, vector<1x128x128xbf16>
    %76 = vector.shape_cast %75 : vector<1x128x128xbf16> to vector<128x128xbf16>
    %cst_84 = arith.constant dense<0.000000e+00> : vector<256x128xf32>
    %77 = tpu.matmul %74, %76, %cst_84 {dimension_numbers = #tpu.dot_dimension_numbers<[1], [0], [0], [1], [0, 0, 1, 1], [], []>} : vector<256x128xbf16>, vector<128x128xbf16>, vector<256x128xf32> -> vector<256x128xf32>
    %78 = arith.addf %72, %77 : vector<256x128xf32>
    %c0_85 = arith.constant 0 : index
    %c16_86 = arith.constant 16 : index
    %c0_87 = arith.constant 0 : index
    %79 = vector.load %arg7[%c0_85, %c16_86, %c0_87] : memref<18x48x128xbf16, #tpu.memory_space<vmem>>, vector<16x16x128xbf16>
    %80 = vector.shape_cast %79 : vector<16x16x128xbf16> to vector<256x128xbf16>
    %c1_88 = arith.constant 1 : index
    %c0_89 = arith.constant 0 : index
    %c0_90 = arith.constant 0 : index
    %81 = vector.load %arg4[%c1_88, %c0_89, %c0_90] : memref<9x128x128xbf16, #tpu.memory_space<vmem>>, vector<1x128x128xbf16>
    %82 = vector.shape_cast %81 : vector<1x128x128xbf16> to vector<128x128xbf16>
    %cst_91 = arith.constant dense<0.000000e+00> : vector<256x128xf32>
    %83 = tpu.matmul %80, %82, %cst_91 {dimension_numbers = #tpu.dot_dimension_numbers<[1], [0], [0], [1], [0, 0, 1, 1], [], []>} : vector<256x128xbf16>, vector<128x128xbf16>, vector<256x128xf32> -> vector<256x128xf32>
    %84 = arith.addf %78, %83 : vector<256x128xf32>
    %c0_92 = arith.constant 0 : index
    %c17_93 = arith.constant 17 : index
    %c0_94 = arith.constant 0 : index
    %85 = vector.load %arg7[%c0_92, %c17_93, %c0_94] : memref<18x48x128xbf16, #tpu.memory_space<vmem>>, vector<16x16x128xbf16>
    %86 = vector.shape_cast %85 : vector<16x16x128xbf16> to vector<256x128xbf16>
    %c2_95 = arith.constant 2 : index
    %c0_96 = arith.constant 0 : index
    %c0_97 = arith.constant 0 : index
    %87 = vector.load %arg4[%c2_95, %c0_96, %c0_97] : memref<9x128x128xbf16, #tpu.memory_space<vmem>>, vector<1x128x128xbf16>
    %88 = vector.shape_cast %87 : vector<1x128x128xbf16> to vector<128x128xbf16>
    %cst_98 = arith.constant dense<0.000000e+00> : vector<256x128xf32>
    %89 = tpu.matmul %86, %88, %cst_98 {dimension_numbers = #tpu.dot_dimension_numbers<[1], [0], [0], [1], [0, 0, 1, 1], [], []>} : vector<256x128xbf16>, vector<128x128xbf16>, vector<256x128xf32> -> vector<256x128xf32>
    %90 = arith.addf %84, %89 : vector<256x128xf32>
    %c1_99 = arith.constant 1 : index
    %c15_100 = arith.constant 15 : index
    %c0_101 = arith.constant 0 : index
    %91 = vector.load %arg7[%c1_99, %c15_100, %c0_101] : memref<18x48x128xbf16, #tpu.memory_space<vmem>>, vector<16x16x128xbf16>
    %92 = vector.shape_cast %91 : vector<16x16x128xbf16> to vector<256x128xbf16>
    %c3_102 = arith.constant 3 : index
    %c0_103 = arith.constant 0 : index
    %c0_104 = arith.constant 0 : index
    %93 = vector.load %arg4[%c3_102, %c0_103, %c0_104] : memref<9x128x128xbf16, #tpu.memory_space<vmem>>, vector<1x128x128xbf16>
    %94 = vector.shape_cast %93 : vector<1x128x128xbf16> to vector<128x128xbf16>
    %cst_105 = arith.constant dense<0.000000e+00> : vector<256x128xf32>
    %95 = tpu.matmul %92, %94, %cst_105 {dimension_numbers = #tpu.dot_dimension_numbers<[1], [0], [0], [1], [0, 0, 1, 1], [], []>} : vector<256x128xbf16>, vector<128x128xbf16>, vector<256x128xf32> -> vector<256x128xf32>
    %96 = arith.addf %90, %95 : vector<256x128xf32>
    %c1_106 = arith.constant 1 : index
    %c16_107 = arith.constant 16 : index
    %c0_108 = arith.constant 0 : index
    %97 = vector.load %arg7[%c1_106, %c16_107, %c0_108] : memref<18x48x128xbf16, #tpu.memory_space<vmem>>, vector<16x16x128xbf16>
    %98 = vector.shape_cast %97 : vector<16x16x128xbf16> to vector<256x128xbf16>
    %c4_109 = arith.constant 4 : index
    %c0_110 = arith.constant 0 : index
    %c0_111 = arith.constant 0 : index
    %99 = vector.load %arg4[%c4_109, %c0_110, %c0_111] : memref<9x128x128xbf16, #tpu.memory_space<vmem>>, vector<1x128x128xbf16>
    %100 = vector.shape_cast %99 : vector<1x128x128xbf16> to vector<128x128xbf16>
    %cst_112 = arith.constant dense<0.000000e+00> : vector<256x128xf32>
    %101 = tpu.matmul %98, %100, %cst_112 {dimension_numbers = #tpu.dot_dimension_numbers<[1], [0], [0], [1], [0, 0, 1, 1], [], []>} : vector<256x128xbf16>, vector<128x128xbf16>, vector<256x128xf32> -> vector<256x128xf32>
    %102 = arith.addf %96, %101 : vector<256x128xf32>
    %c1_113 = arith.constant 1 : index
    %c17_114 = arith.constant 17 : index
    %c0_115 = arith.constant 0 : index
    %103 = vector.load %arg7[%c1_113, %c17_114, %c0_115] : memref<18x48x128xbf16, #tpu.memory_space<vmem>>, vector<16x16x128xbf16>
    %104 = vector.shape_cast %103 : vector<16x16x128xbf16> to vector<256x128xbf16>
    %c5_116 = arith.constant 5 : index
    %c0_117 = arith.constant 0 : index
    %c0_118 = arith.constant 0 : index
    %105 = vector.load %arg4[%c5_116, %c0_117, %c0_118] : memref<9x128x128xbf16, #tpu.memory_space<vmem>>, vector<1x128x128xbf16>
    %106 = vector.shape_cast %105 : vector<1x128x128xbf16> to vector<128x128xbf16>
    %cst_119 = arith.constant dense<0.000000e+00> : vector<256x128xf32>
    %107 = tpu.matmul %104, %106, %cst_119 {dimension_numbers = #tpu.dot_dimension_numbers<[1], [0], [0], [1], [0, 0, 1, 1], [], []>} : vector<256x128xbf16>, vector<128x128xbf16>, vector<256x128xf32> -> vector<256x128xf32>
    %108 = arith.addf %102, %107 : vector<256x128xf32>
    %c2_120 = arith.constant 2 : index
    %c15_121 = arith.constant 15 : index
    %c0_122 = arith.constant 0 : index
    %109 = vector.load %arg7[%c2_120, %c15_121, %c0_122] : memref<18x48x128xbf16, #tpu.memory_space<vmem>>, vector<16x16x128xbf16>
    %110 = vector.shape_cast %109 : vector<16x16x128xbf16> to vector<256x128xbf16>
    %c6_123 = arith.constant 6 : index
    %c0_124 = arith.constant 0 : index
    %c0_125 = arith.constant 0 : index
    %111 = vector.load %arg4[%c6_123, %c0_124, %c0_125] : memref<9x128x128xbf16, #tpu.memory_space<vmem>>, vector<1x128x128xbf16>
    %112 = vector.shape_cast %111 : vector<1x128x128xbf16> to vector<128x128xbf16>
    %cst_126 = arith.constant dense<0.000000e+00> : vector<256x128xf32>
    %113 = tpu.matmul %110, %112, %cst_126 {dimension_numbers = #tpu.dot_dimension_numbers<[1], [0], [0], [1], [0, 0, 1, 1], [], []>} : vector<256x128xbf16>, vector<128x128xbf16>, vector<256x128xf32> -> vector<256x128xf32>
    %114 = arith.addf %108, %113 : vector<256x128xf32>
    %c2_127 = arith.constant 2 : index
    %c16_128 = arith.constant 16 : index
    %c0_129 = arith.constant 0 : index
    %115 = vector.load %arg7[%c2_127, %c16_128, %c0_129] : memref<18x48x128xbf16, #tpu.memory_space<vmem>>, vector<16x16x128xbf16>
    %116 = vector.shape_cast %115 : vector<16x16x128xbf16> to vector<256x128xbf16>
    %c7_130 = arith.constant 7 : index
    %c0_131 = arith.constant 0 : index
    %c0_132 = arith.constant 0 : index
    %117 = vector.load %arg4[%c7_130, %c0_131, %c0_132] : memref<9x128x128xbf16, #tpu.memory_space<vmem>>, vector<1x128x128xbf16>
    %118 = vector.shape_cast %117 : vector<1x128x128xbf16> to vector<128x128xbf16>
    %cst_133 = arith.constant dense<0.000000e+00> : vector<256x128xf32>
    %119 = tpu.matmul %116, %118, %cst_133 {dimension_numbers = #tpu.dot_dimension_numbers<[1], [0], [0], [1], [0, 0, 1, 1], [], []>} : vector<256x128xbf16>, vector<128x128xbf16>, vector<256x128xf32> -> vector<256x128xf32>
    %120 = arith.addf %114, %119 : vector<256x128xf32>
    %c2_134 = arith.constant 2 : index
    %c17_135 = arith.constant 17 : index
    %c0_136 = arith.constant 0 : index
    %121 = vector.load %arg7[%c2_134, %c17_135, %c0_136] : memref<18x48x128xbf16, #tpu.memory_space<vmem>>, vector<16x16x128xbf16>
    %122 = vector.shape_cast %121 : vector<16x16x128xbf16> to vector<256x128xbf16>
    %c8_137 = arith.constant 8 : index
    %c0_138 = arith.constant 0 : index
    %c0_139 = arith.constant 0 : index
    %123 = vector.load %arg4[%c8_137, %c0_138, %c0_139] : memref<9x128x128xbf16, #tpu.memory_space<vmem>>, vector<1x128x128xbf16>
    %124 = vector.shape_cast %123 : vector<1x128x128xbf16> to vector<128x128xbf16>
    %cst_140 = arith.constant dense<0.000000e+00> : vector<256x128xf32>
    %125 = tpu.matmul %122, %124, %cst_140 {dimension_numbers = #tpu.dot_dimension_numbers<[1], [0], [0], [1], [0, 0, 1, 1], [], []>} : vector<256x128xbf16>, vector<128x128xbf16>, vector<256x128xf32> -> vector<256x128xf32>
    %126 = arith.addf %120, %125 : vector<256x128xf32>
    %c0_141 = arith.constant 0 : index
    %c0_142 = arith.constant 0 : index
    %127 = vector.load %arg5[%c0_141, %c0_142] : memref<1x128xf32, #tpu.memory_space<vmem>>, vector<1x128xf32>
    %128 = vector.broadcast %127 : vector<1x128xf32> to vector<256x128xf32>
    %129 = arith.addf %126, %128 : vector<256x128xf32>
    %cst_143 = arith.constant 0.000000e+00 : f32
    %130 = vector.broadcast %cst_143 : f32 to vector<256x128xf32>
    %131 = arith.maximumf %129, %130 : vector<256x128xf32>
    %132 = arith.truncf %131 : vector<256x128xf32> to vector<256x128xbf16>
    %c0_144 = arith.constant 0 : index
    %c0_145 = arith.constant 0 : index
    %c0_146 = arith.constant 0 : index
    %133 = vector.load %arg6[%c0_144, %c0_145, %c0_146] : memref<1x256x128xbf16, #tpu.memory_space<vmem>>, vector<1x256x128xbf16>
    %134 = vector.shape_cast %133 : vector<1x256x128xbf16> to vector<256x128xbf16>
    %135 = vector.shape_cast %132 : vector<256x128xbf16> to vector<1x256x128xbf16>
    tpu.vector_store %arg6[%c0_144, %c0_145, %c0_146], %135 {strides = array<i32>} : memref<1x256x128xbf16, #tpu.memory_space<vmem>>, vector<1x256x128xbf16>,
    return
  }
  func.func @transform_0(%arg0: i32) -> (i32, i32, i32, i32) {
    %c0_i32 = arith.constant 0 : i32
    %c0_i32_0 = arith.constant 0 : i32
    %c0_i32_1 = arith.constant 0 : i32
    %c0_i32_2 = arith.constant 0 : i32
    return %arg0, %c0_i32, %c0_i32_0, %c0_i32_1 : i32, i32, i32, i32
  }
  func.func @transform_1(%arg0: i32) -> (i32, i32, i32) {
    %c0_i32 = arith.constant 0 : i32
    %c0_i32_0 = arith.constant 0 : i32
    %c0_i32_1 = arith.constant 0 : i32
    %c0_i32_2 = arith.constant 0 : i32
    return %c0_i32, %c0_i32_0, %c0_i32_1 : i32, i32, i32
  }
  func.func @transform_2(%arg0: i32) -> (i32, i32) {
    %c0_i32 = arith.constant 0 : i32
    %c0_i32_0 = arith.constant 0 : i32
    %c0_i32_1 = arith.constant 0 : i32
    return %c0_i32, %c0_i32_0 : i32, i32
  }
  func.func @transform_3(%arg0: i32) -> (i32, i32, i32) {
    %c0_i32 = arith.constant 0 : i32
    %c0_i32_0 = arith.constant 0 : i32
    %c0_i32_1 = arith.constant 0 : i32
    %c0_i32_2 = arith.constant 0 : i32
    return %c0_i32, %c0_i32_0, %c0_i32_1 : i32, i32, i32
  }
  func.func @transform_4(%arg0: i32) -> (i32, i32) {
    %c0_i32 = arith.constant 0 : i32
    %c0_i32_0 = arith.constant 0 : i32
    %c0_i32_1 = arith.constant 0 : i32
    return %c0_i32, %c0_i32_0 : i32, i32
  }
  func.func @transform_5(%arg0: i32) -> (i32, i32, i32) {
    %c0_i32 = arith.constant 0 : i32
    %c0_i32_0 = arith.constant 0 : i32
    %c0_i32_1 = arith.constant 0 : i32
    return %arg0, %c0_i32, %c0_i32_0 : i32, i32, i32
  }
}

</mosaic_0001>

<llo_original>
// kernel: tpu_custom_call.1
$region0: #{tpu_custom_call.1}
  #allocation0 [shape = 'u32[]', space=smem, size = 0x4, offset = 0x4, fixed_abs, tag = 'smem constant byte address 0x4 - core index']
  #allocation1 [shape = 'u32[72,128]{1,0:T(1,128)}', space=vmem, size = 0x9000, scoped, tag = 'internal scratch']
  #allocation2 [shape = 'bf16[18,48,128]{2,1,0:T(8,128)(2,1)}', space=vmem, size = 0x36000, scoped, tag = 'scratch operand']
  %s0 = inlined_call_operand.hbm [shape: bf16[2,16,16,128], index: 0, kind: input, shape index: {}]
  %s1 = inlined_call_operand.hbm [shape: bf16[9,128,128], index: 1, kind: input, shape index: {}]
  %s2 = inlined_call_operand.vmem [shape: f32[1,128], index: 2, kind: input, shape index: {}]
  %s3 = inlined_call_operand.hbm [shape: bf16[9,128,128], index: 3, kind: input, shape index: {}]
  %s4 = inlined_call_operand.vmem [shape: f32[1,128], index: 4, kind: input, shape index: {}]
  %s5 = inlined_call_operand.hbm [shape: bf16[2,256,128], index: 5, kind: output, shape index: {}]
  %s6 = sld [smem:[#allocation0]]
  $region65: #{tpu_custom_call.1} parent=0
    _
  %s8 = ssub.s32 1, %s6
  %s9 = scalar_select 0, %s8, %s6
  $region1: #{tpu_custom_call.1} parent=0
    #allocation3 [shape = 'u8[131072]{0}', space=vmem, size = 0x20000, scoped, tag = 'input window, operand 0']
    #allocation4 [shape = 's32[2]{0}', space=sflag, size = 0x8, scoped, tag = 'scoped memory for tpu_custom_call.1']
    #allocation5 [shape = 's32[2]{0}', space=sflag, size = 0x8, scoped, tag = 'scoped memory for tpu_custom_call.1']
    #allocation6 [shape = 'u8[294912]{0}', space=vmem, size = 0x48000, scoped, tag = 'input window, operand 1, single buffered']
    #allocation7 [shape = 's32[1]{0}', space=sflag, size = 0x4, scoped, tag = 'scoped memory for tpu_custom_call.1']
    #allocation8 [shape = 'u8[294912]{0}', space=vmem, size = 0x48000, scoped, tag = 'input window, operand 3, single buffered']
    #allocation9 [shape = 'u8[131072]{0}', space=vmem, size = 0x20000, scoped, tag = 'output window, operand 0']
    %10 = vsyncpa [#allocation4], 0
    %s11 = scalar_lea.sflag [#allocation4], 1
    %12 = vsyncpa %s11, 0
    %13 = vsyncpa [#allocation7], 0
    %14 = vsyncpa [#allocation5], 0
    %s15 = scalar_lea.sflag [#allocation5], 1
    %16 = vsyncpa %s15, 0
    loop: start=0, step=1, limit=4
    $region2: #{tpu_custom_call.1} parent=1 // loop_pre_header
      _
    $region3: #{tpu_custom_call.1} parent=1 // loop_header
      %s18 = sphi 0, %s22
      %p19 = scmp.ge.s32.totalorder %s18, 4
      %s28 = sphi 0, %s30
      %s31 = sphi 0, %s28
      %s32 = sphi 0, %s31
      %s48 = sphi 0, %s32
      %s52 = sphi 0, %s52
      %s54 = sphi 0, %s52
      %s55 = sphi 0, %s54
      %s69 = sphi 0, %s55
      %s73 = sphi 0, %s73
      %s75 = sphi 0, %s73
      %s76 = sphi 0, %s75
      %s90 = sphi 0, %s76
      %s94 = sphi 0, %s94
      %s96 = sphi 0, %s94
      %s97 = sphi 0, %s96
      %s111 = sphi 0, %s97
      %s115 = sphi 0, %s115
      %s117 = sphi 0, %s115
      %s118 = sphi 0, %s117
      %s132 = sphi 0, %s118
      %s138 = sphi 0, %s140
      %s141 = sphi 0, %s138
      %s142 = sphi 0, %s141
      %s158 = sphi 0, %s142
    $region4: #{tpu_custom_call.1} parent=1 // loop_header_branch
      %21 = sbr.rel (%p19) target = $region8
    $region5: #{tpu_custom_call.1} parent=1 // loop_body
      %s23 = ssub.s32 %s18, 1
      %s24 = ssub.s32 %s18, 2
      %s25 = sadd.s32 %s18, 1
      %s26 = ssub.s32 %s18, %s25
      %p27 = scmp.eq.s32.totalorder %s26, 0
      %s29 = sadd.s32 %s28, 1
      %s30 = scalar_select %p27, %s28, %s29
      %p33 = pneg %p27
      %p34 = scmp.eq.s32.totalorder %s18, 1
      %p35 = por %p33, %p34
      %p36 = scmp.ne.s32.totalorder %s28, %s31
      %p37 = scmp.eq.s32.totalorder %s18, 0
      %p38 = por %p36, %p37
      %p39 = scmp.ne.s32.totalorder %s28, %s31
      %p40 = scmp.eq.s32.totalorder %s23, 1
      %p41 = por %p39, %p40
      %p42 = scmp.ne.s32.totalorder %s31, %s32
      %p43 = scmp.eq.s32.totalorder %s23, 0
      %p44 = por %p42, %p43
      %p45 = scmp.ne.s32.totalorder %s31, %s32
      %p46 = scmp.eq.s32.totalorder %s24, 1
      %p47 = por %p45, %p46
      %p49 = scmp.ne.s32.totalorder %s32, %s48
      %p50 = scmp.eq.s32.totalorder %s24, 0
      %p51 = por %p49, %p50
      %s53 = sadd.s32 %s52, 1
      %p56 = scmp.eq.s32.totalorder %s18, 1
      %p57 = scmp.ne.s32.totalorder %s52, %s54
      %p58 = scmp.eq.s32.totalorder %s18, 0
      %p59 = por %p57, %p58
      %p60 = scmp.ne.s32.totalorder %s52, %s54
      %p61 = scmp.eq.s32.totalorder %s23, 1
      %p62 = por %p60, %p61
      %p63 = scmp.ne.s32.totalorder %s54, %s55
      %p64 = scmp.eq.s32.totalorder %s23, 0
      %p65 = por %p63, %p64
      %p66 = scmp.ne.s32.totalorder %s54, %s55
      %p67 = scmp.eq.s32.totalorder %s24, 1
      %p68 = por %p66, %p67
      %p70 = scmp.ne.s32.totalorder %s55, %s69
      %p71 = scmp.eq.s32.totalorder %s24, 0
      %p72 = por %p70, %p71
      %s74 = sadd.s32 %s73, 1
      %p77 = scmp.eq.s32.totalorder %s18, 1
      %p78 = scmp.ne.s32.totalorder %s73, %s75
      %p79 = scmp.eq.s32.totalorder %s18, 0
      %p80 = por %p78, %p79
      %p81 = scmp.ne.s32.totalorder %s73, %s75
      %p82 = scmp.eq.s32.totalorder %s23, 1
      %p83 = por %p81, %p82
      %p84 = scmp.ne.s32.totalorder %s75, %s76
      %p85 = scmp.eq.s32.totalorder %s23, 0
      %p86 = por %p84, %p85
      %p87 = scmp.ne.s32.totalorder %s75, %s76
      %p88 = scmp.eq.s32.totalorder %s24, 1
      %p89 = por %p87, %p88
      %p91 = scmp.ne.s32.totalorder %s76, %s90
      %p92 = scmp.eq.s32.totalorder %s24, 0
      %p93 = por %p91, %p92
      %s95 = sadd.s32 %s94, 1
      %p98 = scmp.eq.s32.totalorder %s18, 1
      %p99 = scmp.ne.s32.totalorder %s94, %s96
      %p100 = scmp.eq.s32.totalorder %s18, 0
      %p101 = por %p99, %p100
      %p102 = scmp.ne.s32.totalorder %s94, %s96
      %p103 = scmp.eq.s32.totalorder %s23, 1
      %p104 = por %p102, %p103
      %p105 = scmp.ne.s32.totalorder %s96, %s97
      %p106 = scmp.eq.s32.totalorder %s23, 0
      %p107 = por %p105, %p106
      %p108 = scmp.ne.s32.totalorder %s96, %s97
      %p109 = scmp.eq.s32.totalorder %s24, 1
      %p110 = por %p108, %p109
      %p112 = scmp.ne.s32.totalorder %s97, %s111
      %p113 = scmp.eq.s32.totalorder %s24, 0
      %p114 = por %p112, %p113
      %s116 = sadd.s32 %s115, 1
      %p119 = scmp.eq.s32.totalorder %s18, 1
      %p120 = scmp.ne.s32.totalorder %s115, %s117
      %p121 = scmp.eq.s32.totalorder %s18, 0
      %p122 = por %p120, %p121
      %p123 = scmp.ne.s32.totalorder %s115, %s117
      %p124 = scmp.eq.s32.totalorder %s23, 1
      %p125 = por %p123, %p124
      %p126 = scmp.ne.s32.totalorder %s117, %s118
      %p127 = scmp.eq.s32.totalorder %s23, 0
      %p128 = por %p126, %p127
      %p129 = scmp.ne.s32.totalorder %s117, %s118
      %p130 = scmp.eq.s32.totalorder %s24, 1
      %p131 = por %p129, %p130
      %p133 = scmp.ne.s32.totalorder %s118, %s132
      %p134 = scmp.eq.s32.totalorder %s24, 0
      %p135 = por %p133, %p134
      %s136 = ssub.s32 %s18, %s25
      %p137 = scmp.eq.s32.totalorder %s136, 0
      %s139 = sadd.s32 %s138, 1
      %s140 = scalar_select %p137, %s138, %s139
      %p143 = pneg %p137
      %p144 = scmp.eq.s32.totalorder %s18, 1
      %p145 = por %p143, %p144
      %p146 = scmp.ne.s32.totalorder %s138, %s141
      %p147 = scmp.eq.s32.totalorder %s18, 0
      %p148 = por %p146, %p147
      %p149 = scmp.ne.s32.totalorder %s138, %s141
      %p150 = scmp.eq.s32.totalorder %s23, 1
      %p151 = por %p149, %p150
      %p152 = scmp.ne.s32.totalorder %s141, %s142
      %p153 = scmp.eq.s32.totalorder %s23, 0
      %p154 = por %p152, %p153
      %p155 = scmp.ne.s32.totalorder %s141, %s142
      %p156 = scmp.eq.s32.totalorder %s24, 1
      %p157 = por %p155, %p156
      %p159 = scmp.ne.s32.totalorder %s142, %s158
      %p160 = scmp.eq.s32.totalorder %s24, 0
      %p161 = por %p159, %p160
      %p162 = scmp.le.s32.totalorder 1, %s18
      %p163 = scmp.lt.s32.totalorder %s18, 3
      %p164 = pnand %p162, %p163
      %p165 = pneg %p164
      // Predicated region
      $region9: #{tpu_custom_call.1} parent=5 // pred_check
        _
      $region10: #{tpu_custom_call.1} parent=5 // pred_check_branch
        %167 = sbr.rel (%p164) target = $region12
      $region11: #{tpu_custom_call.1} parent=5 // pred_region
        %s168 = ssub.s32 %s18, 1
        // Predicated region
        $region13: #{tpu_custom_call.1} parent=11 // pred_check
          %p169 = pneg %p65
        $region14: #{tpu_custom_call.1} parent=11 // pred_check_branch
          %171 = sbr.rel (%p169) target = $region16
        $region15: #{tpu_custom_call.1} parent=11 // pred_region
          %173 = vsyncadd [#allocation7], 0
          %s174 = sshll.u32 %s1, 4
          %s175 = int_to_ptr.hbm [resolvable:$true] %s174
          %s176 = sshll.u32 [#allocation6], 4
          %s177 = int_to_ptr.vmem [resolvable:$true] %s176
          %182 = dma.hbm_to_vmem [thread:$0]  %s175, 9216, %s177, [#allocation7], 64, 64, 4
        $region16: #{tpu_custom_call.1} parent=11 // pred_fallthru
          _
        // Predicated region
        $region17: #{tpu_custom_call.1} parent=11 // pred_check
          %p183 = pneg %p86
        $region18: #{tpu_custom_call.1} parent=11 // pred_check_branch
          %185 = sbr.rel (%p183) target = $region20
        $region19: #{tpu_custom_call.1} parent=11 // pred_region
          _
        $region20: #{tpu_custom_call.1} parent=11 // pred_fallthru
          _
        // Predicated region
        $region21: #{tpu_custom_call.1} parent=11 // pred_check
          %p186 = pneg %p107
        $region22: #{tpu_custom_call.1} parent=11 // pred_check_branch
          %188 = sbr.rel (%p186) target = $region24
        $region23: #{tpu_custom_call.1} parent=11 // pred_region
          %190 = vsyncadd [#allocation7], 0
          %s191 = sshll.u32 %s3, 4
          %s192 = int_to_ptr.hbm [resolvable:$true] %s191
          %s193 = sshll.u32 [#allocation8], 4
          %s194 = int_to_ptr.vmem [resolvable:$true] %s193
          %199 = dma.hbm_to_vmem [thread:$0]  %s192, 9216, %s194, [#allocation7], 64, 64, 4
        $region24: #{tpu_custom_call.1} parent=11 // pred_fallthru
          _
        // Predicated region
        $region25: #{tpu_custom_call.1} parent=11 // pred_check
          %p200 = pneg %p128
        $region26: #{tpu_custom_call.1} parent=11 // pred_check_branch
          %202 = sbr.rel (%p200) target = $region28
        $region27: #{tpu_custom_call.1} parent=11 // pred_region
          _
        $region28: #{tpu_custom_call.1} parent=11 // pred_fallthru
          _
      $region12: #{tpu_custom_call.1} parent=5 // pred_fallthru
        _
      %p203 = scmp.lt.s32.totalorder %s18, 2
      // Predicated region
      $region29: #{tpu_custom_call.1} parent=5 // pred_check
        %p204 = pneg %p203
      $region30: #{tpu_custom_call.1} parent=5 // pred_check_branch
        %206 = sbr.rel (%p204) target = $region32
      $region31: #{tpu_custom_call.1} parent=5 // pred_region
        // Predicated region
        $region33: #{tpu_custom_call.1} parent=31 // pred_check
          %p207 = pneg %p38
        $region34: #{tpu_custom_call.1} parent=31 // pred_check_branch
          %209 = sbr.rel (%p207) target = $region36
        $region35: #{tpu_custom_call.1} parent=31 // pred_region
          %s210 = sand.u32 %s28, 1
          %s211 = scalar_lea.sflag [#allocation4], %s210
          %s212 = sand.u32 %s28, 1
          %s213 = smul.addr %s212, 128
          %s214 = scalar_lea.vmem [#allocation3], %s213
          %216 = vsyncadd %s211, 0
          %s217 = smul.addr %s18, 32
          %s218 = smul.addr %s217, 4
          %s219 = scalar_lea.hbm %s0, %s218
          %s220 = sshll.u32 %s219, 4
          %s221 = int_to_ptr.hbm [resolvable:$true] %s220
          %s222 = sshll.u32 %s214, 4
          %s223 = int_to_ptr.vmem [resolvable:$true] %s222
          %228 = dma.hbm_to_vmem [thread:$0]  %s221, 2048, %s223, %s211, 64, 64, 4
        $region36: #{tpu_custom_call.1} parent=31 // pred_fallthru
          _
      $region32: #{tpu_custom_call.1} parent=5 // pred_fallthru
        _
      %p229 = scmp.le.s32.totalorder 1, %s18
      %p230 = scmp.lt.s32.totalorder %s18, 3
      %p231 = pnand %p229, %p230
      %p232 = pneg %p231
      // Predicated region
      $region37: #{tpu_custom_call.1} parent=5 // pred_check
        _
      $region38: #{tpu_custom_call.1} parent=5 // pred_check_branch
        %234 = sbr.rel (%p231) target = $region40
      $region39: #{tpu_custom_call.1} parent=5 // pred_region
        %s235 = ssub.s32 %s18, 1
        %s236 = sand.u32 %s31, 1
        %s237 = scalar_lea.sflag [#allocation4], %s236
        %s238 = sand.u32 %s31, 1
        %s239 = smul.addr %s238, 128
        %s240 = scalar_lea.vmem [#allocation3], %s239
        // Predicated region
        $region41: #{tpu_custom_call.1} parent=39 // pred_check
          %p241 = pneg %p44
        $region42: #{tpu_custom_call.1} parent=39 // pred_check_branch
          %243 = sbr.rel (%p241) target = $region44
        $region43: #{tpu_custom_call.1} parent=39 // pred_region
          %245 = dma.done %s237, 2048
        $region44: #{tpu_custom_call.1} parent=39 // pred_fallthru
          _
        // Predicated region
        $region45: #{tpu_custom_call.1} parent=39 // pred_check
          %p246 = pneg %p65
        $region46: #{tpu_custom_call.1} parent=39 // pred_check_branch
          %248 = sbr.rel (%p246) target = $region48
        $region47: #{tpu_custom_call.1} parent=39 // pred_region
          %250 = dma.done [#allocation7], 9216
        $region48: #{tpu_custom_call.1} parent=39 // pred_fallthru
          _
        // Predicated region
        $region49: #{tpu_custom_call.1} parent=39 // pred_check
          %p251 = pneg %p107
        $region50: #{tpu_custom_call.1} parent=39 // pred_check_branch
          %253 = sbr.rel (%p251) target = $region52
        $region51: #{tpu_custom_call.1} parent=39 // pred_region
          %255 = dma.done [#allocation7], 9216
        $region52: #{tpu_custom_call.1} parent=39 // pred_fallthru
          _
        %s256 = sand.u32 %s31, 1
        %s257 = scalar_lea.sflag [#allocation4], %s256
        %s258 = sand.u32 %s31, 1
        %s259 = smul.addr %s258, 128
        %s260 = scalar_lea.vmem [#allocation3], %s259
        %p261 = pneg %p44
        %p262 = pneg %p41
        %p263 = pneg %p65
        %p264 = pneg %p62
        %p265 = pneg %p86
        %p266 = pneg %p83
        %p267 = pneg %p107
        %p268 = pneg %p104
        %p269 = pneg %p128
        %p270 = pneg %p125
        %p271 = pneg %p154
        %p272 = pneg %p151
        %s273 = sand.u32 %s141, 1
        %s274 = scalar_lea.sflag [#allocation5], %s273
        %s275 = sand.u32 %s141, 1
        %s276 = smul.addr %s275, 128
        %s277 = scalar_lea.vmem [#allocation9], %s276
        %279 = vst [vmem:[#allocation2] sm:$0xf] 0
        %280 = vst [vmem:[#allocation2 + $0x4] sm:$0xf] 0
        %281 = vst [vmem:[#allocation2 + $0x8] sm:$0xf] 0
        %282 = vst [vmem:[#allocation2 + $0xc] sm:$0xf] 0
        %283 = vst [vmem:[#allocation2 + $0x10] sm:$0xf] 0
        %284 = vst [vmem:[#allocation2 + $0x14] sm:$0xf] 0
        %s285 = scalar_lea.vmem [#allocation2], 408
        %286 = vst [vmem:[%s285] sm:$0xf] 0
        %287 = vst [vmem:[%s285 + $0x4] sm:$0xf] 0
        %288 = vst [vmem:[%s285 + $0x8] sm:$0xf] 0
        %289 = vst [vmem:[%s285 + $0xc] sm:$0xf] 0
        %290 = vst [vmem:[%s285 + $0x10] sm:$0xf] 0
        %291 = vst [vmem:[%s285 + $0x14] sm:$0xf] 0
        %vm292 = vcmask 1043459
        %vm293 = vsmask.f32 7950
        %vm294 = vmand %vm292, %vm293
        %v295 = vld [vmem:[#allocation2 + $0x4] sm:$0x8]
        %v296 = vsel %vm294, 0, %v295
        %297 = vst [vmem:[#allocation2 + $0x4] sm:$0x8] %v296
        %v298 = vld [vmem:[#allocation2 + $0x1c] sm:$0x8]
        %v299 = vsel %vm294, 0, %v298
        %300 = vst [vmem:[#allocation2 + $0x1c] sm:$0x8] %v299
        %v301 = vld [vmem:[#allocation2 + $0x34] sm:$0x8]
        %v302 = vsel %vm294, 0, %v301
        %303 = vst [vmem:[#allocation2 + $0x34] sm:$0x8] %v302
        %v304 = vld [vmem:[#allocation2 + $0x4c] sm:$0x8]
        %v305 = vsel %vm294, 0, %v304
        %306 = vst [vmem:[#allocation2 + $0x4c] sm:$0x8] %v305
        %v307 = vld [vmem:[#allocation2 + $0x64] sm:$0x8]
        %v308 = vsel %vm294, 0, %v307
        %309 = vst [vmem:[#allocation2 + $0x64] sm:$0x8] %v308
        %v310 = vld [vmem:[#allocation2 + $0x7c] sm:$0x8]
        %v311 = vsel %vm294, 0, %v310
        %312 = vst [vmem:[#allocation2 + $0x7c] sm:$0x8] %v311
        %v313 = vld [vmem:[#allocation2 + $0x94] sm:$0x8]
        %v314 = vsel %vm294, 0, %v313
        %315 = vst [vmem:[#allocation2 + $0x94] sm:$0x8] %v314
        %v316 = vld [vmem:[#allocation2 + $0xac] sm:$0x8]
        %v317 = vsel %vm294, 0, %v316
        %318 = vst [vmem:[#allocation2 + $0xac] sm:$0x8] %v317
        %v319 = vld [vmem:[#allocation2 + $0xc4] sm:$0x8]
        %v320 = vsel %vm294, 0, %v319
        %321 = vst [vmem:[#allocation2 + $0xc4] sm:$0x8] %v320
        %v322 = vld [vmem:[#allocation2 + $0xdc] sm:$0x8]
        %v323 = vsel %vm294, 0, %v322
        %324 = vst [vmem:[#allocation2 + $0xdc] sm:$0x8] %v323
        %v325 = vld [vmem:[#allocation2 + $0xf4] sm:$0x8]
        %v326 = vsel %vm294, 0, %v325
        %327 = vst [vmem:[#allocation2 + $0xf4] sm:$0x8] %v326
        %v328 = vld [vmem:[#allocation2 + $0x10c] sm:$0x8]
        %v329 = vsel %vm294, 0, %v328
        %330 = vst [vmem:[#allocation2 + $0x10c] sm:$0x8] %v329
        %v331 = vld [vmem:[#allocation2 + $0x124] sm:$0x8]
        %v332 = vsel %vm294, 0, %v331
        %333 = vst [vmem:[#allocation2 + $0x124] sm:$0x8] %v332
        %v334 = vld [vmem:[#allocation2 + $0x13c] sm:$0x8]
        %v335 = vsel %vm294, 0, %v334
        %336 = vst [vmem:[#allocation2 + $0x13c] sm:$0x8] %v335
        %v337 = vld [vmem:[#allocation2 + $0x154] sm:$0x8]
        %v338 = vsel %vm294, 0, %v337
        %339 = vst [vmem:[#allocation2 + $0x154] sm:$0x8] %v338
        %v340 = vld [vmem:[#allocation2 + $0x16c] sm:$0x8]
        %v341 = vsel %vm294, 0, %v340
        %342 = vst [vmem:[#allocation2 + $0x16c] sm:$0x8] %v341
        %v343 = vld [vmem:[#allocation2 + $0x184] sm:$0x8]
        %v344 = vsel %vm294, 0, %v343
        %345 = vst [vmem:[#allocation2 + $0x184] sm:$0x8] %v344
        %v346 = vld [vmem:[#allocation2 + $0x19c] sm:$0x8]
        %v347 = vsel %vm294, 0, %v346
        %348 = vst [vmem:[#allocation2 + $0x19c] sm:$0x8] %v347
        %vm349 = vcmask 1040384
        %vm350 = vsmask.f32 256
        %vm351 = vmand %vm349, %vm350
        %v352 = vld [vmem:[#allocation2 + $0x10] sm:$0x1]
        %v353 = vsel %vm351, 0, %v352
        %354 = vst [vmem:[#allocation2 + $0x10] sm:$0x1] %v353
        %v355 = vld [vmem:[#allocation2 + $0x28] sm:$0x1]
        %v356 = vsel %vm351, 0, %v355
        %357 = vst [vmem:[#allocation2 + $0x28] sm:$0x1] %v356
        %v358 = vld [vmem:[#allocation2 + $0x40] sm:$0x1]
        %v359 = vsel %vm351, 0, %v358
        %360 = vst [vmem:[#allocation2 + $0x40] sm:$0x1] %v359
        %v361 = vld [vmem:[#allocation2 + $0x58] sm:$0x1]
        %v362 = vsel %vm351, 0, %v361
        %363 = vst [vmem:[#allocation2 + $0x58] sm:$0x1] %v362
        %v364 = vld [vmem:[#allocation2 + $0x70] sm:$0x1]
        %v365 = vsel %vm351, 0, %v364
        %366 = vst [vmem:[#allocation2 + $0x70] sm:$0x1] %v365
        %v367 = vld [vmem:[#allocation2 + $0x88] sm:$0x1]
        %v368 = vsel %vm351, 0, %v367
        %369 = vst [vmem:[#allocation2 + $0x88] sm:$0x1] %v368
        %v370 = vld [vmem:[#allocation2 + $0xa0] sm:$0x1]
        %v371 = vsel %vm351, 0, %v370
        %372 = vst [vmem:[#allocation2 + $0xa0] sm:$0x1] %v371
        %v373 = vld [vmem:[#allocation2 + $0xb8] sm:$0x1]
        %v374 = vsel %vm351, 0, %v373
        %375 = vst [vmem:[#allocation2 + $0xb8] sm:$0x1] %v374
        %v376 = vld [vmem:[#allocation2 + $0xd0] sm:$0x1]
        %v377 = vsel %vm351, 0, %v376
        %378 = vst [vmem:[#allocation2 + $0xd0] sm:$0x1] %v377
        %v379 = vld [vmem:[#allocation2 + $0xe8] sm:$0x1]
        %v380 = vsel %vm351, 0, %v379
        %381 = vst [vmem:[#allocation2 + $0xe8] sm:$0x1] %v380
        %v382 = vld [vmem:[#allocation2 + $0x100] sm:$0x1]
        %v383 = vsel %vm351, 0, %v382
        %384 = vst [vmem:[#allocation2 + $0x100] sm:$0x1] %v383
        %v385 = vld [vmem:[#allocation2 + $0x118] sm:$0x1]
        %v386 = vsel %vm351, 0, %v385
        %387 = vst [vmem:[#allocation2 + $0x118] sm:$0x1] %v386
        %v388 = vld [vmem:[#allocation2 + $0x130] sm:$0x1]
        %v389 = vsel %vm351, 0, %v388
        %390 = vst [vmem:[#allocation2 + $0x130] sm:$0x1] %v389
        %v391 = vld [vmem:[#allocation2 + $0x148] sm:$0x1]
        %v392 = vsel %vm351, 0, %v391
        %393 = vst [vmem:[#allocation2 + $0x148] sm:$0x1] %v392
        %v394 = vld [vmem:[#allocation2 + $0x160] sm:$0x1]
        %v395 = vsel %vm351, 0, %v394
        %396 = vst [vmem:[#allocation2 + $0x160] sm:$0x1] %v395
        %v397 = vld [vmem:[#allocation2 + $0x178] sm:$0x1]
        %v398 = vsel %vm351, 0, %v397
        %399 = vst [vmem:[#allocation2 + $0x178] sm:$0x1] %v398
        %v400 = vld [vmem:[#allocation2 + $0x190] sm:$0x1]
        %v401 = vsel %vm351, 0, %v400
        %402 = vst [vmem:[#allocation2 + $0x190] sm:$0x1] %v401
        %v403 = vld [vmem:[#allocation2 + $0x1a8] sm:$0x1]
        %v404 = vsel %vm351, 0, %v403
        %405 = vst [vmem:[#allocation2 + $0x1a8] sm:$0x1] %v404
        %v406 = vld [vmem:[%s240] sm:$0xf]
        %v407 = vld [vmem:[%s240 + $0x4] sm:$0xf]
        %v408 = vld [vmem:[%s240 + $0x8] sm:$0xf]
        %v409 = vld [vmem:[%s240 + $0xc] sm:$0xf]
        %v410 = vld [vmem:[%s240 + $0x10] sm:$0xf]
        %v411 = vld [vmem:[%s240 + $0x14] sm:$0xf]
        %v412 = vld [vmem:[%s240 + $0x18] sm:$0xf]
        %v413 = vld [vmem:[%s240 + $0x1c] sm:$0xf]
        %v414 = vld [vmem:[%s240 + $0x20] sm:$0xf]
        %v415 = vld [vmem:[%s240 + $0x24] sm:$0xf]
        %v416 = vld [vmem:[%s240 + $0x28] sm:$0xf]
        %v417 = vld [vmem:[%s240 + $0x2c] sm:$0xf]
        %v418 = vld [vmem:[%s240 + $0x30] sm:$0xf]
        %v419 = vld [vmem:[%s240 + $0x34] sm:$0xf]
        %v420 = vld [vmem:[%s240 + $0x38] sm:$0xf]
        %v421 = vld [vmem:[%s240 + $0x3c] sm:$0xf]
        %v422 = vld [vmem:[%s240 + $0x40] sm:$0xf]
        %v423 = vld [vmem:[%s240 + $0x44] sm:$0xf]
        %v424 = vld [vmem:[%s240 + $0x48] sm:$0xf]
        %v425 = vld [vmem:[%s240 + $0x4c] sm:$0xf]
        %v426 = vld [vmem:[%s240 + $0x50] sm:$0xf]
        %v427 = vld [vmem:[%s240 + $0x54] sm:$0xf]
        %v428 = vld [vmem:[%s240 + $0x58] sm:$0xf]
        %v429 = vld [vmem:[%s240 + $0x5c] sm:$0xf]
        %v430 = vld [vmem:[%s240 + $0x60] sm:$0xf]
        %v431 = vld [vmem:[%s240 + $0x64] sm:$0xf]
        %v432 = vld [vmem:[%s240 + $0x68] sm:$0xf]
        %v433 = vld [vmem:[%s240 + $0x6c] sm:$0xf]
        %v434 = vld [vmem:[%s240 + $0x70] sm:$0xf]
        %v435 = vld [vmem:[%s240 + $0x74] sm:$0xf]
        %v436 = vld [vmem:[%s240 + $0x78] sm:$0xf]
        %v437 = vld [vmem:[%s240 + $0x7c] sm:$0xf]
        %s438 = scalar_lea.vmem [#allocation2], 24
        %439 = vst [vmem:[%s438 + $0x8] sm:$0xf] %v406
        %440 = vst [vmem:[%s438 + $0xc] sm:$0xf] %v407
        %441 = vst [vmem:[%s438 + $0x20] sm:$0xf] %v408
        %442 = vst [vmem:[%s438 + $0x24] sm:$0xf] %v409
        %443 = vst [vmem:[%s438 + $0x38] sm:$0xf] %v410
        %444 = vst [vmem:[%s438 + $0x3c] sm:$0xf] %v411
        %445 = vst [vmem:[%s438 + $0x50] sm:$0xf] %v412
        %446 = vst [vmem:[%s438 + $0x54] sm:$0xf] %v413
        %447 = vst [vmem:[%s438 + $0x68] sm:$0xf] %v414
        %448 = vst [vmem:[%s438 + $0x6c] sm:$0xf] %v415
        %449 = vst [vmem:[%s438 + $0x80] sm:$0xf] %v416
        %450 = vst [vmem:[%s438 + $0x84] sm:$0xf] %v417
        %451 = vst [vmem:[%s438 + $0x98] sm:$0xf] %v418
        %452 = vst [vmem:[%s438 + $0x9c] sm:$0xf] %v419
        %453 = vst [vmem:[%s438 + $0xb0] sm:$0xf] %v420
        %454 = vst [vmem:[%s438 + $0xb4] sm:$0xf] %v421
        %455 = vst [vmem:[%s438 + $0xc8] sm:$0xf] %v422
        %456 = vst [vmem:[%s438 + $0xcc] sm:$0xf] %v423
        %457 = vst [vmem:[%s438 + $0xe0] sm:$0xf] %v424
        %458 = vst [vmem:[%s438 + $0xe4] sm:$0xf] %v425
        %459 = vst [vmem:[%s438 + $0xf8] sm:$0xf] %v426
        %460 = vst [vmem:[%s438 + $0xfc] sm:$0xf] %v427
        %461 = vst [vmem:[%s438 + $0x110] sm:$0xf] %v428
        %462 = vst [vmem:[%s438 + $0x114] sm:$0xf] %v429
        %463 = vst [vmem:[%s438 + $0x128] sm:$0xf] %v430
        %464 = vst [vmem:[%s438 + $0x12c] sm:$0xf] %v431
        %465 = vst [vmem:[%s438 + $0x140] sm:$0xf] %v432
        %466 = vst [vmem:[%s438 + $0x144] sm:$0xf] %v433
        %467 = vst [vmem:[%s438 + $0x158] sm:$0xf] %v434
        %468 = vst [vmem:[%s438 + $0x15c] sm:$0xf] %v435
        %469 = vst [vmem:[%s438 + $0x170] sm:$0xf] %v436
        %470 = vst [vmem:[%s438 + $0x174] sm:$0xf] %v437
        %v471 = vld [vmem:[#allocation2 + $0x4] sm:$0x8]
        %v472 = vld [vmem:[#allocation2 + $0x8] sm:$0xf]
        %v473 = vld [vmem:[#allocation2 + $0xc] sm:$0xf]
        %v474 = vld [vmem:[#allocation2 + $0x1c] sm:$0x8]
        %v475 = vld [vmem:[#allocation2 + $0x20] sm:$0xf]
        %v476 = vld [vmem:[#allocation2 + $0x24] sm:$0xf]
        %v477 = vld [vmem:[#allocation2 + $0x34] sm:$0x8]
        %v478 = vld [vmem:[#allocation2 + $0x38] sm:$0xf]
        %v479 = vld [vmem:[#allocation2 + $0x3c] sm:$0xf]
        %v480 = vld [vmem:[#allocation2 + $0x4c] sm:$0x8]
        %v481 = vld [vmem:[#allocation2 + $0x50] sm:$0xf]
        %v482 = vld [vmem:[#allocation2 + $0x54] sm:$0xf]
        %v483 = vld [vmem:[#allocation2 + $0x64] sm:$0x8]
        %v484 = vld [vmem:[#allocation2 + $0x68] sm:$0xf]
        %v485 = vld [vmem:[#allocation2 + $0x6c] sm:$0xf]
        %v486 = vld [vmem:[#allocation2 + $0x7c] sm:$0x8]
        %v487 = vld [vmem:[#allocation2 + $0x80] sm:$0xf]
        %v488 = vld [vmem:[#allocation2 + $0x84] sm:$0xf]
        %v489 = vld [vmem:[#allocation2 + $0x94] sm:$0x8]
        %v490 = vld [vmem:[#allocation2 + $0x98] sm:$0xf]
        %v491 = vld [vmem:[#allocation2 + $0x9c] sm:$0xf]
        %v492 = vld [vmem:[#allocation2 + $0xac] sm:$0x8]
        %v493 = vld [vmem:[#allocation2 + $0xb0] sm:$0xf]
        %v494 = vld [vmem:[#allocation2 + $0xb4] sm:$0xf]
        %v495 = vld [vmem:[#allocation2 + $0xc4] sm:$0x8]
        %v496 = vld [vmem:[#allocation2 + $0xc8] sm:$0xf]
        %v497 = vld [vmem:[#allocation2 + $0xcc] sm:$0xf]
        %v498 = vld [vmem:[#allocation2 + $0xdc] sm:$0x8]
        %v499 = vld [vmem:[#allocation2 + $0xe0] sm:$0xf]
        %v500 = vld [vmem:[#allocation2 + $0xe4] sm:$0xf]
        %v501 = vld [vmem:[#allocation2 + $0xf4] sm:$0x8]
        %v502 = vld [vmem:[#allocation2 + $0xf8] sm:$0xf]
        %v503 = vld [vmem:[#allocation2 + $0xfc] sm:$0xf]
        %v504 = vld [vmem:[#allocation2 + $0x10c] sm:$0x8]
        %v505 = vld [vmem:[#allocation2 + $0x110] sm:$0xf]
        %v506 = vld [vmem:[#allocation2 + $0x114] sm:$0xf]
        %v507 = vld [vmem:[#allocation2 + $0x124] sm:$0x8]
        %v508 = vld [vmem:[#allocation2 + $0x128] sm:$0xf]
        %v509 = vld [vmem:[#allocation2 + $0x12c] sm:$0xf]
        %v510 = vld [vmem:[#allocation2 + $0x13c] sm:$0x8]
        %v511 = vld [vmem:[#allocation2 + $0x140] sm:$0xf]
        %v512 = vld [vmem:[#allocation2 + $0x144] sm:$0xf]
        %v513 = vld [vmem:[#allocation2 + $0x154] sm:$0x8]
        %v514 = vld [vmem:[#allocation2 + $0x158] sm:$0xf]
        %v515 = vld [vmem:[#allocation2 + $0x15c] sm:$0xf]
        %v516 = vld [vmem:[#allocation2 + $0x16c] sm:$0x8]
        %v517 = vld [vmem:[#allocation2 + $0x170] sm:$0xf]
        %v518 = vld [vmem:[#allocation2 + $0x174] sm:$0xf]
        %vm519 = vsmask.f32 4368
        %vm520 = vmor %vm350, %vm519
        %v522 = vshrl.u32 %v471, 16
        %v524 = vrot.slane %v522, 7
        %v525 = vrot.slane %v524, 4
        %v527 = vshrl.u32 %v472, 16
        %v529 = vrot.slane %v527, 7
        %v530 = vshll.u32 %v472, 16
        %v532 = vor.u32 %v529, %v530
        %v533 = vsel %vm520, %v525, %v532
        %v534 = vrot.slane %v529, 4
        %v536 = vshrl.u32 %v473, 16
        %v538 = vrot.slane %v536, 7
        %v539 = vshll.u32 %v473, 16
        %v541 = vor.u32 %v538, %v539
        %v542 = vsel %vm520, %v534, %v541
        %v544 = vshrl.u32 %v474, 16
        %v546 = vrot.slane %v544, 7
        %v547 = vrot.slane %v546, 4
        %v549 = vshrl.u32 %v475, 16
        %v551 = vrot.slane %v549, 7
        %v552 = vshll.u32 %v475, 16
        %v554 = vor.u32 %v551, %v552
        %v555 = vsel %vm520, %v547, %v554
        %v556 = vrot.slane %v551, 4
        %v558 = vshrl.u32 %v476, 16
        %v560 = vrot.slane %v558, 7
        %v561 = vshll.u32 %v476, 16
        %v563 = vor.u32 %v560, %v561
        %v564 = vsel %vm520, %v556, %v563
        %v566 = vshrl.u32 %v477, 16
        %v568 = vrot.slane %v566, 7
        %v569 = vrot.slane %v568, 4
        %v571 = vshrl.u32 %v478, 16
        %v573 = vrot.slane %v571, 7
        %v574 = vshll.u32 %v478, 16
        %v576 = vor.u32 %v573, %v574
        %v577 = vsel %vm520, %v569, %v576
        %v578 = vrot.slane %v573, 4
        %v580 = vshrl.u32 %v479, 16
        %v582 = vrot.slane %v580, 7
        %v583 = vshll.u32 %v479, 16
        %v585 = vor.u32 %v582, %v583
        %v586 = vsel %vm520, %v578, %v585
        %v588 = vshrl.u32 %v480, 16
        %v590 = vrot.slane %v588, 7
        %v591 = vrot.slane %v590, 4
        %v593 = vshrl.u32 %v481, 16
        %v595 = vrot.slane %v593, 7
        %v596 = vshll.u32 %v481, 16
        %v598 = vor.u32 %v595, %v596
        %v599 = vsel %vm520, %v591, %v598
        %v600 = vrot.slane %v595, 4
        %v602 = vshrl.u32 %v482, 16
        %v604 = vrot.slane %v602, 7
        %v605 = vshll.u32 %v482, 16
        %v607 = vor.u32 %v604, %v605
        %v608 = vsel %vm520, %v600, %v607
        %v610 = vshrl.u32 %v483, 16
        %v612 = vrot.slane %v610, 7
        %v613 = vrot.slane %v612, 4
        %v615 = vshrl.u32 %v484, 16
        %v617 = vrot.slane %v615, 7
        %v618 = vshll.u32 %v484, 16
        %v620 = vor.u32 %v617, %v618
        %v621 = vsel %vm520, %v613, %v620
        %v622 = vrot.slane %v617, 4
        %v624 = vshrl.u32 %v485, 16
        %v626 = vrot.slane %v624, 7
        %v627 = vshll.u32 %v485, 16
        %v629 = vor.u32 %v626, %v627
        %v630 = vsel %vm520, %v622, %v629
        %v632 = vshrl.u32 %v486, 16
        %v634 = vrot.slane %v632, 7
        %v635 = vrot.slane %v634, 4
        %v637 = vshrl.u32 %v487, 16
        %v639 = vrot.slane %v637, 7
        %v640 = vshll.u32 %v487, 16
        %v642 = vor.u32 %v639, %v640
        %v643 = vsel %vm520, %v635, %v642
        %v644 = vrot.slane %v639, 4
        %v646 = vshrl.u32 %v488, 16
        %v648 = vrot.slane %v646, 7
        %v649 = vshll.u32 %v488, 16
        %v651 = vor.u32 %v648, %v649
        %v652 = vsel %vm520, %v644, %v651
        %v654 = vshrl.u32 %v489, 16
        %v656 = vrot.slane %v654, 7
        %v657 = vrot.slane %v656, 4
        %v659 = vshrl.u32 %v490, 16
        %v661 = vrot.slane %v659, 7
        %v662 = vshll.u32 %v490, 16
        %v664 = vor.u32 %v661, %v662
        %v665 = vsel %vm520, %v657, %v664
        %v666 = vrot.slane %v661, 4
        %v668 = vshrl.u32 %v491, 16
        %v670 = vrot.slane %v668, 7
        %v671 = vshll.u32 %v491, 16
        %v673 = vor.u32 %v670, %v671
        %v674 = vsel %vm520, %v666, %v673
        %v676 = vshrl.u32 %v492, 16
        %v678 = vrot.slane %v676, 7
        %v679 = vrot.slane %v678, 4
        %v681 = vshrl.u32 %v493, 16
        %v683 = vrot.slane %v681, 7
        %v684 = vshll.u32 %v493, 16
        %v686 = vor.u32 %v683, %v684
        %v687 = vsel %vm520, %v679, %v686
        %v688 = vrot.slane %v683, 4
        %v690 = vshrl.u32 %v494, 16
        %v692 = vrot.slane %v690, 7
        %v693 = vshll.u32 %v494, 16
        %v695 = vor.u32 %v692, %v693
        %v696 = vsel %vm520, %v688, %v695
        %v698 = vshrl.u32 %v495, 16
        %v700 = vrot.slane %v698, 7
        %v701 = vrot.slane %v700, 4
        %v703 = vshrl.u32 %v496, 16
        %v705 = vrot.slane %v703, 7
        %v706 = vshll.u32 %v496, 16
        %v708 = vor.u32 %v705, %v706
        %v709 = vsel %vm520, %v701, %v708
        %v710 = vrot.slane %v705, 4
        %v712 = vshrl.u32 %v497, 16
        %v714 = vrot.slane %v712, 7
        %v715 = vshll.u32 %v497, 16
        %v717 = vor.u32 %v714, %v715
        %v718 = vsel %vm520, %v710, %v717
        %v720 = vshrl.u32 %v498, 16
        %v722 = vrot.slane %v720, 7
        %v723 = vrot.slane %v722, 4
        %v725 = vshrl.u32 %v499, 16
        %v727 = vrot.slane %v725, 7
        %v728 = vshll.u32 %v499, 16
        %v730 = vor.u32 %v727, %v728
        %v731 = vsel %vm520, %v723, %v730
        %v732 = vrot.slane %v727, 4
        %v734 = vshrl.u32 %v500, 16
        %v736 = vrot.slane %v734, 7
        %v737 = vshll.u32 %v500, 16
        %v739 = vor.u32 %v736, %v737
        %v740 = vsel %vm520, %v732, %v739
        %v742 = vshrl.u32 %v501, 16
        %v744 = vrot.slane %v742, 7
        %v745 = vrot.slane %v744, 4
        %v747 = vshrl.u32 %v502, 16
        %v749 = vrot.slane %v747, 7
        %v750 = vshll.u32 %v502, 16
        %v752 = vor.u32 %v749, %v750
        %v753 = vsel %vm520, %v745, %v752
        %v754 = vrot.slane %v749, 4
        %v756 = vshrl.u32 %v503, 16
        %v758 = vrot.slane %v756, 7
        %v759 = vshll.u32 %v503, 16
        %v761 = vor.u32 %v758, %v759
        %v762 = vsel %vm520, %v754, %v761
        %v764 = vshrl.u32 %v504, 16
        %v766 = vrot.slane %v764, 7
        %v767 = vrot.slane %v766, 4
        %v769 = vshrl.u32 %v505, 16
        %v771 = vrot.slane %v769, 7
        %v772 = vshll.u32 %v505, 16
        %v774 = vor.u32 %v771, %v772
        %v775 = vsel %vm520, %v767, %v774
        %v776 = vrot.slane %v771, 4
        %v778 = vshrl.u32 %v506, 16
        %v780 = vrot.slane %v778, 7
        %v781 = vshll.u32 %v506, 16
        %v783 = vor.u32 %v780, %v781
        %v784 = vsel %vm520, %v776, %v783
        %v786 = vshrl.u32 %v507, 16
        %v788 = vrot.slane %v786, 7
        %v789 = vrot.slane %v788, 4
        %v791 = vshrl.u32 %v508, 16
        %v793 = vrot.slane %v791, 7
        %v794 = vshll.u32 %v508, 16
        %v796 = vor.u32 %v793, %v794
        %v797 = vsel %vm520, %v789, %v796
        %v798 = vrot.slane %v793, 4
        %v800 = vshrl.u32 %v509, 16
        %v802 = vrot.slane %v800, 7
        %v803 = vshll.u32 %v509, 16
        %v805 = vor.u32 %v802, %v803
        %v806 = vsel %vm520, %v798, %v805
        %v808 = vshrl.u32 %v510, 16
        %v810 = vrot.slane %v808, 7
        %v811 = vrot.slane %v810, 4
        %v813 = vshrl.u32 %v511, 16
        %v815 = vrot.slane %v813, 7
        %v816 = vshll.u32 %v511, 16
        %v818 = vor.u32 %v815, %v816
        %v819 = vsel %vm520, %v811, %v818
        %v820 = vrot.slane %v815, 4
        %v822 = vshrl.u32 %v512, 16
        %v824 = vrot.slane %v822, 7
        %v825 = vshll.u32 %v512, 16
        %v827 = vor.u32 %v824, %v825
        %v828 = vsel %vm520, %v820, %v827
        %v830 = vshrl.u32 %v513, 16
        %v832 = vrot.slane %v830, 7
        %v833 = vrot.slane %v832, 4
        %v835 = vshrl.u32 %v514, 16
        %v837 = vrot.slane %v835, 7
        %v838 = vshll.u32 %v514, 16
        %v840 = vor.u32 %v837, %v838
        %v841 = vsel %vm520, %v833, %v840
        %v842 = vrot.slane %v837, 4
        %v844 = vshrl.u32 %v515, 16
        %v846 = vrot.slane %v844, 7
        %v847 = vshll.u32 %v515, 16
        %v849 = vor.u32 %v846, %v847
        %v850 = vsel %vm520, %v842, %v849
        %v852 = vshrl.u32 %v516, 16
        %v854 = vrot.slane %v852, 7
        %v855 = vrot.slane %v854, 4
        %v857 = vshrl.u32 %v517, 16
        %v859 = vrot.slane %v857, 7
        %v860 = vshll.u32 %v517, 16
        %v862 = vor.u32 %v859, %v860
        %v863 = vsel %vm520, %v855, %v862
        %v864 = vrot.slane %v859, 4
        %v866 = vshrl.u32 %v518, 16
        %v868 = vrot.slane %v866, 7
        %v869 = vshll.u32 %v518, 16
        %v871 = vor.u32 %v868, %v869
        %v872 = vsel %vm520, %v864, %v871
        %v873 = vld [vmem:[#allocation6] sm:$0xf]
        %v874 = vld [vmem:[#allocation6 + $0x4] sm:$0xf]
        %v875 = vld [vmem:[#allocation6 + $0x8] sm:$0xf]
        %v876 = vld [vmem:[#allocation6 + $0xc] sm:$0xf]
        %v877 = vld [vmem:[#allocation6 + $0x10] sm:$0xf]
        %v878 = vld [vmem:[#allocation6 + $0x14] sm:$0xf]
        %v879 = vld [vmem:[#allocation6 + $0x18] sm:$0xf]
        %v880 = vld [vmem:[#allocation6 + $0x1c] sm:$0xf]
        %v881 = vld [vmem:[#allocation6 + $0x20] sm:$0xf]
        %v882 = vld [vmem:[#allocation6 + $0x24] sm:$0xf]
        %v883 = vld [vmem:[#allocation6 + $0x28] sm:$0xf]
        %v884 = vld [vmem:[#allocation6 + $0x2c] sm:$0xf]
        %v885 = vld [vmem:[#allocation6 + $0x30] sm:$0xf]
        %v886 = vld [vmem:[#allocation6 + $0x34] sm:$0xf]
        %v887 = vld [vmem:[#allocation6 + $0x38] sm:$0xf]
        %v888 = vld [vmem:[#allocation6 + $0x3c] sm:$0xf]
        %s889 = scalar_lea.vmem [#allocation6], 64
        %v890 = vld [vmem:[%s889] sm:$0xf]
        %v891 = vld [vmem:[%s889 + $0x4] sm:$0xf]
        %v892 = vld [vmem:[%s889 + $0x8] sm:$0xf]
        %v893 = vld [vmem:[%s889 + $0xc] sm:$0xf]
        %v894 = vld [vmem:[%s889 + $0x10] sm:$0xf]
        %v895 = vld [vmem:[%s889 + $0x14] sm:$0xf]
        %v896 = vld [vmem:[%s889 + $0x18] sm:$0xf]
        %v897 = vld [vmem:[%s889 + $0x1c] sm:$0xf]
        %v898 = vld [vmem:[%s889 + $0x20] sm:$0xf]
        %v899 = vld [vmem:[%s889 + $0x24] sm:$0xf]
        %v900 = vld [vmem:[%s889 + $0x28] sm:$0xf]
        %v901 = vld [vmem:[%s889 + $0x2c] sm:$0xf]
        %v902 = vld [vmem:[%s889 + $0x30] sm:$0xf]
        %v903 = vld [vmem:[%s889 + $0x34] sm:$0xf]
        %v904 = vld [vmem:[%s889 + $0x38] sm:$0xf]
        %v905 = vld [vmem:[%s889 + $0x3c] sm:$0xf]
        %v938 = vunpack.c.l.b16 %v472
        %v939 = vunpack.c.l.b16 %v473
        %v940 = vunpack.c.l.b16 %v475
        %v941 = vunpack.c.l.b16 %v476
        %v942 = vunpack.c.l.b16 %v478
        %v943 = vunpack.c.l.b16 %v479
        %v944 = vunpack.c.l.b16 %v481
        %v945 = vunpack.c.l.b16 %v482
        %v946 = vunpack.c.l.b16 %v484
        %v947 = vunpack.c.l.b16 %v485
        %v948 = vunpack.c.l.b16 %v487
        %v949 = vunpack.c.l.b16 %v488
        %v950 = vunpack.c.l.b16 %v490
        %v951 = vunpack.c.l.b16 %v491
        %v952 = vunpack.c.l.b16 %v493
        %v953 = vunpack.c.l.b16 %v494
        %v954 = vunpack.c.l.b16 %v496
        %v955 = vunpack.c.l.b16 %v497
        %v956 = vunpack.c.l.b16 %v499
        %v957 = vunpack.c.l.b16 %v500
        %v958 = vunpack.c.l.b16 %v502
        %v959 = vunpack.c.l.b16 %v503
        %v960 = vunpack.c.l.b16 %v505
        %v961 = vunpack.c.l.b16 %v506
        %v962 = vunpack.c.l.b16 %v508
        %v963 = vunpack.c.l.b16 %v509
        %v964 = vunpack.c.l.b16 %v511
        %v965 = vunpack.c.l.b16 %v512
        %v966 = vunpack.c.l.b16 %v514
        %v967 = vunpack.c.l.b16 %v515
        %v968 = vunpack.c.l.b16 %v517
        %v969 = vunpack.c.l.b16 %v518
        %v970 = vpack.c.b16 %v939, %v938
        %v971 = vpack.c.b16 %v941, %v940
        %v972 = vpack.c.b16 %v943, %v942
        %v973 = vpack.c.b16 %v945, %v944
        %v974 = vpack.c.b16 %v947, %v946
        %v975 = vpack.c.b16 %v949, %v948
        %v976 = vpack.c.b16 %v951, %v950
        %v977 = vpack.c.b16 %v953, %v952
        %v978 = vpack.c.b16 %v955, %v954
        %v979 = vpack.c.b16 %v957, %v956
        %v980 = vpack.c.b16 %v959, %v958
        %v981 = vpack.c.b16 %v961, %v960
        %v982 = vpack.c.b16 %v963, %v962
        %v983 = vpack.c.b16 %v965, %v964
        %v984 = vpack.c.b16 %v967, %v966
        %v985 = vpack.c.b16 %v969, %v968
        %v1018 = vunpack.c.l.b16 %v890
        %v1019 = vunpack.c.l.b16 %v891
        %v1020 = vunpack.c.l.b16 %v892
        %v1021 = vunpack.c.l.b16 %v893
        %v1022 = vunpack.c.l.b16 %v894
        %v1023 = vunpack.c.l.b16 %v895
        %v1024 = vunpack.c.l.b16 %v896
        %v1025 = vunpack.c.l.b16 %v897
        %v1026 = vunpack.c.l.b16 %v898
        %v1027 = vunpack.c.l.b16 %v899
        %v1028 = vunpack.c.l.b16 %v900
        %v1029 = vunpack.c.l.b16 %v901
        %v1030 = vunpack.c.l.b16 %v902
        %v1031 = vunpack.c.l.b16 %v903
        %v1032 = vunpack.c.l.b16 %v904
        %v1033 = vunpack.c.l.b16 %v905
        %v1034 = vpack.c.b16 %v1019, %v1018
        %v1035 = vpack.c.b16 %v1021, %v1020
        %v1036 = vpack.c.b16 %v1023, %v1022
        %v1037 = vpack.c.b16 %v1025, %v1024
        %v1038 = vpack.c.b16 %v1027, %v1026
        %v1039 = vpack.c.b16 %v1029, %v1028
        %v1040 = vpack.c.b16 %v1031, %v1030
        %v1041 = vpack.c.b16 %v1033, %v1032
        %1050 = vmatpush.bf16.msra.mxu0 %v1041
        %1051 = vmatpush.bf16.msra.mxu0 %v1040
        %1052 = vmatpush.bf16.msra.mxu0 %v1039
        %1053 = vmatpush.bf16.msra.mxu0 %v1038
        %1054 = vmatpush.bf16.msra.mxu0 %v1037
        %1055 = vmatpush.bf16.msra.mxu0 %v1036
        %1056 = vmatpush.bf16.msra.mxu0 %v1035
        %1057 = vmatpush.bf16.msra.mxu0 %v1034
        %1058 = vmatmul.bf16.gmra.mxu0 %v970
        %v1059 = vpop.f32.mrf.mxu0
        %v1060 = vadd.f32 0.0, %v1059
        %v1061 = vpop.f32.mrf.mxu0
        %v1062 = vadd.f32 0.0, %v1061
        %1063 = vmatmul.bf16.gmra.mxu0 %v971
        %v1064 = vpop.f32.mrf.mxu0
        %v1065 = vadd.f32 0.0, %v1064
        %v1066 = vpop.f32.mrf.mxu0
        %v1067 = vadd.f32 0.0, %v1066
        %1068 = vmatmul.bf16.gmra.mxu0 %v972
        %v1069 = vpop.f32.mrf.mxu0
        %v1070 = vadd.f32 0.0, %v1069
        %v1071 = vpop.f32.mrf.mxu0
        %v1072 = vadd.f32 0.0, %v1071
        %1073 = vmatmul.bf16.gmra.mxu0 %v973
        %v1074 = vpop.f32.mrf.mxu0
        %v1075 = vadd.f32 0.0, %v1074
        %v1076 = vpop.f32.mrf.mxu0
        %v1077 = vadd.f32 0.0, %v1076
        %1078 = vmatmul.bf16.gmra.mxu0 %v974
        %v1079 = vpop.f32.mrf.mxu0
        %v1080 = vadd.f32 0.0, %v1079
        %v1081 = vpop.f32.mrf.mxu0
        %v1082 = vadd.f32 0.0, %v1081
        %1083 = vmatmul.bf16.gmra.mxu0 %v975
        %v1084 = vpop.f32.mrf.mxu0
        %v1085 = vadd.f32 0.0, %v1084
        %v1086 = vpop.f32.mrf.mxu0
        %v1087 = vadd.f32 0.0, %v1086
        %1088 = vmatmul.bf16.gmra.mxu0 %v976
        %v1089 = vpop.f32.mrf.mxu0
        %v1090 = vadd.f32 0.0, %v1089
        %v1091 = vpop.f32.mrf.mxu0
        %v1092 = vadd.f32 0.0, %v1091
        %1093 = vmatmul.bf16.gmra.mxu0 %v977
        %v1094 = vpop.f32.mrf.mxu0
        %v1095 = vadd.f32 0.0, %v1094
        %v1096 = vpop.f32.mrf.mxu0
        %v1097 = vadd.f32 0.0, %v1096
        %1098 = vmatmul.bf16.gmra.mxu0 %v978
        %v1099 = vpop.f32.mrf.mxu0
        %v1100 = vadd.f32 0.0, %v1099
        %v1101 = vpop.f32.mrf.mxu0
        %v1102 = vadd.f32 0.0, %v1101
        %1103 = vmatmul.bf16.gmra.mxu0 %v979
        %v1104 = vpop.f32.mrf.mxu0
        %v1105 = vadd.f32 0.0, %v1104
        %v1106 = vpop.f32.mrf.mxu0
        %v1107 = vadd.f32 0.0, %v1106
        %1108 = vmatmul.bf16.gmra.mxu0 %v980
        %v1109 = vpop.f32.mrf.mxu0
        %v1110 = vadd.f32 0.0, %v1109
        %v1111 = vpop.f32.mrf.mxu0
        %v1112 = vadd.f32 0.0, %v1111
        %1113 = vmatmul.bf16.gmra.mxu0 %v981
        %v1114 = vpop.f32.mrf.mxu0
        %v1115 = vadd.f32 0.0, %v1114
        %v1116 = vpop.f32.mrf.mxu0
        %v1117 = vadd.f32 0.0, %v1116
        %1118 = vmatmul.bf16.gmra.mxu0 %v982
        %v1119 = vpop.f32.mrf.mxu0
        %v1120 = vadd.f32 0.0, %v1119
        %v1121 = vpop.f32.mrf.mxu0
        %v1122 = vadd.f32 0.0, %v1121
        %1123 = vmatmul.bf16.gmra.mxu0 %v983
        %v1124 = vpop.f32.mrf.mxu0
        %v1125 = vadd.f32 0.0, %v1124
        %v1126 = vpop.f32.mrf.mxu0
        %v1127 = vadd.f32 0.0, %v1126
        %1128 = vmatmul.bf16.gmra.mxu0 %v984
        %v1129 = vpop.f32.mrf.mxu0
        %v1130 = vadd.f32 0.0, %v1129
        %v1131 = vpop.f32.mrf.mxu0
        %v1132 = vadd.f32 0.0, %v1131
        %1133 = vmatmul.bf16.gmra.mxu0 %v985
        %v1134 = vpop.f32.mrf.mxu0
        %v1135 = vadd.f32 0.0, %v1134
        %v1136 = vpop.f32.mrf.mxu0
        %v1137 = vadd.f32 0.0, %v1136
        %1138 = vdwg.mxu0
        %v1139 = vunpack.c.l.b16 %v533
        %v1140 = vunpack.c.l.b16 %v542
        %v1141 = vunpack.c.l.b16 %v555
        %v1142 = vunpack.c.l.b16 %v564
        %v1143 = vunpack.c.l.b16 %v577
        %v1144 = vunpack.c.l.b16 %v586
        %v1145 = vunpack.c.l.b16 %v599
        %v1146 = vunpack.c.l.b16 %v608
        %v1147 = vunpack.c.l.b16 %v621
        %v1148 = vunpack.c.l.b16 %v630
        %v1149 = vunpack.c.l.b16 %v643
        %v1150 = vunpack.c.l.b16 %v652
        %v1151 = vunpack.c.l.b16 %v665
        %v1152 = vunpack.c.l.b16 %v674
        %v1153 = vunpack.c.l.b16 %v687
        %v1154 = vunpack.c.l.b16 %v696
        %v1155 = vunpack.c.l.b16 %v709
        %v1156 = vunpack.c.l.b16 %v718
        %v1157 = vunpack.c.l.b16 %v731
        %v1158 = vunpack.c.l.b16 %v740
        %v1159 = vunpack.c.l.b16 %v753
        %v1160 = vunpack.c.l.b16 %v762
        %v1161 = vunpack.c.l.b16 %v775
        %v1162 = vunpack.c.l.b16 %v784
        %v1163 = vunpack.c.l.b16 %v797
        %v1164 = vunpack.c.l.b16 %v806
        %v1165 = vunpack.c.l.b16 %v819
        %v1166 = vunpack.c.l.b16 %v828
        %v1167 = vunpack.c.l.b16 %v841
        %v1168 = vunpack.c.l.b16 %v850
        %v1169 = vunpack.c.l.b16 %v863
        %v1170 = vunpack.c.l.b16 %v872
        %v1171 = vpack.c.b16 %v1140, %v1139
        %v1172 = vpack.c.b16 %v1142, %v1141
        %v1173 = vpack.c.b16 %v1144, %v1143
        %v1174 = vpack.c.b16 %v1146, %v1145
        %v1175 = vpack.c.b16 %v1148, %v1147
        %v1176 = vpack.c.b16 %v1150, %v1149
        %v1177 = vpack.c.b16 %v1152, %v1151
        %v1178 = vpack.c.b16 %v1154, %v1153
        %v1179 = vpack.c.b16 %v1156, %v1155
        %v1180 = vpack.c.b16 %v1158, %v1157
        %v1181 = vpack.c.b16 %v1160, %v1159
        %v1182 = vpack.c.b16 %v1162, %v1161
        %v1183 = vpack.c.b16 %v1164, %v1163
        %v1184 = vpack.c.b16 %v1166, %v1165
        %v1185 = vpack.c.b16 %v1168, %v1167
        %v1186 = vpack.c.b16 %v1170, %v1169
        %v1219 = vunpack.c.l.b16 %v873
        %v1220 = vunpack.c.l.b16 %v874
        %v1221 = vunpack.c.l.b16 %v875
        %v1222 = vunpack.c.l.b16 %v876
        %v1223 = vunpack.c.l.b16 %v877
        %v1224 = vunpack.c.l.b16 %v878
        %v1225 = vunpack.c.l.b16 %v879
        %v1226 = vunpack.c.l.b16 %v880
        %v1227 = vunpack.c.l.b16 %v881
        %v1228 = vunpack.c.l.b16 %v882
        %v1229 = vunpack.c.l.b16 %v883
        %v1230 = vunpack.c.l.b16 %v884
        %v1231 = vunpack.c.l.b16 %v885
        %v1232 = vunpack.c.l.b16 %v886
        %v1233 = vunpack.c.l.b16 %v887
        %v1234 = vunpack.c.l.b16 %v888
        %v1235 = vpack.c.b16 %v1220, %v1219
        %v1236 = vpack.c.b16 %v1222, %v1221
        %v1237 = vpack.c.b16 %v1224, %v1223
        %v1238 = vpack.c.b16 %v1226, %v1225
        %v1239 = vpack.c.b16 %v1228, %v1227
        %v1240 = vpack.c.b16 %v1230, %v1229
        %v1241 = vpack.c.b16 %v1232, %v1231
        %v1242 = vpack.c.b16 %v1234, %v1233
        %1251 = vmatpush.bf16.msra.mxu0 %v1242
        %1252 = vmatpush.bf16.msra.mxu0 %v1241
        %1253 = vmatpush.bf16.msra.mxu0 %v1240
        %1254 = vmatpush.bf16.msra.mxu0 %v1239
        %1255 = vmatpush.bf16.msra.mxu0 %v1238
        %1256 = vmatpush.bf16.msra.mxu0 %v1237
        %1257 = vmatpush.bf16.msra.mxu0 %v1236
        %1258 = vmatpush.bf16.msra.mxu0 %v1235
        %1259 = vmatmul.bf16.gmra.mxu0 %v1171
        %v1260 = vpop.f32.mrf.mxu0
        %v1261 = vadd.f32 %v1060, %v1260
        %v1262 = vpop.f32.mrf.mxu0
        %v1263 = vadd.f32 %v1062, %v1262
        %1264 = vmatmul.bf16.gmra.mxu0 %v1172
        %v1265 = vpop.f32.mrf.mxu0
        %v1266 = vadd.f32 %v1065, %v1265
        %v1267 = vpop.f32.mrf.mxu0
        %v1268 = vadd.f32 %v1067, %v1267
        %1269 = vmatmul.bf16.gmra.mxu0 %v1173
        %v1270 = vpop.f32.mrf.mxu0
        %v1271 = vadd.f32 %v1070, %v1270
        %v1272 = vpop.f32.mrf.mxu0
        %v1273 = vadd.f32 %v1072, %v1272
        %1274 = vmatmul.bf16.gmra.mxu0 %v1174
        %v1275 = vpop.f32.mrf.mxu0
        %v1276 = vadd.f32 %v1075, %v1275
        %v1277 = vpop.f32.mrf.mxu0
        %v1278 = vadd.f32 %v1077, %v1277
        %1279 = vmatmul.bf16.gmra.mxu0 %v1175
        %v1280 = vpop.f32.mrf.mxu0
        %v1281 = vadd.f32 %v1080, %v1280
        %v1282 = vpop.f32.mrf.mxu0
        %v1283 = vadd.f32 %v1082, %v1282
        %1284 = vmatmul.bf16.gmra.mxu0 %v1176
        %v1285 = vpop.f32.mrf.mxu0
        %v1286 = vadd.f32 %v1085, %v1285
        %v1287 = vpop.f32.mrf.mxu0
        %v1288 = vadd.f32 %v1087, %v1287
        %1289 = vmatmul.bf16.gmra.mxu0 %v1177
        %v1290 = vpop.f32.mrf.mxu0
        %v1291 = vadd.f32 %v1090, %v1290
        %v1292 = vpop.f32.mrf.mxu0
        %v1293 = vadd.f32 %v1092, %v1292
        %1294 = vmatmul.bf16.gmra.mxu0 %v1178
        %v1295 = vpop.f32.mrf.mxu0
        %v1296 = vadd.f32 %v1095, %v1295
        %v1297 = vpop.f32.mrf.mxu0
        %v1298 = vadd.f32 %v1097, %v1297
        %1299 = vmatmul.bf16.gmra.mxu0 %v1179
        %v1300 = vpop.f32.mrf.mxu0
        %v1301 = vadd.f32 %v1100, %v1300
        %v1302 = vpop.f32.mrf.mxu0
        %v1303 = vadd.f32 %v1102, %v1302
        %1304 = vmatmul.bf16.gmra.mxu0 %v1180
        %v1305 = vpop.f32.mrf.mxu0
        %v1306 = vadd.f32 %v1105, %v1305
        %v1307 = vpop.f32.mrf.mxu0
        %v1308 = vadd.f32 %v1107, %v1307
        %1309 = vmatmul.bf16.gmra.mxu0 %v1181
        %v1310 = vpop.f32.mrf.mxu0
        %v1311 = vadd.f32 %v1110, %v1310
        %v1312 = vpop.f32.mrf.mxu0
        %v1313 = vadd.f32 %v1112, %v1312
        %1314 = vmatmul.bf16.gmra.mxu0 %v1182
        %v1315 = vpop.f32.mrf.mxu0
        %v1316 = vadd.f32 %v1115, %v1315
        %v1317 = vpop.f32.mrf.mxu0
        %v1318 = vadd.f32 %v1117, %v1317
        %1319 = vmatmul.bf16.gmra.mxu0 %v1183
        %v1320 = vpop.f32.mrf.mxu0
        %v1321 = vadd.f32 %v1120, %v1320
        %v1322 = vpop.f32.mrf.mxu0
        %v1323 = vadd.f32 %v1122, %v1322
        %1324 = vmatmul.bf16.gmra.mxu0 %v1184
        %v1325 = vpop.f32.mrf.mxu0
        %v1326 = vadd.f32 %v1125, %v1325
        %v1327 = vpop.f32.mrf.mxu0
        %v1328 = vadd.f32 %v1127, %v1327
        %1329 = vmatmul.bf16.gmra.mxu0 %v1185
        %v1330 = vpop.f32.mrf.mxu0
        %v1331 = vadd.f32 %v1130, %v1330
        %v1332 = vpop.f32.mrf.mxu0
        %v1333 = vadd.f32 %v1132, %v1332
        %1334 = vmatmul.bf16.gmra.mxu0 %v1186
        %v1335 = vpop.f32.mrf.mxu0
        %v1336 = vadd.f32 %v1135, %v1335
        %v1337 = vpop.f32.mrf.mxu0
        %v1338 = vadd.f32 %v1137, %v1337
        %1339 = vdwg.mxu0
        %v1340 = vld [vmem:[#allocation2 + $0x8] sm:$0xf]
        %v1341 = vld [vmem:[#allocation2 + $0xc] sm:$0xf]
        %v1342 = vld [vmem:[#allocation2 + $0x10] sm:$0x1]
        %v1343 = vld [vmem:[#allocation2 + $0x20] sm:$0xf]
        %v1344 = vld [vmem:[#allocation2 + $0x24] sm:$0xf]
        %v1345 = vld [vmem:[#allocation2 + $0x28] sm:$0x1]
        %v1346 = vld [vmem:[#allocation2 + $0x38] sm:$0xf]
        %v1347 = vld [vmem:[#allocation2 + $0x3c] sm:$0xf]
        %v1348 = vld [vmem:[#allocation2 + $0x40] sm:$0x1]
        %v1349 = vld [vmem:[#allocation2 + $0x50] sm:$0xf]
        %v1350 = vld [vmem:[#allocation2 + $0x54] sm:$0xf]
        %v1351 = vld [vmem:[#allocation2 + $0x58] sm:$0x1]
        %v1352 = vld [vmem:[#allocation2 + $0x68] sm:$0xf]
        %v1353 = vld [vmem:[#allocation2 + $0x6c] sm:$0xf]
        %v1354 = vld [vmem:[#allocation2 + $0x70] sm:$0x1]
        %v1355 = vld [vmem:[#allocation2 + $0x80] sm:$0xf]
        %v1356 = vld [vmem:[#allocation2 + $0x84] sm:$0xf]
        %v1357 = vld [vmem:[#allocation2 + $0x88] sm:$0x1]
        %v1358 = vld [vmem:[#allocation2 + $0x98] sm:$0xf]
        %v1359 = vld [vmem:[#allocation2 + $0x9c] sm:$0xf]
        %v1360 = vld [vmem:[#allocation2 + $0xa0] sm:$0x1]
        %v1361 = vld [vmem:[#allocation2 + $0xb0] sm:$0xf]
        %v1362 = vld [vmem:[#allocation2 + $0xb4] sm:$0xf]
        %v1363 = vld [vmem:[#allocation2 + $0xb8] sm:$0x1]
        %v1364 = vld [vmem:[#allocation2 + $0xc8] sm:$0xf]
        %v1365 = vld [vmem:[#allocation2 + $0xcc] sm:$0xf]
        %v1366 = vld [vmem:[#allocation2 + $0xd0] sm:$0x1]
        %v1367 = vld [vmem:[#allocation2 + $0xe0] sm:$0xf]
        %v1368 = vld [vmem:[#allocation2 + $0xe4] sm:$0xf]
        %v1369 = vld [vmem:[#allocation2 + $0xe8] sm:$0x1]
        %v1370 = vld [vmem:[#allocation2 + $0xf8] sm:$0xf]
        %v1371 = vld [vmem:[#allocation2 + $0xfc] sm:$0xf]
        %v1372 = vld [vmem:[#allocation2 + $0x100] sm:$0x1]
        %v1373 = vld [vmem:[#allocation2 + $0x110] sm:$0xf]
        %v1374 = vld [vmem:[#allocation2 + $0x114] sm:$0xf]
        %v1375 = vld [vmem:[#allocation2 + $0x118] sm:$0x1]
        %v1376 = vld [vmem:[#allocation2 + $0x128] sm:$0xf]
        %v1377 = vld [vmem:[#allocation2 + $0x12c] sm:$0xf]
        %v1378 = vld [vmem:[#allocation2 + $0x130] sm:$0x1]
        %v1379 = vld [vmem:[#allocation2 + $0x140] sm:$0xf]
        %v1380 = vld [vmem:[#allocation2 + $0x144] sm:$0xf]
        %v1381 = vld [vmem:[#allocation2 + $0x148] sm:$0x1]
        %v1382 = vld [vmem:[#allocation2 + $0x158] sm:$0xf]
        %v1383 = vld [vmem:[#allocation2 + $0x15c] sm:$0xf]
        %v1384 = vld [vmem:[#allocation2 + $0x160] sm:$0x1]
        %v1385 = vld [vmem:[#allocation2 + $0x170] sm:$0xf]
        %v1386 = vld [vmem:[#allocation2 + $0x174] sm:$0xf]
        %v1387 = vld [vmem:[#allocation2 + $0x178] sm:$0x1]
        %vm1388 = vsmask.f32 3328
        %vm1389 = vsmask.f32 7440
        %vm1390 = vmor %vm1388, %vm1389
        %v1392 = vshrl.u32 %v1340, 16
        %v1394 = vrot.slane %v1392, 4
        %v1395 = vshll.u32 %v1340, 16
        %v1397 = vrot.slane %v1395, 5
        %v1398 = vor.u32 %v1394, %v1397
        %v1399 = vrot.slane %v1398, 4
        %v1401 = vshll.u32 %v1341, 16
        %v1403 = vrot.slane %v1401, 5
        %v1404 = vsel %vm1390, %v1399, %v1403
        %v1405 = vshrl.u32 %v1341, 16
        %v1407 = vrot.slane %v1405, 4
        %v1408 = vor.u32 %v1407, %v1403
        %v1409 = vrot.slane %v1408, 4
        %v1411 = vshll.u32 %v1342, 16
        %v1413 = vrot.slane %v1411, 5
        %v1414 = vsel %vm1390, %v1409, %v1413
        %v1416 = vshrl.u32 %v1343, 16
        %v1418 = vrot.slane %v1416, 4
        %v1419 = vshll.u32 %v1343, 16
        %v1421 = vrot.slane %v1419, 5
        %v1422 = vor.u32 %v1418, %v1421
        %v1423 = vrot.slane %v1422, 4
        %v1425 = vshll.u32 %v1344, 16
        %v1427 = vrot.slane %v1425, 5
        %v1428 = vsel %vm1390, %v1423, %v1427
        %v1429 = vshrl.u32 %v1344, 16
        %v1431 = vrot.slane %v1429, 4
        %v1432 = vor.u32 %v1431, %v1427
        %v1433 = vrot.slane %v1432, 4
        %v1435 = vshll.u32 %v1345, 16
        %v1437 = vrot.slane %v1435, 5
        %v1438 = vsel %vm1390, %v1433, %v1437
        %v1440 = vshrl.u32 %v1346, 16
        %v1442 = vrot.slane %v1440, 4
        %v1443 = vshll.u32 %v1346, 16
        %v1445 = vrot.slane %v1443, 5
        %v1446 = vor.u32 %v1442, %v1445
        %v1447 = vrot.slane %v1446, 4
        %v1449 = vshll.u32 %v1347, 16
        %v1451 = vrot.slane %v1449, 5
        %v1452 = vsel %vm1390, %v1447, %v1451
        %v1453 = vshrl.u32 %v1347, 16
        %v1455 = vrot.slane %v1453, 4
        %v1456 = vor.u32 %v1455, %v1451
        %v1457 = vrot.slane %v1456, 4
        %v1459 = vshll.u32 %v1348, 16
        %v1461 = vrot.slane %v1459, 5
        %v1462 = vsel %vm1390, %v1457, %v1461
        %v1464 = vshrl.u32 %v1349, 16
        %v1466 = vrot.slane %v1464, 4
        %v1467 = vshll.u32 %v1349, 16
        %v1469 = vrot.slane %v1467, 5
        %v1470 = vor.u32 %v1466, %v1469
        %v1471 = vrot.slane %v1470, 4
        %v1473 = vshll.u32 %v1350, 16
        %v1475 = vrot.slane %v1473, 5
        %v1476 = vsel %vm1390, %v1471, %v1475
        %v1477 = vshrl.u32 %v1350, 16
        %v1479 = vrot.slane %v1477, 4
        %v1480 = vor.u32 %v1479, %v1475
        %v1481 = vrot.slane %v1480, 4
        %v1483 = vshll.u32 %v1351, 16
        %v1485 = vrot.slane %v1483, 5
        %v1486 = vsel %vm1390, %v1481, %v1485
        %v1488 = vshrl.u32 %v1352, 16
        %v1490 = vrot.slane %v1488, 4
        %v1491 = vshll.u32 %v1352, 16
        %v1493 = vrot.slane %v1491, 5
        %v1494 = vor.u32 %v1490, %v1493
        %v1495 = vrot.slane %v1494, 4
        %v1497 = vshll.u32 %v1353, 16
        %v1499 = vrot.slane %v1497, 5
        %v1500 = vsel %vm1390, %v1495, %v1499
        %v1501 = vshrl.u32 %v1353, 16
        %v1503 = vrot.slane %v1501, 4
        %v1504 = vor.u32 %v1503, %v1499
        %v1505 = vrot.slane %v1504, 4
        %v1507 = vshll.u32 %v1354, 16
        %v1509 = vrot.slane %v1507, 5
        %v1510 = vsel %vm1390, %v1505, %v1509
        %v1512 = vshrl.u32 %v1355, 16
        %v1514 = vrot.slane %v1512, 4
        %v1515 = vshll.u32 %v1355, 16
        %v1517 = vrot.slane %v1515, 5
        %v1518 = vor.u32 %v1514, %v1517
        %v1519 = vrot.slane %v1518, 4
        %v1521 = vshll.u32 %v1356, 16
        %v1523 = vrot.slane %v1521, 5
        %v1524 = vsel %vm1390, %v1519, %v1523
        %v1525 = vshrl.u32 %v1356, 16
        %v1527 = vrot.slane %v1525, 4
        %v1528 = vor.u32 %v1527, %v1523
        %v1529 = vrot.slane %v1528, 4
        %v1531 = vshll.u32 %v1357, 16
        %v1533 = vrot.slane %v1531, 5
        %v1534 = vsel %vm1390, %v1529, %v1533
        %v1536 = vshrl.u32 %v1358, 16
        %v1538 = vrot.slane %v1536, 4
        %v1539 = vshll.u32 %v1358, 16
        %v1541 = vrot.slane %v1539, 5
        %v1542 = vor.u32 %v1538, %v1541
        %v1543 = vrot.slane %v1542, 4
        %v1545 = vshll.u32 %v1359, 16
        %v1547 = vrot.slane %v1545, 5
        %v1548 = vsel %vm1390, %v1543, %v1547
        %v1549 = vshrl.u32 %v1359, 16
        %v1551 = vrot.slane %v1549, 4
        %v1552 = vor.u32 %v1551, %v1547
        %v1553 = vrot.slane %v1552, 4
        %v1555 = vshll.u32 %v1360, 16
        %v1557 = vrot.slane %v1555, 5
        %v1558 = vsel %vm1390, %v1553, %v1557
        %v1560 = vshrl.u32 %v1361, 16
        %v1562 = vrot.slane %v1560, 4
        %v1563 = vshll.u32 %v1361, 16
        %v1565 = vrot.slane %v1563, 5
        %v1566 = vor.u32 %v1562, %v1565
        %v1567 = vrot.slane %v1566, 4
        %v1569 = vshll.u32 %v1362, 16
        %v1571 = vrot.slane %v1569, 5
        %v1572 = vsel %vm1390, %v1567, %v1571
        %v1573 = vshrl.u32 %v1362, 16
        %v1575 = vrot.slane %v1573, 4
        %v1576 = vor.u32 %v1575, %v1571
        %v1577 = vrot.slane %v1576, 4
        %v1579 = vshll.u32 %v1363, 16
        %v1581 = vrot.slane %v1579, 5
        %v1582 = vsel %vm1390, %v1577, %v1581
        %v1584 = vshrl.u32 %v1364, 16
        %v1586 = vrot.slane %v1584, 4
        %v1587 = vshll.u32 %v1364, 16
        %v1589 = vrot.slane %v1587, 5
        %v1590 = vor.u32 %v1586, %v1589
        %v1591 = vrot.slane %v1590, 4
        %v1593 = vshll.u32 %v1365, 16
        %v1595 = vrot.slane %v1593, 5
        %v1596 = vsel %vm1390, %v1591, %v1595
        %v1597 = vshrl.u32 %v1365, 16
        %v1599 = vrot.slane %v1597, 4
        %v1600 = vor.u32 %v1599, %v1595
        %v1601 = vrot.slane %v1600, 4
        %v1603 = vshll.u32 %v1366, 16
        %v1605 = vrot.slane %v1603, 5
        %v1606 = vsel %vm1390, %v1601, %v1605
        %v1608 = vshrl.u32 %v1367, 16
        %v1610 = vrot.slane %v1608, 4
        %v1611 = vshll.u32 %v1367, 16
        %v1613 = vrot.slane %v1611, 5
        %v1614 = vor.u32 %v1610, %v1613
        %v1615 = vrot.slane %v1614, 4
        %v1617 = vshll.u32 %v1368, 16
        %v1619 = vrot.slane %v1617, 5
        %v1620 = vsel %vm1390, %v1615, %v1619
        %v1621 = vshrl.u32 %v1368, 16
        %v1623 = vrot.slane %v1621, 4
        %v1624 = vor.u32 %v1623, %v1619
        %v1625 = vrot.slane %v1624, 4
        %v1627 = vshll.u32 %v1369, 16
        %v1629 = vrot.slane %v1627, 5
        %v1630 = vsel %vm1390, %v1625, %v1629
        %v1632 = vshrl.u32 %v1370, 16
        %v1634 = vrot.slane %v1632, 4
        %v1635 = vshll.u32 %v1370, 16
        %v1637 = vrot.slane %v1635, 5
        %v1638 = vor.u32 %v1634, %v1637
        %v1639 = vrot.slane %v1638, 4
        %v1641 = vshll.u32 %v1371, 16
        %v1643 = vrot.slane %v1641, 5
        %v1644 = vsel %vm1390, %v1639, %v1643
        %v1645 = vshrl.u32 %v1371, 16
        %v1647 = vrot.slane %v1645, 4
        %v1648 = vor.u32 %v1647, %v1643
        %v1649 = vrot.slane %v1648, 4
        %v1651 = vshll.u32 %v1372, 16
        %v1653 = vrot.slane %v1651, 5
        %v1654 = vsel %vm1390, %v1649, %v1653
        %v1656 = vshrl.u32 %v1373, 16
        %v1658 = vrot.slane %v1656, 4
        %v1659 = vshll.u32 %v1373, 16
        %v1661 = vrot.slane %v1659, 5
        %v1662 = vor.u32 %v1658, %v1661
        %v1663 = vrot.slane %v1662, 4
        %v1665 = vshll.u32 %v1374, 16
        %v1667 = vrot.slane %v1665, 5
        %v1668 = vsel %vm1390, %v1663, %v1667
        %v1669 = vshrl.u32 %v1374, 16
        %v1671 = vrot.slane %v1669, 4
        %v1672 = vor.u32 %v1671, %v1667
        %v1673 = vrot.slane %v1672, 4
        %v1675 = vshll.u32 %v1375, 16
        %v1677 = vrot.slane %v1675, 5
        %v1678 = vsel %vm1390, %v1673, %v1677
        %v1680 = vshrl.u32 %v1376, 16
        %v1682 = vrot.slane %v1680, 4
        %v1683 = vshll.u32 %v1376, 16
        %v1685 = vrot.slane %v1683, 5
        %v1686 = vor.u32 %v1682, %v1685
        %v1687 = vrot.slane %v1686, 4
        %v1689 = vshll.u32 %v1377, 16
        %v1691 = vrot.slane %v1689, 5
        %v1692 = vsel %vm1390, %v1687, %v1691
        %v1693 = vshrl.u32 %v1377, 16
        %v1695 = vrot.slane %v1693, 4
        %v1696 = vor.u32 %v1695, %v1691
        %v1697 = vrot.slane %v1696, 4
        %v1699 = vshll.u32 %v1378, 16
        %v1701 = vrot.slane %v1699, 5
        %v1702 = vsel %vm1390, %v1697, %v1701
        %v1704 = vshrl.u32 %v1379, 16
        %v1706 = vrot.slane %v1704, 4
        %v1707 = vshll.u32 %v1379, 16
        %v1709 = vrot.slane %v1707, 5
        %v1710 = vor.u32 %v1706, %v1709
        %v1711 = vrot.slane %v1710, 4
        %v1713 = vshll.u32 %v1380, 16
        %v1715 = vrot.slane %v1713, 5
        %v1716 = vsel %vm1390, %v1711, %v1715
        %v1717 = vshrl.u32 %v1380, 16
        %v1719 = vrot.slane %v1717, 4
        %v1720 = vor.u32 %v1719, %v1715
        %v1721 = vrot.slane %v1720, 4
        %v1723 = vshll.u32 %v1381, 16
        %v1725 = vrot.slane %v1723, 5
        %v1726 = vsel %vm1390, %v1721, %v1725
        %v1728 = vshrl.u32 %v1382, 16
        %v1730 = vrot.slane %v1728, 4
        %v1731 = vshll.u32 %v1382, 16
        %v1733 = vrot.slane %v1731, 5
        %v1734 = vor.u32 %v1730, %v1733
        %v1735 = vrot.slane %v1734, 4
        %v1737 = vshll.u32 %v1383, 16
        %v1739 = vrot.slane %v1737, 5
        %v1740 = vsel %vm1390, %v1735, %v1739
        %v1741 = vshrl.u32 %v1383, 16
        %v1743 = vrot.slane %v1741, 4
        %v1744 = vor.u32 %v1743, %v1739
        %v1745 = vrot.slane %v1744, 4
        %v1747 = vshll.u32 %v1384, 16
        %v1749 = vrot.slane %v1747, 5
        %v1750 = vsel %vm1390, %v1745, %v1749
        %v1752 = vshrl.u32 %v1385, 16
        %v1754 = vrot.slane %v1752, 4
        %v1755 = vshll.u32 %v1385, 16
        %v1757 = vrot.slane %v1755, 5
        %v1758 = vor.u32 %v1754, %v1757
        %v1759 = vrot.slane %v1758, 4
        %v1761 = vshll.u32 %v1386, 16
        %v1763 = vrot.slane %v1761, 5
        %v1764 = vsel %vm1390, %v1759, %v1763
        %v1765 = vshrl.u32 %v1386, 16
        %v1767 = vrot.slane %v1765, 4
        %v1768 = vor.u32 %v1767, %v1763
        %v1769 = vrot.slane %v1768, 4
        %v1771 = vshll.u32 %v1387, 16
        %v1773 = vrot.slane %v1771, 5
        %v1774 = vsel %vm1390, %v1769, %v1773
        %s1775 = scalar_lea.vmem [#allocation6], 128
        %v1776 = vld [vmem:[%s1775] sm:$0xf]
        %v1777 = vld [vmem:[%s1775 + $0x4] sm:$0xf]
        %v1778 = vld [vmem:[%s1775 + $0x8] sm:$0xf]
        %v1779 = vld [vmem:[%s1775 + $0xc] sm:$0xf]
        %v1780 = vld [vmem:[%s1775 + $0x10] sm:$0xf]
        %v1781 = vld [vmem:[%s1775 + $0x14] sm:$0xf]
        %v1782 = vld [vmem:[%s1775 + $0x18] sm:$0xf]
        %v1783 = vld [vmem:[%s1775 + $0x1c] sm:$0xf]
        %v1784 = vld [vmem:[%s1775 + $0x20] sm:$0xf]
        %v1785 = vld [vmem:[%s1775 + $0x24] sm:$0xf]
        %v1786 = vld [vmem:[%s1775 + $0x28] sm:$0xf]
        %v1787 = vld [vmem:[%s1775 + $0x2c] sm:$0xf]
        %v1788 = vld [vmem:[%s1775 + $0x30] sm:$0xf]
        %v1789 = vld [vmem:[%s1775 + $0x34] sm:$0xf]
        %v1790 = vld [vmem:[%s1775 + $0x38] sm:$0xf]
        %v1791 = vld [vmem:[%s1775 + $0x3c] sm:$0xf]
        %v1792 = vunpack.c.l.b16 %v1404
        %v1793 = vunpack.c.l.b16 %v1414
        %v1794 = vunpack.c.l.b16 %v1428
        %v1795 = vunpack.c.l.b16 %v1438
        %v1796 = vunpack.c.l.b16 %v1452
        %v1797 = vunpack.c.l.b16 %v1462
        %v1798 = vunpack.c.l.b16 %v1476
        %v1799 = vunpack.c.l.b16 %v1486
        %v1800 = vunpack.c.l.b16 %v1500
        %v1801 = vunpack.c.l.b16 %v1510
        %v1802 = vunpack.c.l.b16 %v1524
        %v1803 = vunpack.c.l.b16 %v1534
        %v1804 = vunpack.c.l.b16 %v1548
        %v1805 = vunpack.c.l.b16 %v1558
        %v1806 = vunpack.c.l.b16 %v1572
        %v1807 = vunpack.c.l.b16 %v1582
        %v1808 = vunpack.c.l.b16 %v1596
        %v1809 = vunpack.c.l.b16 %v1606
        %v1810 = vunpack.c.l.b16 %v1620
        %v1811 = vunpack.c.l.b16 %v1630
        %v1812 = vunpack.c.l.b16 %v1644
        %v1813 = vunpack.c.l.b16 %v1654
        %v1814 = vunpack.c.l.b16 %v1668
        %v1815 = vunpack.c.l.b16 %v1678
        %v1816 = vunpack.c.l.b16 %v1692
        %v1817 = vunpack.c.l.b16 %v1702
        %v1818 = vunpack.c.l.b16 %v1716
        %v1819 = vunpack.c.l.b16 %v1726
        %v1820 = vunpack.c.l.b16 %v1740
        %v1821 = vunpack.c.l.b16 %v1750
        %v1822 = vunpack.c.l.b16 %v1764
        %v1823 = vunpack.c.l.b16 %v1774
        %v1824 = vpack.c.b16 %v1793, %v1792
        %v1825 = vpack.c.b16 %v1795, %v1794
        %v1826 = vpack.c.b16 %v1797, %v1796
        %v1827 = vpack.c.b16 %v1799, %v1798
        %v1828 = vpack.c.b16 %v1801, %v1800
        %v1829 = vpack.c.b16 %v1803, %v1802
        %v1830 = vpack.c.b16 %v1805, %v1804
        %v1831 = vpack.c.b16 %v1807, %v1806
        %v1832 = vpack.c.b16 %v1809, %v1808
        %v1833 = vpack.c.b16 %v1811, %v1810
        %v1834 = vpack.c.b16 %v1813, %v1812
        %v1835 = vpack.c.b16 %v1815, %v1814
        %v1836 = vpack.c.b16 %v1817, %v1816
        %v1837 = vpack.c.b16 %v1819, %v1818
        %v1838 = vpack.c.b16 %v1821, %v1820
        %v1839 = vpack.c.b16 %v1823, %v1822
        %v1872 = vunpack.c.l.b16 %v1776
        %v1873 = vunpack.c.l.b16 %v1777
        %v1874 = vunpack.c.l.b16 %v1778
        %v1875 = vunpack.c.l.b16 %v1779
        %v1876 = vunpack.c.l.b16 %v1780
        %v1877 = vunpack.c.l.b16 %v1781
        %v1878 = vunpack.c.l.b16 %v1782
        %v1879 = vunpack.c.l.b16 %v1783
        %v1880 = vunpack.c.l.b16 %v1784
        %v1881 = vunpack.c.l.b16 %v1785
        %v1882 = vunpack.c.l.b16 %v1786
        %v1883 = vunpack.c.l.b16 %v1787
        %v1884 = vunpack.c.l.b16 %v1788
        %v1885 = vunpack.c.l.b16 %v1789
        %v1886 = vunpack.c.l.b16 %v1790
        %v1887 = vunpack.c.l.b16 %v1791
        %v1888 = vpack.c.b16 %v1873, %v1872
        %v1889 = vpack.c.b16 %v1875, %v1874
        %v1890 = vpack.c.b16 %v1877, %v1876
        %v1891 = vpack.c.b16 %v1879, %v1878
        %v1892 = vpack.c.b16 %v1881, %v1880
        %v1893 = vpack.c.b16 %v1883, %v1882
        %v1894 = vpack.c.b16 %v1885, %v1884
        %v1895 = vpack.c.b16 %v1887, %v1886
        %1904 = vmatpush.bf16.msra.mxu0 %v1895
        %1905 = vmatpush.bf16.msra.mxu0 %v1894
        %1906 = vmatpush.bf16.msra.mxu0 %v1893
        %1907 = vmatpush.bf16.msra.mxu0 %v1892
        %1908 = vmatpush.bf16.msra.mxu0 %v1891
        %1909 = vmatpush.bf16.msra.mxu0 %v1890
        %1910 = vmatpush.bf16.msra.mxu0 %v1889
        %1911 = vmatpush.bf16.msra.mxu0 %v1888
        %1912 = vmatmul.bf16.gmra.mxu0 %v1824
        %v1913 = vpop.f32.mrf.mxu0
        %v1914 = vadd.f32 0.0, %v1913
        %v1915 = vpop.f32.mrf.mxu0
        %v1916 = vadd.f32 0.0, %v1915
        %1917 = vmatmul.bf16.gmra.mxu0 %v1825
        %v1918 = vpop.f32.mrf.mxu0
        %v1919 = vadd.f32 0.0, %v1918
        %v1920 = vpop.f32.mrf.mxu0
        %v1921 = vadd.f32 0.0, %v1920
        %1922 = vmatmul.bf16.gmra.mxu0 %v1826
        %v1923 = vpop.f32.mrf.mxu0
        %v1924 = vadd.f32 0.0, %v1923
        %v1925 = vpop.f32.mrf.mxu0
        %v1926 = vadd.f32 0.0, %v1925
        %1927 = vmatmul.bf16.gmra.mxu0 %v1827
        %v1928 = vpop.f32.mrf.mxu0
        %v1929 = vadd.f32 0.0, %v1928
        %v1930 = vpop.f32.mrf.mxu0
        %v1931 = vadd.f32 0.0, %v1930
        %1932 = vmatmul.bf16.gmra.mxu0 %v1828
        %v1933 = vpop.f32.mrf.mxu0
        %v1934 = vadd.f32 0.0, %v1933
        %v1935 = vpop.f32.mrf.mxu0
        %v1936 = vadd.f32 0.0, %v1935
        %1937 = vmatmul.bf16.gmra.mxu0 %v1829
        %v1938 = vpop.f32.mrf.mxu0
        %v1939 = vadd.f32 0.0, %v1938
        %v1940 = vpop.f32.mrf.mxu0
        %v1941 = vadd.f32 0.0, %v1940
        %1942 = vmatmul.bf16.gmra.mxu0 %v1830
        %v1943 = vpop.f32.mrf.mxu0
        %v1944 = vadd.f32 0.0, %v1943
        %v1945 = vpop.f32.mrf.mxu0
        %v1946 = vadd.f32 0.0, %v1945
        %1947 = vmatmul.bf16.gmra.mxu0 %v1831
        %v1948 = vpop.f32.mrf.mxu0
        %v1949 = vadd.f32 0.0, %v1948
        %v1950 = vpop.f32.mrf.mxu0
        %v1951 = vadd.f32 0.0, %v1950
        %1952 = vmatmul.bf16.gmra.mxu0 %v1832
        %v1953 = vpop.f32.mrf.mxu0
        %v1954 = vadd.f32 0.0, %v1953
        %v1955 = vpop.f32.mrf.mxu0
        %v1956 = vadd.f32 0.0, %v1955
        %1957 = vmatmul.bf16.gmra.mxu0 %v1833
        %v1958 = vpop.f32.mrf.mxu0
        %v1959 = vadd.f32 0.0, %v1958
        %v1960 = vpop.f32.mrf.mxu0
        %v1961 = vadd.f32 0.0, %v1960
        %1962 = vmatmul.bf16.gmra.mxu0 %v1834
        %v1963 = vpop.f32.mrf.mxu0
        %v1964 = vadd.f32 0.0, %v1963
        %v1965 = vpop.f32.mrf.mxu0
        %v1966 = vadd.f32 0.0, %v1965
        %1967 = vmatmul.bf16.gmra.mxu0 %v1835
        %v1968 = vpop.f32.mrf.mxu0
        %v1969 = vadd.f32 0.0, %v1968
        %v1970 = vpop.f32.mrf.mxu0
        %v1971 = vadd.f32 0.0, %v1970
        %1972 = vmatmul.bf16.gmra.mxu0 %v1836
        %v1973 = vpop.f32.mrf.mxu0
        %v1974 = vadd.f32 0.0, %v1973
        %v1975 = vpop.f32.mrf.mxu0
        %v1976 = vadd.f32 0.0, %v1975
        %1977 = vmatmul.bf16.gmra.mxu0 %v1837
        %v1978 = vpop.f32.mrf.mxu0
        %v1979 = vadd.f32 0.0, %v1978
        %v1980 = vpop.f32.mrf.mxu0
        %v1981 = vadd.f32 0.0, %v1980
        %1982 = vmatmul.bf16.gmra.mxu0 %v1838
        %v1983 = vpop.f32.mrf.mxu0
        %v1984 = vadd.f32 0.0, %v1983
        %v1985 = vpop.f32.mrf.mxu0
        %v1986 = vadd.f32 0.0, %v1985
        %1987 = vmatmul.bf16.gmra.mxu0 %v1839
        %v1988 = vpop.f32.mrf.mxu0
        %v1989 = vadd.f32 0.0, %v1988
        %v1990 = vpop.f32.mrf.mxu0
        %v1991 = vadd.f32 0.0, %v1990
        %1992 = vdwg.mxu0
        %v1993 = vadd.f32 %v1261, %v1914
        %v1994 = vadd.f32 %v1263, %v1916
        %v1995 = vadd.f32 %v1266, %v1919
        %v1996 = vadd.f32 %v1268, %v1921
        %v1997 = vadd.f32 %v1271, %v1924
        %v1998 = vadd.f32 %v1273, %v1926
        %v1999 = vadd.f32 %v1276, %v1929
        %v2000 = vadd.f32 %v1278, %v1931
        %v2001 = vadd.f32 %v1281, %v1934
        %v2002 = vadd.f32 %v1283, %v1936
        %v2003 = vadd.f32 %v1286, %v1939
        %v2004 = vadd.f32 %v1288, %v1941
        %v2005 = vadd.f32 %v1291, %v1944
        %v2006 = vadd.f32 %v1293, %v1946
        %v2007 = vadd.f32 %v1296, %v1949
        %v2008 = vadd.f32 %v1298, %v1951
        %v2009 = vadd.f32 %v1301, %v1954
        %v2010 = vadd.f32 %v1303, %v1956
        %v2011 = vadd.f32 %v1306, %v1959
        %v2012 = vadd.f32 %v1308, %v1961
        %v2013 = vadd.f32 %v1311, %v1964
        %v2014 = vadd.f32 %v1313, %v1966
        %v2015 = vadd.f32 %v1316, %v1969
        %v2016 = vadd.f32 %v1318, %v1971
        %v2017 = vadd.f32 %v1321, %v1974
        %v2018 = vadd.f32 %v1323, %v1976
        %v2019 = vadd.f32 %v1326, %v1979
        %v2020 = vadd.f32 %v1328, %v1981
        %v2021 = vadd.f32 %v1331, %v1984
        %v2022 = vadd.f32 %v1333, %v1986
        %v2023 = vadd.f32 %v1336, %v1989
        %v2024 = vadd.f32 %v1338, %v1991
        %v2025 = vld [vmem:[%s438 + $0x4] sm:$0x8]
        %v2026 = vld [vmem:[%s438 + $0x8] sm:$0xf]
        %v2027 = vld [vmem:[%s438 + $0xc] sm:$0xf]
        %v2028 = vld [vmem:[%s438 + $0x1c] sm:$0x8]
        %v2029 = vld [vmem:[%s438 + $0x20] sm:$0xf]
        %v2030 = vld [vmem:[%s438 + $0x24] sm:$0xf]
        %v2031 = vld [vmem:[%s438 + $0x34] sm:$0x8]
        %v2032 = vld [vmem:[%s438 + $0x38] sm:$0xf]
        %v2033 = vld [vmem:[%s438 + $0x3c] sm:$0xf]
        %v2034 = vld [vmem:[%s438 + $0x4c] sm:$0x8]
        %v2035 = vld [vmem:[%s438 + $0x50] sm:$0xf]
        %v2036 = vld [vmem:[%s438 + $0x54] sm:$0xf]
        %v2037 = vld [vmem:[%s438 + $0x64] sm:$0x8]
        %v2038 = vld [vmem:[%s438 + $0x68] sm:$0xf]
        %v2039 = vld [vmem:[%s438 + $0x6c] sm:$0xf]
        %v2040 = vld [vmem:[%s438 + $0x7c] sm:$0x8]
        %v2041 = vld [vmem:[%s438 + $0x80] sm:$0xf]
        %v2042 = vld [vmem:[%s438 + $0x84] sm:$0xf]
        %v2043 = vld [vmem:[%s438 + $0x94] sm:$0x8]
        %v2044 = vld [vmem:[%s438 + $0x98] sm:$0xf]
        %v2045 = vld [vmem:[%s438 + $0x9c] sm:$0xf]
        %v2046 = vld [vmem:[%s438 + $0xac] sm:$0x8]
        %v2047 = vld [vmem:[%s438 + $0xb0] sm:$0xf]
        %v2048 = vld [vmem:[%s438 + $0xb4] sm:$0xf]
        %v2049 = vld [vmem:[%s438 + $0xc4] sm:$0x8]
        %v2050 = vld [vmem:[%s438 + $0xc8] sm:$0xf]
        %v2051 = vld [vmem:[%s438 + $0xcc] sm:$0xf]
        %v2052 = vld [vmem:[%s438 + $0xdc] sm:$0x8]
        %v2053 = vld [vmem:[%s438 + $0xe0] sm:$0xf]
        %v2054 = vld [vmem:[%s438 + $0xe4] sm:$0xf]
        %v2055 = vld [vmem:[%s438 + $0xf4] sm:$0x8]
        %v2056 = vld [vmem:[%s438 + $0xf8] sm:$0xf]
        %v2057 = vld [vmem:[%s438 + $0xfc] sm:$0xf]
        %v2058 = vld [vmem:[%s438 + $0x10c] sm:$0x8]
        %v2059 = vld [vmem:[%s438 + $0x110] sm:$0xf]
        %v2060 = vld [vmem:[%s438 + $0x114] sm:$0xf]
        %v2061 = vld [vmem:[%s438 + $0x124] sm:$0x8]
        %v2062 = vld [vmem:[%s438 + $0x128] sm:$0xf]
        %v2063 = vld [vmem:[%s438 + $0x12c] sm:$0xf]
        %v2064 = vld [vmem:[%s438 + $0x13c] sm:$0x8]
        %v2065 = vld [vmem:[%s438 + $0x140] sm:$0xf]
        %v2066 = vld [vmem:[%s438 + $0x144] sm:$0xf]
        %v2067 = vld [vmem:[%s438 + $0x154] sm:$0x8]
        %v2068 = vld [vmem:[%s438 + $0x158] sm:$0xf]
        %v2069 = vld [vmem:[%s438 + $0x15c] sm:$0xf]
        %v2070 = vld [vmem:[%s438 + $0x16c] sm:$0x8]
        %v2071 = vld [vmem:[%s438 + $0x170] sm:$0xf]
        %v2072 = vld [vmem:[%s438 + $0x174] sm:$0xf]
        %v2074 = vshrl.u32 %v2025, 16
        %v2076 = vrot.slane %v2074, 7
        %v2077 = vrot.slane %v2076, 4
        %v2079 = vshrl.u32 %v2026, 16
        %v2081 = vrot.slane %v2079, 7
        %v2082 = vshll.u32 %v2026, 16
        %v2084 = vor.u32 %v2081, %v2082
        %v2085 = vsel %vm520, %v2077, %v2084
        %v2086 = vrot.slane %v2081, 4
        %v2088 = vshrl.u32 %v2027, 16
        %v2090 = vrot.slane %v2088, 7
        %v2091 = vshll.u32 %v2027, 16
        %v2093 = vor.u32 %v2090, %v2091
        %v2094 = vsel %vm520, %v2086, %v2093
        %v2096 = vshrl.u32 %v2028, 16
        %v2098 = vrot.slane %v2096, 7
        %v2099 = vrot.slane %v2098, 4
        %v2101 = vshrl.u32 %v2029, 16
        %v2103 = vrot.slane %v2101, 7
        %v2104 = vshll.u32 %v2029, 16
        %v2106 = vor.u32 %v2103, %v2104
        %v2107 = vsel %vm520, %v2099, %v2106
        %v2108 = vrot.slane %v2103, 4
        %v2110 = vshrl.u32 %v2030, 16
        %v2112 = vrot.slane %v2110, 7
        %v2113 = vshll.u32 %v2030, 16
        %v2115 = vor.u32 %v2112, %v2113
        %v2116 = vsel %vm520, %v2108, %v2115
        %v2118 = vshrl.u32 %v2031, 16
        %v2120 = vrot.slane %v2118, 7
        %v2121 = vrot.slane %v2120, 4
        %v2123 = vshrl.u32 %v2032, 16
        %v2125 = vrot.slane %v2123, 7
        %v2126 = vshll.u32 %v2032, 16
        %v2128 = vor.u32 %v2125, %v2126
        %v2129 = vsel %vm520, %v2121, %v2128
        %v2130 = vrot.slane %v2125, 4
        %v2132 = vshrl.u32 %v2033, 16
        %v2134 = vrot.slane %v2132, 7
        %v2135 = vshll.u32 %v2033, 16
        %v2137 = vor.u32 %v2134, %v2135
        %v2138 = vsel %vm520, %v2130, %v2137
        %v2140 = vshrl.u32 %v2034, 16
        %v2142 = vrot.slane %v2140, 7
        %v2143 = vrot.slane %v2142, 4
        %v2145 = vshrl.u32 %v2035, 16
        %v2147 = vrot.slane %v2145, 7
        %v2148 = vshll.u32 %v2035, 16
        %v2150 = vor.u32 %v2147, %v2148
        %v2151 = vsel %vm520, %v2143, %v2150
        %v2152 = vrot.slane %v2147, 4
        %v2154 = vshrl.u32 %v2036, 16
        %v2156 = vrot.slane %v2154, 7
        %v2157 = vshll.u32 %v2036, 16
        %v2159 = vor.u32 %v2156, %v2157
        %v2160 = vsel %vm520, %v2152, %v2159
        %v2162 = vshrl.u32 %v2037, 16
        %v2164 = vrot.slane %v2162, 7
        %v2165 = vrot.slane %v2164, 4
        %v2167 = vshrl.u32 %v2038, 16
        %v2169 = vrot.slane %v2167, 7
        %v2170 = vshll.u32 %v2038, 16
        %v2172 = vor.u32 %v2169, %v2170
        %v2173 = vsel %vm520, %v2165, %v2172
        %v2174 = vrot.slane %v2169, 4
        %v2176 = vshrl.u32 %v2039, 16
        %v2178 = vrot.slane %v2176, 7
        %v2179 = vshll.u32 %v2039, 16
        %v2181 = vor.u32 %v2178, %v2179
        %v2182 = vsel %vm520, %v2174, %v2181
        %v2184 = vshrl.u32 %v2040, 16
        %v2186 = vrot.slane %v2184, 7
        %v2187 = vrot.slane %v2186, 4
        %v2189 = vshrl.u32 %v2041, 16
        %v2191 = vrot.slane %v2189, 7
        %v2192 = vshll.u32 %v2041, 16
        %v2194 = vor.u32 %v2191, %v2192
        %v2195 = vsel %vm520, %v2187, %v2194
        %v2196 = vrot.slane %v2191, 4
        %v2198 = vshrl.u32 %v2042, 16
        %v2200 = vrot.slane %v2198, 7
        %v2201 = vshll.u32 %v2042, 16
        %v2203 = vor.u32 %v2200, %v2201
        %v2204 = vsel %vm520, %v2196, %v2203
        %v2206 = vshrl.u32 %v2043, 16
        %v2208 = vrot.slane %v2206, 7
        %v2209 = vrot.slane %v2208, 4
        %v2211 = vshrl.u32 %v2044, 16
        %v2213 = vrot.slane %v2211, 7
        %v2214 = vshll.u32 %v2044, 16
        %v2216 = vor.u32 %v2213, %v2214
        %v2217 = vsel %vm520, %v2209, %v2216
        %v2218 = vrot.slane %v2213, 4
        %v2220 = vshrl.u32 %v2045, 16
        %v2222 = vrot.slane %v2220, 7
        %v2223 = vshll.u32 %v2045, 16
        %v2225 = vor.u32 %v2222, %v2223
        %v2226 = vsel %vm520, %v2218, %v2225
        %v2228 = vshrl.u32 %v2046, 16
        %v2230 = vrot.slane %v2228, 7
        %v2231 = vrot.slane %v2230, 4
        %v2233 = vshrl.u32 %v2047, 16
        %v2235 = vrot.slane %v2233, 7
        %v2236 = vshll.u32 %v2047, 16
        %v2238 = vor.u32 %v2235, %v2236
        %v2239 = vsel %vm520, %v2231, %v2238
        %v2240 = vrot.slane %v2235, 4
        %v2242 = vshrl.u32 %v2048, 16
        %v2244 = vrot.slane %v2242, 7
        %v2245 = vshll.u32 %v2048, 16
        %v2247 = vor.u32 %v2244, %v2245
        %v2248 = vsel %vm520, %v2240, %v2247
        %v2250 = vshrl.u32 %v2049, 16
        %v2252 = vrot.slane %v2250, 7
        %v2253 = vrot.slane %v2252, 4
        %v2255 = vshrl.u32 %v2050, 16
        %v2257 = vrot.slane %v2255, 7
        %v2258 = vshll.u32 %v2050, 16
        %v2260 = vor.u32 %v2257, %v2258
        %v2261 = vsel %vm520, %v2253, %v2260
        %v2262 = vrot.slane %v2257, 4
        %v2264 = vshrl.u32 %v2051, 16
        %v2266 = vrot.slane %v2264, 7
        %v2267 = vshll.u32 %v2051, 16
        %v2269 = vor.u32 %v2266, %v2267
        %v2270 = vsel %vm520, %v2262, %v2269
        %v2272 = vshrl.u32 %v2052, 16
        %v2274 = vrot.slane %v2272, 7
        %v2275 = vrot.slane %v2274, 4
        %v2277 = vshrl.u32 %v2053, 16
        %v2279 = vrot.slane %v2277, 7
        %v2280 = vshll.u32 %v2053, 16
        %v2282 = vor.u32 %v2279, %v2280
        %v2283 = vsel %vm520, %v2275, %v2282
        %v2284 = vrot.slane %v2279, 4
        %v2286 = vshrl.u32 %v2054, 16
        %v2288 = vrot.slane %v2286, 7
        %v2289 = vshll.u32 %v2054, 16
        %v2291 = vor.u32 %v2288, %v2289
        %v2292 = vsel %vm520, %v2284, %v2291
        %v2294 = vshrl.u32 %v2055, 16
        %v2296 = vrot.slane %v2294, 7
        %v2297 = vrot.slane %v2296, 4
        %v2299 = vshrl.u32 %v2056, 16
        %v2301 = vrot.slane %v2299, 7
        %v2302 = vshll.u32 %v2056, 16
        %v2304 = vor.u32 %v2301, %v2302
        %v2305 = vsel %vm520, %v2297, %v2304
        %v2306 = vrot.slane %v2301, 4
        %v2308 = vshrl.u32 %v2057, 16
        %v2310 = vrot.slane %v2308, 7
        %v2311 = vshll.u32 %v2057, 16
        %v2313 = vor.u32 %v2310, %v2311
        %v2314 = vsel %vm520, %v2306, %v2313
        %v2316 = vshrl.u32 %v2058, 16
        %v2318 = vrot.slane %v2316, 7
        %v2319 = vrot.slane %v2318, 4
        %v2321 = vshrl.u32 %v2059, 16
        %v2323 = vrot.slane %v2321, 7
        %v2324 = vshll.u32 %v2059, 16
        %v2326 = vor.u32 %v2323, %v2324
        %v2327 = vsel %vm520, %v2319, %v2326
        %v2328 = vrot.slane %v2323, 4
        %v2330 = vshrl.u32 %v2060, 16
        %v2332 = vrot.slane %v2330, 7
        %v2333 = vshll.u32 %v2060, 16
        %v2335 = vor.u32 %v2332, %v2333
        %v2336 = vsel %vm520, %v2328, %v2335
        %v2338 = vshrl.u32 %v2061, 16
        %v2340 = vrot.slane %v2338, 7
        %v2341 = vrot.slane %v2340, 4
        %v2343 = vshrl.u32 %v2062, 16
        %v2345 = vrot.slane %v2343, 7
        %v2346 = vshll.u32 %v2062, 16
        %v2348 = vor.u32 %v2345, %v2346
        %v2349 = vsel %vm520, %v2341, %v2348
        %v2350 = vrot.slane %v2345, 4
        %v2352 = vshrl.u32 %v2063, 16
        %v2354 = vrot.slane %v2352, 7
        %v2355 = vshll.u32 %v2063, 16
        %v2357 = vor.u32 %v2354, %v2355
        %v2358 = vsel %vm520, %v2350, %v2357
        %v2360 = vshrl.u32 %v2064, 16
        %v2362 = vrot.slane %v2360, 7
        %v2363 = vrot.slane %v2362, 4
        %v2365 = vshrl.u32 %v2065, 16
        %v2367 = vrot.slane %v2365, 7
        %v2368 = vshll.u32 %v2065, 16
        %v2370 = vor.u32 %v2367, %v2368
        %v2371 = vsel %vm520, %v2363, %v2370
        %v2372 = vrot.slane %v2367, 4
        %v2374 = vshrl.u32 %v2066, 16
        %v2376 = vrot.slane %v2374, 7
        %v2377 = vshll.u32 %v2066, 16
        %v2379 = vor.u32 %v2376, %v2377
        %v2380 = vsel %vm520, %v2372, %v2379
        %v2382 = vshrl.u32 %v2067, 16
        %v2384 = vrot.slane %v2382, 7
        %v2385 = vrot.slane %v2384, 4
        %v2387 = vshrl.u32 %v2068, 16
        %v2389 = vrot.slane %v2387, 7
        %v2390 = vshll.u32 %v2068, 16
        %v2392 = vor.u32 %v2389, %v2390
        %v2393 = vsel %vm520, %v2385, %v2392
        %v2394 = vrot.slane %v2389, 4
        %v2396 = vshrl.u32 %v2069, 16
        %v2398 = vrot.slane %v2396, 7
        %v2399 = vshll.u32 %v2069, 16
        %v2401 = vor.u32 %v2398, %v2399
        %v2402 = vsel %vm520, %v2394, %v2401
        %v2404 = vshrl.u32 %v2070, 16
        %v2406 = vrot.slane %v2404, 7
        %v2407 = vrot.slane %v2406, 4
        %v2409 = vshrl.u32 %v2071, 16
        %v2411 = vrot.slane %v2409, 7
        %v2412 = vshll.u32 %v2071, 16
        %v2414 = vor.u32 %v2411, %v2412
        %v2415 = vsel %vm520, %v2407, %v2414
        %v2416 = vrot.slane %v2411, 4
        %v2418 = vshrl.u32 %v2072, 16
        %v2420 = vrot.slane %v2418, 7
        %v2421 = vshll.u32 %v2072, 16
        %v2423 = vor.u32 %v2420, %v2421
        %v2424 = vsel %vm520, %v2416, %v2423
        %s2425 = scalar_lea.vmem [#allocation6], 192
        %v2426 = vld [vmem:[%s2425] sm:$0xf]
        %v2427 = vld [vmem:[%s2425 + $0x4] sm:$0xf]
        %v2428 = vld [vmem:[%s2425 + $0x8] sm:$0xf]
        %v2429 = vld [vmem:[%s2425 + $0xc] sm:$0xf]
        %v2430 = vld [vmem:[%s2425 + $0x10] sm:$0xf]
        %v2431 = vld [vmem:[%s2425 + $0x14] sm:$0xf]
        %v2432 = vld [vmem:[%s2425 + $0x18] sm:$0xf]
        %v2433 = vld [vmem:[%s2425 + $0x1c] sm:$0xf]
        %v2434 = vld [vmem:[%s2425 + $0x20] sm:$0xf]
        %v2435 = vld [vmem:[%s2425 + $0x24] sm:$0xf]
        %v2436 = vld [vmem:[%s2425 + $0x28] sm:$0xf]
        %v2437 = vld [vmem:[%s2425 + $0x2c] sm:$0xf]
        %v2438 = vld [vmem:[%s2425 + $0x30] sm:$0xf]
        %v2439 = vld [vmem:[%s2425 + $0x34] sm:$0xf]
        %v2440 = vld [vmem:[%s2425 + $0x38] sm:$0xf]
        %v2441 = vld [vmem:[%s2425 + $0x3c] sm:$0xf]
        %v2442 = vunpack.c.l.b16 %v2085
        %v2443 = vunpack.c.l.b16 %v2094
        %v2444 = vunpack.c.l.b16 %v2107
        %v2445 = vunpack.c.l.b16 %v2116
        %v2446 = vunpack.c.l.b16 %v2129
        %v2447 = vunpack.c.l.b16 %v2138
        %v2448 = vunpack.c.l.b16 %v2151
        %v2449 = vunpack.c.l.b16 %v2160
        %v2450 = vunpack.c.l.b16 %v2173
        %v2451 = vunpack.c.l.b16 %v2182
        %v2452 = vunpack.c.l.b16 %v2195
        %v2453 = vunpack.c.l.b16 %v2204
        %v2454 = vunpack.c.l.b16 %v2217
        %v2455 = vunpack.c.l.b16 %v2226
        %v2456 = vunpack.c.l.b16 %v2239
        %v2457 = vunpack.c.l.b16 %v2248
        %v2458 = vunpack.c.l.b16 %v2261
        %v2459 = vunpack.c.l.b16 %v2270
        %v2460 = vunpack.c.l.b16 %v2283
        %v2461 = vunpack.c.l.b16 %v2292
        %v2462 = vunpack.c.l.b16 %v2305
        %v2463 = vunpack.c.l.b16 %v2314
        %v2464 = vunpack.c.l.b16 %v2327
        %v2465 = vunpack.c.l.b16 %v2336
        %v2466 = vunpack.c.l.b16 %v2349
        %v2467 = vunpack.c.l.b16 %v2358
        %v2468 = vunpack.c.l.b16 %v2371
        %v2469 = vunpack.c.l.b16 %v2380
        %v2470 = vunpack.c.l.b16 %v2393
        %v2471 = vunpack.c.l.b16 %v2402
        %v2472 = vunpack.c.l.b16 %v2415
        %v2473 = vunpack.c.l.b16 %v2424
        %v2474 = vpack.c.b16 %v2443, %v2442
        %v2475 = vpack.c.b16 %v2445, %v2444
        %v2476 = vpack.c.b16 %v2447, %v2446
        %v2477 = vpack.c.b16 %v2449, %v2448
        %v2478 = vpack.c.b16 %v2451, %v2450
        %v2479 = vpack.c.b16 %v2453, %v2452
        %v2480 = vpack.c.b16 %v2455, %v2454
        %v2481 = vpack.c.b16 %v2457, %v2456
        %v2482 = vpack.c.b16 %v2459, %v2458
        %v2483 = vpack.c.b16 %v2461, %v2460
        %v2484 = vpack.c.b16 %v2463, %v2462
        %v2485 = vpack.c.b16 %v2465, %v2464
        %v2486 = vpack.c.b16 %v2467, %v2466
        %v2487 = vpack.c.b16 %v2469, %v2468
        %v2488 = vpack.c.b16 %v2471, %v2470
        %v2489 = vpack.c.b16 %v2473, %v2472
        %v2522 = vunpack.c.l.b16 %v2426
        %v2523 = vunpack.c.l.b16 %v2427
        %v2524 = vunpack.c.l.b16 %v2428
        %v2525 = vunpack.c.l.b16 %v2429
        %v2526 = vunpack.c.l.b16 %v2430
        %v2527 = vunpack.c.l.b16 %v2431
        %v2528 = vunpack.c.l.b16 %v2432
        %v2529 = vunpack.c.l.b16 %v2433
        %v2530 = vunpack.c.l.b16 %v2434
        %v2531 = vunpack.c.l.b16 %v2435
        %v2532 = vunpack.c.l.b16 %v2436
        %v2533 = vunpack.c.l.b16 %v2437
        %v2534 = vunpack.c.l.b16 %v2438
        %v2535 = vunpack.c.l.b16 %v2439
        %v2536 = vunpack.c.l.b16 %v2440
        %v2537 = vunpack.c.l.b16 %v2441
        %v2538 = vpack.c.b16 %v2523, %v2522
        %v2539 = vpack.c.b16 %v2525, %v2524
        %v2540 = vpack.c.b16 %v2527, %v2526
        %v2541 = vpack.c.b16 %v2529, %v2528
        %v2542 = vpack.c.b16 %v2531, %v2530
        %v2543 = vpack.c.b16 %v2533, %v2532
        %v2544 = vpack.c.b16 %v2535, %v2534
        %v2545 = vpack.c.b16 %v2537, %v2536
        %2554 = vmatpush.bf16.msra.mxu0 %v2545
        %2555 = vmatpush.bf16.msra.mxu0 %v2544
        %2556 = vmatpush.bf16.msra.mxu0 %v2543
        %2557 = vmatpush.bf16.msra.mxu0 %v2542
        %2558 = vmatpush.bf16.msra.mxu0 %v2541
        %2559 = vmatpush.bf16.msra.mxu0 %v2540
        %2560 = vmatpush.bf16.msra.mxu0 %v2539
        %2561 = vmatpush.bf16.msra.mxu0 %v2538
        %2562 = vmatmul.bf16.gmra.mxu0 %v2474
        %v2563 = vpop.f32.mrf.mxu0
        %v2564 = vadd.f32 0.0, %v2563
        %v2565 = vpop.f32.mrf.mxu0
        %v2566 = vadd.f32 0.0, %v2565
        %2567 = vmatmul.bf16.gmra.mxu0 %v2475
        %v2568 = vpop.f32.mrf.mxu0
        %v2569 = vadd.f32 0.0, %v2568
        %v2570 = vpop.f32.mrf.mxu0
        %v2571 = vadd.f32 0.0, %v2570
        %2572 = vmatmul.bf16.gmra.mxu0 %v2476
        %v2573 = vpop.f32.mrf.mxu0
        %v2574 = vadd.f32 0.0, %v2573
        %v2575 = vpop.f32.mrf.mxu0
        %v2576 = vadd.f32 0.0, %v2575
        %2577 = vmatmul.bf16.gmra.mxu0 %v2477
        %v2578 = vpop.f32.mrf.mxu0
        %v2579 = vadd.f32 0.0, %v2578
        %v2580 = vpop.f32.mrf.mxu0
        %v2581 = vadd.f32 0.0, %v2580
        %2582 = vmatmul.bf16.gmra.mxu0 %v2478
        %v2583 = vpop.f32.mrf.mxu0
        %v2584 = vadd.f32 0.0, %v2583
        %v2585 = vpop.f32.mrf.mxu0
        %v2586 = vadd.f32 0.0, %v2585
        %2587 = vmatmul.bf16.gmra.mxu0 %v2479
        %v2588 = vpop.f32.mrf.mxu0
        %v2589 = vadd.f32 0.0, %v2588
        %v2590 = vpop.f32.mrf.mxu0
        %v2591 = vadd.f32 0.0, %v2590
        %2592 = vmatmul.bf16.gmra.mxu0 %v2480
        %v2593 = vpop.f32.mrf.mxu0
        %v2594 = vadd.f32 0.0, %v2593
        %v2595 = vpop.f32.mrf.mxu0
        %v2596 = vadd.f32 0.0, %v2595
        %2597 = vmatmul.bf16.gmra.mxu0 %v2481
        %v2598 = vpop.f32.mrf.mxu0
        %v2599 = vadd.f32 0.0, %v2598
        %v2600 = vpop.f32.mrf.mxu0
        %v2601 = vadd.f32 0.0, %v2600
        %2602 = vmatmul.bf16.gmra.mxu0 %v2482
        %v2603 = vpop.f32.mrf.mxu0
        %v2604 = vadd.f32 0.0, %v2603
        %v2605 = vpop.f32.mrf.mxu0
        %v2606 = vadd.f32 0.0, %v2605
        %2607 = vmatmul.bf16.gmra.mxu0 %v2483
        %v2608 = vpop.f32.mrf.mxu0
        %v2609 = vadd.f32 0.0, %v2608
        %v2610 = vpop.f32.mrf.mxu0
        %v2611 = vadd.f32 0.0, %v2610
        %2612 = vmatmul.bf16.gmra.mxu0 %v2484
        %v2613 = vpop.f32.mrf.mxu0
        %v2614 = vadd.f32 0.0, %v2613
        %v2615 = vpop.f32.mrf.mxu0
        %v2616 = vadd.f32 0.0, %v2615
        %2617 = vmatmul.bf16.gmra.mxu0 %v2485
        %v2618 = vpop.f32.mrf.mxu0
        %v2619 = vadd.f32 0.0, %v2618
        %v2620 = vpop.f32.mrf.mxu0
        %v2621 = vadd.f32 0.0, %v2620
        %2622 = vmatmul.bf16.gmra.mxu0 %v2486
        %v2623 = vpop.f32.mrf.mxu0
        %v2624 = vadd.f32 0.0, %v2623
        %v2625 = vpop.f32.mrf.mxu0
        %v2626 = vadd.f32 0.0, %v2625
        %2627 = vmatmul.bf16.gmra.mxu0 %v2487
        %v2628 = vpop.f32.mrf.mxu0
        %v2629 = vadd.f32 0.0, %v2628
        %v2630 = vpop.f32.mrf.mxu0
        %v2631 = vadd.f32 0.0, %v2630
        %2632 = vmatmul.bf16.gmra.mxu0 %v2488
        %v2633 = vpop.f32.mrf.mxu0
        %v2634 = vadd.f32 0.0, %v2633
        %v2635 = vpop.f32.mrf.mxu0
        %v2636 = vadd.f32 0.0, %v2635
        %2637 = vmatmul.bf16.gmra.mxu0 %v2489
        %v2638 = vpop.f32.mrf.mxu0
        %v2639 = vadd.f32 0.0, %v2638
        %v2640 = vpop.f32.mrf.mxu0
        %v2641 = vadd.f32 0.0, %v2640
        %2642 = vdwg.mxu0
        %v2643 = vadd.f32 %v1993, %v2564
        %v2644 = vadd.f32 %v1994, %v2566
        %v2645 = vadd.f32 %v1995, %v2569
        %v2646 = vadd.f32 %v1996, %v2571
        %v2647 = vadd.f32 %v1997, %v2574
        %v2648 = vadd.f32 %v1998, %v2576
        %v2649 = vadd.f32 %v1999, %v2579
        %v2650 = vadd.f32 %v2000, %v2581
        %v2651 = vadd.f32 %v2001, %v2584
        %v2652 = vadd.f32 %v2002, %v2586
        %v2653 = vadd.f32 %v2003, %v2589
        %v2654 = vadd.f32 %v2004, %v2591
        %v2655 = vadd.f32 %v2005, %v2594
        %v2656 = vadd.f32 %v2006, %v2596
        %v2657 = vadd.f32 %v2007, %v2599
        %v2658 = vadd.f32 %v2008, %v2601
        %v2659 = vadd.f32 %v2009, %v2604
        %v2660 = vadd.f32 %v2010, %v2606
        %v2661 = vadd.f32 %v2011, %v2609
        %v2662 = vadd.f32 %v2012, %v2611
        %v2663 = vadd.f32 %v2013, %v2614
        %v2664 = vadd.f32 %v2014, %v2616
        %v2665 = vadd.f32 %v2015, %v2619
        %v2666 = vadd.f32 %v2016, %v2621
        %v2667 = vadd.f32 %v2017, %v2624
        %v2668 = vadd.f32 %v2018, %v2626
        %v2669 = vadd.f32 %v2019, %v2629
        %v2670 = vadd.f32 %v2020, %v2631
        %v2671 = vadd.f32 %v2021, %v2634
        %v2672 = vadd.f32 %v2022, %v2636
        %v2673 = vadd.f32 %v2023, %v2639
        %v2674 = vadd.f32 %v2024, %v2641
        %s2675 = scalar_lea.vmem [#allocation6], 256
        %v2676 = vld [vmem:[%s2675] sm:$0xf]
        %v2677 = vld [vmem:[%s2675 + $0x4] sm:$0xf]
        %v2678 = vld [vmem:[%s2675 + $0x8] sm:$0xf]
        %v2679 = vld [vmem:[%s2675 + $0xc] sm:$0xf]
        %v2680 = vld [vmem:[%s2675 + $0x10] sm:$0xf]
        %v2681 = vld [vmem:[%s2675 + $0x14] sm:$0xf]
        %v2682 = vld [vmem:[%s2675 + $0x18] sm:$0xf]
        %v2683 = vld [vmem:[%s2675 + $0x1c] sm:$0xf]
        %v2684 = vld [vmem:[%s2675 + $0x20] sm:$0xf]
        %v2685 = vld [vmem:[%s2675 + $0x24] sm:$0xf]
        %v2686 = vld [vmem:[%s2675 + $0x28] sm:$0xf]
        %v2687 = vld [vmem:[%s2675 + $0x2c] sm:$0xf]
        %v2688 = vld [vmem:[%s2675 + $0x30] sm:$0xf]
        %v2689 = vld [vmem:[%s2675 + $0x34] sm:$0xf]
        %v2690 = vld [vmem:[%s2675 + $0x38] sm:$0xf]
        %v2691 = vld [vmem:[%s2675 + $0x3c] sm:$0xf]
        %v2724 = vunpack.c.l.b16 %v2026
        %v2725 = vunpack.c.l.b16 %v2027
        %v2726 = vunpack.c.l.b16 %v2029
        %v2727 = vunpack.c.l.b16 %v2030
        %v2728 = vunpack.c.l.b16 %v2032
        %v2729 = vunpack.c.l.b16 %v2033
        %v2730 = vunpack.c.l.b16 %v2035
        %v2731 = vunpack.c.l.b16 %v2036
        %v2732 = vunpack.c.l.b16 %v2038
        %v2733 = vunpack.c.l.b16 %v2039
        %v2734 = vunpack.c.l.b16 %v2041
        %v2735 = vunpack.c.l.b16 %v2042
        %v2736 = vunpack.c.l.b16 %v2044
        %v2737 = vunpack.c.l.b16 %v2045
        %v2738 = vunpack.c.l.b16 %v2047
        %v2739 = vunpack.c.l.b16 %v2048
        %v2740 = vunpack.c.l.b16 %v2050
        %v2741 = vunpack.c.l.b16 %v2051
        %v2742 = vunpack.c.l.b16 %v2053
        %v2743 = vunpack.c.l.b16 %v2054
        %v2744 = vunpack.c.l.b16 %v2056
        %v2745 = vunpack.c.l.b16 %v2057
        %v2746 = vunpack.c.l.b16 %v2059
        %v2747 = vunpack.c.l.b16 %v2060
        %v2748 = vunpack.c.l.b16 %v2062
        %v2749 = vunpack.c.l.b16 %v2063
        %v2750 = vunpack.c.l.b16 %v2065
        %v2751 = vunpack.c.l.b16 %v2066
        %v2752 = vunpack.c.l.b16 %v2068
        %v2753 = vunpack.c.l.b16 %v2069
        %v2754 = vunpack.c.l.b16 %v2071
        %v2755 = vunpack.c.l.b16 %v2072
        %v2756 = vpack.c.b16 %v2725, %v2724
        %v2757 = vpack.c.b16 %v2727, %v2726
        %v2758 = vpack.c.b16 %v2729, %v2728
        %v2759 = vpack.c.b16 %v2731, %v2730
        %v2760 = vpack.c.b16 %v2733, %v2732
        %v2761 = vpack.c.b16 %v2735, %v2734
        %v2762 = vpack.c.b16 %v2737, %v2736
        %v2763 = vpack.c.b16 %v2739, %v2738
        %v2764 = vpack.c.b16 %v2741, %v2740
        %v2765 = vpack.c.b16 %v2743, %v2742
        %v2766 = vpack.c.b16 %v2745, %v2744
        %v2767 = vpack.c.b16 %v2747, %v2746
        %v2768 = vpack.c.b16 %v2749, %v2748
        %v2769 = vpack.c.b16 %v2751, %v2750
        %v2770 = vpack.c.b16 %v2753, %v2752
        %v2771 = vpack.c.b16 %v2755, %v2754
        %v2804 = vunpack.c.l.b16 %v2676
        %v2805 = vunpack.c.l.b16 %v2677
        %v2806 = vunpack.c.l.b16 %v2678
        %v2807 = vunpack.c.l.b16 %v2679
        %v2808 = vunpack.c.l.b16 %v2680
        %v2809 = vunpack.c.l.b16 %v2681
        %v2810 = vunpack.c.l.b16 %v2682
        %v2811 = vunpack.c.l.b16 %v2683
        %v2812 = vunpack.c.l.b16 %v2684
        %v2813 = vunpack.c.l.b16 %v2685
        %v2814 = vunpack.c.l.b16 %v2686
        %v2815 = vunpack.c.l.b16 %v2687
        %v2816 = vunpack.c.l.b16 %v2688
        %v2817 = vunpack.c.l.b16 %v2689
        %v2818 = vunpack.c.l.b16 %v2690
        %v2819 = vunpack.c.l.b16 %v2691
        %v2820 = vpack.c.b16 %v2805, %v2804
        %v2821 = vpack.c.b16 %v2807, %v2806
        %v2822 = vpack.c.b16 %v2809, %v2808
        %v2823 = vpack.c.b16 %v2811, %v2810
        %v2824 = vpack.c.b16 %v2813, %v2812
        %v2825 = vpack.c.b16 %v2815, %v2814
        %v2826 = vpack.c.b16 %v2817, %v2816
        %v2827 = vpack.c.b16 %v2819, %v2818
        %2836 = vmatpush.bf16.msra.mxu0 %v2827
        %2837 = vmatpush.bf16.msra.mxu0 %v2826
        %2838 = vmatpush.bf16.msra.mxu0 %v2825
        %2839 = vmatpush.bf16.msra.mxu0 %v2824
        %2840 = vmatpush.bf16.msra.mxu0 %v2823
        %2841 = vmatpush.bf16.msra.mxu0 %v2822
        %2842 = vmatpush.bf16.msra.mxu0 %v2821
        %2843 = vmatpush.bf16.msra.mxu0 %v2820
        %2844 = vmatmul.bf16.gmra.mxu0 %v2756
        %v2845 = vpop.f32.mrf.mxu0
        %v2846 = vadd.f32 0.0, %v2845
        %v2847 = vpop.f32.mrf.mxu0
        %v2848 = vadd.f32 0.0, %v2847
        %2849 = vmatmul.bf16.gmra.mxu0 %v2757
        %v2850 = vpop.f32.mrf.mxu0
        %v2851 = vadd.f32 0.0, %v2850
        %v2852 = vpop.f32.mrf.mxu0
        %v2853 = vadd.f32 0.0, %v2852
        %2854 = vmatmul.bf16.gmra.mxu0 %v2758
        %v2855 = vpop.f32.mrf.mxu0
        %v2856 = vadd.f32 0.0, %v2855
        %v2857 = vpop.f32.mrf.mxu0
        %v2858 = vadd.f32 0.0, %v2857
        %2859 = vmatmul.bf16.gmra.mxu0 %v2759
        %v2860 = vpop.f32.mrf.mxu0
        %v2861 = vadd.f32 0.0, %v2860
        %v2862 = vpop.f32.mrf.mxu0
        %v2863 = vadd.f32 0.0, %v2862
        %2864 = vmatmul.bf16.gmra.mxu0 %v2760
        %v2865 = vpop.f32.mrf.mxu0
        %v2866 = vadd.f32 0.0, %v2865
        %v2867 = vpop.f32.mrf.mxu0
        %v2868 = vadd.f32 0.0, %v2867
        %2869 = vmatmul.bf16.gmra.mxu0 %v2761
        %v2870 = vpop.f32.mrf.mxu0
        %v2871 = vadd.f32 0.0, %v2870
        %v2872 = vpop.f32.mrf.mxu0
        %v2873 = vadd.f32 0.0, %v2872
        %2874 = vmatmul.bf16.gmra.mxu0 %v2762
        %v2875 = vpop.f32.mrf.mxu0
        %v2876 = vadd.f32 0.0, %v2875
        %v2877 = vpop.f32.mrf.mxu0
        %v2878 = vadd.f32 0.0, %v2877
        %2879 = vmatmul.bf16.gmra.mxu0 %v2763
        %v2880 = vpop.f32.mrf.mxu0
        %v2881 = vadd.f32 0.0, %v2880
        %v2882 = vpop.f32.mrf.mxu0
        %v2883 = vadd.f32 0.0, %v2882
        %2884 = vmatmul.bf16.gmra.mxu0 %v2764
        %v2885 = vpop.f32.mrf.mxu0
        %v2886 = vadd.f32 0.0, %v2885
        %v2887 = vpop.f32.mrf.mxu0
        %v2888 = vadd.f32 0.0, %v2887
        %2889 = vmatmul.bf16.gmra.mxu0 %v2765
        %v2890 = vpop.f32.mrf.mxu0
        %v2891 = vadd.f32 0.0, %v2890
        %v2892 = vpop.f32.mrf.mxu0
        %v2893 = vadd.f32 0.0, %v2892
        %2894 = vmatmul.bf16.gmra.mxu0 %v2766
        %v2895 = vpop.f32.mrf.mxu0
        %v2896 = vadd.f32 0.0, %v2895
        %v2897 = vpop.f32.mrf.mxu0
        %v2898 = vadd.f32 0.0, %v2897
        %2899 = vmatmul.bf16.gmra.mxu0 %v2767
        %v2900 = vpop.f32.mrf.mxu0
        %v2901 = vadd.f32 0.0, %v2900
        %v2902 = vpop.f32.mrf.mxu0
        %v2903 = vadd.f32 0.0, %v2902
        %2904 = vmatmul.bf16.gmra.mxu0 %v2768
        %v2905 = vpop.f32.mrf.mxu0
        %v2906 = vadd.f32 0.0, %v2905
        %v2907 = vpop.f32.mrf.mxu0
        %v2908 = vadd.f32 0.0, %v2907
        %2909 = vmatmul.bf16.gmra.mxu0 %v2769
        %v2910 = vpop.f32.mrf.mxu0
        %v2911 = vadd.f32 0.0, %v2910
        %v2912 = vpop.f32.mrf.mxu0
        %v2913 = vadd.f32 0.0, %v2912
        %2914 = vmatmul.bf16.gmra.mxu0 %v2770
        %v2915 = vpop.f32.mrf.mxu0
        %v2916 = vadd.f32 0.0, %v2915
        %v2917 = vpop.f32.mrf.mxu0
        %v2918 = vadd.f32 0.0, %v2917
        %2919 = vmatmul.bf16.gmra.mxu0 %v2771
        %v2920 = vpop.f32.mrf.mxu0
        %v2921 = vadd.f32 0.0, %v2920
        %v2922 = vpop.f32.mrf.mxu0
        %v2923 = vadd.f32 0.0, %v2922
        %2924 = vdwg.mxu0
        %v2925 = vadd.f32 %v2643, %v2846
        %v2926 = vadd.f32 %v2644, %v2848
        %v2927 = vadd.f32 %v2645, %v2851
        %v2928 = vadd.f32 %v2646, %v2853
        %v2929 = vadd.f32 %v2647, %v2856
        %v2930 = vadd.f32 %v2648, %v2858
        %v2931 = vadd.f32 %v2649, %v2861
        %v2932 = vadd.f32 %v2650, %v2863
        %v2933 = vadd.f32 %v2651, %v2866
        %v2934 = vadd.f32 %v2652, %v2868
        %v2935 = vadd.f32 %v2653, %v2871
        %v2936 = vadd.f32 %v2654, %v2873
        %v2937 = vadd.f32 %v2655, %v2876
        %v2938 = vadd.f32 %v2656, %v2878
        %v2939 = vadd.f32 %v2657, %v2881
        %v2940 = vadd.f32 %v2658, %v2883
        %v2941 = vadd.f32 %v2659, %v2886
        %v2942 = vadd.f32 %v2660, %v2888
        %v2943 = vadd.f32 %v2661, %v2891
        %v2944 = vadd.f32 %v2662, %v2893
        %v2945 = vadd.f32 %v2663, %v2896
        %v2946 = vadd.f32 %v2664, %v2898
        %v2947 = vadd.f32 %v2665, %v2901
        %v2948 = vadd.f32 %v2666, %v2903
        %v2949 = vadd.f32 %v2667, %v2906
        %v2950 = vadd.f32 %v2668, %v2908
        %v2951 = vadd.f32 %v2669, %v2911
        %v2952 = vadd.f32 %v2670, %v2913
        %v2953 = vadd.f32 %v2671, %v2916
        %v2954 = vadd.f32 %v2672, %v2918
        %v2955 = vadd.f32 %v2673, %v2921
        %v2956 = vadd.f32 %v2674, %v2923
        %v2957 = vld [vmem:[%s438 + $0x8] sm:$0xf]
        %v2958 = vld [vmem:[%s438 + $0xc] sm:$0xf]
        %v2959 = vld [vmem:[%s438 + $0x10] sm:$0x1]
        %v2960 = vld [vmem:[%s438 + $0x20] sm:$0xf]
        %v2961 = vld [vmem:[%s438 + $0x24] sm:$0xf]
        %v2962 = vld [vmem:[%s438 + $0x28] sm:$0x1]
        %v2963 = vld [vmem:[%s438 + $0x38] sm:$0xf]
        %v2964 = vld [vmem:[%s438 + $0x3c] sm:$0xf]
        %v2965 = vld [vmem:[%s438 + $0x40] sm:$0x1]
        %v2966 = vld [vmem:[%s438 + $0x50] sm:$0xf]
        %v2967 = vld [vmem:[%s438 + $0x54] sm:$0xf]
        %v2968 = vld [vmem:[%s438 + $0x58] sm:$0x1]
        %v2969 = vld [vmem:[%s438 + $0x68] sm:$0xf]
        %v2970 = vld [vmem:[%s438 + $0x6c] sm:$0xf]
        %v2971 = vld [vmem:[%s438 + $0x70] sm:$0x1]
        %v2972 = vld [vmem:[%s438 + $0x80] sm:$0xf]
        %v2973 = vld [vmem:[%s438 + $0x84] sm:$0xf]
        %v2974 = vld [vmem:[%s438 + $0x88] sm:$0x1]
        %v2975 = vld [vmem:[%s438 + $0x98] sm:$0xf]
        %v2976 = vld [vmem:[%s438 + $0x9c] sm:$0xf]
        %v2977 = vld [vmem:[%s438 + $0xa0] sm:$0x1]
        %v2978 = vld [vmem:[%s438 + $0xb0] sm:$0xf]
        %v2979 = vld [vmem:[%s438 + $0xb4] sm:$0xf]
        %v2980 = vld [vmem:[%s438 + $0xb8] sm:$0x1]
        %v2981 = vld [vmem:[%s438 + $0xc8] sm:$0xf]
        %v2982 = vld [vmem:[%s438 + $0xcc] sm:$0xf]
        %v2983 = vld [vmem:[%s438 + $0xd0] sm:$0x1]
        %v2984 = vld [vmem:[%s438 + $0xe0] sm:$0xf]
        %v2985 = vld [vmem:[%s438 + $0xe4] sm:$0xf]
        %v2986 = vld [vmem:[%s438 + $0xe8] sm:$0x1]
        %v2987 = vld [vmem:[%s438 + $0xf8] sm:$0xf]
        %v2988 = vld [vmem:[%s438 + $0xfc] sm:$0xf]
        %v2989 = vld [vmem:[%s438 + $0x100] sm:$0x1]
        %v2990 = vld [vmem:[%s438 + $0x110] sm:$0xf]
        %v2991 = vld [vmem:[%s438 + $0x114] sm:$0xf]
        %v2992 = vld [vmem:[%s438 + $0x118] sm:$0x1]
        %v2993 = vld [vmem:[%s438 + $0x128] sm:$0xf]
        %v2994 = vld [vmem:[%s438 + $0x12c] sm:$0xf]
        %v2995 = vld [vmem:[%s438 + $0x130] sm:$0x1]
        %v2996 = vld [vmem:[%s438 + $0x140] sm:$0xf]
        %v2997 = vld [vmem:[%s438 + $0x144] sm:$0xf]
        %v2998 = vld [vmem:[%s438 + $0x148] sm:$0x1]
        %v2999 = vld [vmem:[%s438 + $0x158] sm:$0xf]
        %v3000 = vld [vmem:[%s438 + $0x15c] sm:$0xf]
        %v3001 = vld [vmem:[%s438 + $0x160] sm:$0x1]
        %v3002 = vld [vmem:[%s438 + $0x170] sm:$0xf]
        %v3003 = vld [vmem:[%s438 + $0x174] sm:$0xf]
        %v3004 = vld [vmem:[%s438 + $0x178] sm:$0x1]
        %v3006 = vshrl.u32 %v2957, 16
        %v3008 = vrot.slane %v3006, 4
        %v3009 = vshll.u32 %v2957, 16
        %v3011 = vrot.slane %v3009, 5
        %v3012 = vor.u32 %v3008, %v3011
        %v3013 = vrot.slane %v3012, 4
        %v3015 = vshll.u32 %v2958, 16
        %v3017 = vrot.slane %v3015, 5
        %v3018 = vsel %vm1390, %v3013, %v3017
        %v3019 = vshrl.u32 %v2958, 16
        %v3021 = vrot.slane %v3019, 4
        %v3022 = vor.u32 %v3021, %v3017
        %v3023 = vrot.slane %v3022, 4
        %v3025 = vshll.u32 %v2959, 16
        %v3027 = vrot.slane %v3025, 5
        %v3028 = vsel %vm1390, %v3023, %v3027
        %v3030 = vshrl.u32 %v2960, 16
        %v3032 = vrot.slane %v3030, 4
        %v3033 = vshll.u32 %v2960, 16
        %v3035 = vrot.slane %v3033, 5
        %v3036 = vor.u32 %v3032, %v3035
        %v3037 = vrot.slane %v3036, 4
        %v3039 = vshll.u32 %v2961, 16
        %v3041 = vrot.slane %v3039, 5
        %v3042 = vsel %vm1390, %v3037, %v3041
        %v3043 = vshrl.u32 %v2961, 16
        %v3045 = vrot.slane %v3043, 4
        %v3046 = vor.u32 %v3045, %v3041
        %v3047 = vrot.slane %v3046, 4
        %v3049 = vshll.u32 %v2962, 16
        %v3051 = vrot.slane %v3049, 5
        %v3052 = vsel %vm1390, %v3047, %v3051
        %v3054 = vshrl.u32 %v2963, 16
        %v3056 = vrot.slane %v3054, 4
        %v3057 = vshll.u32 %v2963, 16
        %v3059 = vrot.slane %v3057, 5
        %v3060 = vor.u32 %v3056, %v3059
        %v3061 = vrot.slane %v3060, 4
        %v3063 = vshll.u32 %v2964, 16
        %v3065 = vrot.slane %v3063, 5
        %v3066 = vsel %vm1390, %v3061, %v3065
        %v3067 = vshrl.u32 %v2964, 16
        %v3069 = vrot.slane %v3067, 4
        %v3070 = vor.u32 %v3069, %v3065
        %v3071 = vrot.slane %v3070, 4
        %v3073 = vshll.u32 %v2965, 16
        %v3075 = vrot.slane %v3073, 5
        %v3076 = vsel %vm1390, %v3071, %v3075
        %v3078 = vshrl.u32 %v2966, 16
        %v3080 = vrot.slane %v3078, 4
        %v3081 = vshll.u32 %v2966, 16
        %v3083 = vrot.slane %v3081, 5
        %v3084 = vor.u32 %v3080, %v3083
        %v3085 = vrot.slane %v3084, 4
        %v3087 = vshll.u32 %v2967, 16
        %v3089 = vrot.slane %v3087, 5
        %v3090 = vsel %vm1390, %v3085, %v3089
        %v3091 = vshrl.u32 %v2967, 16
        %v3093 = vrot.slane %v3091, 4
        %v3094 = vor.u32 %v3093, %v3089
        %v3095 = vrot.slane %v3094, 4
        %v3097 = vshll.u32 %v2968, 16
        %v3099 = vrot.slane %v3097, 5
        %v3100 = vsel %vm1390, %v3095, %v3099
        %v3102 = vshrl.u32 %v2969, 16
        %v3104 = vrot.slane %v3102, 4
        %v3105 = vshll.u32 %v2969, 16
        %v3107 = vrot.slane %v3105, 5
        %v3108 = vor.u32 %v3104, %v3107
        %v3109 = vrot.slane %v3108, 4
        %v3111 = vshll.u32 %v2970, 16
        %v3113 = vrot.slane %v3111, 5
        %v3114 = vsel %vm1390, %v3109, %v3113
        %v3115 = vshrl.u32 %v2970, 16
        %v3117 = vrot.slane %v3115, 4
        %v3118 = vor.u32 %v3117, %v3113
        %v3119 = vrot.slane %v3118, 4
        %v3121 = vshll.u32 %v2971, 16
        %v3123 = vrot.slane %v3121, 5
        %v3124 = vsel %vm1390, %v3119, %v3123
        %v3126 = vshrl.u32 %v2972, 16
        %v3128 = vrot.slane %v3126, 4
        %v3129 = vshll.u32 %v2972, 16
        %v3131 = vrot.slane %v3129, 5
        %v3132 = vor.u32 %v3128, %v3131
        %v3133 = vrot.slane %v3132, 4
        %v3135 = vshll.u32 %v2973, 16
        %v3137 = vrot.slane %v3135, 5
        %v3138 = vsel %vm1390, %v3133, %v3137
        %v3139 = vshrl.u32 %v2973, 16
        %v3141 = vrot.slane %v3139, 4
        %v3142 = vor.u32 %v3141, %v3137
        %v3143 = vrot.slane %v3142, 4
        %v3145 = vshll.u32 %v2974, 16
        %v3147 = vrot.slane %v3145, 5
        %v3148 = vsel %vm1390, %v3143, %v3147
        %v3150 = vshrl.u32 %v2975, 16
        %v3152 = vrot.slane %v3150, 4
        %v3153 = vshll.u32 %v2975, 16
        %v3155 = vrot.slane %v3153, 5
        %v3156 = vor.u32 %v3152, %v3155
        %v3157 = vrot.slane %v3156, 4
        %v3159 = vshll.u32 %v2976, 16
        %v3161 = vrot.slane %v3159, 5
        %v3162 = vsel %vm1390, %v3157, %v3161
        %v3163 = vshrl.u32 %v2976, 16
        %v3165 = vrot.slane %v3163, 4
        %v3166 = vor.u32 %v3165, %v3161
        %v3167 = vrot.slane %v3166, 4
        %v3169 = vshll.u32 %v2977, 16
        %v3171 = vrot.slane %v3169, 5
        %v3172 = vsel %vm1390, %v3167, %v3171
        %v3174 = vshrl.u32 %v2978, 16
        %v3176 = vrot.slane %v3174, 4
        %v3177 = vshll.u32 %v2978, 16
        %v3179 = vrot.slane %v3177, 5
        %v3180 = vor.u32 %v3176, %v3179
        %v3181 = vrot.slane %v3180, 4
        %v3183 = vshll.u32 %v2979, 16
        %v3185 = vrot.slane %v3183, 5
        %v3186 = vsel %vm1390, %v3181, %v3185
        %v3187 = vshrl.u32 %v2979, 16
        %v3189 = vrot.slane %v3187, 4
        %v3190 = vor.u32 %v3189, %v3185
        %v3191 = vrot.slane %v3190, 4
        %v3193 = vshll.u32 %v2980, 16
        %v3195 = vrot.slane %v3193, 5
        %v3196 = vsel %vm1390, %v3191, %v3195
        %v3198 = vshrl.u32 %v2981, 16
        %v3200 = vrot.slane %v3198, 4
        %v3201 = vshll.u32 %v2981, 16
        %v3203 = vrot.slane %v3201, 5
        %v3204 = vor.u32 %v3200, %v3203
        %v3205 = vrot.slane %v3204, 4
        %v3207 = vshll.u32 %v2982, 16
        %v3209 = vrot.slane %v3207, 5
        %v3210 = vsel %vm1390, %v3205, %v3209
        %v3211 = vshrl.u32 %v2982, 16
        %v3213 = vrot.slane %v3211, 4
        %v3214 = vor.u32 %v3213, %v3209
        %v3215 = vrot.slane %v3214, 4
        %v3217 = vshll.u32 %v2983, 16
        %v3219 = vrot.slane %v3217, 5
        %v3220 = vsel %vm1390, %v3215, %v3219
        %v3222 = vshrl.u32 %v2984, 16
        %v3224 = vrot.slane %v3222, 4
        %v3225 = vshll.u32 %v2984, 16
        %v3227 = vrot.slane %v3225, 5
        %v3228 = vor.u32 %v3224, %v3227
        %v3229 = vrot.slane %v3228, 4
        %v3231 = vshll.u32 %v2985, 16
        %v3233 = vrot.slane %v3231, 5
        %v3234 = vsel %vm1390, %v3229, %v3233
        %v3235 = vshrl.u32 %v2985, 16
        %v3237 = vrot.slane %v3235, 4
        %v3238 = vor.u32 %v3237, %v3233
        %v3239 = vrot.slane %v3238, 4
        %v3241 = vshll.u32 %v2986, 16
        %v3243 = vrot.slane %v3241, 5
        %v3244 = vsel %vm1390, %v3239, %v3243
        %v3246 = vshrl.u32 %v2987, 16
        %v3248 = vrot.slane %v3246, 4
        %v3249 = vshll.u32 %v2987, 16
        %v3251 = vrot.slane %v3249, 5
        %v3252 = vor.u32 %v3248, %v3251
        %v3253 = vrot.slane %v3252, 4
        %v3255 = vshll.u32 %v2988, 16
        %v3257 = vrot.slane %v3255, 5
        %v3258 = vsel %vm1390, %v3253, %v3257
        %v3259 = vshrl.u32 %v2988, 16
        %v3261 = vrot.slane %v3259, 4
        %v3262 = vor.u32 %v3261, %v3257
        %v3263 = vrot.slane %v3262, 4
        %v3265 = vshll.u32 %v2989, 16
        %v3267 = vrot.slane %v3265, 5
        %v3268 = vsel %vm1390, %v3263, %v3267
        %v3270 = vshrl.u32 %v2990, 16
        %v3272 = vrot.slane %v3270, 4
        %v3273 = vshll.u32 %v2990, 16
        %v3275 = vrot.slane %v3273, 5
        %v3276 = vor.u32 %v3272, %v3275
        %v3277 = vrot.slane %v3276, 4
        %v3279 = vshll.u32 %v2991, 16
        %v3281 = vrot.slane %v3279, 5
        %v3282 = vsel %vm1390, %v3277, %v3281
        %v3283 = vshrl.u32 %v2991, 16
        %v3285 = vrot.slane %v3283, 4
        %v3286 = vor.u32 %v3285, %v3281
        %v3287 = vrot.slane %v3286, 4
        %v3289 = vshll.u32 %v2992, 16
        %v3291 = vrot.slane %v3289, 5
        %v3292 = vsel %vm1390, %v3287, %v3291
        %v3294 = vshrl.u32 %v2993, 16
        %v3296 = vrot.slane %v3294, 4
        %v3297 = vshll.u32 %v2993, 16
        %v3299 = vrot.slane %v3297, 5
        %v3300 = vor.u32 %v3296, %v3299
        %v3301 = vrot.slane %v3300, 4
        %v3303 = vshll.u32 %v2994, 16
        %v3305 = vrot.slane %v3303, 5
        %v3306 = vsel %vm1390, %v3301, %v3305
        %v3307 = vshrl.u32 %v2994, 16
        %v3309 = vrot.slane %v3307, 4
        %v3310 = vor.u32 %v3309, %v3305
        %v3311 = vrot.slane %v3310, 4
        %v3313 = vshll.u32 %v2995, 16
        %v3315 = vrot.slane %v3313, 5
        %v3316 = vsel %vm1390, %v3311, %v3315
        %v3318 = vshrl.u32 %v2996, 16
        %v3320 = vrot.slane %v3318, 4
        %v3321 = vshll.u32 %v2996, 16
        %v3323 = vrot.slane %v3321, 5
        %v3324 = vor.u32 %v3320, %v3323
        %v3325 = vrot.slane %v3324, 4
        %v3327 = vshll.u32 %v2997, 16
        %v3329 = vrot.slane %v3327, 5
        %v3330 = vsel %vm1390, %v3325, %v3329
        %v3331 = vshrl.u32 %v2997, 16
        %v3333 = vrot.slane %v3331, 4
        %v3334 = vor.u32 %v3333, %v3329
        %v3335 = vrot.slane %v3334, 4
        %v3337 = vshll.u32 %v2998, 16
        %v3339 = vrot.slane %v3337, 5
        %v3340 = vsel %vm1390, %v3335, %v3339
        %v3342 = vshrl.u32 %v2999, 16
        %v3344 = vrot.slane %v3342, 4
        %v3345 = vshll.u32 %v2999, 16
        %v3347 = vrot.slane %v3345, 5
        %v3348 = vor.u32 %v3344, %v3347
        %v3349 = vrot.slane %v3348, 4
        %v3351 = vshll.u32 %v3000, 16
        %v3353 = vrot.slane %v3351, 5
        %v3354 = vsel %vm1390, %v3349, %v3353
        %v3355 = vshrl.u32 %v3000, 16
        %v3357 = vrot.slane %v3355, 4
        %v3358 = vor.u32 %v3357, %v3353
        %v3359 = vrot.slane %v3358, 4
        %v3361 = vshll.u32 %v3001, 16
        %v3363 = vrot.slane %v3361, 5
        %v3364 = vsel %vm1390, %v3359, %v3363
        %v3366 = vshrl.u32 %v3002, 16
        %v3368 = vrot.slane %v3366, 4
        %v3369 = vshll.u32 %v3002, 16
        %v3371 = vrot.slane %v3369, 5
        %v3372 = vor.u32 %v3368, %v3371
        %v3373 = vrot.slane %v3372, 4
        %v3375 = vshll.u32 %v3003, 16
        %v3377 = vrot.slane %v3375, 5
        %v3378 = vsel %vm1390, %v3373, %v3377
        %v3379 = vshrl.u32 %v3003, 16
        %v3381 = vrot.slane %v3379, 4
        %v3382 = vor.u32 %v3381, %v3377
        %v3383 = vrot.slane %v3382, 4
        %v3385 = vshll.u32 %v3004, 16
        %v3387 = vrot.slane %v3385, 5
        %v3388 = vsel %vm1390, %v3383, %v3387
        %s3389 = scalar_lea.vmem [#allocation6], 320
        %v3390 = vld [vmem:[%s3389] sm:$0xf]
        %v3391 = vld [vmem:[%s3389 + $0x4] sm:$0xf]
        %v3392 = vld [vmem:[%s3389 + $0x8] sm:$0xf]
        %v3393 = vld [vmem:[%s3389 + $0xc] sm:$0xf]
        %v3394 = vld [vmem:[%s3389 + $0x10] sm:$0xf]
        %v3395 = vld [vmem:[%s3389 + $0x14] sm:$0xf]
        %v3396 = vld [vmem:[%s3389 + $0x18] sm:$0xf]
        %v3397 = vld [vmem:[%s3389 + $0x1c] sm:$0xf]
        %v3398 = vld [vmem:[%s3389 + $0x20] sm:$0xf]
        %v3399 = vld [vmem:[%s3389 + $0x24] sm:$0xf]
        %v3400 = vld [vmem:[%s3389 + $0x28] sm:$0xf]
        %v3401 = vld [vmem:[%s3389 + $0x2c] sm:$0xf]
        %v3402 = vld [vmem:[%s3389 + $0x30] sm:$0xf]
        %v3403 = vld [vmem:[%s3389 + $0x34] sm:$0xf]
        %v3404 = vld [vmem:[%s3389 + $0x38] sm:$0xf]
        %v3405 = vld [vmem:[%s3389 + $0x3c] sm:$0xf]
        %v3406 = vunpack.c.l.b16 %v3018
        %v3407 = vunpack.c.l.b16 %v3028
        %v3408 = vunpack.c.l.b16 %v3042
        %v3409 = vunpack.c.l.b16 %v3052
        %v3410 = vunpack.c.l.b16 %v3066
        %v3411 = vunpack.c.l.b16 %v3076
        %v3412 = vunpack.c.l.b16 %v3090
        %v3413 = vunpack.c.l.b16 %v3100
        %v3414 = vunpack.c.l.b16 %v3114
        %v3415 = vunpack.c.l.b16 %v3124
        %v3416 = vunpack.c.l.b16 %v3138
        %v3417 = vunpack.c.l.b16 %v3148
        %v3418 = vunpack.c.l.b16 %v3162
        %v3419 = vunpack.c.l.b16 %v3172
        %v3420 = vunpack.c.l.b16 %v3186
        %v3421 = vunpack.c.l.b16 %v3196
        %v3422 = vunpack.c.l.b16 %v3210
        %v3423 = vunpack.c.l.b16 %v3220
        %v3424 = vunpack.c.l.b16 %v3234
        %v3425 = vunpack.c.l.b16 %v3244
        %v3426 = vunpack.c.l.b16 %v3258
        %v3427 = vunpack.c.l.b16 %v3268
        %v3428 = vunpack.c.l.b16 %v3282
        %v3429 = vunpack.c.l.b16 %v3292
        %v3430 = vunpack.c.l.b16 %v3306
        %v3431 = vunpack.c.l.b16 %v3316
        %v3432 = vunpack.c.l.b16 %v3330
        %v3433 = vunpack.c.l.b16 %v3340
        %v3434 = vunpack.c.l.b16 %v3354
        %v3435 = vunpack.c.l.b16 %v3364
        %v3436 = vunpack.c.l.b16 %v3378
        %v3437 = vunpack.c.l.b16 %v3388
        %v3438 = vpack.c.b16 %v3407, %v3406
        %v3439 = vpack.c.b16 %v3409, %v3408
        %v3440 = vpack.c.b16 %v3411, %v3410
        %v3441 = vpack.c.b16 %v3413, %v3412
        %v3442 = vpack.c.b16 %v3415, %v3414
        %v3443 = vpack.c.b16 %v3417, %v3416
        %v3444 = vpack.c.b16 %v3419, %v3418
        %v3445 = vpack.c.b16 %v3421, %v3420
        %v3446 = vpack.c.b16 %v3423, %v3422
        %v3447 = vpack.c.b16 %v3425, %v3424
        %v3448 = vpack.c.b16 %v3427, %v3426
        %v3449 = vpack.c.b16 %v3429, %v3428
        %v3450 = vpack.c.b16 %v3431, %v3430
        %v3451 = vpack.c.b16 %v3433, %v3432
        %v3452 = vpack.c.b16 %v3435, %v3434
        %v3453 = vpack.c.b16 %v3437, %v3436
        %v3486 = vunpack.c.l.b16 %v3390
        %v3487 = vunpack.c.l.b16 %v3391
        %v3488 = vunpack.c.l.b16 %v3392
        %v3489 = vunpack.c.l.b16 %v3393
        %v3490 = vunpack.c.l.b16 %v3394
        %v3491 = vunpack.c.l.b16 %v3395
        %v3492 = vunpack.c.l.b16 %v3396
        %v3493 = vunpack.c.l.b16 %v3397
        %v3494 = vunpack.c.l.b16 %v3398
        %v3495 = vunpack.c.l.b16 %v3399
        %v3496 = vunpack.c.l.b16 %v3400
        %v3497 = vunpack.c.l.b16 %v3401
        %v3498 = vunpack.c.l.b16 %v3402
        %v3499 = vunpack.c.l.b16 %v3403
        %v3500 = vunpack.c.l.b16 %v3404
        %v3501 = vunpack.c.l.b16 %v3405
        %v3502 = vpack.c.b16 %v3487, %v3486
        %v3503 = vpack.c.b16 %v3489, %v3488
        %v3504 = vpack.c.b16 %v3491, %v3490
        %v3505 = vpack.c.b16 %v3493, %v3492
        %v3506 = vpack.c.b16 %v3495, %v3494
        %v3507 = vpack.c.b16 %v3497, %v3496
        %v3508 = vpack.c.b16 %v3499, %v3498
        %v3509 = vpack.c.b16 %v3501, %v3500
        %3518 = vmatpush.bf16.msra.mxu0 %v3509
        %3519 = vmatpush.bf16.msra.mxu0 %v3508
        %3520 = vmatpush.bf16.msra.mxu0 %v3507
        %3521 = vmatpush.bf16.msra.mxu0 %v3506
        %3522 = vmatpush.bf16.msra.mxu0 %v3505
        %3523 = vmatpush.bf16.msra.mxu0 %v3504
        %3524 = vmatpush.bf16.msra.mxu0 %v3503
        %3525 = vmatpush.bf16.msra.mxu0 %v3502
        %3526 = vmatmul.bf16.gmra.mxu0 %v3438
        %v3527 = vpop.f32.mrf.mxu0
        %v3528 = vadd.f32 0.0, %v3527
        %v3529 = vpop.f32.mrf.mxu0
        %v3530 = vadd.f32 0.0, %v3529
        %3531 = vmatmul.bf16.gmra.mxu0 %v3439
        %v3532 = vpop.f32.mrf.mxu0
        %v3533 = vadd.f32 0.0, %v3532
        %v3534 = vpop.f32.mrf.mxu0
        %v3535 = vadd.f32 0.0, %v3534
        %3536 = vmatmul.bf16.gmra.mxu0 %v3440
        %v3537 = vpop.f32.mrf.mxu0
        %v3538 = vadd.f32 0.0, %v3537
        %v3539 = vpop.f32.mrf.mxu0
        %v3540 = vadd.f32 0.0, %v3539
        %3541 = vmatmul.bf16.gmra.mxu0 %v3441
        %v3542 = vpop.f32.mrf.mxu0
        %v3543 = vadd.f32 0.0, %v3542
        %v3544 = vpop.f32.mrf.mxu0
        %v3545 = vadd.f32 0.0, %v3544
        %3546 = vmatmul.bf16.gmra.mxu0 %v3442
        %v3547 = vpop.f32.mrf.mxu0
        %v3548 = vadd.f32 0.0, %v3547
        %v3549 = vpop.f32.mrf.mxu0
        %v3550 = vadd.f32 0.0, %v3549
        %3551 = vmatmul.bf16.gmra.mxu0 %v3443
        %v3552 = vpop.f32.mrf.mxu0
        %v3553 = vadd.f32 0.0, %v3552
        %v3554 = vpop.f32.mrf.mxu0
        %v3555 = vadd.f32 0.0, %v3554
        %3556 = vmatmul.bf16.gmra.mxu0 %v3444
        %v3557 = vpop.f32.mrf.mxu0
        %v3558 = vadd.f32 0.0, %v3557
        %v3559 = vpop.f32.mrf.mxu0
        %v3560 = vadd.f32 0.0, %v3559
        %3561 = vmatmul.bf16.gmra.mxu0 %v3445
        %v3562 = vpop.f32.mrf.mxu0
        %v3563 = vadd.f32 0.0, %v3562
        %v3564 = vpop.f32.mrf.mxu0
        %v3565 = vadd.f32 0.0, %v3564
        %3566 = vmatmul.bf16.gmra.mxu0 %v3446
        %v3567 = vpop.f32.mrf.mxu0
        %v3568 = vadd.f32 0.0, %v3567
        %v3569 = vpop.f32.mrf.mxu0
        %v3570 = vadd.f32 0.0, %v3569
        %3571 = vmatmul.bf16.gmra.mxu0 %v3447
        %v3572 = vpop.f32.mrf.mxu0
        %v3573 = vadd.f32 0.0, %v3572
        %v3574 = vpop.f32.mrf.mxu0
        %v3575 = vadd.f32 0.0, %v3574
        %3576 = vmatmul.bf16.gmra.mxu0 %v3448
        %v3577 = vpop.f32.mrf.mxu0
        %v3578 = vadd.f32 0.0, %v3577
        %v3579 = vpop.f32.mrf.mxu0
        %v3580 = vadd.f32 0.0, %v3579
        %3581 = vmatmul.bf16.gmra.mxu0 %v3449
        %v3582 = vpop.f32.mrf.mxu0
        %v3583 = vadd.f32 0.0, %v3582
        %v3584 = vpop.f32.mrf.mxu0
        %v3585 = vadd.f32 0.0, %v3584
        %3586 = vmatmul.bf16.gmra.mxu0 %v3450
        %v3587 = vpop.f32.mrf.mxu0
        %v3588 = vadd.f32 0.0, %v3587
        %v3589 = vpop.f32.mrf.mxu0
        %v3590 = vadd.f32 0.0, %v3589
        %3591 = vmatmul.bf16.gmra.mxu0 %v3451
        %v3592 = vpop.f32.mrf.mxu0
        %v3593 = vadd.f32 0.0, %v3592
        %v3594 = vpop.f32.mrf.mxu0
        %v3595 = vadd.f32 0.0, %v3594
        %3596 = vmatmul.bf16.gmra.mxu0 %v3452
        %v3597 = vpop.f32.mrf.mxu0
        %v3598 = vadd.f32 0.0, %v3597
        %v3599 = vpop.f32.mrf.mxu0
        %v3600 = vadd.f32 0.0, %v3599
        %3601 = vmatmul.bf16.gmra.mxu0 %v3453
        %v3602 = vpop.f32.mrf.mxu0
        %v3603 = vadd.f32 0.0, %v3602
        %v3604 = vpop.f32.mrf.mxu0
        %v3605 = vadd.f32 0.0, %v3604
        %3606 = vdwg.mxu0
        %v3607 = vadd.f32 %v2925, %v3528
        %v3608 = vadd.f32 %v2926, %v3530
        %v3609 = vadd.f32 %v2927, %v3533
        %v3610 = vadd.f32 %v2928, %v3535
        %v3611 = vadd.f32 %v2929, %v3538
        %v3612 = vadd.f32 %v2930, %v3540
        %v3613 = vadd.f32 %v2931, %v3543
        %v3614 = vadd.f32 %v2932, %v3545
        %v3615 = vadd.f32 %v2933, %v3548
        %v3616 = vadd.f32 %v2934, %v3550
        %v3617 = vadd.f32 %v2935, %v3553
        %v3618 = vadd.f32 %v2936, %v3555
        %v3619 = vadd.f32 %v2937, %v3558
        %v3620 = vadd.f32 %v2938, %v3560
        %v3621 = vadd.f32 %v2939, %v3563
        %v3622 = vadd.f32 %v2940, %v3565
        %v3623 = vadd.f32 %v2941, %v3568
        %v3624 = vadd.f32 %v2942, %v3570
        %v3625 = vadd.f32 %v2943, %v3573
        %v3626 = vadd.f32 %v2944, %v3575
        %v3627 = vadd.f32 %v2945, %v3578
        %v3628 = vadd.f32 %v2946, %v3580
        %v3629 = vadd.f32 %v2947, %v3583
        %v3630 = vadd.f32 %v2948, %v3585
        %v3631 = vadd.f32 %v2949, %v3588
        %v3632 = vadd.f32 %v2950, %v3590
        %v3633 = vadd.f32 %v2951, %v3593
        %v3634 = vadd.f32 %v2952, %v3595
        %v3635 = vadd.f32 %v2953, %v3598
        %v3636 = vadd.f32 %v2954, %v3600
        %v3637 = vadd.f32 %v2955, %v3603
        %v3638 = vadd.f32 %v2956, %v3605
        %s3639 = scalar_lea.vmem [#allocation2], 48
        %v3640 = vld [vmem:[%s3639 + $0x4] sm:$0x8]
        %v3641 = vld [vmem:[%s3639 + $0x8] sm:$0xf]
        %v3642 = vld [vmem:[%s3639 + $0xc] sm:$0xf]
        %v3643 = vld [vmem:[%s3639 + $0x1c] sm:$0x8]
        %v3644 = vld [vmem:[%s3639 + $0x20] sm:$0xf]
        %v3645 = vld [vmem:[%s3639 + $0x24] sm:$0xf]
        %v3646 = vld [vmem:[%s3639 + $0x34] sm:$0x8]
        %v3647 = vld [vmem:[%s3639 + $0x38] sm:$0xf]
        %v3648 = vld [vmem:[%s3639 + $0x3c] sm:$0xf]
        %v3649 = vld [vmem:[%s3639 + $0x4c] sm:$0x8]
        %v3650 = vld [vmem:[%s3639 + $0x50] sm:$0xf]
        %v3651 = vld [vmem:[%s3639 + $0x54] sm:$0xf]
        %v3652 = vld [vmem:[%s3639 + $0x64] sm:$0x8]
        %v3653 = vld [vmem:[%s3639 + $0x68] sm:$0xf]
        %v3654 = vld [vmem:[%s3639 + $0x6c] sm:$0xf]
        %v3655 = vld [vmem:[%s3639 + $0x7c] sm:$0x8]
        %v3656 = vld [vmem:[%s3639 + $0x80] sm:$0xf]
        %v3657 = vld [vmem:[%s3639 + $0x84] sm:$0xf]
        %v3658 = vld [vmem:[%s3639 + $0x94] sm:$0x8]
        %v3659 = vld [vmem:[%s3639 + $0x98] sm:$0xf]
        %v3660 = vld [vmem:[%s3639 + $0x9c] sm:$0xf]
        %v3661 = vld [vmem:[%s3639 + $0xac] sm:$0x8]
        %v3662 = vld [vmem:[%s3639 + $0xb0] sm:$0xf]
        %v3663 = vld [vmem:[%s3639 + $0xb4] sm:$0xf]
        %v3664 = vld [vmem:[%s3639 + $0xc4] sm:$0x8]
        %v3665 = vld [vmem:[%s3639 + $0xc8] sm:$0xf]
        %v3666 = vld [vmem:[%s3639 + $0xcc] sm:$0xf]
        %v3667 = vld [vmem:[%s3639 + $0xdc] sm:$0x8]
        %v3668 = vld [vmem:[%s3639 + $0xe0] sm:$0xf]
        %v3669 = vld [vmem:[%s3639 + $0xe4] sm:$0xf]
        %v3670 = vld [vmem:[%s3639 + $0xf4] sm:$0x8]
        %v3671 = vld [vmem:[%s3639 + $0xf8] sm:$0xf]
        %v3672 = vld [vmem:[%s3639 + $0xfc] sm:$0xf]
        %v3673 = vld [vmem:[%s3639 + $0x10c] sm:$0x8]
        %v3674 = vld [vmem:[%s3639 + $0x110] sm:$0xf]
        %v3675 = vld [vmem:[%s3639 + $0x114] sm:$0xf]
        %v3676 = vld [vmem:[%s3639 + $0x124] sm:$0x8]
        %v3677 = vld [vmem:[%s3639 + $0x128] sm:$0xf]
        %v3678 = vld [vmem:[%s3639 + $0x12c] sm:$0xf]
        %v3679 = vld [vmem:[%s3639 + $0x13c] sm:$0x8]
        %v3680 = vld [vmem:[%s3639 + $0x140] sm:$0xf]
        %v3681 = vld [vmem:[%s3639 + $0x144] sm:$0xf]
        %v3682 = vld [vmem:[%s3639 + $0x154] sm:$0x8]
        %v3683 = vld [vmem:[%s3639 + $0x158] sm:$0xf]
        %v3684 = vld [vmem:[%s3639 + $0x15c] sm:$0xf]
        %v3685 = vld [vmem:[%s3639 + $0x16c] sm:$0x8]
        %v3686 = vld [vmem:[%s3639 + $0x170] sm:$0xf]
        %v3687 = vld [vmem:[%s3639 + $0x174] sm:$0xf]
        %v3689 = vshrl.u32 %v3640, 16
        %v3691 = vrot.slane %v3689, 7
        %v3692 = vrot.slane %v3691, 4
        %v3694 = vshrl.u32 %v3641, 16
        %v3696 = vrot.slane %v3694, 7
        %v3697 = vshll.u32 %v3641, 16
        %v3699 = vor.u32 %v3696, %v3697
        %v3700 = vsel %vm520, %v3692, %v3699
        %v3701 = vrot.slane %v3696, 4
        %v3703 = vshrl.u32 %v3642, 16
        %v3705 = vrot.slane %v3703, 7
        %v3706 = vshll.u32 %v3642, 16
        %v3708 = vor.u32 %v3705, %v3706
        %v3709 = vsel %vm520, %v3701, %v3708
        %v3711 = vshrl.u32 %v3643, 16
        %v3713 = vrot.slane %v3711, 7
        %v3714 = vrot.slane %v3713, 4
        %v3716 = vshrl.u32 %v3644, 16
        %v3718 = vrot.slane %v3716, 7
        %v3719 = vshll.u32 %v3644, 16
        %v3721 = vor.u32 %v3718, %v3719
        %v3722 = vsel %vm520, %v3714, %v3721
        %v3723 = vrot.slane %v3718, 4
        %v3725 = vshrl.u32 %v3645, 16
        %v3727 = vrot.slane %v3725, 7
        %v3728 = vshll.u32 %v3645, 16
        %v3730 = vor.u32 %v3727, %v3728
        %v3731 = vsel %vm520, %v3723, %v3730
        %v3733 = vshrl.u32 %v3646, 16
        %v3735 = vrot.slane %v3733, 7
        %v3736 = vrot.slane %v3735, 4
        %v3738 = vshrl.u32 %v3647, 16
        %v3740 = vrot.slane %v3738, 7
        %v3741 = vshll.u32 %v3647, 16
        %v3743 = vor.u32 %v3740, %v3741
        %v3744 = vsel %vm520, %v3736, %v3743
        %v3745 = vrot.slane %v3740, 4
        %v3747 = vshrl.u32 %v3648, 16
        %v3749 = vrot.slane %v3747, 7
        %v3750 = vshll.u32 %v3648, 16
        %v3752 = vor.u32 %v3749, %v3750
        %v3753 = vsel %vm520, %v3745, %v3752
        %v3755 = vshrl.u32 %v3649, 16
        %v3757 = vrot.slane %v3755, 7
        %v3758 = vrot.slane %v3757, 4
        %v3760 = vshrl.u32 %v3650, 16
        %v3762 = vrot.slane %v3760, 7
        %v3763 = vshll.u32 %v3650, 16
        %v3765 = vor.u32 %v3762, %v3763
        %v3766 = vsel %vm520, %v3758, %v3765
        %v3767 = vrot.slane %v3762, 4
        %v3769 = vshrl.u32 %v3651, 16
        %v3771 = vrot.slane %v3769, 7
        %v3772 = vshll.u32 %v3651, 16
        %v3774 = vor.u32 %v3771, %v3772
        %v3775 = vsel %vm520, %v3767, %v3774
        %v3777 = vshrl.u32 %v3652, 16
        %v3779 = vrot.slane %v3777, 7
        %v3780 = vrot.slane %v3779, 4
        %v3782 = vshrl.u32 %v3653, 16
        %v3784 = vrot.slane %v3782, 7
        %v3785 = vshll.u32 %v3653, 16
        %v3787 = vor.u32 %v3784, %v3785
        %v3788 = vsel %vm520, %v3780, %v3787
        %v3789 = vrot.slane %v3784, 4
        %v3791 = vshrl.u32 %v3654, 16
        %v3793 = vrot.slane %v3791, 7
        %v3794 = vshll.u32 %v3654, 16
        %v3796 = vor.u32 %v3793, %v3794
        %v3797 = vsel %vm520, %v3789, %v3796
        %v3799 = vshrl.u32 %v3655, 16
        %v3801 = vrot.slane %v3799, 7
        %v3802 = vrot.slane %v3801, 4
        %v3804 = vshrl.u32 %v3656, 16
        %v3806 = vrot.slane %v3804, 7
        %v3807 = vshll.u32 %v3656, 16
        %v3809 = vor.u32 %v3806, %v3807
        %v3810 = vsel %vm520, %v3802, %v3809
        %v3811 = vrot.slane %v3806, 4
        %v3813 = vshrl.u32 %v3657, 16
        %v3815 = vrot.slane %v3813, 7
        %v3816 = vshll.u32 %v3657, 16
        %v3818 = vor.u32 %v3815, %v3816
        %v3819 = vsel %vm520, %v3811, %v3818
        %v3821 = vshrl.u32 %v3658, 16
        %v3823 = vrot.slane %v3821, 7
        %v3824 = vrot.slane %v3823, 4
        %v3826 = vshrl.u32 %v3659, 16
        %v3828 = vrot.slane %v3826, 7
        %v3829 = vshll.u32 %v3659, 16
        %v3831 = vor.u32 %v3828, %v3829
        %v3832 = vsel %vm520, %v3824, %v3831
        %v3833 = vrot.slane %v3828, 4
        %v3835 = vshrl.u32 %v3660, 16
        %v3837 = vrot.slane %v3835, 7
        %v3838 = vshll.u32 %v3660, 16
        %v3840 = vor.u32 %v3837, %v3838
        %v3841 = vsel %vm520, %v3833, %v3840
        %v3843 = vshrl.u32 %v3661, 16
        %v3845 = vrot.slane %v3843, 7
        %v3846 = vrot.slane %v3845, 4
        %v3848 = vshrl.u32 %v3662, 16
        %v3850 = vrot.slane %v3848, 7
        %v3851 = vshll.u32 %v3662, 16
        %v3853 = vor.u32 %v3850, %v3851
        %v3854 = vsel %vm520, %v3846, %v3853
        %v3855 = vrot.slane %v3850, 4
        %v3857 = vshrl.u32 %v3663, 16
        %v3859 = vrot.slane %v3857, 7
        %v3860 = vshll.u32 %v3663, 16
        %v3862 = vor.u32 %v3859, %v3860
        %v3863 = vsel %vm520, %v3855, %v3862
        %v3865 = vshrl.u32 %v3664, 16
        %v3867 = vrot.slane %v3865, 7
        %v3868 = vrot.slane %v3867, 4
        %v3870 = vshrl.u32 %v3665, 16
        %v3872 = vrot.slane %v3870, 7
        %v3873 = vshll.u32 %v3665, 16
        %v3875 = vor.u32 %v3872, %v3873
        %v3876 = vsel %vm520, %v3868, %v3875
        %v3877 = vrot.slane %v3872, 4
        %v3879 = vshrl.u32 %v3666, 16
        %v3881 = vrot.slane %v3879, 7
        %v3882 = vshll.u32 %v3666, 16
        %v3884 = vor.u32 %v3881, %v3882
        %v3885 = vsel %vm520, %v3877, %v3884
        %v3887 = vshrl.u32 %v3667, 16
        %v3889 = vrot.slane %v3887, 7
        %v3890 = vrot.slane %v3889, 4
        %v3892 = vshrl.u32 %v3668, 16
        %v3894 = vrot.slane %v3892, 7
        %v3895 = vshll.u32 %v3668, 16
        %v3897 = vor.u32 %v3894, %v3895
        %v3898 = vsel %vm520, %v3890, %v3897
        %v3899 = vrot.slane %v3894, 4
        %v3901 = vshrl.u32 %v3669, 16
        %v3903 = vrot.slane %v3901, 7
        %v3904 = vshll.u32 %v3669, 16
        %v3906 = vor.u32 %v3903, %v3904
        %v3907 = vsel %vm520, %v3899, %v3906
        %v3909 = vshrl.u32 %v3670, 16
        %v3911 = vrot.slane %v3909, 7
        %v3912 = vrot.slane %v3911, 4
        %v3914 = vshrl.u32 %v3671, 16
        %v3916 = vrot.slane %v3914, 7
        %v3917 = vshll.u32 %v3671, 16
        %v3919 = vor.u32 %v3916, %v3917
        %v3920 = vsel %vm520, %v3912, %v3919
        %v3921 = vrot.slane %v3916, 4
        %v3923 = vshrl.u32 %v3672, 16
        %v3925 = vrot.slane %v3923, 7
        %v3926 = vshll.u32 %v3672, 16
        %v3928 = vor.u32 %v3925, %v3926
        %v3929 = vsel %vm520, %v3921, %v3928
        %v3931 = vshrl.u32 %v3673, 16
        %v3933 = vrot.slane %v3931, 7
        %v3934 = vrot.slane %v3933, 4
        %v3936 = vshrl.u32 %v3674, 16
        %v3938 = vrot.slane %v3936, 7
        %v3939 = vshll.u32 %v3674, 16
        %v3941 = vor.u32 %v3938, %v3939
        %v3942 = vsel %vm520, %v3934, %v3941
        %v3943 = vrot.slane %v3938, 4
        %v3945 = vshrl.u32 %v3675, 16
        %v3947 = vrot.slane %v3945, 7
        %v3948 = vshll.u32 %v3675, 16
        %v3950 = vor.u32 %v3947, %v3948
        %v3951 = vsel %vm520, %v3943, %v3950
        %v3953 = vshrl.u32 %v3676, 16
        %v3955 = vrot.slane %v3953, 7
        %v3956 = vrot.slane %v3955, 4
        %v3958 = vshrl.u32 %v3677, 16
        %v3960 = vrot.slane %v3958, 7
        %v3961 = vshll.u32 %v3677, 16
        %v3963 = vor.u32 %v3960, %v3961
        %v3964 = vsel %vm520, %v3956, %v3963
        %v3965 = vrot.slane %v3960, 4
        %v3967 = vshrl.u32 %v3678, 16
        %v3969 = vrot.slane %v3967, 7
        %v3970 = vshll.u32 %v3678, 16
        %v3972 = vor.u32 %v3969, %v3970
        %v3973 = vsel %vm520, %v3965, %v3972
        %v3975 = vshrl.u32 %v3679, 16
        %v3977 = vrot.slane %v3975, 7
        %v3978 = vrot.slane %v3977, 4
        %v3980 = vshrl.u32 %v3680, 16
        %v3982 = vrot.slane %v3980, 7
        %v3983 = vshll.u32 %v3680, 16
        %v3985 = vor.u32 %v3982, %v3983
        %v3986 = vsel %vm520, %v3978, %v3985
        %v3987 = vrot.slane %v3982, 4
        %v3989 = vshrl.u32 %v3681, 16
        %v3991 = vrot.slane %v3989, 7
        %v3992 = vshll.u32 %v3681, 16
        %v3994 = vor.u32 %v3991, %v3992
        %v3995 = vsel %vm520, %v3987, %v3994
        %v3997 = vshrl.u32 %v3682, 16
        %v3999 = vrot.slane %v3997, 7
        %v4000 = vrot.slane %v3999, 4
        %v4002 = vshrl.u32 %v3683, 16
        %v4004 = vrot.slane %v4002, 7
        %v4005 = vshll.u32 %v3683, 16
        %v4007 = vor.u32 %v4004, %v4005
        %v4008 = vsel %vm520, %v4000, %v4007
        %v4009 = vrot.slane %v4004, 4
        %v4011 = vshrl.u32 %v3684, 16
        %v4013 = vrot.slane %v4011, 7
        %v4014 = vshll.u32 %v3684, 16
        %v4016 = vor.u32 %v4013, %v4014
        %v4017 = vsel %vm520, %v4009, %v4016
        %v4019 = vshrl.u32 %v3685, 16
        %v4021 = vrot.slane %v4019, 7
        %v4022 = vrot.slane %v4021, 4
        %v4024 = vshrl.u32 %v3686, 16
        %v4026 = vrot.slane %v4024, 7
        %v4027 = vshll.u32 %v3686, 16
        %v4029 = vor.u32 %v4026, %v4027
        %v4030 = vsel %vm520, %v4022, %v4029
        %v4031 = vrot.slane %v4026, 4
        %v4033 = vshrl.u32 %v3687, 16
        %v4035 = vrot.slane %v4033, 7
        %v4036 = vshll.u32 %v3687, 16
        %v4038 = vor.u32 %v4035, %v4036
        %v4039 = vsel %vm520, %v4031, %v4038
        %s4040 = scalar_lea.vmem [#allocation6], 384
        %v4041 = vld [vmem:[%s4040] sm:$0xf]
        %v4042 = vld [vmem:[%s4040 + $0x4] sm:$0xf]
        %v4043 = vld [vmem:[%s4040 + $0x8] sm:$0xf]
        %v4044 = vld [vmem:[%s4040 + $0xc] sm:$0xf]
        %v4045 = vld [vmem:[%s4040 + $0x10] sm:$0xf]
        %v4046 = vld [vmem:[%s4040 + $0x14] sm:$0xf]
        %v4047 = vld [vmem:[%s4040 + $0x18] sm:$0xf]
        %v4048 = vld [vmem:[%s4040 + $0x1c] sm:$0xf]
        %v4049 = vld [vmem:[%s4040 + $0x20] sm:$0xf]
        %v4050 = vld [vmem:[%s4040 + $0x24] sm:$0xf]
        %v4051 = vld [vmem:[%s4040 + $0x28] sm:$0xf]
        %v4052 = vld [vmem:[%s4040 + $0x2c] sm:$0xf]
        %v4053 = vld [vmem:[%s4040 + $0x30] sm:$0xf]
        %v4054 = vld [vmem:[%s4040 + $0x34] sm:$0xf]
        %v4055 = vld [vmem:[%s4040 + $0x38] sm:$0xf]
        %v4056 = vld [vmem:[%s4040 + $0x3c] sm:$0xf]
        %v4057 = vunpack.c.l.b16 %v3700
        %v4058 = vunpack.c.l.b16 %v3709
        %v4059 = vunpack.c.l.b16 %v3722
        %v4060 = vunpack.c.l.b16 %v3731
        %v4061 = vunpack.c.l.b16 %v3744
        %v4062 = vunpack.c.l.b16 %v3753
        %v4063 = vunpack.c.l.b16 %v3766
        %v4064 = vunpack.c.l.b16 %v3775
        %v4065 = vunpack.c.l.b16 %v3788
        %v4066 = vunpack.c.l.b16 %v3797
        %v4067 = vunpack.c.l.b16 %v3810
        %v4068 = vunpack.c.l.b16 %v3819
        %v4069 = vunpack.c.l.b16 %v3832
        %v4070 = vunpack.c.l.b16 %v3841
        %v4071 = vunpack.c.l.b16 %v3854
        %v4072 = vunpack.c.l.b16 %v3863
        %v4073 = vunpack.c.l.b16 %v3876
        %v4074 = vunpack.c.l.b16 %v3885
        %v4075 = vunpack.c.l.b16 %v3898
        %v4076 = vunpack.c.l.b16 %v3907
        %v4077 = vunpack.c.l.b16 %v3920
        %v4078 = vunpack.c.l.b16 %v3929
        %v4079 = vunpack.c.l.b16 %v3942
        %v4080 = vunpack.c.l.b16 %v3951
        %v4081 = vunpack.c.l.b16 %v3964
        %v4082 = vunpack.c.l.b16 %v3973
        %v4083 = vunpack.c.l.b16 %v3986
        %v4084 = vunpack.c.l.b16 %v3995
        %v4085 = vunpack.c.l.b16 %v4008
        %v4086 = vunpack.c.l.b16 %v4017
        %v4087 = vunpack.c.l.b16 %v4030
        %v4088 = vunpack.c.l.b16 %v4039
        %v4089 = vpack.c.b16 %v4058, %v4057
        %v4090 = vpack.c.b16 %v4060, %v4059
        %v4091 = vpack.c.b16 %v4062, %v4061
        %v4092 = vpack.c.b16 %v4064, %v4063
        %v4093 = vpack.c.b16 %v4066, %v4065
        %v4094 = vpack.c.b16 %v4068, %v4067
        %v4095 = vpack.c.b16 %v4070, %v4069
        %v4096 = vpack.c.b16 %v4072, %v4071
        %v4097 = vpack.c.b16 %v4074, %v4073
        %v4098 = vpack.c.b16 %v4076, %v4075
        %v4099 = vpack.c.b16 %v4078, %v4077
        %v4100 = vpack.c.b16 %v4080, %v4079
        %v4101 = vpack.c.b16 %v4082, %v4081
        %v4102 = vpack.c.b16 %v4084, %v4083
        %v4103 = vpack.c.b16 %v4086, %v4085
        %v4104 = vpack.c.b16 %v4088, %v4087
        %v4137 = vunpack.c.l.b16 %v4041
        %v4138 = vunpack.c.l.b16 %v4042
        %v4139 = vunpack.c.l.b16 %v4043
        %v4140 = vunpack.c.l.b16 %v4044
        %v4141 = vunpack.c.l.b16 %v4045
        %v4142 = vunpack.c.l.b16 %v4046
        %v4143 = vunpack.c.l.b16 %v4047
        %v4144 = vunpack.c.l.b16 %v4048
        %v4145 = vunpack.c.l.b16 %v4049
        %v4146 = vunpack.c.l.b16 %v4050
        %v4147 = vunpack.c.l.b16 %v4051
        %v4148 = vunpack.c.l.b16 %v4052
        %v4149 = vunpack.c.l.b16 %v4053
        %v4150 = vunpack.c.l.b16 %v4054
        %v4151 = vunpack.c.l.b16 %v4055
        %v4152 = vunpack.c.l.b16 %v4056
        %v4153 = vpack.c.b16 %v4138, %v4137
        %v4154 = vpack.c.b16 %v4140, %v4139
        %v4155 = vpack.c.b16 %v4142, %v4141
        %v4156 = vpack.c.b16 %v4144, %v4143
        %v4157 = vpack.c.b16 %v4146, %v4145
        %v4158 = vpack.c.b16 %v4148, %v4147
        %v4159 = vpack.c.b16 %v4150, %v4149
        %v4160 = vpack.c.b16 %v4152, %v4151
        %4169 = vmatpush.bf16.msra.mxu0 %v4160
        %4170 = vmatpush.bf16.msra.mxu0 %v4159
        %4171 = vmatpush.bf16.msra.mxu0 %v4158
        %4172 = vmatpush.bf16.msra.mxu0 %v4157
        %4173 = vmatpush.bf16.msra.mxu0 %v4156
        %4174 = vmatpush.bf16.msra.mxu0 %v4155
        %4175 = vmatpush.bf16.msra.mxu0 %v4154
        %4176 = vmatpush.bf16.msra.mxu0 %v4153
        %4177 = vmatmul.bf16.gmra.mxu0 %v4089
        %v4178 = vpop.f32.mrf.mxu0
        %v4179 = vadd.f32 0.0, %v4178
        %v4180 = vpop.f32.mrf.mxu0
        %v4181 = vadd.f32 0.0, %v4180
        %4182 = vmatmul.bf16.gmra.mxu0 %v4090
        %v4183 = vpop.f32.mrf.mxu0
        %v4184 = vadd.f32 0.0, %v4183
        %v4185 = vpop.f32.mrf.mxu0
        %v4186 = vadd.f32 0.0, %v4185
        %4187 = vmatmul.bf16.gmra.mxu0 %v4091
        %v4188 = vpop.f32.mrf.mxu0
        %v4189 = vadd.f32 0.0, %v4188
        %v4190 = vpop.f32.mrf.mxu0
        %v4191 = vadd.f32 0.0, %v4190
        %4192 = vmatmul.bf16.gmra.mxu0 %v4092
        %v4193 = vpop.f32.mrf.mxu0
        %v4194 = vadd.f32 0.0, %v4193
        %v4195 = vpop.f32.mrf.mxu0
        %v4196 = vadd.f32 0.0, %v4195
        %4197 = vmatmul.bf16.gmra.mxu0 %v4093
        %v4198 = vpop.f32.mrf.mxu0
        %v4199 = vadd.f32 0.0, %v4198
        %v4200 = vpop.f32.mrf.mxu0
        %v4201 = vadd.f32 0.0, %v4200
        %4202 = vmatmul.bf16.gmra.mxu0 %v4094
        %v4203 = vpop.f32.mrf.mxu0
        %v4204 = vadd.f32 0.0, %v4203
        %v4205 = vpop.f32.mrf.mxu0
        %v4206 = vadd.f32 0.0, %v4205
        %4207 = vmatmul.bf16.gmra.mxu0 %v4095
        %v4208 = vpop.f32.mrf.mxu0
        %v4209 = vadd.f32 0.0, %v4208
        %v4210 = vpop.f32.mrf.mxu0
        %v4211 = vadd.f32 0.0, %v4210
        %4212 = vmatmul.bf16.gmra.mxu0 %v4096
        %v4213 = vpop.f32.mrf.mxu0
        %v4214 = vadd.f32 0.0, %v4213
        %v4215 = vpop.f32.mrf.mxu0
        %v4216 = vadd.f32 0.0, %v4215
        %4217 = vmatmul.bf16.gmra.mxu0 %v4097
        %v4218 = vpop.f32.mrf.mxu0
        %v4219 = vadd.f32 0.0, %v4218
        %v4220 = vpop.f32.mrf.mxu0
        %v4221 = vadd.f32 0.0, %v4220
        %4222 = vmatmul.bf16.gmra.mxu0 %v4098
        %v4223 = vpop.f32.mrf.mxu0
        %v4224 = vadd.f32 0.0, %v4223
        %v4225 = vpop.f32.mrf.mxu0
        %v4226 = vadd.f32 0.0, %v4225
        %4227 = vmatmul.bf16.gmra.mxu0 %v4099
        %v4228 = vpop.f32.mrf.mxu0
        %v4229 = vadd.f32 0.0, %v4228
        %v4230 = vpop.f32.mrf.mxu0
        %v4231 = vadd.f32 0.0, %v4230
        %4232 = vmatmul.bf16.gmra.mxu0 %v4100
        %v4233 = vpop.f32.mrf.mxu0
        %v4234 = vadd.f32 0.0, %v4233
        %v4235 = vpop.f32.mrf.mxu0
        %v4236 = vadd.f32 0.0, %v4235
        %4237 = vmatmul.bf16.gmra.mxu0 %v4101
        %v4238 = vpop.f32.mrf.mxu0
        %v4239 = vadd.f32 0.0, %v4238
        %v4240 = vpop.f32.mrf.mxu0
        %v4241 = vadd.f32 0.0, %v4240
        %4242 = vmatmul.bf16.gmra.mxu0 %v4102
        %v4243 = vpop.f32.mrf.mxu0
        %v4244 = vadd.f32 0.0, %v4243
        %v4245 = vpop.f32.mrf.mxu0
        %v4246 = vadd.f32 0.0, %v4245
        %4247 = vmatmul.bf16.gmra.mxu0 %v4103
        %v4248 = vpop.f32.mrf.mxu0
        %v4249 = vadd.f32 0.0, %v4248
        %v4250 = vpop.f32.mrf.mxu0
        %v4251 = vadd.f32 0.0, %v4250
        %4252 = vmatmul.bf16.gmra.mxu0 %v4104
        %v4253 = vpop.f32.mrf.mxu0
        %v4254 = vadd.f32 0.0, %v4253
        %v4255 = vpop.f32.mrf.mxu0
        %v4256 = vadd.f32 0.0, %v4255
        %4257 = vdwg.mxu0
        %v4258 = vadd.f32 %v3607, %v4179
        %v4259 = vadd.f32 %v3608, %v4181
        %v4260 = vadd.f32 %v3609, %v4184
        %v4261 = vadd.f32 %v3610, %v4186
        %v4262 = vadd.f32 %v3611, %v4189
        %v4263 = vadd.f32 %v3612, %v4191
        %v4264 = vadd.f32 %v3613, %v4194
        %v4265 = vadd.f32 %v3614, %v4196
        %v4266 = vadd.f32 %v3615, %v4199
        %v4267 = vadd.f32 %v3616, %v4201
        %v4268 = vadd.f32 %v3617, %v4204
        %v4269 = vadd.f32 %v3618, %v4206
        %v4270 = vadd.f32 %v3619, %v4209
        %v4271 = vadd.f32 %v3620, %v4211
        %v4272 = vadd.f32 %v3621, %v4214
        %v4273 = vadd.f32 %v3622, %v4216
        %v4274 = vadd.f32 %v3623, %v4219
        %v4275 = vadd.f32 %v3624, %v4221
        %v4276 = vadd.f32 %v3625, %v4224
        %v4277 = vadd.f32 %v3626, %v4226
        %v4278 = vadd.f32 %v3627, %v4229
        %v4279 = vadd.f32 %v3628, %v4231
        %v4280 = vadd.f32 %v3629, %v4234
        %v4281 = vadd.f32 %v3630, %v4236
        %v4282 = vadd.f32 %v3631, %v4239
        %v4283 = vadd.f32 %v3632, %v4241
        %v4284 = vadd.f32 %v3633, %v4244
        %v4285 = vadd.f32 %v3634, %v4246
        %v4286 = vadd.f32 %v3635, %v4249
        %v4287 = vadd.f32 %v3636, %v4251
        %v4288 = vadd.f32 %v3637, %v4254
        %v4289 = vadd.f32 %v3638, %v4256
        %s4290 = scalar_lea.vmem [#allocation6], 448
        %v4291 = vld [vmem:[%s4290] sm:$0xf]
        %v4292 = vld [vmem:[%s4290 + $0x4] sm:$0xf]
        %v4293 = vld [vmem:[%s4290 + $0x8] sm:$0xf]
        %v4294 = vld [vmem:[%s4290 + $0xc] sm:$0xf]
        %v4295 = vld [vmem:[%s4290 + $0x10] sm:$0xf]
        %v4296 = vld [vmem:[%s4290 + $0x14] sm:$0xf]
        %v4297 = vld [vmem:[%s4290 + $0x18] sm:$0xf]
        %v4298 = vld [vmem:[%s4290 + $0x1c] sm:$0xf]
        %v4299 = vld [vmem:[%s4290 + $0x20] sm:$0xf]
        %v4300 = vld [vmem:[%s4290 + $0x24] sm:$0xf]
        %v4301 = vld [vmem:[%s4290 + $0x28] sm:$0xf]
        %v4302 = vld [vmem:[%s4290 + $0x2c] sm:$0xf]
        %v4303 = vld [vmem:[%s4290 + $0x30] sm:$0xf]
        %v4304 = vld [vmem:[%s4290 + $0x34] sm:$0xf]
        %v4305 = vld [vmem:[%s4290 + $0x38] sm:$0xf]
        %v4306 = vld [vmem:[%s4290 + $0x3c] sm:$0xf]
        %v4339 = vunpack.c.l.b16 %v3641
        %v4340 = vunpack.c.l.b16 %v3642
        %v4341 = vunpack.c.l.b16 %v3644
        %v4342 = vunpack.c.l.b16 %v3645
        %v4343 = vunpack.c.l.b16 %v3647
        %v4344 = vunpack.c.l.b16 %v3648
        %v4345 = vunpack.c.l.b16 %v3650
        %v4346 = vunpack.c.l.b16 %v3651
        %v4347 = vunpack.c.l.b16 %v3653
        %v4348 = vunpack.c.l.b16 %v3654
        %v4349 = vunpack.c.l.b16 %v3656
        %v4350 = vunpack.c.l.b16 %v3657
        %v4351 = vunpack.c.l.b16 %v3659
        %v4352 = vunpack.c.l.b16 %v3660
        %v4353 = vunpack.c.l.b16 %v3662
        %v4354 = vunpack.c.l.b16 %v3663
        %v4355 = vunpack.c.l.b16 %v3665
        %v4356 = vunpack.c.l.b16 %v3666
        %v4357 = vunpack.c.l.b16 %v3668
        %v4358 = vunpack.c.l.b16 %v3669
        %v4359 = vunpack.c.l.b16 %v3671
        %v4360 = vunpack.c.l.b16 %v3672
        %v4361 = vunpack.c.l.b16 %v3674
        %v4362 = vunpack.c.l.b16 %v3675
        %v4363 = vunpack.c.l.b16 %v3677
        %v4364 = vunpack.c.l.b16 %v3678
        %v4365 = vunpack.c.l.b16 %v3680
        %v4366 = vunpack.c.l.b16 %v3681
        %v4367 = vunpack.c.l.b16 %v3683
        %v4368 = vunpack.c.l.b16 %v3684
        %v4369 = vunpack.c.l.b16 %v3686
        %v4370 = vunpack.c.l.b16 %v3687
        %v4371 = vpack.c.b16 %v4340, %v4339
        %v4372 = vpack.c.b16 %v4342, %v4341
        %v4373 = vpack.c.b16 %v4344, %v4343
        %v4374 = vpack.c.b16 %v4346, %v4345
        %v4375 = vpack.c.b16 %v4348, %v4347
        %v4376 = vpack.c.b16 %v4350, %v4349
        %v4377 = vpack.c.b16 %v4352, %v4351
        %v4378 = vpack.c.b16 %v4354, %v4353
        %v4379 = vpack.c.b16 %v4356, %v4355
        %v4380 = vpack.c.b16 %v4358, %v4357
        %v4381 = vpack.c.b16 %v4360, %v4359
        %v4382 = vpack.c.b16 %v4362, %v4361
        %v4383 = vpack.c.b16 %v4364, %v4363
        %v4384 = vpack.c.b16 %v4366, %v4365
        %v4385 = vpack.c.b16 %v4368, %v4367
        %v4386 = vpack.c.b16 %v4370, %v4369
        %v4419 = vunpack.c.l.b16 %v4291
        %v4420 = vunpack.c.l.b16 %v4292
        %v4421 = vunpack.c.l.b16 %v4293
        %v4422 = vunpack.c.l.b16 %v4294
        %v4423 = vunpack.c.l.b16 %v4295
        %v4424 = vunpack.c.l.b16 %v4296
        %v4425 = vunpack.c.l.b16 %v4297
        %v4426 = vunpack.c.l.b16 %v4298
        %v4427 = vunpack.c.l.b16 %v4299
        %v4428 = vunpack.c.l.b16 %v4300
        %v4429 = vunpack.c.l.b16 %v4301
        %v4430 = vunpack.c.l.b16 %v4302
        %v4431 = vunpack.c.l.b16 %v4303
        %v4432 = vunpack.c.l.b16 %v4304
        %v4433 = vunpack.c.l.b16 %v4305
        %v4434 = vunpack.c.l.b16 %v4306
        %v4435 = vpack.c.b16 %v4420, %v4419
        %v4436 = vpack.c.b16 %v4422, %v4421
        %v4437 = vpack.c.b16 %v4424, %v4423
        %v4438 = vpack.c.b16 %v4426, %v4425
        %v4439 = vpack.c.b16 %v4428, %v4427
        %v4440 = vpack.c.b16 %v4430, %v4429
        %v4441 = vpack.c.b16 %v4432, %v4431
        %v4442 = vpack.c.b16 %v4434, %v4433
        %4451 = vmatpush.bf16.msra.mxu0 %v4442
        %4452 = vmatpush.bf16.msra.mxu0 %v4441
        %4453 = vmatpush.bf16.msra.mxu0 %v4440
        %4454 = vmatpush.bf16.msra.mxu0 %v4439
        %4455 = vmatpush.bf16.msra.mxu0 %v4438
        %4456 = vmatpush.bf16.msra.mxu0 %v4437
        %4457 = vmatpush.bf16.msra.mxu0 %v4436
        %4458 = vmatpush.bf16.msra.mxu0 %v4435
        %4459 = vmatmul.bf16.gmra.mxu0 %v4371
        %v4460 = vpop.f32.mrf.mxu0
        %v4461 = vadd.f32 0.0, %v4460
        %v4462 = vpop.f32.mrf.mxu0
        %v4463 = vadd.f32 0.0, %v4462
        %4464 = vmatmul.bf16.gmra.mxu0 %v4372
        %v4465 = vpop.f32.mrf.mxu0
        %v4466 = vadd.f32 0.0, %v4465
        %v4467 = vpop.f32.mrf.mxu0
        %v4468 = vadd.f32 0.0, %v4467
        %4469 = vmatmul.bf16.gmra.mxu0 %v4373
        %v4470 = vpop.f32.mrf.mxu0
        %v4471 = vadd.f32 0.0, %v4470
        %v4472 = vpop.f32.mrf.mxu0
        %v4473 = vadd.f32 0.0, %v4472
        %4474 = vmatmul.bf16.gmra.mxu0 %v4374
        %v4475 = vpop.f32.mrf.mxu0
        %v4476 = vadd.f32 0.0, %v4475
        %v4477 = vpop.f32.mrf.mxu0
        %v4478 = vadd.f32 0.0, %v4477
        %4479 = vmatmul.bf16.gmra.mxu0 %v4375
        %v4480 = vpop.f32.mrf.mxu0
        %v4481 = vadd.f32 0.0, %v4480
        %v4482 = vpop.f32.mrf.mxu0
        %v4483 = vadd.f32 0.0, %v4482
        %4484 = vmatmul.bf16.gmra.mxu0 %v4376
        %v4485 = vpop.f32.mrf.mxu0
        %v4486 = vadd.f32 0.0, %v4485
        %v4487 = vpop.f32.mrf.mxu0
        %v4488 = vadd.f32 0.0, %v4487
        %4489 = vmatmul.bf16.gmra.mxu0 %v4377
        %v4490 = vpop.f32.mrf.mxu0
        %v4491 = vadd.f32 0.0, %v4490
        %v4492 = vpop.f32.mrf.mxu0
        %v4493 = vadd.f32 0.0, %v4492
        %4494 = vmatmul.bf16.gmra.mxu0 %v4378
        %v4495 = vpop.f32.mrf.mxu0
        %v4496 = vadd.f32 0.0, %v4495
        %v4497 = vpop.f32.mrf.mxu0
        %v4498 = vadd.f32 0.0, %v4497
        %4499 = vmatmul.bf16.gmra.mxu0 %v4379
        %v4500 = vpop.f32.mrf.mxu0
        %v4501 = vadd.f32 0.0, %v4500
        %v4502 = vpop.f32.mrf.mxu0
        %v4503 = vadd.f32 0.0, %v4502
        %4504 = vmatmul.bf16.gmra.mxu0 %v4380
        %v4505 = vpop.f32.mrf.mxu0
        %v4506 = vadd.f32 0.0, %v4505
        %v4507 = vpop.f32.mrf.mxu0
        %v4508 = vadd.f32 0.0, %v4507
        %4509 = vmatmul.bf16.gmra.mxu0 %v4381
        %v4510 = vpop.f32.mrf.mxu0
        %v4511 = vadd.f32 0.0, %v4510
        %v4512 = vpop.f32.mrf.mxu0
        %v4513 = vadd.f32 0.0, %v4512
        %4514 = vmatmul.bf16.gmra.mxu0 %v4382
        %v4515 = vpop.f32.mrf.mxu0
        %v4516 = vadd.f32 0.0, %v4515
        %v4517 = vpop.f32.mrf.mxu0
        %v4518 = vadd.f32 0.0, %v4517
        %4519 = vmatmul.bf16.gmra.mxu0 %v4383
        %v4520 = vpop.f32.mrf.mxu0
        %v4521 = vadd.f32 0.0, %v4520
        %v4522 = vpop.f32.mrf.mxu0
        %v4523 = vadd.f32 0.0, %v4522
        %4524 = vmatmul.bf16.gmra.mxu0 %v4384
        %v4525 = vpop.f32.mrf.mxu0
        %v4526 = vadd.f32 0.0, %v4525
        %v4527 = vpop.f32.mrf.mxu0
        %v4528 = vadd.f32 0.0, %v4527
        %4529 = vmatmul.bf16.gmra.mxu0 %v4385
        %v4530 = vpop.f32.mrf.mxu0
        %v4531 = vadd.f32 0.0, %v4530
        %v4532 = vpop.f32.mrf.mxu0
        %v4533 = vadd.f32 0.0, %v4532
        %4534 = vmatmul.bf16.gmra.mxu0 %v4386
        %v4535 = vpop.f32.mrf.mxu0
        %v4536 = vadd.f32 0.0, %v4535
        %v4537 = vpop.f32.mrf.mxu0
        %v4538 = vadd.f32 0.0, %v4537
        %4539 = vdwg.mxu0
        %v4540 = vadd.f32 %v4258, %v4461
        %v4541 = vadd.f32 %v4259, %v4463
        %v4542 = vadd.f32 %v4260, %v4466
        %v4543 = vadd.f32 %v4261, %v4468
        %v4544 = vadd.f32 %v4262, %v4471
        %v4545 = vadd.f32 %v4263, %v4473
        %v4546 = vadd.f32 %v4264, %v4476
        %v4547 = vadd.f32 %v4265, %v4478
        %v4548 = vadd.f32 %v4266, %v4481
        %v4549 = vadd.f32 %v4267, %v4483
        %v4550 = vadd.f32 %v4268, %v4486
        %v4551 = vadd.f32 %v4269, %v4488
        %v4552 = vadd.f32 %v4270, %v4491
        %v4553 = vadd.f32 %v4271, %v4493
        %v4554 = vadd.f32 %v4272, %v4496
        %v4555 = vadd.f32 %v4273, %v4498
        %v4556 = vadd.f32 %v4274, %v4501
        %v4557 = vadd.f32 %v4275, %v4503
        %v4558 = vadd.f32 %v4276, %v4506
        %v4559 = vadd.f32 %v4277, %v4508
        %v4560 = vadd.f32 %v4278, %v4511
        %v4561 = vadd.f32 %v4279, %v4513
        %v4562 = vadd.f32 %v4280, %v4516
        %v4563 = vadd.f32 %v4281, %v4518
        %v4564 = vadd.f32 %v4282, %v4521
        %v4565 = vadd.f32 %v4283, %v4523
        %v4566 = vadd.f32 %v4284, %v4526
        %v4567 = vadd.f32 %v4285, %v4528
        %v4568 = vadd.f32 %v4286, %v4531
        %v4569 = vadd.f32 %v4287, %v4533
        %v4570 = vadd.f32 %v4288, %v4536
        %v4571 = vadd.f32 %v4289, %v4538
        %v4572 = vld [vmem:[%s3639 + $0x8] sm:$0xf]
        %v4573 = vld [vmem:[%s3639 + $0xc] sm:$0xf]
        %v4574 = vld [vmem:[%s3639 + $0x10] sm:$0x1]
        %v4575 = vld [vmem:[%s3639 + $0x20] sm:$0xf]
        %v4576 = vld [vmem:[%s3639 + $0x24] sm:$0xf]
        %v4577 = vld [vmem:[%s3639 + $0x28] sm:$0x1]
        %v4578 = vld [vmem:[%s3639 + $0x38] sm:$0xf]
        %v4579 = vld [vmem:[%s3639 + $0x3c] sm:$0xf]
        %v4580 = vld [vmem:[%s3639 + $0x40] sm:$0x1]
        %v4581 = vld [vmem:[%s3639 + $0x50] sm:$0xf]
        %v4582 = vld [vmem:[%s3639 + $0x54] sm:$0xf]
        %v4583 = vld [vmem:[%s3639 + $0x58] sm:$0x1]
        %v4584 = vld [vmem:[%s3639 + $0x68] sm:$0xf]
        %v4585 = vld [vmem:[%s3639 + $0x6c] sm:$0xf]
        %v4586 = vld [vmem:[%s3639 + $0x70] sm:$0x1]
        %v4587 = vld [vmem:[%s3639 + $0x80] sm:$0xf]
        %v4588 = vld [vmem:[%s3639 + $0x84] sm:$0xf]
        %v4589 = vld [vmem:[%s3639 + $0x88] sm:$0x1]
        %v4590 = vld [vmem:[%s3639 + $0x98] sm:$0xf]
        %v4591 = vld [vmem:[%s3639 + $0x9c] sm:$0xf]
        %v4592 = vld [vmem:[%s3639 + $0xa0] sm:$0x1]
        %v4593 = vld [vmem:[%s3639 + $0xb0] sm:$0xf]
        %v4594 = vld [vmem:[%s3639 + $0xb4] sm:$0xf]
        %v4595 = vld [vmem:[%s3639 + $0xb8] sm:$0x1]
        %v4596 = vld [vmem:[%s3639 + $0xc8] sm:$0xf]
        %v4597 = vld [vmem:[%s3639 + $0xcc] sm:$0xf]
        %v4598 = vld [vmem:[%s3639 + $0xd0] sm:$0x1]
        %v4599 = vld [vmem:[%s3639 + $0xe0] sm:$0xf]
        %v4600 = vld [vmem:[%s3639 + $0xe4] sm:$0xf]
        %v4601 = vld [vmem:[%s3639 + $0xe8] sm:$0x1]
        %v4602 = vld [vmem:[%s3639 + $0xf8] sm:$0xf]
        %v4603 = vld [vmem:[%s3639 + $0xfc] sm:$0xf]
        %v4604 = vld [vmem:[%s3639 + $0x100] sm:$0x1]
        %v4605 = vld [vmem:[%s3639 + $0x110] sm:$0xf]
        %v4606 = vld [vmem:[%s3639 + $0x114] sm:$0xf]
        %v4607 = vld [vmem:[%s3639 + $0x118] sm:$0x1]
        %v4608 = vld [vmem:[%s3639 + $0x128] sm:$0xf]
        %v4609 = vld [vmem:[%s3639 + $0x12c] sm:$0xf]
        %v4610 = vld [vmem:[%s3639 + $0x130] sm:$0x1]
        %v4611 = vld [vmem:[%s3639 + $0x140] sm:$0xf]
        %v4612 = vld [vmem:[%s3639 + $0x144] sm:$0xf]
        %v4613 = vld [vmem:[%s3639 + $0x148] sm:$0x1]
        %v4614 = vld [vmem:[%s3639 + $0x158] sm:$0xf]
        %v4615 = vld [vmem:[%s3639 + $0x15c] sm:$0xf]
        %v4616 = vld [vmem:[%s3639 + $0x160] sm:$0x1]
        %v4617 = vld [vmem:[%s3639 + $0x170] sm:$0xf]
        %v4618 = vld [vmem:[%s3639 + $0x174] sm:$0xf]
        %v4619 = vld [vmem:[%s3639 + $0x178] sm:$0x1]
        %v4621 = vshrl.u32 %v4572, 16
        %v4623 = vrot.slane %v4621, 4
        %v4624 = vshll.u32 %v4572, 16
        %v4626 = vrot.slane %v4624, 5
        %v4627 = vor.u32 %v4623, %v4626
        %v4628 = vrot.slane %v4627, 4
        %v4630 = vshll.u32 %v4573, 16
        %v4632 = vrot.slane %v4630, 5
        %v4633 = vsel %vm1390, %v4628, %v4632
        %v4634 = vshrl.u32 %v4573, 16
        %v4636 = vrot.slane %v4634, 4
        %v4637 = vor.u32 %v4636, %v4632
        %v4638 = vrot.slane %v4637, 4
        %v4640 = vshll.u32 %v4574, 16
        %v4642 = vrot.slane %v4640, 5
        %v4643 = vsel %vm1390, %v4638, %v4642
        %v4645 = vshrl.u32 %v4575, 16
        %v4647 = vrot.slane %v4645, 4
        %v4648 = vshll.u32 %v4575, 16
        %v4650 = vrot.slane %v4648, 5
        %v4651 = vor.u32 %v4647, %v4650
        %v4652 = vrot.slane %v4651, 4
        %v4654 = vshll.u32 %v4576, 16
        %v4656 = vrot.slane %v4654, 5
        %v4657 = vsel %vm1390, %v4652, %v4656
        %v4658 = vshrl.u32 %v4576, 16
        %v4660 = vrot.slane %v4658, 4
        %v4661 = vor.u32 %v4660, %v4656
        %v4662 = vrot.slane %v4661, 4
        %v4664 = vshll.u32 %v4577, 16
        %v4666 = vrot.slane %v4664, 5
        %v4667 = vsel %vm1390, %v4662, %v4666
        %v4669 = vshrl.u32 %v4578, 16
        %v4671 = vrot.slane %v4669, 4
        %v4672 = vshll.u32 %v4578, 16
        %v4674 = vrot.slane %v4672, 5
        %v4675 = vor.u32 %v4671, %v4674
        %v4676 = vrot.slane %v4675, 4
        %v4678 = vshll.u32 %v4579, 16
        %v4680 = vrot.slane %v4678, 5
        %v4681 = vsel %vm1390, %v4676, %v4680
        %v4682 = vshrl.u32 %v4579, 16
        %v4684 = vrot.slane %v4682, 4
        %v4685 = vor.u32 %v4684, %v4680
        %v4686 = vrot.slane %v4685, 4
        %v4688 = vshll.u32 %v4580, 16
        %v4690 = vrot.slane %v4688, 5
        %v4691 = vsel %vm1390, %v4686, %v4690
        %v4693 = vshrl.u32 %v4581, 16
        %v4695 = vrot.slane %v4693, 4
        %v4696 = vshll.u32 %v4581, 16
        %v4698 = vrot.slane %v4696, 5
        %v4699 = vor.u32 %v4695, %v4698
        %v4700 = vrot.slane %v4699, 4
        %v4702 = vshll.u32 %v4582, 16
        %v4704 = vrot.slane %v4702, 5
        %v4705 = vsel %vm1390, %v4700, %v4704
        %v4706 = vshrl.u32 %v4582, 16
        %v4708 = vrot.slane %v4706, 4
        %v4709 = vor.u32 %v4708, %v4704
        %v4710 = vrot.slane %v4709, 4
        %v4712 = vshll.u32 %v4583, 16
        %v4714 = vrot.slane %v4712, 5
        %v4715 = vsel %vm1390, %v4710, %v4714
        %v4717 = vshrl.u32 %v4584, 16
        %v4719 = vrot.slane %v4717, 4
        %v4720 = vshll.u32 %v4584, 16
        %v4722 = vrot.slane %v4720, 5
        %v4723 = vor.u32 %v4719, %v4722
        %v4724 = vrot.slane %v4723, 4
        %v4726 = vshll.u32 %v4585, 16
        %v4728 = vrot.slane %v4726, 5
        %v4729 = vsel %vm1390, %v4724, %v4728
        %v4730 = vshrl.u32 %v4585, 16
        %v4732 = vrot.slane %v4730, 4
        %v4733 = vor.u32 %v4732, %v4728
        %v4734 = vrot.slane %v4733, 4
        %v4736 = vshll.u32 %v4586, 16
        %v4738 = vrot.slane %v4736, 5
        %v4739 = vsel %vm1390, %v4734, %v4738
        %v4741 = vshrl.u32 %v4587, 16
        %v4743 = vrot.slane %v4741, 4
        %v4744 = vshll.u32 %v4587, 16
        %v4746 = vrot.slane %v4744, 5
        %v4747 = vor.u32 %v4743, %v4746
        %v4748 = vrot.slane %v4747, 4
        %v4750 = vshll.u32 %v4588, 16
        %v4752 = vrot.slane %v4750, 5
        %v4753 = vsel %vm1390, %v4748, %v4752
        %v4754 = vshrl.u32 %v4588, 16
        %v4756 = vrot.slane %v4754, 4
        %v4757 = vor.u32 %v4756, %v4752
        %v4758 = vrot.slane %v4757, 4
        %v4760 = vshll.u32 %v4589, 16
        %v4762 = vrot.slane %v4760, 5
        %v4763 = vsel %vm1390, %v4758, %v4762
        %v4765 = vshrl.u32 %v4590, 16
        %v4767 = vrot.slane %v4765, 4
        %v4768 = vshll.u32 %v4590, 16
        %v4770 = vrot.slane %v4768, 5
        %v4771 = vor.u32 %v4767, %v4770
        %v4772 = vrot.slane %v4771, 4
        %v4774 = vshll.u32 %v4591, 16
        %v4776 = vrot.slane %v4774, 5
        %v4777 = vsel %vm1390, %v4772, %v4776
        %v4778 = vshrl.u32 %v4591, 16
        %v4780 = vrot.slane %v4778, 4
        %v4781 = vor.u32 %v4780, %v4776
        %v4782 = vrot.slane %v4781, 4
        %v4784 = vshll.u32 %v4592, 16
        %v4786 = vrot.slane %v4784, 5
        %v4787 = vsel %vm1390, %v4782, %v4786
        %v4789 = vshrl.u32 %v4593, 16
        %v4791 = vrot.slane %v4789, 4
        %v4792 = vshll.u32 %v4593, 16
        %v4794 = vrot.slane %v4792, 5
        %v4795 = vor.u32 %v4791, %v4794
        %v4796 = vrot.slane %v4795, 4
        %v4798 = vshll.u32 %v4594, 16
        %v4800 = vrot.slane %v4798, 5
        %v4801 = vsel %vm1390, %v4796, %v4800
        %v4802 = vshrl.u32 %v4594, 16
        %v4804 = vrot.slane %v4802, 4
        %v4805 = vor.u32 %v4804, %v4800
        %v4806 = vrot.slane %v4805, 4
        %v4808 = vshll.u32 %v4595, 16
        %v4810 = vrot.slane %v4808, 5
        %v4811 = vsel %vm1390, %v4806, %v4810
        %v4813 = vshrl.u32 %v4596, 16
        %v4815 = vrot.slane %v4813, 4
        %v4816 = vshll.u32 %v4596, 16
        %v4818 = vrot.slane %v4816, 5
        %v4819 = vor.u32 %v4815, %v4818
        %v4820 = vrot.slane %v4819, 4
        %v4822 = vshll.u32 %v4597, 16
        %v4824 = vrot.slane %v4822, 5
        %v4825 = vsel %vm1390, %v4820, %v4824
        %v4826 = vshrl.u32 %v4597, 16
        %v4828 = vrot.slane %v4826, 4
        %v4829 = vor.u32 %v4828, %v4824
        %v4830 = vrot.slane %v4829, 4
        %v4832 = vshll.u32 %v4598, 16
        %v4834 = vrot.slane %v4832, 5
        %v4835 = vsel %vm1390, %v4830, %v4834
        %v4837 = vshrl.u32 %v4599, 16
        %v4839 = vrot.slane %v4837, 4
        %v4840 = vshll.u32 %v4599, 16
        %v4842 = vrot.slane %v4840, 5
        %v4843 = vor.u32 %v4839, %v4842
        %v4844 = vrot.slane %v4843, 4
        %v4846 = vshll.u32 %v4600, 16
        %v4848 = vrot.slane %v4846, 5
        %v4849 = vsel %vm1390, %v4844, %v4848
        %v4850 = vshrl.u32 %v4600, 16
        %v4852 = vrot.slane %v4850, 4
        %v4853 = vor.u32 %v4852, %v4848
        %v4854 = vrot.slane %v4853, 4
        %v4856 = vshll.u32 %v4601, 16
        %v4858 = vrot.slane %v4856, 5
        %v4859 = vsel %vm1390, %v4854, %v4858
        %v4861 = vshrl.u32 %v4602, 16
        %v4863 = vrot.slane %v4861, 4
        %v4864 = vshll.u32 %v4602, 16
        %v4866 = vrot.slane %v4864, 5
        %v4867 = vor.u32 %v4863, %v4866
        %v4868 = vrot.slane %v4867, 4
        %v4870 = vshll.u32 %v4603, 16
        %v4872 = vrot.slane %v4870, 5
        %v4873 = vsel %vm1390, %v4868, %v4872
        %v4874 = vshrl.u32 %v4603, 16
        %v4876 = vrot.slane %v4874, 4
        %v4877 = vor.u32 %v4876, %v4872
        %v4878 = vrot.slane %v4877, 4
        %v4880 = vshll.u32 %v4604, 16
        %v4882 = vrot.slane %v4880, 5
        %v4883 = vsel %vm1390, %v4878, %v4882
        %v4885 = vshrl.u32 %v4605, 16
        %v4887 = vrot.slane %v4885, 4
        %v4888 = vshll.u32 %v4605, 16
        %v4890 = vrot.slane %v4888, 5
        %v4891 = vor.u32 %v4887, %v4890
        %v4892 = vrot.slane %v4891, 4
        %v4894 = vshll.u32 %v4606, 16
        %v4896 = vrot.slane %v4894, 5
        %v4897 = vsel %vm1390, %v4892, %v4896
        %v4898 = vshrl.u32 %v4606, 16
        %v4900 = vrot.slane %v4898, 4
        %v4901 = vor.u32 %v4900, %v4896
        %v4902 = vrot.slane %v4901, 4
        %v4904 = vshll.u32 %v4607, 16
        %v4906 = vrot.slane %v4904, 5
        %v4907 = vsel %vm1390, %v4902, %v4906
        %v4909 = vshrl.u32 %v4608, 16
        %v4911 = vrot.slane %v4909, 4
        %v4912 = vshll.u32 %v4608, 16
        %v4914 = vrot.slane %v4912, 5
        %v4915 = vor.u32 %v4911, %v4914
        %v4916 = vrot.slane %v4915, 4
        %v4918 = vshll.u32 %v4609, 16
        %v4920 = vrot.slane %v4918, 5
        %v4921 = vsel %vm1390, %v4916, %v4920
        %v4922 = vshrl.u32 %v4609, 16
        %v4924 = vrot.slane %v4922, 4
        %v4925 = vor.u32 %v4924, %v4920
        %v4926 = vrot.slane %v4925, 4
        %v4928 = vshll.u32 %v4610, 16
        %v4930 = vrot.slane %v4928, 5
        %v4931 = vsel %vm1390, %v4926, %v4930
        %v4933 = vshrl.u32 %v4611, 16
        %v4935 = vrot.slane %v4933, 4
        %v4936 = vshll.u32 %v4611, 16
        %v4938 = vrot.slane %v4936, 5
        %v4939 = vor.u32 %v4935, %v4938
        %v4940 = vrot.slane %v4939, 4
        %v4942 = vshll.u32 %v4612, 16
        %v4944 = vrot.slane %v4942, 5
        %v4945 = vsel %vm1390, %v4940, %v4944
        %v4946 = vshrl.u32 %v4612, 16
        %v4948 = vrot.slane %v4946, 4
        %v4949 = vor.u32 %v4948, %v4944
        %v4950 = vrot.slane %v4949, 4
        %v4952 = vshll.u32 %v4613, 16
        %v4954 = vrot.slane %v4952, 5
        %v4955 = vsel %vm1390, %v4950, %v4954
        %v4957 = vshrl.u32 %v4614, 16
        %v4959 = vrot.slane %v4957, 4
        %v4960 = vshll.u32 %v4614, 16
        %v4962 = vrot.slane %v4960, 5
        %v4963 = vor.u32 %v4959, %v4962
        %v4964 = vrot.slane %v4963, 4
        %v4966 = vshll.u32 %v4615, 16
        %v4968 = vrot.slane %v4966, 5
        %v4969 = vsel %vm1390, %v4964, %v4968
        %v4970 = vshrl.u32 %v4615, 16
        %v4972 = vrot.slane %v4970, 4
        %v4973 = vor.u32 %v4972, %v4968
        %v4974 = vrot.slane %v4973, 4
        %v4976 = vshll.u32 %v4616, 16
        %v4978 = vrot.slane %v4976, 5
        %v4979 = vsel %vm1390, %v4974, %v4978
        %v4981 = vshrl.u32 %v4617, 16
        %v4983 = vrot.slane %v4981, 4
        %v4984 = vshll.u32 %v4617, 16
        %v4986 = vrot.slane %v4984, 5
        %v4987 = vor.u32 %v4983, %v4986
        %v4988 = vrot.slane %v4987, 4
        %v4990 = vshll.u32 %v4618, 16
        %v4992 = vrot.slane %v4990, 5
        %v4993 = vsel %vm1390, %v4988, %v4992
        %v4994 = vshrl.u32 %v4618, 16
        %v4996 = vrot.slane %v4994, 4
        %v4997 = vor.u32 %v4996, %v4992
        %v4998 = vrot.slane %v4997, 4
        %v5000 = vshll.u32 %v4619, 16
        %v5002 = vrot.slane %v5000, 5
        %v5003 = vsel %vm1390, %v4998, %v5002
        %s5004 = scalar_lea.vmem [#allocation6], 512
        %v5005 = vld [vmem:[%s5004] sm:$0xf]
        %v5006 = vld [vmem:[%s5004 + $0x4] sm:$0xf]
        %v5007 = vld [vmem:[%s5004 + $0x8] sm:$0xf]
        %v5008 = vld [vmem:[%s5004 + $0xc] sm:$0xf]
        %v5009 = vld [vmem:[%s5004 + $0x10] sm:$0xf]
        %v5010 = vld [vmem:[%s5004 + $0x14] sm:$0xf]
        %v5011 = vld [vmem:[%s5004 + $0x18] sm:$0xf]
        %v5012 = vld [vmem:[%s5004 + $0x1c] sm:$0xf]
        %v5013 = vld [vmem:[%s5004 + $0x20] sm:$0xf]
        %v5014 = vld [vmem:[%s5004 + $0x24] sm:$0xf]
        %v5015 = vld [vmem:[%s5004 + $0x28] sm:$0xf]
        %v5016 = vld [vmem:[%s5004 + $0x2c] sm:$0xf]
        %v5017 = vld [vmem:[%s5004 + $0x30] sm:$0xf]
        %v5018 = vld [vmem:[%s5004 + $0x34] sm:$0xf]
        %v5019 = vld [vmem:[%s5004 + $0x38] sm:$0xf]
        %v5020 = vld [vmem:[%s5004 + $0x3c] sm:$0xf]
        %v5021 = vunpack.c.l.b16 %v4633
        %v5022 = vunpack.c.l.b16 %v4643
        %v5023 = vunpack.c.l.b16 %v4657
        %v5024 = vunpack.c.l.b16 %v4667
        %v5025 = vunpack.c.l.b16 %v4681
        %v5026 = vunpack.c.l.b16 %v4691
        %v5027 = vunpack.c.l.b16 %v4705
        %v5028 = vunpack.c.l.b16 %v4715
        %v5029 = vunpack.c.l.b16 %v4729
        %v5030 = vunpack.c.l.b16 %v4739
        %v5031 = vunpack.c.l.b16 %v4753
        %v5032 = vunpack.c.l.b16 %v4763
        %v5033 = vunpack.c.l.b16 %v4777
        %v5034 = vunpack.c.l.b16 %v4787
        %v5035 = vunpack.c.l.b16 %v4801
        %v5036 = vunpack.c.l.b16 %v4811
        %v5037 = vunpack.c.l.b16 %v4825
        %v5038 = vunpack.c.l.b16 %v4835
        %v5039 = vunpack.c.l.b16 %v4849
        %v5040 = vunpack.c.l.b16 %v4859
        %v5041 = vunpack.c.l.b16 %v4873
        %v5042 = vunpack.c.l.b16 %v4883
        %v5043 = vunpack.c.l.b16 %v4897
        %v5044 = vunpack.c.l.b16 %v4907
        %v5045 = vunpack.c.l.b16 %v4921
        %v5046 = vunpack.c.l.b16 %v4931
        %v5047 = vunpack.c.l.b16 %v4945
        %v5048 = vunpack.c.l.b16 %v4955
        %v5049 = vunpack.c.l.b16 %v4969
        %v5050 = vunpack.c.l.b16 %v4979
        %v5051 = vunpack.c.l.b16 %v4993
        %v5052 = vunpack.c.l.b16 %v5003
        %v5053 = vpack.c.b16 %v5022, %v5021
        %v5054 = vpack.c.b16 %v5024, %v5023
        %v5055 = vpack.c.b16 %v5026, %v5025
        %v5056 = vpack.c.b16 %v5028, %v5027
        %v5057 = vpack.c.b16 %v5030, %v5029
        %v5058 = vpack.c.b16 %v5032, %v5031
        %v5059 = vpack.c.b16 %v5034, %v5033
        %v5060 = vpack.c.b16 %v5036, %v5035
        %v5061 = vpack.c.b16 %v5038, %v5037
        %v5062 = vpack.c.b16 %v5040, %v5039
        %v5063 = vpack.c.b16 %v5042, %v5041
        %v5064 = vpack.c.b16 %v5044, %v5043
        %v5065 = vpack.c.b16 %v5046, %v5045
        %v5066 = vpack.c.b16 %v5048, %v5047
        %v5067 = vpack.c.b16 %v5050, %v5049
        %v5068 = vpack.c.b16 %v5052, %v5051
        %v5101 = vunpack.c.l.b16 %v5005
        %v5102 = vunpack.c.l.b16 %v5006
        %v5103 = vunpack.c.l.b16 %v5007
        %v5104 = vunpack.c.l.b16 %v5008
        %v5105 = vunpack.c.l.b16 %v5009
        %v5106 = vunpack.c.l.b16 %v5010
        %v5107 = vunpack.c.l.b16 %v5011
        %v5108 = vunpack.c.l.b16 %v5012
        %v5109 = vunpack.c.l.b16 %v5013
        %v5110 = vunpack.c.l.b16 %v5014
        %v5111 = vunpack.c.l.b16 %v5015
        %v5112 = vunpack.c.l.b16 %v5016
        %v5113 = vunpack.c.l.b16 %v5017
        %v5114 = vunpack.c.l.b16 %v5018
        %v5115 = vunpack.c.l.b16 %v5019
        %v5116 = vunpack.c.l.b16 %v5020
        %v5117 = vpack.c.b16 %v5102, %v5101
        %v5118 = vpack.c.b16 %v5104, %v5103
        %v5119 = vpack.c.b16 %v5106, %v5105
        %v5120 = vpack.c.b16 %v5108, %v5107
        %v5121 = vpack.c.b16 %v5110, %v5109
        %v5122 = vpack.c.b16 %v5112, %v5111
        %v5123 = vpack.c.b16 %v5114, %v5113
        %v5124 = vpack.c.b16 %v5116, %v5115
        %5133 = vmatpush.bf16.msra.mxu0 %v5124
        %5134 = vmatpush.bf16.msra.mxu0 %v5123
        %5135 = vmatpush.bf16.msra.mxu0 %v5122
        %5136 = vmatpush.bf16.msra.mxu0 %v5121
        %5137 = vmatpush.bf16.msra.mxu0 %v5120
        %5138 = vmatpush.bf16.msra.mxu0 %v5119
        %5139 = vmatpush.bf16.msra.mxu0 %v5118
        %5140 = vmatpush.bf16.msra.mxu0 %v5117
        %5141 = vmatmul.bf16.gmra.mxu0 %v5053
        %v5142 = vpop.f32.mrf.mxu0
        %v5143 = vadd.f32 0.0, %v5142
        %v5144 = vpop.f32.mrf.mxu0
        %v5145 = vadd.f32 0.0, %v5144
        %5146 = vmatmul.bf16.gmra.mxu0 %v5054
        %v5147 = vpop.f32.mrf.mxu0
        %v5148 = vadd.f32 0.0, %v5147
        %v5149 = vpop.f32.mrf.mxu0
        %v5150 = vadd.f32 0.0, %v5149
        %5151 = vmatmul.bf16.gmra.mxu0 %v5055
        %v5152 = vpop.f32.mrf.mxu0
        %v5153 = vadd.f32 0.0, %v5152
        %v5154 = vpop.f32.mrf.mxu0
        %v5155 = vadd.f32 0.0, %v5154
        %5156 = vmatmul.bf16.gmra.mxu0 %v5056
        %v5157 = vpop.f32.mrf.mxu0
        %v5158 = vadd.f32 0.0, %v5157
        %v5159 = vpop.f32.mrf.mxu0
        %v5160 = vadd.f32 0.0, %v5159
        %5161 = vmatmul.bf16.gmra.mxu0 %v5057
        %v5162 = vpop.f32.mrf.mxu0
        %v5163 = vadd.f32 0.0, %v5162
        %v5164 = vpop.f32.mrf.mxu0
        %v5165 = vadd.f32 0.0, %v5164
        %5166 = vmatmul.bf16.gmra.mxu0 %v5058
        %v5167 = vpop.f32.mrf.mxu0
        %v5168 = vadd.f32 0.0, %v5167
        %v5169 = vpop.f32.mrf.mxu0
        %v5170 = vadd.f32 0.0, %v5169
        %5171 = vmatmul.bf16.gmra.mxu0 %v5059
        %v5172 = vpop.f32.mrf.mxu0
        %v5173 = vadd.f32 0.0, %v5172
        %v5174 = vpop.f32.mrf.mxu0
        %v5175 = vadd.f32 0.0, %v5174
        %5176 = vmatmul.bf16.gmra.mxu0 %v5060
        %v5177 = vpop.f32.mrf.mxu0
        %v5178 = vadd.f32 0.0, %v5177
        %v5179 = vpop.f32.mrf.mxu0
        %v5180 = vadd.f32 0.0, %v5179
        %5181 = vmatmul.bf16.gmra.mxu0 %v5061
        %v5182 = vpop.f32.mrf.mxu0
        %v5183 = vadd.f32 0.0, %v5182
        %v5184 = vpop.f32.mrf.mxu0
        %v5185 = vadd.f32 0.0, %v5184
        %5186 = vmatmul.bf16.gmra.mxu0 %v5062
        %v5187 = vpop.f32.mrf.mxu0
        %v5188 = vadd.f32 0.0, %v5187
        %v5189 = vpop.f32.mrf.mxu0
        %v5190 = vadd.f32 0.0, %v5189
        %5191 = vmatmul.bf16.gmra.mxu0 %v5063
        %v5192 = vpop.f32.mrf.mxu0
        %v5193 = vadd.f32 0.0, %v5192
        %v5194 = vpop.f32.mrf.mxu0
        %v5195 = vadd.f32 0.0, %v5194
        %5196 = vmatmul.bf16.gmra.mxu0 %v5064
        %v5197 = vpop.f32.mrf.mxu0
        %v5198 = vadd.f32 0.0, %v5197
        %v5199 = vpop.f32.mrf.mxu0
        %v5200 = vadd.f32 0.0, %v5199
        %5201 = vmatmul.bf16.gmra.mxu0 %v5065
        %v5202 = vpop.f32.mrf.mxu0
        %v5203 = vadd.f32 0.0, %v5202
        %v5204 = vpop.f32.mrf.mxu0
        %v5205 = vadd.f32 0.0, %v5204
        %5206 = vmatmul.bf16.gmra.mxu0 %v5066
        %v5207 = vpop.f32.mrf.mxu0
        %v5208 = vadd.f32 0.0, %v5207
        %v5209 = vpop.f32.mrf.mxu0
        %v5210 = vadd.f32 0.0, %v5209
        %5211 = vmatmul.bf16.gmra.mxu0 %v5067
        %v5212 = vpop.f32.mrf.mxu0
        %v5213 = vadd.f32 0.0, %v5212
        %v5214 = vpop.f32.mrf.mxu0
        %v5215 = vadd.f32 0.0, %v5214
        %5216 = vmatmul.bf16.gmra.mxu0 %v5068
        %v5217 = vpop.f32.mrf.mxu0
        %v5218 = vadd.f32 0.0, %v5217
        %v5219 = vpop.f32.mrf.mxu0
        %v5220 = vadd.f32 0.0, %v5219
        %5221 = vdwg.mxu0
        %v5222 = vadd.f32 %v4540, %v5143
        %v5223 = vadd.f32 %v4541, %v5145
        %v5224 = vadd.f32 %v4542, %v5148
        %v5225 = vadd.f32 %v4543, %v5150
        %v5226 = vadd.f32 %v4544, %v5153
        %v5227 = vadd.f32 %v4545, %v5155
        %v5228 = vadd.f32 %v4546, %v5158
        %v5229 = vadd.f32 %v4547, %v5160
        %v5230 = vadd.f32 %v4548, %v5163
        %v5231 = vadd.f32 %v4549, %v5165
        %v5232 = vadd.f32 %v4550, %v5168
        %v5233 = vadd.f32 %v4551, %v5170
        %v5234 = vadd.f32 %v4552, %v5173
        %v5235 = vadd.f32 %v4553, %v5175
        %v5236 = vadd.f32 %v4554, %v5178
        %v5237 = vadd.f32 %v4555, %v5180
        %v5238 = vadd.f32 %v4556, %v5183
        %v5239 = vadd.f32 %v4557, %v5185
        %v5240 = vadd.f32 %v4558, %v5188
        %v5241 = vadd.f32 %v4559, %v5190
        %v5242 = vadd.f32 %v4560, %v5193
        %v5243 = vadd.f32 %v4561, %v5195
        %v5244 = vadd.f32 %v4562, %v5198
        %v5245 = vadd.f32 %v4563, %v5200
        %v5246 = vadd.f32 %v4564, %v5203
        %v5247 = vadd.f32 %v4565, %v5205
        %v5248 = vadd.f32 %v4566, %v5208
        %v5249 = vadd.f32 %v4567, %v5210
        %v5250 = vadd.f32 %v4568, %v5213
        %v5251 = vadd.f32 %v4569, %v5215
        %v5252 = vadd.f32 %v4570, %v5218
        %v5253 = vadd.f32 %v4571, %v5220
        %v5254 = vld [vmem:[%s2] sm:$0x1]
        %v5256 = vperm.slane %v5254, 0
        %v5258 = vadd.f32 %v5222, %v5256
        %v5259 = vadd.f32 %v5223, %v5256
        %v5260 = vadd.f32 %v5224, %v5256
        %v5261 = vadd.f32 %v5225, %v5256
        %v5262 = vadd.f32 %v5226, %v5256
        %v5263 = vadd.f32 %v5227, %v5256
        %v5264 = vadd.f32 %v5228, %v5256
        %v5265 = vadd.f32 %v5229, %v5256
        %v5266 = vadd.f32 %v5230, %v5256
        %v5267 = vadd.f32 %v5231, %v5256
        %v5268 = vadd.f32 %v5232, %v5256
        %v5269 = vadd.f32 %v5233, %v5256
        %v5270 = vadd.f32 %v5234, %v5256
        %v5271 = vadd.f32 %v5235, %v5256
        %v5272 = vadd.f32 %v5236, %v5256
        %v5273 = vadd.f32 %v5237, %v5256
        %v5274 = vadd.f32 %v5238, %v5256
        %v5275 = vadd.f32 %v5239, %v5256
        %v5276 = vadd.f32 %v5240, %v5256
        %v5277 = vadd.f32 %v5241, %v5256
        %v5278 = vadd.f32 %v5242, %v5256
        %v5279 = vadd.f32 %v5243, %v5256
        %v5280 = vadd.f32 %v5244, %v5256
        %v5281 = vadd.f32 %v5245, %v5256
        %v5282 = vadd.f32 %v5246, %v5256
        %v5283 = vadd.f32 %v5247, %v5256
        %v5284 = vadd.f32 %v5248, %v5256
        %v5285 = vadd.f32 %v5249, %v5256
        %v5286 = vadd.f32 %v5250, %v5256
        %v5287 = vadd.f32 %v5251, %v5256
        %v5288 = vadd.f32 %v5252, %v5256
        %v5289 = vadd.f32 %v5253, %v5256
        %v5290 = vmax.f32 %v5258, 0.0
        %v5291 = vmax.f32 %v5259, 0.0
        %v5292 = vmax.f32 %v5260, 0.0
        %v5293 = vmax.f32 %v5261, 0.0
        %v5294 = vmax.f32 %v5262, 0.0
        %v5295 = vmax.f32 %v5263, 0.0
        %v5296 = vmax.f32 %v5264, 0.0
        %v5297 = vmax.f32 %v5265, 0.0
        %v5298 = vmax.f32 %v5266, 0.0
        %v5299 = vmax.f32 %v5267, 0.0
        %v5300 = vmax.f32 %v5268, 0.0
        %v5301 = vmax.f32 %v5269, 0.0
        %v5302 = vmax.f32 %v5270, 0.0
        %v5303 = vmax.f32 %v5271, 0.0
        %v5304 = vmax.f32 %v5272, 0.0
        %v5305 = vmax.f32 %v5273, 0.0
        %v5306 = vmax.f32 %v5274, 0.0
        %v5307 = vmax.f32 %v5275, 0.0
        %v5308 = vmax.f32 %v5276, 0.0
        %v5309 = vmax.f32 %v5277, 0.0
        %v5310 = vmax.f32 %v5278, 0.0
        %v5311 = vmax.f32 %v5279, 0.0
        %v5312 = vmax.f32 %v5280, 0.0
        %v5313 = vmax.f32 %v5281, 0.0
        %v5314 = vmax.f32 %v5282, 0.0
        %v5315 = vmax.f32 %v5283, 0.0
        %v5316 = vmax.f32 %v5284, 0.0
        %v5317 = vmax.f32 %v5285, 0.0
        %v5318 = vmax.f32 %v5286, 0.0
        %v5319 = vmax.f32 %v5287, 0.0
        %v5320 = vmax.f32 %v5288, 0.0
        %v5321 = vmax.f32 %v5289, 0.0
        %v5322 = vpack.c.bf16 %v5290, %v5290
        %v5323 = vpack.c.bf16 %v5291, %v5291
        %v5324 = vpack.c.bf16 %v5292, %v5292
        %v5325 = vpack.c.bf16 %v5293, %v5293
        %v5326 = vpack.c.bf16 %v5294, %v5294
        %v5327 = vpack.c.bf16 %v5295, %v5295
        %v5328 = vpack.c.bf16 %v5296, %v5296
        %v5329 = vpack.c.bf16 %v5297, %v5297
        %v5330 = vpack.c.bf16 %v5298, %v5298
        %v5331 = vpack.c.bf16 %v5299, %v5299
        %v5332 = vpack.c.bf16 %v5300, %v5300
        %v5333 = vpack.c.bf16 %v5301, %v5301
        %v5334 = vpack.c.bf16 %v5302, %v5302
        %v5335 = vpack.c.bf16 %v5303, %v5303
        %v5336 = vpack.c.bf16 %v5304, %v5304
        %v5337 = vpack.c.bf16 %v5305, %v5305
        %v5338 = vpack.c.bf16 %v5306, %v5306
        %v5339 = vpack.c.bf16 %v5307, %v5307
        %v5340 = vpack.c.bf16 %v5308, %v5308
        %v5341 = vpack.c.bf16 %v5309, %v5309
        %v5342 = vpack.c.bf16 %v5310, %v5310
        %v5343 = vpack.c.bf16 %v5311, %v5311
        %v5344 = vpack.c.bf16 %v5312, %v5312
        %v5345 = vpack.c.bf16 %v5313, %v5313
        %v5346 = vpack.c.bf16 %v5314, %v5314
        %v5347 = vpack.c.bf16 %v5315, %v5315
        %v5348 = vpack.c.bf16 %v5316, %v5316
        %v5349 = vpack.c.bf16 %v5317, %v5317
        %v5350 = vpack.c.bf16 %v5318, %v5318
        %v5351 = vpack.c.bf16 %v5319, %v5319
        %v5352 = vpack.c.bf16 %v5320, %v5320
        %v5353 = vpack.c.bf16 %v5321, %v5321
        %5354 = vst [vmem:[%s438 + $0x8] sm:$0xf] %v5322
        %5355 = vst [vmem:[%s438 + $0xc] sm:$0xf] %v5323
        %5356 = vst [vmem:[%s438 + $0x20] sm:$0xf] %v5324
        %5357 = vst [vmem:[%s438 + $0x24] sm:$0xf] %v5325
        %5358 = vst [vmem:[%s438 + $0x38] sm:$0xf] %v5326
        %5359 = vst [vmem:[%s438 + $0x3c] sm:$0xf] %v5327
        %5360 = vst [vmem:[%s438 + $0x50] sm:$0xf] %v5328
        %5361 = vst [vmem:[%s438 + $0x54] sm:$0xf] %v5329
        %5362 = vst [vmem:[%s438 + $0x68] sm:$0xf] %v5330
        %5363 = vst [vmem:[%s438 + $0x6c] sm:$0xf] %v5331
        %5364 = vst [vmem:[%s438 + $0x80] sm:$0xf] %v5332
        %5365 = vst [vmem:[%s438 + $0x84] sm:$0xf] %v5333
        %5366 = vst [vmem:[%s438 + $0x98] sm:$0xf] %v5334
        %5367 = vst [vmem:[%s438 + $0x9c] sm:$0xf] %v5335
        %5368 = vst [vmem:[%s438 + $0xb0] sm:$0xf] %v5336
        %5369 = vst [vmem:[%s438 + $0xb4] sm:$0xf] %v5337
        %5370 = vst [vmem:[%s438 + $0xc8] sm:$0xf] %v5338
        %5371 = vst [vmem:[%s438 + $0xcc] sm:$0xf] %v5339
        %5372 = vst [vmem:[%s438 + $0xe0] sm:$0xf] %v5340
        %5373 = vst [vmem:[%s438 + $0xe4] sm:$0xf] %v5341
        %5374 = vst [vmem:[%s438 + $0xf8] sm:$0xf] %v5342
        %5375 = vst [vmem:[%s438 + $0xfc] sm:$0xf] %v5343
        %5376 = vst [vmem:[%s438 + $0x110] sm:$0xf] %v5344
        %5377 = vst [vmem:[%s438 + $0x114] sm:$0xf] %v5345
        %5378 = vst [vmem:[%s438 + $0x128] sm:$0xf] %v5346
        %5379 = vst [vmem:[%s438 + $0x12c] sm:$0xf] %v5347
        %5380 = vst [vmem:[%s438 + $0x140] sm:$0xf] %v5348
        %5381 = vst [vmem:[%s438 + $0x144] sm:$0xf] %v5349
        %5382 = vst [vmem:[%s438 + $0x158] sm:$0xf] %v5350
        %5383 = vst [vmem:[%s438 + $0x15c] sm:$0xf] %v5351
        %5384 = vst [vmem:[%s438 + $0x170] sm:$0xf] %v5352
        %5385 = vst [vmem:[%s438 + $0x174] sm:$0xf] %v5353
        %v5386 = vld [vmem:[#allocation2 + $0x4] sm:$0x8]
        %v5387 = vld [vmem:[#allocation2 + $0x8] sm:$0xf]
        %v5388 = vld [vmem:[#allocation2 + $0xc] sm:$0xf]
        %v5389 = vld [vmem:[#allocation2 + $0x1c] sm:$0x8]
        %v5390 = vld [vmem:[#allocation2 + $0x20] sm:$0xf]
        %v5391 = vld [vmem:[#allocation2 + $0x24] sm:$0xf]
        %v5392 = vld [vmem:[#allocation2 + $0x34] sm:$0x8]
        %v5393 = vld [vmem:[#allocation2 + $0x38] sm:$0xf]
        %v5394 = vld [vmem:[#allocation2 + $0x3c] sm:$0xf]
        %v5395 = vld [vmem:[#allocation2 + $0x4c] sm:$0x8]
        %v5396 = vld [vmem:[#allocation2 + $0x50] sm:$0xf]
        %v5397 = vld [vmem:[#allocation2 + $0x54] sm:$0xf]
        %v5398 = vld [vmem:[#allocation2 + $0x64] sm:$0x8]
        %v5399 = vld [vmem:[#allocation2 + $0x68] sm:$0xf]
        %v5400 = vld [vmem:[#allocation2 + $0x6c] sm:$0xf]
        %v5401 = vld [vmem:[#allocation2 + $0x7c] sm:$0x8]
        %v5402 = vld [vmem:[#allocation2 + $0x80] sm:$0xf]
        %v5403 = vld [vmem:[#allocation2 + $0x84] sm:$0xf]
        %v5404 = vld [vmem:[#allocation2 + $0x94] sm:$0x8]
        %v5405 = vld [vmem:[#allocation2 + $0x98] sm:$0xf]
        %v5406 = vld [vmem:[#allocation2 + $0x9c] sm:$0xf]
        %v5407 = vld [vmem:[#allocation2 + $0xac] sm:$0x8]
        %v5408 = vld [vmem:[#allocation2 + $0xb0] sm:$0xf]
        %v5409 = vld [vmem:[#allocation2 + $0xb4] sm:$0xf]
        %v5410 = vld [vmem:[#allocation2 + $0xc4] sm:$0x8]
        %v5411 = vld [vmem:[#allocation2 + $0xc8] sm:$0xf]
        %v5412 = vld [vmem:[#allocation2 + $0xcc] sm:$0xf]
        %v5413 = vld [vmem:[#allocation2 + $0xdc] sm:$0x8]
        %v5414 = vld [vmem:[#allocation2 + $0xe0] sm:$0xf]
        %v5415 = vld [vmem:[#allocation2 + $0xe4] sm:$0xf]
        %v5416 = vld [vmem:[#allocation2 + $0xf4] sm:$0x8]
        %v5417 = vld [vmem:[#allocation2 + $0xf8] sm:$0xf]
        %v5418 = vld [vmem:[#allocation2 + $0xfc] sm:$0xf]
        %v5419 = vld [vmem:[#allocation2 + $0x10c] sm:$0x8]
        %v5420 = vld [vmem:[#allocation2 + $0x110] sm:$0xf]
        %v5421 = vld [vmem:[#allocation2 + $0x114] sm:$0xf]
        %v5422 = vld [vmem:[#allocation2 + $0x124] sm:$0x8]
        %v5423 = vld [vmem:[#allocation2 + $0x128] sm:$0xf]
        %v5424 = vld [vmem:[#allocation2 + $0x12c] sm:$0xf]
        %v5425 = vld [vmem:[#allocation2 + $0x13c] sm:$0x8]
        %v5426 = vld [vmem:[#allocation2 + $0x140] sm:$0xf]
        %v5427 = vld [vmem:[#allocation2 + $0x144] sm:$0xf]
        %v5428 = vld [vmem:[#allocation2 + $0x154] sm:$0x8]
        %v5429 = vld [vmem:[#allocation2 + $0x158] sm:$0xf]
        %v5430 = vld [vmem:[#allocation2 + $0x15c] sm:$0xf]
        %v5431 = vld [vmem:[#allocation2 + $0x16c] sm:$0x8]
        %v5432 = vld [vmem:[#allocation2 + $0x170] sm:$0xf]
        %v5433 = vld [vmem:[#allocation2 + $0x174] sm:$0xf]
        %v5435 = vshrl.u32 %v5386, 16
        %v5437 = vrot.slane %v5435, 7
        %v5438 = vrot.slane %v5437, 4
        %v5440 = vshrl.u32 %v5387, 16
        %v5442 = vrot.slane %v5440, 7
        %v5443 = vshll.u32 %v5387, 16
        %v5445 = vor.u32 %v5442, %v5443
        %v5446 = vsel %vm520, %v5438, %v5445
        %v5447 = vrot.slane %v5442, 4
        %v5449 = vshrl.u32 %v5388, 16
        %v5451 = vrot.slane %v5449, 7
        %v5452 = vshll.u32 %v5388, 16
        %v5454 = vor.u32 %v5451, %v5452
        %v5455 = vsel %vm520, %v5447, %v5454
        %v5457 = vshrl.u32 %v5389, 16
        %v5459 = vrot.slane %v5457, 7
        %v5460 = vrot.slane %v5459, 4
        %v5462 = vshrl.u32 %v5390, 16
        %v5464 = vrot.slane %v5462, 7
        %v5465 = vshll.u32 %v5390, 16
        %v5467 = vor.u32 %v5464, %v5465
        %v5468 = vsel %vm520, %v5460, %v5467
        %v5469 = vrot.slane %v5464, 4
        %v5471 = vshrl.u32 %v5391, 16
        %v5473 = vrot.slane %v5471, 7
        %v5474 = vshll.u32 %v5391, 16
        %v5476 = vor.u32 %v5473, %v5474
        %v5477 = vsel %vm520, %v5469, %v5476
        %v5479 = vshrl.u32 %v5392, 16
        %v5481 = vrot.slane %v5479, 7
        %v5482 = vrot.slane %v5481, 4
        %v5484 = vshrl.u32 %v5393, 16
        %v5486 = vrot.slane %v5484, 7
        %v5487 = vshll.u32 %v5393, 16
        %v5489 = vor.u32 %v5486, %v5487
        %v5490 = vsel %vm520, %v5482, %v5489
        %v5491 = vrot.slane %v5486, 4
        %v5493 = vshrl.u32 %v5394, 16
        %v5495 = vrot.slane %v5493, 7
        %v5496 = vshll.u32 %v5394, 16
        %v5498 = vor.u32 %v5495, %v5496
        %v5499 = vsel %vm520, %v5491, %v5498
        %v5501 = vshrl.u32 %v5395, 16
        %v5503 = vrot.slane %v5501, 7
        %v5504 = vrot.slane %v5503, 4
        %v5506 = vshrl.u32 %v5396, 16
        %v5508 = vrot.slane %v5506, 7
        %v5509 = vshll.u32 %v5396, 16
        %v5511 = vor.u32 %v5508, %v5509
        %v5512 = vsel %vm520, %v5504, %v5511
        %v5513 = vrot.slane %v5508, 4
        %v5515 = vshrl.u32 %v5397, 16
        %v5517 = vrot.slane %v5515, 7
        %v5518 = vshll.u32 %v5397, 16
        %v5520 = vor.u32 %v5517, %v5518
        %v5521 = vsel %vm520, %v5513, %v5520
        %v5523 = vshrl.u32 %v5398, 16
        %v5525 = vrot.slane %v5523, 7
        %v5526 = vrot.slane %v5525, 4
        %v5528 = vshrl.u32 %v5399, 16
        %v5530 = vrot.slane %v5528, 7
        %v5531 = vshll.u32 %v5399, 16
        %v5533 = vor.u32 %v5530, %v5531
        %v5534 = vsel %vm520, %v5526, %v5533
        %v5535 = vrot.slane %v5530, 4
        %v5537 = vshrl.u32 %v5400, 16
        %v5539 = vrot.slane %v5537, 7
        %v5540 = vshll.u32 %v5400, 16
        %v5542 = vor.u32 %v5539, %v5540
        %v5543 = vsel %vm520, %v5535, %v5542
        %v5545 = vshrl.u32 %v5401, 16
        %v5547 = vrot.slane %v5545, 7
        %v5548 = vrot.slane %v5547, 4
        %v5550 = vshrl.u32 %v5402, 16
        %v5552 = vrot.slane %v5550, 7
        %v5553 = vshll.u32 %v5402, 16
        %v5555 = vor.u32 %v5552, %v5553
        %v5556 = vsel %vm520, %v5548, %v5555
        %v5557 = vrot.slane %v5552, 4
        %v5559 = vshrl.u32 %v5403, 16
        %v5561 = vrot.slane %v5559, 7
        %v5562 = vshll.u32 %v5403, 16
        %v5564 = vor.u32 %v5561, %v5562
        %v5565 = vsel %vm520, %v5557, %v5564
        %v5567 = vshrl.u32 %v5404, 16
        %v5569 = vrot.slane %v5567, 7
        %v5570 = vrot.slane %v5569, 4
        %v5572 = vshrl.u32 %v5405, 16
        %v5574 = vrot.slane %v5572, 7
        %v5575 = vshll.u32 %v5405, 16
        %v5577 = vor.u32 %v5574, %v5575
        %v5578 = vsel %vm520, %v5570, %v5577
        %v5579 = vrot.slane %v5574, 4
        %v5581 = vshrl.u32 %v5406, 16
        %v5583 = vrot.slane %v5581, 7
        %v5584 = vshll.u32 %v5406, 16
        %v5586 = vor.u32 %v5583, %v5584
        %v5587 = vsel %vm520, %v5579, %v5586
        %v5589 = vshrl.u32 %v5407, 16
        %v5591 = vrot.slane %v5589, 7
        %v5592 = vrot.slane %v5591, 4
        %v5594 = vshrl.u32 %v5408, 16
        %v5596 = vrot.slane %v5594, 7
        %v5597 = vshll.u32 %v5408, 16
        %v5599 = vor.u32 %v5596, %v5597
        %v5600 = vsel %vm520, %v5592, %v5599
        %v5601 = vrot.slane %v5596, 4
        %v5603 = vshrl.u32 %v5409, 16
        %v5605 = vrot.slane %v5603, 7
        %v5606 = vshll.u32 %v5409, 16
        %v5608 = vor.u32 %v5605, %v5606
        %v5609 = vsel %vm520, %v5601, %v5608
        %v5611 = vshrl.u32 %v5410, 16
        %v5613 = vrot.slane %v5611, 7
        %v5614 = vrot.slane %v5613, 4
        %v5616 = vshrl.u32 %v5411, 16
        %v5618 = vrot.slane %v5616, 7
        %v5619 = vshll.u32 %v5411, 16
        %v5621 = vor.u32 %v5618, %v5619
        %v5622 = vsel %vm520, %v5614, %v5621
        %v5623 = vrot.slane %v5618, 4
        %v5625 = vshrl.u32 %v5412, 16
        %v5627 = vrot.slane %v5625, 7
        %v5628 = vshll.u32 %v5412, 16
        %v5630 = vor.u32 %v5627, %v5628
        %v5631 = vsel %vm520, %v5623, %v5630
        %v5633 = vshrl.u32 %v5413, 16
        %v5635 = vrot.slane %v5633, 7
        %v5636 = vrot.slane %v5635, 4
        %v5638 = vshrl.u32 %v5414, 16
        %v5640 = vrot.slane %v5638, 7
        %v5641 = vshll.u32 %v5414, 16
        %v5643 = vor.u32 %v5640, %v5641
        %v5644 = vsel %vm520, %v5636, %v5643
        %v5645 = vrot.slane %v5640, 4
        %v5647 = vshrl.u32 %v5415, 16
        %v5649 = vrot.slane %v5647, 7
        %v5650 = vshll.u32 %v5415, 16
        %v5652 = vor.u32 %v5649, %v5650
        %v5653 = vsel %vm520, %v5645, %v5652
        %v5655 = vshrl.u32 %v5416, 16
        %v5657 = vrot.slane %v5655, 7
        %v5658 = vrot.slane %v5657, 4
        %v5660 = vshrl.u32 %v5417, 16
        %v5662 = vrot.slane %v5660, 7
        %v5663 = vshll.u32 %v5417, 16
        %v5665 = vor.u32 %v5662, %v5663
        %v5666 = vsel %vm520, %v5658, %v5665
        %v5667 = vrot.slane %v5662, 4
        %v5669 = vshrl.u32 %v5418, 16
        %v5671 = vrot.slane %v5669, 7
        %v5672 = vshll.u32 %v5418, 16
        %v5674 = vor.u32 %v5671, %v5672
        %v5675 = vsel %vm520, %v5667, %v5674
        %v5677 = vshrl.u32 %v5419, 16
        %v5679 = vrot.slane %v5677, 7
        %v5680 = vrot.slane %v5679, 4
        %v5682 = vshrl.u32 %v5420, 16
        %v5684 = vrot.slane %v5682, 7
        %v5685 = vshll.u32 %v5420, 16
        %v5687 = vor.u32 %v5684, %v5685
        %v5688 = vsel %vm520, %v5680, %v5687
        %v5689 = vrot.slane %v5684, 4
        %v5691 = vshrl.u32 %v5421, 16
        %v5693 = vrot.slane %v5691, 7
        %v5694 = vshll.u32 %v5421, 16
        %v5696 = vor.u32 %v5693, %v5694
        %v5697 = vsel %vm520, %v5689, %v5696
        %v5699 = vshrl.u32 %v5422, 16
        %v5701 = vrot.slane %v5699, 7
        %v5702 = vrot.slane %v5701, 4
        %v5704 = vshrl.u32 %v5423, 16
        %v5706 = vrot.slane %v5704, 7
        %v5707 = vshll.u32 %v5423, 16
        %v5709 = vor.u32 %v5706, %v5707
        %v5710 = vsel %vm520, %v5702, %v5709
        %v5711 = vrot.slane %v5706, 4
        %v5713 = vshrl.u32 %v5424, 16
        %v5715 = vrot.slane %v5713, 7
        %v5716 = vshll.u32 %v5424, 16
        %v5718 = vor.u32 %v5715, %v5716
        %v5719 = vsel %vm520, %v5711, %v5718
        %v5721 = vshrl.u32 %v5425, 16
        %v5723 = vrot.slane %v5721, 7
        %v5724 = vrot.slane %v5723, 4
        %v5726 = vshrl.u32 %v5426, 16
        %v5728 = vrot.slane %v5726, 7
        %v5729 = vshll.u32 %v5426, 16
        %v5731 = vor.u32 %v5728, %v5729
        %v5732 = vsel %vm520, %v5724, %v5731
        %v5733 = vrot.slane %v5728, 4
        %v5735 = vshrl.u32 %v5427, 16
        %v5737 = vrot.slane %v5735, 7
        %v5738 = vshll.u32 %v5427, 16
        %v5740 = vor.u32 %v5737, %v5738
        %v5741 = vsel %vm520, %v5733, %v5740
        %v5743 = vshrl.u32 %v5428, 16
        %v5745 = vrot.slane %v5743, 7
        %v5746 = vrot.slane %v5745, 4
        %v5748 = vshrl.u32 %v5429, 16
        %v5750 = vrot.slane %v5748, 7
        %v5751 = vshll.u32 %v5429, 16
        %v5753 = vor.u32 %v5750, %v5751
        %v5754 = vsel %vm520, %v5746, %v5753
        %v5755 = vrot.slane %v5750, 4
        %v5757 = vshrl.u32 %v5430, 16
        %v5759 = vrot.slane %v5757, 7
        %v5760 = vshll.u32 %v5430, 16
        %v5762 = vor.u32 %v5759, %v5760
        %v5763 = vsel %vm520, %v5755, %v5762
        %v5765 = vshrl.u32 %v5431, 16
        %v5767 = vrot.slane %v5765, 7
        %v5768 = vrot.slane %v5767, 4
        %v5770 = vshrl.u32 %v5432, 16
        %v5772 = vrot.slane %v5770, 7
        %v5773 = vshll.u32 %v5432, 16
        %v5775 = vor.u32 %v5772, %v5773
        %v5776 = vsel %vm520, %v5768, %v5775
        %v5777 = vrot.slane %v5772, 4
        %v5779 = vshrl.u32 %v5433, 16
        %v5781 = vrot.slane %v5779, 7
        %v5782 = vshll.u32 %v5433, 16
        %v5784 = vor.u32 %v5781, %v5782
        %v5785 = vsel %vm520, %v5777, %v5784
        %v5786 = vld [vmem:[#allocation8] sm:$0xf]
        %v5787 = vld [vmem:[#allocation8 + $0x4] sm:$0xf]
        %v5788 = vld [vmem:[#allocation8 + $0x8] sm:$0xf]
        %v5789 = vld [vmem:[#allocation8 + $0xc] sm:$0xf]
        %v5790 = vld [vmem:[#allocation8 + $0x10] sm:$0xf]
        %v5791 = vld [vmem:[#allocation8 + $0x14] sm:$0xf]
        %v5792 = vld [vmem:[#allocation8 + $0x18] sm:$0xf]
        %v5793 = vld [vmem:[#allocation8 + $0x1c] sm:$0xf]
        %v5794 = vld [vmem:[#allocation8 + $0x20] sm:$0xf]
        %v5795 = vld [vmem:[#allocation8 + $0x24] sm:$0xf]
        %v5796 = vld [vmem:[#allocation8 + $0x28] sm:$0xf]
        %v5797 = vld [vmem:[#allocation8 + $0x2c] sm:$0xf]
        %v5798 = vld [vmem:[#allocation8 + $0x30] sm:$0xf]
        %v5799 = vld [vmem:[#allocation8 + $0x34] sm:$0xf]
        %v5800 = vld [vmem:[#allocation8 + $0x38] sm:$0xf]
        %v5801 = vld [vmem:[#allocation8 + $0x3c] sm:$0xf]
        %s5802 = scalar_lea.vmem [#allocation8], 64
        %v5803 = vld [vmem:[%s5802] sm:$0xf]
        %v5804 = vld [vmem:[%s5802 + $0x4] sm:$0xf]
        %v5805 = vld [vmem:[%s5802 + $0x8] sm:$0xf]
        %v5806 = vld [vmem:[%s5802 + $0xc] sm:$0xf]
        %v5807 = vld [vmem:[%s5802 + $0x10] sm:$0xf]
        %v5808 = vld [vmem:[%s5802 + $0x14] sm:$0xf]
        %v5809 = vld [vmem:[%s5802 + $0x18] sm:$0xf]
        %v5810 = vld [vmem:[%s5802 + $0x1c] sm:$0xf]
        %v5811 = vld [vmem:[%s5802 + $0x20] sm:$0xf]
        %v5812 = vld [vmem:[%s5802 + $0x24] sm:$0xf]
        %v5813 = vld [vmem:[%s5802 + $0x28] sm:$0xf]
        %v5814 = vld [vmem:[%s5802 + $0x2c] sm:$0xf]
        %v5815 = vld [vmem:[%s5802 + $0x30] sm:$0xf]
        %v5816 = vld [vmem:[%s5802 + $0x34] sm:$0xf]
        %v5817 = vld [vmem:[%s5802 + $0x38] sm:$0xf]
        %v5818 = vld [vmem:[%s5802 + $0x3c] sm:$0xf]
        %v5851 = vunpack.c.l.b16 %v5387
        %v5852 = vunpack.c.l.b16 %v5388
        %v5853 = vunpack.c.l.b16 %v5390
        %v5854 = vunpack.c.l.b16 %v5391
        %v5855 = vunpack.c.l.b16 %v5393
        %v5856 = vunpack.c.l.b16 %v5394
        %v5857 = vunpack.c.l.b16 %v5396
        %v5858 = vunpack.c.l.b16 %v5397
        %v5859 = vunpack.c.l.b16 %v5399
        %v5860 = vunpack.c.l.b16 %v5400
        %v5861 = vunpack.c.l.b16 %v5402
        %v5862 = vunpack.c.l.b16 %v5403
        %v5863 = vunpack.c.l.b16 %v5405
        %v5864 = vunpack.c.l.b16 %v5406
        %v5865 = vunpack.c.l.b16 %v5408
        %v5866 = vunpack.c.l.b16 %v5409
        %v5867 = vunpack.c.l.b16 %v5411
        %v5868 = vunpack.c.l.b16 %v5412
        %v5869 = vunpack.c.l.b16 %v5414
        %v5870 = vunpack.c.l.b16 %v5415
        %v5871 = vunpack.c.l.b16 %v5417
        %v5872 = vunpack.c.l.b16 %v5418
        %v5873 = vunpack.c.l.b16 %v5420
        %v5874 = vunpack.c.l.b16 %v5421
        %v5875 = vunpack.c.l.b16 %v5423
        %v5876 = vunpack.c.l.b16 %v5424
        %v5877 = vunpack.c.l.b16 %v5426
        %v5878 = vunpack.c.l.b16 %v5427
        %v5879 = vunpack.c.l.b16 %v5429
        %v5880 = vunpack.c.l.b16 %v5430
        %v5881 = vunpack.c.l.b16 %v5432
        %v5882 = vunpack.c.l.b16 %v5433
        %v5883 = vpack.c.b16 %v5852, %v5851
        %v5884 = vpack.c.b16 %v5854, %v5853
        %v5885 = vpack.c.b16 %v5856, %v5855
        %v5886 = vpack.c.b16 %v5858, %v5857
        %v5887 = vpack.c.b16 %v5860, %v5859
        %v5888 = vpack.c.b16 %v5862, %v5861
        %v5889 = vpack.c.b16 %v5864, %v5863
        %v5890 = vpack.c.b16 %v5866, %v5865
        %v5891 = vpack.c.b16 %v5868, %v5867
        %v5892 = vpack.c.b16 %v5870, %v5869
        %v5893 = vpack.c.b16 %v5872, %v5871
        %v5894 = vpack.c.b16 %v5874, %v5873
        %v5895 = vpack.c.b16 %v5876, %v5875
        %v5896 = vpack.c.b16 %v5878, %v5877
        %v5897 = vpack.c.b16 %v5880, %v5879
        %v5898 = vpack.c.b16 %v5882, %v5881
        %v5931 = vunpack.c.l.b16 %v5803
        %v5932 = vunpack.c.l.b16 %v5804
        %v5933 = vunpack.c.l.b16 %v5805
        %v5934 = vunpack.c.l.b16 %v5806
        %v5935 = vunpack.c.l.b16 %v5807
        %v5936 = vunpack.c.l.b16 %v5808
        %v5937 = vunpack.c.l.b16 %v5809
        %v5938 = vunpack.c.l.b16 %v5810
        %v5939 = vunpack.c.l.b16 %v5811
        %v5940 = vunpack.c.l.b16 %v5812
        %v5941 = vunpack.c.l.b16 %v5813
        %v5942 = vunpack.c.l.b16 %v5814
        %v5943 = vunpack.c.l.b16 %v5815
        %v5944 = vunpack.c.l.b16 %v5816
        %v5945 = vunpack.c.l.b16 %v5817
        %v5946 = vunpack.c.l.b16 %v5818
        %v5947 = vpack.c.b16 %v5932, %v5931
        %v5948 = vpack.c.b16 %v5934, %v5933
        %v5949 = vpack.c.b16 %v5936, %v5935
        %v5950 = vpack.c.b16 %v5938, %v5937
        %v5951 = vpack.c.b16 %v5940, %v5939
        %v5952 = vpack.c.b16 %v5942, %v5941
        %v5953 = vpack.c.b16 %v5944, %v5943
        %v5954 = vpack.c.b16 %v5946, %v5945
        %5963 = vmatpush.bf16.msra.mxu0 %v5954
        %5964 = vmatpush.bf16.msra.mxu0 %v5953
        %5965 = vmatpush.bf16.msra.mxu0 %v5952
        %5966 = vmatpush.bf16.msra.mxu0 %v5951
        %5967 = vmatpush.bf16.msra.mxu0 %v5950
        %5968 = vmatpush.bf16.msra.mxu0 %v5949
        %5969 = vmatpush.bf16.msra.mxu0 %v5948
        %5970 = vmatpush.bf16.msra.mxu0 %v5947
        %5971 = vmatmul.bf16.gmra.mxu0 %v5883
        %v5972 = vpop.f32.mrf.mxu0
        %v5973 = vadd.f32 0.0, %v5972
        %v5974 = vpop.f32.mrf.mxu0
        %v5975 = vadd.f32 0.0, %v5974
        %5976 = vmatmul.bf16.gmra.mxu0 %v5884
        %v5977 = vpop.f32.mrf.mxu0
        %v5978 = vadd.f32 0.0, %v5977
        %v5979 = vpop.f32.mrf.mxu0
        %v5980 = vadd.f32 0.0, %v5979
        %5981 = vmatmul.bf16.gmra.mxu0 %v5885
        %v5982 = vpop.f32.mrf.mxu0
        %v5983 = vadd.f32 0.0, %v5982
        %v5984 = vpop.f32.mrf.mxu0
        %v5985 = vadd.f32 0.0, %v5984
        %5986 = vmatmul.bf16.gmra.mxu0 %v5886
        %v5987 = vpop.f32.mrf.mxu0
        %v5988 = vadd.f32 0.0, %v5987
        %v5989 = vpop.f32.mrf.mxu0
        %v5990 = vadd.f32 0.0, %v5989
        %5991 = vmatmul.bf16.gmra.mxu0 %v5887
        %v5992 = vpop.f32.mrf.mxu0
        %v5993 = vadd.f32 0.0, %v5992
        %v5994 = vpop.f32.mrf.mxu0
        %v5995 = vadd.f32 0.0, %v5994
        %5996 = vmatmul.bf16.gmra.mxu0 %v5888
        %v5997 = vpop.f32.mrf.mxu0
        %v5998 = vadd.f32 0.0, %v5997
        %v5999 = vpop.f32.mrf.mxu0
        %v6000 = vadd.f32 0.0, %v5999
        %6001 = vmatmul.bf16.gmra.mxu0 %v5889
        %v6002 = vpop.f32.mrf.mxu0
        %v6003 = vadd.f32 0.0, %v6002
        %v6004 = vpop.f32.mrf.mxu0
        %v6005 = vadd.f32 0.0, %v6004
        %6006 = vmatmul.bf16.gmra.mxu0 %v5890
        %v6007 = vpop.f32.mrf.mxu0
        %v6008 = vadd.f32 0.0, %v6007
        %v6009 = vpop.f32.mrf.mxu0
        %v6010 = vadd.f32 0.0, %v6009
        %6011 = vmatmul.bf16.gmra.mxu0 %v5891
        %v6012 = vpop.f32.mrf.mxu0
        %v6013 = vadd.f32 0.0, %v6012
        %v6014 = vpop.f32.mrf.mxu0
        %v6015 = vadd.f32 0.0, %v6014
        %6016 = vmatmul.bf16.gmra.mxu0 %v5892
        %v6017 = vpop.f32.mrf.mxu0
        %v6018 = vadd.f32 0.0, %v6017
        %v6019 = vpop.f32.mrf.mxu0
        %v6020 = vadd.f32 0.0, %v6019
        %6021 = vmatmul.bf16.gmra.mxu0 %v5893
        %v6022 = vpop.f32.mrf.mxu0
        %v6023 = vadd.f32 0.0, %v6022
        %v6024 = vpop.f32.mrf.mxu0
        %v6025 = vadd.f32 0.0, %v6024
        %6026 = vmatmul.bf16.gmra.mxu0 %v5894
        %v6027 = vpop.f32.mrf.mxu0
        %v6028 = vadd.f32 0.0, %v6027
        %v6029 = vpop.f32.mrf.mxu0
        %v6030 = vadd.f32 0.0, %v6029
        %6031 = vmatmul.bf16.gmra.mxu0 %v5895
        %v6032 = vpop.f32.mrf.mxu0
        %v6033 = vadd.f32 0.0, %v6032
        %v6034 = vpop.f32.mrf.mxu0
        %v6035 = vadd.f32 0.0, %v6034
        %6036 = vmatmul.bf16.gmra.mxu0 %v5896
        %v6037 = vpop.f32.mrf.mxu0
        %v6038 = vadd.f32 0.0, %v6037
        %v6039 = vpop.f32.mrf.mxu0
        %v6040 = vadd.f32 0.0, %v6039
        %6041 = vmatmul.bf16.gmra.mxu0 %v5897
        %v6042 = vpop.f32.mrf.mxu0
        %v6043 = vadd.f32 0.0, %v6042
        %v6044 = vpop.f32.mrf.mxu0
        %v6045 = vadd.f32 0.0, %v6044
        %6046 = vmatmul.bf16.gmra.mxu0 %v5898
        %v6047 = vpop.f32.mrf.mxu0
        %v6048 = vadd.f32 0.0, %v6047
        %v6049 = vpop.f32.mrf.mxu0
        %v6050 = vadd.f32 0.0, %v6049
        %6051 = vdwg.mxu0
        %v6052 = vunpack.c.l.b16 %v5446
        %v6053 = vunpack.c.l.b16 %v5455
        %v6054 = vunpack.c.l.b16 %v5468
        %v6055 = vunpack.c.l.b16 %v5477
        %v6056 = vunpack.c.l.b16 %v5490
        %v6057 = vunpack.c.l.b16 %v5499
        %v6058 = vunpack.c.l.b16 %v5512
        %v6059 = vunpack.c.l.b16 %v5521
        %v6060 = vunpack.c.l.b16 %v5534
        %v6061 = vunpack.c.l.b16 %v5543
        %v6062 = vunpack.c.l.b16 %v5556
        %v6063 = vunpack.c.l.b16 %v5565
        %v6064 = vunpack.c.l.b16 %v5578
        %v6065 = vunpack.c.l.b16 %v5587
        %v6066 = vunpack.c.l.b16 %v5600
        %v6067 = vunpack.c.l.b16 %v5609
        %v6068 = vunpack.c.l.b16 %v5622
        %v6069 = vunpack.c.l.b16 %v5631
        %v6070 = vunpack.c.l.b16 %v5644
        %v6071 = vunpack.c.l.b16 %v5653
        %v6072 = vunpack.c.l.b16 %v5666
        %v6073 = vunpack.c.l.b16 %v5675
        %v6074 = vunpack.c.l.b16 %v5688
        %v6075 = vunpack.c.l.b16 %v5697
        %v6076 = vunpack.c.l.b16 %v5710
        %v6077 = vunpack.c.l.b16 %v5719
        %v6078 = vunpack.c.l.b16 %v5732
        %v6079 = vunpack.c.l.b16 %v5741
        %v6080 = vunpack.c.l.b16 %v5754
        %v6081 = vunpack.c.l.b16 %v5763
        %v6082 = vunpack.c.l.b16 %v5776
        %v6083 = vunpack.c.l.b16 %v5785
        %v6084 = vpack.c.b16 %v6053, %v6052
        %v6085 = vpack.c.b16 %v6055, %v6054
        %v6086 = vpack.c.b16 %v6057, %v6056
        %v6087 = vpack.c.b16 %v6059, %v6058
        %v6088 = vpack.c.b16 %v6061, %v6060
        %v6089 = vpack.c.b16 %v6063, %v6062
        %v6090 = vpack.c.b16 %v6065, %v6064
        %v6091 = vpack.c.b16 %v6067, %v6066
        %v6092 = vpack.c.b16 %v6069, %v6068
        %v6093 = vpack.c.b16 %v6071, %v6070
        %v6094 = vpack.c.b16 %v6073, %v6072
        %v6095 = vpack.c.b16 %v6075, %v6074
        %v6096 = vpack.c.b16 %v6077, %v6076
        %v6097 = vpack.c.b16 %v6079, %v6078
        %v6098 = vpack.c.b16 %v6081, %v6080
        %v6099 = vpack.c.b16 %v6083, %v6082
        %v6132 = vunpack.c.l.b16 %v5786
        %v6133 = vunpack.c.l.b16 %v5787
        %v6134 = vunpack.c.l.b16 %v5788
        %v6135 = vunpack.c.l.b16 %v5789
        %v6136 = vunpack.c.l.b16 %v5790
        %v6137 = vunpack.c.l.b16 %v5791
        %v6138 = vunpack.c.l.b16 %v5792
        %v6139 = vunpack.c.l.b16 %v5793
        %v6140 = vunpack.c.l.b16 %v5794
        %v6141 = vunpack.c.l.b16 %v5795
        %v6142 = vunpack.c.l.b16 %v5796
        %v6143 = vunpack.c.l.b16 %v5797
        %v6144 = vunpack.c.l.b16 %v5798
        %v6145 = vunpack.c.l.b16 %v5799
        %v6146 = vunpack.c.l.b16 %v5800
        %v6147 = vunpack.c.l.b16 %v5801
        %v6148 = vpack.c.b16 %v6133, %v6132
        %v6149 = vpack.c.b16 %v6135, %v6134
        %v6150 = vpack.c.b16 %v6137, %v6136
        %v6151 = vpack.c.b16 %v6139, %v6138
        %v6152 = vpack.c.b16 %v6141, %v6140
        %v6153 = vpack.c.b16 %v6143, %v6142
        %v6154 = vpack.c.b16 %v6145, %v6144
        %v6155 = vpack.c.b16 %v6147, %v6146
        %6164 = vmatpush.bf16.msra.mxu0 %v6155
        %6165 = vmatpush.bf16.msra.mxu0 %v6154
        %6166 = vmatpush.bf16.msra.mxu0 %v6153
        %6167 = vmatpush.bf16.msra.mxu0 %v6152
        %6168 = vmatpush.bf16.msra.mxu0 %v6151
        %6169 = vmatpush.bf16.msra.mxu0 %v6150
        %6170 = vmatpush.bf16.msra.mxu0 %v6149
        %6171 = vmatpush.bf16.msra.mxu0 %v6148
        %6172 = vmatmul.bf16.gmra.mxu0 %v6084
        %v6173 = vpop.f32.mrf.mxu0
        %v6174 = vadd.f32 %v5973, %v6173
        %v6175 = vpop.f32.mrf.mxu0
        %v6176 = vadd.f32 %v5975, %v6175
        %6177 = vmatmul.bf16.gmra.mxu0 %v6085
        %v6178 = vpop.f32.mrf.mxu0
        %v6179 = vadd.f32 %v5978, %v6178
        %v6180 = vpop.f32.mrf.mxu0
        %v6181 = vadd.f32 %v5980, %v6180
        %6182 = vmatmul.bf16.gmra.mxu0 %v6086
        %v6183 = vpop.f32.mrf.mxu0
        %v6184 = vadd.f32 %v5983, %v6183
        %v6185 = vpop.f32.mrf.mxu0
        %v6186 = vadd.f32 %v5985, %v6185
        %6187 = vmatmul.bf16.gmra.mxu0 %v6087
        %v6188 = vpop.f32.mrf.mxu0
        %v6189 = vadd.f32 %v5988, %v6188
        %v6190 = vpop.f32.mrf.mxu0
        %v6191 = vadd.f32 %v5990, %v6190
        %6192 = vmatmul.bf16.gmra.mxu0 %v6088
        %v6193 = vpop.f32.mrf.mxu0
        %v6194 = vadd.f32 %v5993, %v6193
        %v6195 = vpop.f32.mrf.mxu0
        %v6196 = vadd.f32 %v5995, %v6195
        %6197 = vmatmul.bf16.gmra.mxu0 %v6089
        %v6198 = vpop.f32.mrf.mxu0
        %v6199 = vadd.f32 %v5998, %v6198
        %v6200 = vpop.f32.mrf.mxu0
        %v6201 = vadd.f32 %v6000, %v6200
        %6202 = vmatmul.bf16.gmra.mxu0 %v6090
        %v6203 = vpop.f32.mrf.mxu0
        %v6204 = vadd.f32 %v6003, %v6203
        %v6205 = vpop.f32.mrf.mxu0
        %v6206 = vadd.f32 %v6005, %v6205
        %6207 = vmatmul.bf16.gmra.mxu0 %v6091
        %v6208 = vpop.f32.mrf.mxu0
        %v6209 = vadd.f32 %v6008, %v6208
        %v6210 = vpop.f32.mrf.mxu0
        %v6211 = vadd.f32 %v6010, %v6210
        %6212 = vmatmul.bf16.gmra.mxu0 %v6092
        %v6213 = vpop.f32.mrf.mxu0
        %v6214 = vadd.f32 %v6013, %v6213
        %v6215 = vpop.f32.mrf.mxu0
        %v6216 = vadd.f32 %v6015, %v6215
        %6217 = vmatmul.bf16.gmra.mxu0 %v6093
        %v6218 = vpop.f32.mrf.mxu0
        %v6219 = vadd.f32 %v6018, %v6218
        %v6220 = vpop.f32.mrf.mxu0
        %v6221 = vadd.f32 %v6020, %v6220
        %6222 = vmatmul.bf16.gmra.mxu0 %v6094
        %v6223 = vpop.f32.mrf.mxu0
        %v6224 = vadd.f32 %v6023, %v6223
        %v6225 = vpop.f32.mrf.mxu0
        %v6226 = vadd.f32 %v6025, %v6225
        %6227 = vmatmul.bf16.gmra.mxu0 %v6095
        %v6228 = vpop.f32.mrf.mxu0
        %v6229 = vadd.f32 %v6028, %v6228
        %v6230 = vpop.f32.mrf.mxu0
        %v6231 = vadd.f32 %v6030, %v6230
        %6232 = vmatmul.bf16.gmra.mxu0 %v6096
        %v6233 = vpop.f32.mrf.mxu0
        %v6234 = vadd.f32 %v6033, %v6233
        %v6235 = vpop.f32.mrf.mxu0
        %v6236 = vadd.f32 %v6035, %v6235
        %6237 = vmatmul.bf16.gmra.mxu0 %v6097
        %v6238 = vpop.f32.mrf.mxu0
        %v6239 = vadd.f32 %v6038, %v6238
        %v6240 = vpop.f32.mrf.mxu0
        %v6241 = vadd.f32 %v6040, %v6240
        %6242 = vmatmul.bf16.gmra.mxu0 %v6098
        %v6243 = vpop.f32.mrf.mxu0
        %v6244 = vadd.f32 %v6043, %v6243
        %v6245 = vpop.f32.mrf.mxu0
        %v6246 = vadd.f32 %v6045, %v6245
        %6247 = vmatmul.bf16.gmra.mxu0 %v6099
        %v6248 = vpop.f32.mrf.mxu0
        %v6249 = vadd.f32 %v6048, %v6248
        %v6250 = vpop.f32.mrf.mxu0
        %v6251 = vadd.f32 %v6050, %v6250
        %6252 = vdwg.mxu0
        %v6253 = vld [vmem:[#allocation2 + $0x8] sm:$0xf]
        %v6254 = vld [vmem:[#allocation2 + $0xc] sm:$0xf]
        %v6255 = vld [vmem:[#allocation2 + $0x10] sm:$0x1]
        %v6256 = vld [vmem:[#allocation2 + $0x20] sm:$0xf]
        %v6257 = vld [vmem:[#allocation2 + $0x24] sm:$0xf]
        %v6258 = vld [vmem:[#allocation2 + $0x28] sm:$0x1]
        %v6259 = vld [vmem:[#allocation2 + $0x38] sm:$0xf]
        %v6260 = vld [vmem:[#allocation2 + $0x3c] sm:$0xf]
        %v6261 = vld [vmem:[#allocation2 + $0x40] sm:$0x1]
        %v6262 = vld [vmem:[#allocation2 + $0x50] sm:$0xf]
        %v6263 = vld [vmem:[#allocation2 + $0x54] sm:$0xf]
        %v6264 = vld [vmem:[#allocation2 + $0x58] sm:$0x1]
        %v6265 = vld [vmem:[#allocation2 + $0x68] sm:$0xf]
        %v6266 = vld [vmem:[#allocation2 + $0x6c] sm:$0xf]
        %v6267 = vld [vmem:[#allocation2 + $0x70] sm:$0x1]
        %v6268 = vld [vmem:[#allocation2 + $0x80] sm:$0xf]
        %v6269 = vld [vmem:[#allocation2 + $0x84] sm:$0xf]
        %v6270 = vld [vmem:[#allocation2 + $0x88] sm:$0x1]
        %v6271 = vld [vmem:[#allocation2 + $0x98] sm:$0xf]
        %v6272 = vld [vmem:[#allocation2 + $0x9c] sm:$0xf]
        %v6273 = vld [vmem:[#allocation2 + $0xa0] sm:$0x1]
        %v6274 = vld [vmem:[#allocation2 + $0xb0] sm:$0xf]
        %v6275 = vld [vmem:[#allocation2 + $0xb4] sm:$0xf]
        %v6276 = vld [vmem:[#allocation2 + $0xb8] sm:$0x1]
        %v6277 = vld [vmem:[#allocation2 + $0xc8] sm:$0xf]
        %v6278 = vld [vmem:[#allocation2 + $0xcc] sm:$0xf]
        %v6279 = vld [vmem:[#allocation2 + $0xd0] sm:$0x1]
        %v6280 = vld [vmem:[#allocation2 + $0xe0] sm:$0xf]
        %v6281 = vld [vmem:[#allocation2 + $0xe4] sm:$0xf]
        %v6282 = vld [vmem:[#allocation2 + $0xe8] sm:$0x1]
        %v6283 = vld [vmem:[#allocation2 + $0xf8] sm:$0xf]
        %v6284 = vld [vmem:[#allocation2 + $0xfc] sm:$0xf]
        %v6285 = vld [vmem:[#allocation2 + $0x100] sm:$0x1]
        %v6286 = vld [vmem:[#allocation2 + $0x110] sm:$0xf]
        %v6287 = vld [vmem:[#allocation2 + $0x114] sm:$0xf]
        %v6288 = vld [vmem:[#allocation2 + $0x118] sm:$0x1]
        %v6289 = vld [vmem:[#allocation2 + $0x128] sm:$0xf]
        %v6290 = vld [vmem:[#allocation2 + $0x12c] sm:$0xf]
        %v6291 = vld [vmem:[#allocation2 + $0x130] sm:$0x1]
        %v6292 = vld [vmem:[#allocation2 + $0x140] sm:$0xf]
        %v6293 = vld [vmem:[#allocation2 + $0x144] sm:$0xf]
        %v6294 = vld [vmem:[#allocation2 + $0x148] sm:$0x1]
        %v6295 = vld [vmem:[#allocation2 + $0x158] sm:$0xf]
        %v6296 = vld [vmem:[#allocation2 + $0x15c] sm:$0xf]
        %v6297 = vld [vmem:[#allocation2 + $0x160] sm:$0x1]
        %v6298 = vld [vmem:[#allocation2 + $0x170] sm:$0xf]
        %v6299 = vld [vmem:[#allocation2 + $0x174] sm:$0xf]
        %v6300 = vld [vmem:[#allocation2 + $0x178] sm:$0x1]
        %v6302 = vshrl.u32 %v6253, 16
        %v6304 = vrot.slane %v6302, 4
        %v6305 = vshll.u32 %v6253, 16
        %v6307 = vrot.slane %v6305, 5
        %v6308 = vor.u32 %v6304, %v6307
        %v6309 = vrot.slane %v6308, 4
        %v6311 = vshll.u32 %v6254, 16
        %v6313 = vrot.slane %v6311, 5
        %v6314 = vsel %vm1390, %v6309, %v6313
        %v6315 = vshrl.u32 %v6254, 16
        %v6317 = vrot.slane %v6315, 4
        %v6318 = vor.u32 %v6317, %v6313
        %v6319 = vrot.slane %v6318, 4
        %v6321 = vshll.u32 %v6255, 16
        %v6323 = vrot.slane %v6321, 5
        %v6324 = vsel %vm1390, %v6319, %v6323
        %v6326 = vshrl.u32 %v6256, 16
        %v6328 = vrot.slane %v6326, 4
        %v6329 = vshll.u32 %v6256, 16
        %v6331 = vrot.slane %v6329, 5
        %v6332 = vor.u32 %v6328, %v6331
        %v6333 = vrot.slane %v6332, 4
        %v6335 = vshll.u32 %v6257, 16
        %v6337 = vrot.slane %v6335, 5
        %v6338 = vsel %vm1390, %v6333, %v6337
        %v6339 = vshrl.u32 %v6257, 16
        %v6341 = vrot.slane %v6339, 4
        %v6342 = vor.u32 %v6341, %v6337
        %v6343 = vrot.slane %v6342, 4
        %v6345 = vshll.u32 %v6258, 16
        %v6347 = vrot.slane %v6345, 5
        %v6348 = vsel %vm1390, %v6343, %v6347
        %v6350 = vshrl.u32 %v6259, 16
        %v6352 = vrot.slane %v6350, 4
        %v6353 = vshll.u32 %v6259, 16
        %v6355 = vrot.slane %v6353, 5
        %v6356 = vor.u32 %v6352, %v6355
        %v6357 = vrot.slane %v6356, 4
        %v6359 = vshll.u32 %v6260, 16
        %v6361 = vrot.slane %v6359, 5
        %v6362 = vsel %vm1390, %v6357, %v6361
        %v6363 = vshrl.u32 %v6260, 16
        %v6365 = vrot.slane %v6363, 4
        %v6366 = vor.u32 %v6365, %v6361
        %v6367 = vrot.slane %v6366, 4
        %v6369 = vshll.u32 %v6261, 16
        %v6371 = vrot.slane %v6369, 5
        %v6372 = vsel %vm1390, %v6367, %v6371
        %v6374 = vshrl.u32 %v6262, 16
        %v6376 = vrot.slane %v6374, 4
        %v6377 = vshll.u32 %v6262, 16
        %v6379 = vrot.slane %v6377, 5
        %v6380 = vor.u32 %v6376, %v6379
        %v6381 = vrot.slane %v6380, 4
        %v6383 = vshll.u32 %v6263, 16
        %v6385 = vrot.slane %v6383, 5
        %v6386 = vsel %vm1390, %v6381, %v6385
        %v6387 = vshrl.u32 %v6263, 16
        %v6389 = vrot.slane %v6387, 4
        %v6390 = vor.u32 %v6389, %v6385
        %v6391 = vrot.slane %v6390, 4
        %v6393 = vshll.u32 %v6264, 16
        %v6395 = vrot.slane %v6393, 5
        %v6396 = vsel %vm1390, %v6391, %v6395
        %v6398 = vshrl.u32 %v6265, 16
        %v6400 = vrot.slane %v6398, 4
        %v6401 = vshll.u32 %v6265, 16
        %v6403 = vrot.slane %v6401, 5
        %v6404 = vor.u32 %v6400, %v6403
        %v6405 = vrot.slane %v6404, 4
        %v6407 = vshll.u32 %v6266, 16
        %v6409 = vrot.slane %v6407, 5
        %v6410 = vsel %vm1390, %v6405, %v6409
        %v6411 = vshrl.u32 %v6266, 16
        %v6413 = vrot.slane %v6411, 4
        %v6414 = vor.u32 %v6413, %v6409
        %v6415 = vrot.slane %v6414, 4
        %v6417 = vshll.u32 %v6267, 16
        %v6419 = vrot.slane %v6417, 5
        %v6420 = vsel %vm1390, %v6415, %v6419
        %v6422 = vshrl.u32 %v6268, 16
        %v6424 = vrot.slane %v6422, 4
        %v6425 = vshll.u32 %v6268, 16
        %v6427 = vrot.slane %v6425, 5
        %v6428 = vor.u32 %v6424, %v6427
        %v6429 = vrot.slane %v6428, 4
        %v6431 = vshll.u32 %v6269, 16
        %v6433 = vrot.slane %v6431, 5
        %v6434 = vsel %vm1390, %v6429, %v6433
        %v6435 = vshrl.u32 %v6269, 16
        %v6437 = vrot.slane %v6435, 4
        %v6438 = vor.u32 %v6437, %v6433
        %v6439 = vrot.slane %v6438, 4
        %v6441 = vshll.u32 %v6270, 16
        %v6443 = vrot.slane %v6441, 5
        %v6444 = vsel %vm1390, %v6439, %v6443
        %v6446 = vshrl.u32 %v6271, 16
        %v6448 = vrot.slane %v6446, 4
        %v6449 = vshll.u32 %v6271, 16
        %v6451 = vrot.slane %v6449, 5
        %v6452 = vor.u32 %v6448, %v6451
        %v6453 = vrot.slane %v6452, 4
        %v6455 = vshll.u32 %v6272, 16
        %v6457 = vrot.slane %v6455, 5
        %v6458 = vsel %vm1390, %v6453, %v6457
        %v6459 = vshrl.u32 %v6272, 16
        %v6461 = vrot.slane %v6459, 4
        %v6462 = vor.u32 %v6461, %v6457
        %v6463 = vrot.slane %v6462, 4
        %v6465 = vshll.u32 %v6273, 16
        %v6467 = vrot.slane %v6465, 5
        %v6468 = vsel %vm1390, %v6463, %v6467
        %v6470 = vshrl.u32 %v6274, 16
        %v6472 = vrot.slane %v6470, 4
        %v6473 = vshll.u32 %v6274, 16
        %v6475 = vrot.slane %v6473, 5
        %v6476 = vor.u32 %v6472, %v6475
        %v6477 = vrot.slane %v6476, 4
        %v6479 = vshll.u32 %v6275, 16
        %v6481 = vrot.slane %v6479, 5
        %v6482 = vsel %vm1390, %v6477, %v6481
        %v6483 = vshrl.u32 %v6275, 16
        %v6485 = vrot.slane %v6483, 4
        %v6486 = vor.u32 %v6485, %v6481
        %v6487 = vrot.slane %v6486, 4
        %v6489 = vshll.u32 %v6276, 16
        %v6491 = vrot.slane %v6489, 5
        %v6492 = vsel %vm1390, %v6487, %v6491
        %v6494 = vshrl.u32 %v6277, 16
        %v6496 = vrot.slane %v6494, 4
        %v6497 = vshll.u32 %v6277, 16
        %v6499 = vrot.slane %v6497, 5
        %v6500 = vor.u32 %v6496, %v6499
        %v6501 = vrot.slane %v6500, 4
        %v6503 = vshll.u32 %v6278, 16
        %v6505 = vrot.slane %v6503, 5
        %v6506 = vsel %vm1390, %v6501, %v6505
        %v6507 = vshrl.u32 %v6278, 16
        %v6509 = vrot.slane %v6507, 4
        %v6510 = vor.u32 %v6509, %v6505
        %v6511 = vrot.slane %v6510, 4
        %v6513 = vshll.u32 %v6279, 16
        %v6515 = vrot.slane %v6513, 5
        %v6516 = vsel %vm1390, %v6511, %v6515
        %v6518 = vshrl.u32 %v6280, 16
        %v6520 = vrot.slane %v6518, 4
        %v6521 = vshll.u32 %v6280, 16
        %v6523 = vrot.slane %v6521, 5
        %v6524 = vor.u32 %v6520, %v6523
        %v6525 = vrot.slane %v6524, 4
        %v6527 = vshll.u32 %v6281, 16
        %v6529 = vrot.slane %v6527, 5
        %v6530 = vsel %vm1390, %v6525, %v6529
        %v6531 = vshrl.u32 %v6281, 16
        %v6533 = vrot.slane %v6531, 4
        %v6534 = vor.u32 %v6533, %v6529
        %v6535 = vrot.slane %v6534, 4
        %v6537 = vshll.u32 %v6282, 16
        %v6539 = vrot.slane %v6537, 5
        %v6540 = vsel %vm1390, %v6535, %v6539
        %v6542 = vshrl.u32 %v6283, 16
        %v6544 = vrot.slane %v6542, 4
        %v6545 = vshll.u32 %v6283, 16
        %v6547 = vrot.slane %v6545, 5
        %v6548 = vor.u32 %v6544, %v6547
        %v6549 = vrot.slane %v6548, 4
        %v6551 = vshll.u32 %v6284, 16
        %v6553 = vrot.slane %v6551, 5
        %v6554 = vsel %vm1390, %v6549, %v6553
        %v6555 = vshrl.u32 %v6284, 16
        %v6557 = vrot.slane %v6555, 4
        %v6558 = vor.u32 %v6557, %v6553
        %v6559 = vrot.slane %v6558, 4
        %v6561 = vshll.u32 %v6285, 16
        %v6563 = vrot.slane %v6561, 5
        %v6564 = vsel %vm1390, %v6559, %v6563
        %v6566 = vshrl.u32 %v6286, 16
        %v6568 = vrot.slane %v6566, 4
        %v6569 = vshll.u32 %v6286, 16
        %v6571 = vrot.slane %v6569, 5
        %v6572 = vor.u32 %v6568, %v6571
        %v6573 = vrot.slane %v6572, 4
        %v6575 = vshll.u32 %v6287, 16
        %v6577 = vrot.slane %v6575, 5
        %v6578 = vsel %vm1390, %v6573, %v6577
        %v6579 = vshrl.u32 %v6287, 16
        %v6581 = vrot.slane %v6579, 4
        %v6582 = vor.u32 %v6581, %v6577
        %v6583 = vrot.slane %v6582, 4
        %v6585 = vshll.u32 %v6288, 16
        %v6587 = vrot.slane %v6585, 5
        %v6588 = vsel %vm1390, %v6583, %v6587
        %v6590 = vshrl.u32 %v6289, 16
        %v6592 = vrot.slane %v6590, 4
        %v6593 = vshll.u32 %v6289, 16
        %v6595 = vrot.slane %v6593, 5
        %v6596 = vor.u32 %v6592, %v6595
        %v6597 = vrot.slane %v6596, 4
        %v6599 = vshll.u32 %v6290, 16
        %v6601 = vrot.slane %v6599, 5
        %v6602 = vsel %vm1390, %v6597, %v6601
        %v6603 = vshrl.u32 %v6290, 16
        %v6605 = vrot.slane %v6603, 4
        %v6606 = vor.u32 %v6605, %v6601
        %v6607 = vrot.slane %v6606, 4
        %v6609 = vshll.u32 %v6291, 16
        %v6611 = vrot.slane %v6609, 5
        %v6612 = vsel %vm1390, %v6607, %v6611
        %v6614 = vshrl.u32 %v6292, 16
        %v6616 = vrot.slane %v6614, 4
        %v6617 = vshll.u32 %v6292, 16
        %v6619 = vrot.slane %v6617, 5
        %v6620 = vor.u32 %v6616, %v6619
        %v6621 = vrot.slane %v6620, 4
        %v6623 = vshll.u32 %v6293, 16
        %v6625 = vrot.slane %v6623, 5
        %v6626 = vsel %vm1390, %v6621, %v6625
        %v6627 = vshrl.u32 %v6293, 16
        %v6629 = vrot.slane %v6627, 4
        %v6630 = vor.u32 %v6629, %v6625
        %v6631 = vrot.slane %v6630, 4
        %v6633 = vshll.u32 %v6294, 16
        %v6635 = vrot.slane %v6633, 5
        %v6636 = vsel %vm1390, %v6631, %v6635
        %v6638 = vshrl.u32 %v6295, 16
        %v6640 = vrot.slane %v6638, 4
        %v6641 = vshll.u32 %v6295, 16
        %v6643 = vrot.slane %v6641, 5
        %v6644 = vor.u32 %v6640, %v6643
        %v6645 = vrot.slane %v6644, 4
        %v6647 = vshll.u32 %v6296, 16
        %v6649 = vrot.slane %v6647, 5
        %v6650 = vsel %vm1390, %v6645, %v6649
        %v6651 = vshrl.u32 %v6296, 16
        %v6653 = vrot.slane %v6651, 4
        %v6654 = vor.u32 %v6653, %v6649
        %v6655 = vrot.slane %v6654, 4
        %v6657 = vshll.u32 %v6297, 16
        %v6659 = vrot.slane %v6657, 5
        %v6660 = vsel %vm1390, %v6655, %v6659
        %v6662 = vshrl.u32 %v6298, 16
        %v6664 = vrot.slane %v6662, 4
        %v6665 = vshll.u32 %v6298, 16
        %v6667 = vrot.slane %v6665, 5
        %v6668 = vor.u32 %v6664, %v6667
        %v6669 = vrot.slane %v6668, 4
        %v6671 = vshll.u32 %v6299, 16
        %v6673 = vrot.slane %v6671, 5
        %v6674 = vsel %vm1390, %v6669, %v6673
        %v6675 = vshrl.u32 %v6299, 16
        %v6677 = vrot.slane %v6675, 4
        %v6678 = vor.u32 %v6677, %v6673
        %v6679 = vrot.slane %v6678, 4
        %v6681 = vshll.u32 %v6300, 16
        %v6683 = vrot.slane %v6681, 5
        %v6684 = vsel %vm1390, %v6679, %v6683
        %s6685 = scalar_lea.vmem [#allocation8], 128
        %v6686 = vld [vmem:[%s6685] sm:$0xf]
        %v6687 = vld [vmem:[%s6685 + $0x4] sm:$0xf]
        %v6688 = vld [vmem:[%s6685 + $0x8] sm:$0xf]
        %v6689 = vld [vmem:[%s6685 + $0xc] sm:$0xf]
        %v6690 = vld [vmem:[%s6685 + $0x10] sm:$0xf]
        %v6691 = vld [vmem:[%s6685 + $0x14] sm:$0xf]
        %v6692 = vld [vmem:[%s6685 + $0x18] sm:$0xf]
        %v6693 = vld [vmem:[%s6685 + $0x1c] sm:$0xf]
        %v6694 = vld [vmem:[%s6685 + $0x20] sm:$0xf]
        %v6695 = vld [vmem:[%s6685 + $0x24] sm:$0xf]
        %v6696 = vld [vmem:[%s6685 + $0x28] sm:$0xf]
        %v6697 = vld [vmem:[%s6685 + $0x2c] sm:$0xf]
        %v6698 = vld [vmem:[%s6685 + $0x30] sm:$0xf]
        %v6699 = vld [vmem:[%s6685 + $0x34] sm:$0xf]
        %v6700 = vld [vmem:[%s6685 + $0x38] sm:$0xf]
        %v6701 = vld [vmem:[%s6685 + $0x3c] sm:$0xf]
        %v6702 = vunpack.c.l.b16 %v6314
        %v6703 = vunpack.c.l.b16 %v6324
        %v6704 = vunpack.c.l.b16 %v6338
        %v6705 = vunpack.c.l.b16 %v6348
        %v6706 = vunpack.c.l.b16 %v6362
        %v6707 = vunpack.c.l.b16 %v6372
        %v6708 = vunpack.c.l.b16 %v6386
        %v6709 = vunpack.c.l.b16 %v6396
        %v6710 = vunpack.c.l.b16 %v6410
        %v6711 = vunpack.c.l.b16 %v6420
        %v6712 = vunpack.c.l.b16 %v6434
        %v6713 = vunpack.c.l.b16 %v6444
        %v6714 = vunpack.c.l.b16 %v6458
        %v6715 = vunpack.c.l.b16 %v6468
        %v6716 = vunpack.c.l.b16 %v6482
        %v6717 = vunpack.c.l.b16 %v6492
        %v6718 = vunpack.c.l.b16 %v6506
        %v6719 = vunpack.c.l.b16 %v6516
        %v6720 = vunpack.c.l.b16 %v6530
        %v6721 = vunpack.c.l.b16 %v6540
        %v6722 = vunpack.c.l.b16 %v6554
        %v6723 = vunpack.c.l.b16 %v6564
        %v6724 = vunpack.c.l.b16 %v6578
        %v6725 = vunpack.c.l.b16 %v6588
        %v6726 = vunpack.c.l.b16 %v6602
        %v6727 = vunpack.c.l.b16 %v6612
        %v6728 = vunpack.c.l.b16 %v6626
        %v6729 = vunpack.c.l.b16 %v6636
        %v6730 = vunpack.c.l.b16 %v6650
        %v6731 = vunpack.c.l.b16 %v6660
        %v6732 = vunpack.c.l.b16 %v6674
        %v6733 = vunpack.c.l.b16 %v6684
        %v6734 = vpack.c.b16 %v6703, %v6702
        %v6735 = vpack.c.b16 %v6705, %v6704
        %v6736 = vpack.c.b16 %v6707, %v6706
        %v6737 = vpack.c.b16 %v6709, %v6708
        %v6738 = vpack.c.b16 %v6711, %v6710
        %v6739 = vpack.c.b16 %v6713, %v6712
        %v6740 = vpack.c.b16 %v6715, %v6714
        %v6741 = vpack.c.b16 %v6717, %v6716
        %v6742 = vpack.c.b16 %v6719, %v6718
        %v6743 = vpack.c.b16 %v6721, %v6720
        %v6744 = vpack.c.b16 %v6723, %v6722
        %v6745 = vpack.c.b16 %v6725, %v6724
        %v6746 = vpack.c.b16 %v6727, %v6726
        %v6747 = vpack.c.b16 %v6729, %v6728
        %v6748 = vpack.c.b16 %v6731, %v6730
        %v6749 = vpack.c.b16 %v6733, %v6732
        %v6782 = vunpack.c.l.b16 %v6686
        %v6783 = vunpack.c.l.b16 %v6687
        %v6784 = vunpack.c.l.b16 %v6688
        %v6785 = vunpack.c.l.b16 %v6689
        %v6786 = vunpack.c.l.b16 %v6690
        %v6787 = vunpack.c.l.b16 %v6691
        %v6788 = vunpack.c.l.b16 %v6692
        %v6789 = vunpack.c.l.b16 %v6693
        %v6790 = vunpack.c.l.b16 %v6694
        %v6791 = vunpack.c.l.b16 %v6695
        %v6792 = vunpack.c.l.b16 %v6696
        %v6793 = vunpack.c.l.b16 %v6697
        %v6794 = vunpack.c.l.b16 %v6698
        %v6795 = vunpack.c.l.b16 %v6699
        %v6796 = vunpack.c.l.b16 %v6700
        %v6797 = vunpack.c.l.b16 %v6701
        %v6798 = vpack.c.b16 %v6783, %v6782
        %v6799 = vpack.c.b16 %v6785, %v6784
        %v6800 = vpack.c.b16 %v6787, %v6786
        %v6801 = vpack.c.b16 %v6789, %v6788
        %v6802 = vpack.c.b16 %v6791, %v6790
        %v6803 = vpack.c.b16 %v6793, %v6792
        %v6804 = vpack.c.b16 %v6795, %v6794
        %v6805 = vpack.c.b16 %v6797, %v6796
        %6814 = vmatpush.bf16.msra.mxu0 %v6805
        %6815 = vmatpush.bf16.msra.mxu0 %v6804
        %6816 = vmatpush.bf16.msra.mxu0 %v6803
        %6817 = vmatpush.bf16.msra.mxu0 %v6802
        %6818 = vmatpush.bf16.msra.mxu0 %v6801
        %6819 = vmatpush.bf16.msra.mxu0 %v6800
        %6820 = vmatpush.bf16.msra.mxu0 %v6799
        %6821 = vmatpush.bf16.msra.mxu0 %v6798
        %6822 = vmatmul.bf16.gmra.mxu0 %v6734
        %v6823 = vpop.f32.mrf.mxu0
        %v6824 = vadd.f32 0.0, %v6823
        %v6825 = vpop.f32.mrf.mxu0
        %v6826 = vadd.f32 0.0, %v6825
        %6827 = vmatmul.bf16.gmra.mxu0 %v6735
        %v6828 = vpop.f32.mrf.mxu0
        %v6829 = vadd.f32 0.0, %v6828
        %v6830 = vpop.f32.mrf.mxu0
        %v6831 = vadd.f32 0.0, %v6830
        %6832 = vmatmul.bf16.gmra.mxu0 %v6736
        %v6833 = vpop.f32.mrf.mxu0
        %v6834 = vadd.f32 0.0, %v6833
        %v6835 = vpop.f32.mrf.mxu0
        %v6836 = vadd.f32 0.0, %v6835
        %6837 = vmatmul.bf16.gmra.mxu0 %v6737
        %v6838 = vpop.f32.mrf.mxu0
        %v6839 = vadd.f32 0.0, %v6838
        %v6840 = vpop.f32.mrf.mxu0
        %v6841 = vadd.f32 0.0, %v6840
        %6842 = vmatmul.bf16.gmra.mxu0 %v6738
        %v6843 = vpop.f32.mrf.mxu0
        %v6844 = vadd.f32 0.0, %v6843
        %v6845 = vpop.f32.mrf.mxu0
        %v6846 = vadd.f32 0.0, %v6845
        %6847 = vmatmul.bf16.gmra.mxu0 %v6739
        %v6848 = vpop.f32.mrf.mxu0
        %v6849 = vadd.f32 0.0, %v6848
        %v6850 = vpop.f32.mrf.mxu0
        %v6851 = vadd.f32 0.0, %v6850
        %6852 = vmatmul.bf16.gmra.mxu0 %v6740
        %v6853 = vpop.f32.mrf.mxu0
        %v6854 = vadd.f32 0.0, %v6853
        %v6855 = vpop.f32.mrf.mxu0
        %v6856 = vadd.f32 0.0, %v6855
        %6857 = vmatmul.bf16.gmra.mxu0 %v6741
        %v6858 = vpop.f32.mrf.mxu0
        %v6859 = vadd.f32 0.0, %v6858
        %v6860 = vpop.f32.mrf.mxu0
        %v6861 = vadd.f32 0.0, %v6860
        %6862 = vmatmul.bf16.gmra.mxu0 %v6742
        %v6863 = vpop.f32.mrf.mxu0
        %v6864 = vadd.f32 0.0, %v6863
        %v6865 = vpop.f32.mrf.mxu0
        %v6866 = vadd.f32 0.0, %v6865
        %6867 = vmatmul.bf16.gmra.mxu0 %v6743
        %v6868 = vpop.f32.mrf.mxu0
        %v6869 = vadd.f32 0.0, %v6868
        %v6870 = vpop.f32.mrf.mxu0
        %v6871 = vadd.f32 0.0, %v6870
        %6872 = vmatmul.bf16.gmra.mxu0 %v6744
        %v6873 = vpop.f32.mrf.mxu0
        %v6874 = vadd.f32 0.0, %v6873
        %v6875 = vpop.f32.mrf.mxu0
        %v6876 = vadd.f32 0.0, %v6875
        %6877 = vmatmul.bf16.gmra.mxu0 %v6745
        %v6878 = vpop.f32.mrf.mxu0
        %v6879 = vadd.f32 0.0, %v6878
        %v6880 = vpop.f32.mrf.mxu0
        %v6881 = vadd.f32 0.0, %v6880
        %6882 = vmatmul.bf16.gmra.mxu0 %v6746
        %v6883 = vpop.f32.mrf.mxu0
        %v6884 = vadd.f32 0.0, %v6883
        %v6885 = vpop.f32.mrf.mxu0
        %v6886 = vadd.f32 0.0, %v6885
        %6887 = vmatmul.bf16.gmra.mxu0 %v6747
        %v6888 = vpop.f32.mrf.mxu0
        %v6889 = vadd.f32 0.0, %v6888
        %v6890 = vpop.f32.mrf.mxu0
        %v6891 = vadd.f32 0.0, %v6890
        %6892 = vmatmul.bf16.gmra.mxu0 %v6748
        %v6893 = vpop.f32.mrf.mxu0
        %v6894 = vadd.f32 0.0, %v6893
        %v6895 = vpop.f32.mrf.mxu0
        %v6896 = vadd.f32 0.0, %v6895
        %6897 = vmatmul.bf16.gmra.mxu0 %v6749
        %v6898 = vpop.f32.mrf.mxu0
        %v6899 = vadd.f32 0.0, %v6898
        %v6900 = vpop.f32.mrf.mxu0
        %v6901 = vadd.f32 0.0, %v6900
        %6902 = vdwg.mxu0
        %v6903 = vadd.f32 %v6174, %v6824
        %v6904 = vadd.f32 %v6176, %v6826
        %v6905 = vadd.f32 %v6179, %v6829
        %v6906 = vadd.f32 %v6181, %v6831
        %v6907 = vadd.f32 %v6184, %v6834
        %v6908 = vadd.f32 %v6186, %v6836
        %v6909 = vadd.f32 %v6189, %v6839
        %v6910 = vadd.f32 %v6191, %v6841
        %v6911 = vadd.f32 %v6194, %v6844
        %v6912 = vadd.f32 %v6196, %v6846
        %v6913 = vadd.f32 %v6199, %v6849
        %v6914 = vadd.f32 %v6201, %v6851
        %v6915 = vadd.f32 %v6204, %v6854
        %v6916 = vadd.f32 %v6206, %v6856
        %v6917 = vadd.f32 %v6209, %v6859
        %v6918 = vadd.f32 %v6211, %v6861
        %v6919 = vadd.f32 %v6214, %v6864
        %v6920 = vadd.f32 %v6216, %v6866
        %v6921 = vadd.f32 %v6219, %v6869
        %v6922 = vadd.f32 %v6221, %v6871
        %v6923 = vadd.f32 %v6224, %v6874
        %v6924 = vadd.f32 %v6226, %v6876
        %v6925 = vadd.f32 %v6229, %v6879
        %v6926 = vadd.f32 %v6231, %v6881
        %v6927 = vadd.f32 %v6234, %v6884
        %v6928 = vadd.f32 %v6236, %v6886
        %v6929 = vadd.f32 %v6239, %v6889
        %v6930 = vadd.f32 %v6241, %v6891
        %v6931 = vadd.f32 %v6244, %v6894
        %v6932 = vadd.f32 %v6246, %v6896
        %v6933 = vadd.f32 %v6249, %v6899
        %v6934 = vadd.f32 %v6251, %v6901
        %v6935 = vld [vmem:[%s438 + $0x4] sm:$0x8]
        %v6936 = vld [vmem:[%s438 + $0x8] sm:$0xf]
        %v6937 = vld [vmem:[%s438 + $0xc] sm:$0xf]
        %v6938 = vld [vmem:[%s438 + $0x1c] sm:$0x8]
        %v6939 = vld [vmem:[%s438 + $0x20] sm:$0xf]
        %v6940 = vld [vmem:[%s438 + $0x24] sm:$0xf]
        %v6941 = vld [vmem:[%s438 + $0x34] sm:$0x8]
        %v6942 = vld [vmem:[%s438 + $0x38] sm:$0xf]
        %v6943 = vld [vmem:[%s438 + $0x3c] sm:$0xf]
        %v6944 = vld [vmem:[%s438 + $0x4c] sm:$0x8]
        %v6945 = vld [vmem:[%s438 + $0x50] sm:$0xf]
        %v6946 = vld [vmem:[%s438 + $0x54] sm:$0xf]
        %v6947 = vld [vmem:[%s438 + $0x64] sm:$0x8]
        %v6948 = vld [vmem:[%s438 + $0x68] sm:$0xf]
        %v6949 = vld [vmem:[%s438 + $0x6c] sm:$0xf]
        %v6950 = vld [vmem:[%s438 + $0x7c] sm:$0x8]
        %v6951 = vld [vmem:[%s438 + $0x80] sm:$0xf]
        %v6952 = vld [vmem:[%s438 + $0x84] sm:$0xf]
        %v6953 = vld [vmem:[%s438 + $0x94] sm:$0x8]
        %v6954 = vld [vmem:[%s438 + $0x98] sm:$0xf]
        %v6955 = vld [vmem:[%s438 + $0x9c] sm:$0xf]
        %v6956 = vld [vmem:[%s438 + $0xac] sm:$0x8]
        %v6957 = vld [vmem:[%s438 + $0xb0] sm:$0xf]
        %v6958 = vld [vmem:[%s438 + $0xb4] sm:$0xf]
        %v6959 = vld [vmem:[%s438 + $0xc4] sm:$0x8]
        %v6960 = vld [vmem:[%s438 + $0xc8] sm:$0xf]
        %v6961 = vld [vmem:[%s438 + $0xcc] sm:$0xf]
        %v6962 = vld [vmem:[%s438 + $0xdc] sm:$0x8]
        %v6963 = vld [vmem:[%s438 + $0xe0] sm:$0xf]
        %v6964 = vld [vmem:[%s438 + $0xe4] sm:$0xf]
        %v6965 = vld [vmem:[%s438 + $0xf4] sm:$0x8]
        %v6966 = vld [vmem:[%s438 + $0xf8] sm:$0xf]
        %v6967 = vld [vmem:[%s438 + $0xfc] sm:$0xf]
        %v6968 = vld [vmem:[%s438 + $0x10c] sm:$0x8]
        %v6969 = vld [vmem:[%s438 + $0x110] sm:$0xf]
        %v6970 = vld [vmem:[%s438 + $0x114] sm:$0xf]
        %v6971 = vld [vmem:[%s438 + $0x124] sm:$0x8]
        %v6972 = vld [vmem:[%s438 + $0x128] sm:$0xf]
        %v6973 = vld [vmem:[%s438 + $0x12c] sm:$0xf]
        %v6974 = vld [vmem:[%s438 + $0x13c] sm:$0x8]
        %v6975 = vld [vmem:[%s438 + $0x140] sm:$0xf]
        %v6976 = vld [vmem:[%s438 + $0x144] sm:$0xf]
        %v6977 = vld [vmem:[%s438 + $0x154] sm:$0x8]
        %v6978 = vld [vmem:[%s438 + $0x158] sm:$0xf]
        %v6979 = vld [vmem:[%s438 + $0x15c] sm:$0xf]
        %v6980 = vld [vmem:[%s438 + $0x16c] sm:$0x8]
        %v6981 = vld [vmem:[%s438 + $0x170] sm:$0xf]
        %v6982 = vld [vmem:[%s438 + $0x174] sm:$0xf]
        %v6984 = vshrl.u32 %v6935, 16
        %v6986 = vrot.slane %v6984, 7
        %v6987 = vrot.slane %v6986, 4
        %v6989 = vshrl.u32 %v6936, 16
        %v6991 = vrot.slane %v6989, 7
        %v6992 = vshll.u32 %v6936, 16
        %v6994 = vor.u32 %v6991, %v6992
        %v6995 = vsel %vm520, %v6987, %v6994
        %v6996 = vrot.slane %v6991, 4
        %v6998 = vshrl.u32 %v6937, 16
        %v7000 = vrot.slane %v6998, 7
        %v7001 = vshll.u32 %v6937, 16
        %v7003 = vor.u32 %v7000, %v7001
        %v7004 = vsel %vm520, %v6996, %v7003
        %v7006 = vshrl.u32 %v6938, 16
        %v7008 = vrot.slane %v7006, 7
        %v7009 = vrot.slane %v7008, 4
        %v7011 = vshrl.u32 %v6939, 16
        %v7013 = vrot.slane %v7011, 7
        %v7014 = vshll.u32 %v6939, 16
        %v7016 = vor.u32 %v7013, %v7014
        %v7017 = vsel %vm520, %v7009, %v7016
        %v7018 = vrot.slane %v7013, 4
        %v7020 = vshrl.u32 %v6940, 16
        %v7022 = vrot.slane %v7020, 7
        %v7023 = vshll.u32 %v6940, 16
        %v7025 = vor.u32 %v7022, %v7023
        %v7026 = vsel %vm520, %v7018, %v7025
        %v7028 = vshrl.u32 %v6941, 16
        %v7030 = vrot.slane %v7028, 7
        %v7031 = vrot.slane %v7030, 4
        %v7033 = vshrl.u32 %v6942, 16
        %v7035 = vrot.slane %v7033, 7
        %v7036 = vshll.u32 %v6942, 16
        %v7038 = vor.u32 %v7035, %v7036
        %v7039 = vsel %vm520, %v7031, %v7038
        %v7040 = vrot.slane %v7035, 4
        %v7042 = vshrl.u32 %v6943, 16
        %v7044 = vrot.slane %v7042, 7
        %v7045 = vshll.u32 %v6943, 16
        %v7047 = vor.u32 %v7044, %v7045
        %v7048 = vsel %vm520, %v7040, %v7047
        %v7050 = vshrl.u32 %v6944, 16
        %v7052 = vrot.slane %v7050, 7
        %v7053 = vrot.slane %v7052, 4
        %v7055 = vshrl.u32 %v6945, 16
        %v7057 = vrot.slane %v7055, 7
        %v7058 = vshll.u32 %v6945, 16
        %v7060 = vor.u32 %v7057, %v7058
        %v7061 = vsel %vm520, %v7053, %v7060
        %v7062 = vrot.slane %v7057, 4
        %v7064 = vshrl.u32 %v6946, 16
        %v7066 = vrot.slane %v7064, 7
        %v7067 = vshll.u32 %v6946, 16
        %v7069 = vor.u32 %v7066, %v7067
        %v7070 = vsel %vm520, %v7062, %v7069
        %v7072 = vshrl.u32 %v6947, 16
        %v7074 = vrot.slane %v7072, 7
        %v7075 = vrot.slane %v7074, 4
        %v7077 = vshrl.u32 %v6948, 16
        %v7079 = vrot.slane %v7077, 7
        %v7080 = vshll.u32 %v6948, 16
        %v7082 = vor.u32 %v7079, %v7080
        %v7083 = vsel %vm520, %v7075, %v7082
        %v7084 = vrot.slane %v7079, 4
        %v7086 = vshrl.u32 %v6949, 16
        %v7088 = vrot.slane %v7086, 7
        %v7089 = vshll.u32 %v6949, 16
        %v7091 = vor.u32 %v7088, %v7089
        %v7092 = vsel %vm520, %v7084, %v7091
        %v7094 = vshrl.u32 %v6950, 16
        %v7096 = vrot.slane %v7094, 7
        %v7097 = vrot.slane %v7096, 4
        %v7099 = vshrl.u32 %v6951, 16
        %v7101 = vrot.slane %v7099, 7
        %v7102 = vshll.u32 %v6951, 16
        %v7104 = vor.u32 %v7101, %v7102
        %v7105 = vsel %vm520, %v7097, %v7104
        %v7106 = vrot.slane %v7101, 4
        %v7108 = vshrl.u32 %v6952, 16
        %v7110 = vrot.slane %v7108, 7
        %v7111 = vshll.u32 %v6952, 16
        %v7113 = vor.u32 %v7110, %v7111
        %v7114 = vsel %vm520, %v7106, %v7113
        %v7116 = vshrl.u32 %v6953, 16
        %v7118 = vrot.slane %v7116, 7
        %v7119 = vrot.slane %v7118, 4
        %v7121 = vshrl.u32 %v6954, 16
        %v7123 = vrot.slane %v7121, 7
        %v7124 = vshll.u32 %v6954, 16
        %v7126 = vor.u32 %v7123, %v7124
        %v7127 = vsel %vm520, %v7119, %v7126
        %v7128 = vrot.slane %v7123, 4
        %v7130 = vshrl.u32 %v6955, 16
        %v7132 = vrot.slane %v7130, 7
        %v7133 = vshll.u32 %v6955, 16
        %v7135 = vor.u32 %v7132, %v7133
        %v7136 = vsel %vm520, %v7128, %v7135
        %v7138 = vshrl.u32 %v6956, 16
        %v7140 = vrot.slane %v7138, 7
        %v7141 = vrot.slane %v7140, 4
        %v7143 = vshrl.u32 %v6957, 16
        %v7145 = vrot.slane %v7143, 7
        %v7146 = vshll.u32 %v6957, 16
        %v7148 = vor.u32 %v7145, %v7146
        %v7149 = vsel %vm520, %v7141, %v7148
        %v7150 = vrot.slane %v7145, 4
        %v7152 = vshrl.u32 %v6958, 16
        %v7154 = vrot.slane %v7152, 7
        %v7155 = vshll.u32 %v6958, 16
        %v7157 = vor.u32 %v7154, %v7155
        %v7158 = vsel %vm520, %v7150, %v7157
        %v7160 = vshrl.u32 %v6959, 16
        %v7162 = vrot.slane %v7160, 7
        %v7163 = vrot.slane %v7162, 4
        %v7165 = vshrl.u32 %v6960, 16
        %v7167 = vrot.slane %v7165, 7
        %v7168 = vshll.u32 %v6960, 16
        %v7170 = vor.u32 %v7167, %v7168
        %v7171 = vsel %vm520, %v7163, %v7170
        %v7172 = vrot.slane %v7167, 4
        %v7174 = vshrl.u32 %v6961, 16
        %v7176 = vrot.slane %v7174, 7
        %v7177 = vshll.u32 %v6961, 16
        %v7179 = vor.u32 %v7176, %v7177
        %v7180 = vsel %vm520, %v7172, %v7179
        %v7182 = vshrl.u32 %v6962, 16
        %v7184 = vrot.slane %v7182, 7
        %v7185 = vrot.slane %v7184, 4
        %v7187 = vshrl.u32 %v6963, 16
        %v7189 = vrot.slane %v7187, 7
        %v7190 = vshll.u32 %v6963, 16
        %v7192 = vor.u32 %v7189, %v7190
        %v7193 = vsel %vm520, %v7185, %v7192
        %v7194 = vrot.slane %v7189, 4
        %v7196 = vshrl.u32 %v6964, 16
        %v7198 = vrot.slane %v7196, 7
        %v7199 = vshll.u32 %v6964, 16
        %v7201 = vor.u32 %v7198, %v7199
        %v7202 = vsel %vm520, %v7194, %v7201
        %v7204 = vshrl.u32 %v6965, 16
        %v7206 = vrot.slane %v7204, 7
        %v7207 = vrot.slane %v7206, 4
        %v7209 = vshrl.u32 %v6966, 16
        %v7211 = vrot.slane %v7209, 7
        %v7212 = vshll.u32 %v6966, 16
        %v7214 = vor.u32 %v7211, %v7212
        %v7215 = vsel %vm520, %v7207, %v7214
        %v7216 = vrot.slane %v7211, 4
        %v7218 = vshrl.u32 %v6967, 16
        %v7220 = vrot.slane %v7218, 7
        %v7221 = vshll.u32 %v6967, 16
        %v7223 = vor.u32 %v7220, %v7221
        %v7224 = vsel %vm520, %v7216, %v7223
        %v7226 = vshrl.u32 %v6968, 16
        %v7228 = vrot.slane %v7226, 7
        %v7229 = vrot.slane %v7228, 4
        %v7231 = vshrl.u32 %v6969, 16
        %v7233 = vrot.slane %v7231, 7
        %v7234 = vshll.u32 %v6969, 16
        %v7236 = vor.u32 %v7233, %v7234
        %v7237 = vsel %vm520, %v7229, %v7236
        %v7238 = vrot.slane %v7233, 4
        %v7240 = vshrl.u32 %v6970, 16
        %v7242 = vrot.slane %v7240, 7
        %v7243 = vshll.u32 %v6970, 16
        %v7245 = vor.u32 %v7242, %v7243
        %v7246 = vsel %vm520, %v7238, %v7245
        %v7248 = vshrl.u32 %v6971, 16
        %v7250 = vrot.slane %v7248, 7
        %v7251 = vrot.slane %v7250, 4
        %v7253 = vshrl.u32 %v6972, 16
        %v7255 = vrot.slane %v7253, 7
        %v7256 = vshll.u32 %v6972, 16
        %v7258 = vor.u32 %v7255, %v7256
        %v7259 = vsel %vm520, %v7251, %v7258
        %v7260 = vrot.slane %v7255, 4
        %v7262 = vshrl.u32 %v6973, 16
        %v7264 = vrot.slane %v7262, 7
        %v7265 = vshll.u32 %v6973, 16
        %v7267 = vor.u32 %v7264, %v7265
        %v7268 = vsel %vm520, %v7260, %v7267
        %v7270 = vshrl.u32 %v6974, 16
        %v7272 = vrot.slane %v7270, 7
        %v7273 = vrot.slane %v7272, 4
        %v7275 = vshrl.u32 %v6975, 16
        %v7277 = vrot.slane %v7275, 7
        %v7278 = vshll.u32 %v6975, 16
        %v7280 = vor.u32 %v7277, %v7278
        %v7281 = vsel %vm520, %v7273, %v7280
        %v7282 = vrot.slane %v7277, 4
        %v7284 = vshrl.u32 %v6976, 16
        %v7286 = vrot.slane %v7284, 7
        %v7287 = vshll.u32 %v6976, 16
        %v7289 = vor.u32 %v7286, %v7287
        %v7290 = vsel %vm520, %v7282, %v7289
        %v7292 = vshrl.u32 %v6977, 16
        %v7294 = vrot.slane %v7292, 7
        %v7295 = vrot.slane %v7294, 4
        %v7297 = vshrl.u32 %v6978, 16
        %v7299 = vrot.slane %v7297, 7
        %v7300 = vshll.u32 %v6978, 16
        %v7302 = vor.u32 %v7299, %v7300
        %v7303 = vsel %vm520, %v7295, %v7302
        %v7304 = vrot.slane %v7299, 4
        %v7306 = vshrl.u32 %v6979, 16
        %v7308 = vrot.slane %v7306, 7
        %v7309 = vshll.u32 %v6979, 16
        %v7311 = vor.u32 %v7308, %v7309
        %v7312 = vsel %vm520, %v7304, %v7311
        %v7314 = vshrl.u32 %v6980, 16
        %v7316 = vrot.slane %v7314, 7
        %v7317 = vrot.slane %v7316, 4
        %v7319 = vshrl.u32 %v6981, 16
        %v7321 = vrot.slane %v7319, 7
        %v7322 = vshll.u32 %v6981, 16
        %v7324 = vor.u32 %v7321, %v7322
        %v7325 = vsel %vm520, %v7317, %v7324
        %v7326 = vrot.slane %v7321, 4
        %v7328 = vshrl.u32 %v6982, 16
        %v7330 = vrot.slane %v7328, 7
        %v7331 = vshll.u32 %v6982, 16
        %v7333 = vor.u32 %v7330, %v7331
        %v7334 = vsel %vm520, %v7326, %v7333
        %s7335 = scalar_lea.vmem [#allocation8], 192
        %v7336 = vld [vmem:[%s7335] sm:$0xf]
        %v7337 = vld [vmem:[%s7335 + $0x4] sm:$0xf]
        %v7338 = vld [vmem:[%s7335 + $0x8] sm:$0xf]
        %v7339 = vld [vmem:[%s7335 + $0xc] sm:$0xf]
        %v7340 = vld [vmem:[%s7335 + $0x10] sm:$0xf]
        %v7341 = vld [vmem:[%s7335 + $0x14] sm:$0xf]
        %v7342 = vld [vmem:[%s7335 + $0x18] sm:$0xf]
        %v7343 = vld [vmem:[%s7335 + $0x1c] sm:$0xf]
        %v7344 = vld [vmem:[%s7335 + $0x20] sm:$0xf]
        %v7345 = vld [vmem:[%s7335 + $0x24] sm:$0xf]
        %v7346 = vld [vmem:[%s7335 + $0x28] sm:$0xf]
        %v7347 = vld [vmem:[%s7335 + $0x2c] sm:$0xf]
        %v7348 = vld [vmem:[%s7335 + $0x30] sm:$0xf]
        %v7349 = vld [vmem:[%s7335 + $0x34] sm:$0xf]
        %v7350 = vld [vmem:[%s7335 + $0x38] sm:$0xf]
        %v7351 = vld [vmem:[%s7335 + $0x3c] sm:$0xf]
        %v7352 = vunpack.c.l.b16 %v6995
        %v7353 = vunpack.c.l.b16 %v7004
        %v7354 = vunpack.c.l.b16 %v7017
        %v7355 = vunpack.c.l.b16 %v7026
        %v7356 = vunpack.c.l.b16 %v7039
        %v7357 = vunpack.c.l.b16 %v7048
        %v7358 = vunpack.c.l.b16 %v7061
        %v7359 = vunpack.c.l.b16 %v7070
        %v7360 = vunpack.c.l.b16 %v7083
        %v7361 = vunpack.c.l.b16 %v7092
        %v7362 = vunpack.c.l.b16 %v7105
        %v7363 = vunpack.c.l.b16 %v7114
        %v7364 = vunpack.c.l.b16 %v7127
        %v7365 = vunpack.c.l.b16 %v7136
        %v7366 = vunpack.c.l.b16 %v7149
        %v7367 = vunpack.c.l.b16 %v7158
        %v7368 = vunpack.c.l.b16 %v7171
        %v7369 = vunpack.c.l.b16 %v7180
        %v7370 = vunpack.c.l.b16 %v7193
        %v7371 = vunpack.c.l.b16 %v7202
        %v7372 = vunpack.c.l.b16 %v7215
        %v7373 = vunpack.c.l.b16 %v7224
        %v7374 = vunpack.c.l.b16 %v7237
        %v7375 = vunpack.c.l.b16 %v7246
        %v7376 = vunpack.c.l.b16 %v7259
        %v7377 = vunpack.c.l.b16 %v7268
        %v7378 = vunpack.c.l.b16 %v7281
        %v7379 = vunpack.c.l.b16 %v7290
        %v7380 = vunpack.c.l.b16 %v7303
        %v7381 = vunpack.c.l.b16 %v7312
        %v7382 = vunpack.c.l.b16 %v7325
        %v7383 = vunpack.c.l.b16 %v7334
        %v7384 = vpack.c.b16 %v7353, %v7352
        %v7385 = vpack.c.b16 %v7355, %v7354
        %v7386 = vpack.c.b16 %v7357, %v7356
        %v7387 = vpack.c.b16 %v7359, %v7358
        %v7388 = vpack.c.b16 %v7361, %v7360
        %v7389 = vpack.c.b16 %v7363, %v7362
        %v7390 = vpack.c.b16 %v7365, %v7364
        %v7391 = vpack.c.b16 %v7367, %v7366
        %v7392 = vpack.c.b16 %v7369, %v7368
        %v7393 = vpack.c.b16 %v7371, %v7370
        %v7394 = vpack.c.b16 %v7373, %v7372
        %v7395 = vpack.c.b16 %v7375, %v7374
        %v7396 = vpack.c.b16 %v7377, %v7376
        %v7397 = vpack.c.b16 %v7379, %v7378
        %v7398 = vpack.c.b16 %v7381, %v7380
        %v7399 = vpack.c.b16 %v7383, %v7382
        %v7432 = vunpack.c.l.b16 %v7336
        %v7433 = vunpack.c.l.b16 %v7337
        %v7434 = vunpack.c.l.b16 %v7338
        %v7435 = vunpack.c.l.b16 %v7339
        %v7436 = vunpack.c.l.b16 %v7340
        %v7437 = vunpack.c.l.b16 %v7341
        %v7438 = vunpack.c.l.b16 %v7342
        %v7439 = vunpack.c.l.b16 %v7343
        %v7440 = vunpack.c.l.b16 %v7344
        %v7441 = vunpack.c.l.b16 %v7345
        %v7442 = vunpack.c.l.b16 %v7346
        %v7443 = vunpack.c.l.b16 %v7347
        %v7444 = vunpack.c.l.b16 %v7348
        %v7445 = vunpack.c.l.b16 %v7349
        %v7446 = vunpack.c.l.b16 %v7350
        %v7447 = vunpack.c.l.b16 %v7351
        %v7448 = vpack.c.b16 %v7433, %v7432
        %v7449 = vpack.c.b16 %v7435, %v7434
        %v7450 = vpack.c.b16 %v7437, %v7436
        %v7451 = vpack.c.b16 %v7439, %v7438
        %v7452 = vpack.c.b16 %v7441, %v7440
        %v7453 = vpack.c.b16 %v7443, %v7442
        %v7454 = vpack.c.b16 %v7445, %v7444
        %v7455 = vpack.c.b16 %v7447, %v7446
        %7464 = vmatpush.bf16.msra.mxu0 %v7455
        %7465 = vmatpush.bf16.msra.mxu0 %v7454
        %7466 = vmatpush.bf16.msra.mxu0 %v7453
        %7467 = vmatpush.bf16.msra.mxu0 %v7452
        %7468 = vmatpush.bf16.msra.mxu0 %v7451
        %7469 = vmatpush.bf16.msra.mxu0 %v7450
        %7470 = vmatpush.bf16.msra.mxu0 %v7449
        %7471 = vmatpush.bf16.msra.mxu0 %v7448
        %7472 = vmatmul.bf16.gmra.mxu0 %v7384
        %v7473 = vpop.f32.mrf.mxu0
        %v7474 = vadd.f32 0.0, %v7473
        %v7475 = vpop.f32.mrf.mxu0
        %v7476 = vadd.f32 0.0, %v7475
        %7477 = vmatmul.bf16.gmra.mxu0 %v7385
        %v7478 = vpop.f32.mrf.mxu0
        %v7479 = vadd.f32 0.0, %v7478
        %v7480 = vpop.f32.mrf.mxu0
        %v7481 = vadd.f32 0.0, %v7480
        %7482 = vmatmul.bf16.gmra.mxu0 %v7386
        %v7483 = vpop.f32.mrf.mxu0
        %v7484 = vadd.f32 0.0, %v7483
        %v7485 = vpop.f32.mrf.mxu0
        %v7486 = vadd.f32 0.0, %v7485
        %7487 = vmatmul.bf16.gmra.mxu0 %v7387
        %v7488 = vpop.f32.mrf.mxu0
        %v7489 = vadd.f32 0.0, %v7488
        %v7490 = vpop.f32.mrf.mxu0
        %v7491 = vadd.f32 0.0, %v7490
        %7492 = vmatmul.bf16.gmra.mxu0 %v7388
        %v7493 = vpop.f32.mrf.mxu0
        %v7494 = vadd.f32 0.0, %v7493
        %v7495 = vpop.f32.mrf.mxu0
        %v7496 = vadd.f32 0.0, %v7495
        %7497 = vmatmul.bf16.gmra.mxu0 %v7389
        %v7498 = vpop.f32.mrf.mxu0
        %v7499 = vadd.f32 0.0, %v7498
        %v7500 = vpop.f32.mrf.mxu0
        %v7501 = vadd.f32 0.0, %v7500
        %7502 = vmatmul.bf16.gmra.mxu0 %v7390
        %v7503 = vpop.f32.mrf.mxu0
        %v7504 = vadd.f32 0.0, %v7503
        %v7505 = vpop.f32.mrf.mxu0
        %v7506 = vadd.f32 0.0, %v7505
        %7507 = vmatmul.bf16.gmra.mxu0 %v7391
        %v7508 = vpop.f32.mrf.mxu0
        %v7509 = vadd.f32 0.0, %v7508
        %v7510 = vpop.f32.mrf.mxu0
        %v7511 = vadd.f32 0.0, %v7510
        %7512 = vmatmul.bf16.gmra.mxu0 %v7392
        %v7513 = vpop.f32.mrf.mxu0
        %v7514 = vadd.f32 0.0, %v7513
        %v7515 = vpop.f32.mrf.mxu0
        %v7516 = vadd.f32 0.0, %v7515
        %7517 = vmatmul.bf16.gmra.mxu0 %v7393
        %v7518 = vpop.f32.mrf.mxu0
        %v7519 = vadd.f32 0.0, %v7518
        %v7520 = vpop.f32.mrf.mxu0
        %v7521 = vadd.f32 0.0, %v7520
        %7522 = vmatmul.bf16.gmra.mxu0 %v7394
        %v7523 = vpop.f32.mrf.mxu0
        %v7524 = vadd.f32 0.0, %v7523
        %v7525 = vpop.f32.mrf.mxu0
        %v7526 = vadd.f32 0.0, %v7525
        %7527 = vmatmul.bf16.gmra.mxu0 %v7395
        %v7528 = vpop.f32.mrf.mxu0
        %v7529 = vadd.f32 0.0, %v7528
        %v7530 = vpop.f32.mrf.mxu0
        %v7531 = vadd.f32 0.0, %v7530
        %7532 = vmatmul.bf16.gmra.mxu0 %v7396
        %v7533 = vpop.f32.mrf.mxu0
        %v7534 = vadd.f32 0.0, %v7533
        %v7535 = vpop.f32.mrf.mxu0
        %v7536 = vadd.f32 0.0, %v7535
        %7537 = vmatmul.bf16.gmra.mxu0 %v7397
        %v7538 = vpop.f32.mrf.mxu0
        %v7539 = vadd.f32 0.0, %v7538
        %v7540 = vpop.f32.mrf.mxu0
        %v7541 = vadd.f32 0.0, %v7540
        %7542 = vmatmul.bf16.gmra.mxu0 %v7398
        %v7543 = vpop.f32.mrf.mxu0
        %v7544 = vadd.f32 0.0, %v7543
        %v7545 = vpop.f32.mrf.mxu0
        %v7546 = vadd.f32 0.0, %v7545
        %7547 = vmatmul.bf16.gmra.mxu0 %v7399
        %v7548 = vpop.f32.mrf.mxu0
        %v7549 = vadd.f32 0.0, %v7548
        %v7550 = vpop.f32.mrf.mxu0
        %v7551 = vadd.f32 0.0, %v7550
        %7552 = vdwg.mxu0
        %v7553 = vadd.f32 %v6903, %v7474
        %v7554 = vadd.f32 %v6904, %v7476
        %v7555 = vadd.f32 %v6905, %v7479
        %v7556 = vadd.f32 %v6906, %v7481
        %v7557 = vadd.f32 %v6907, %v7484
        %v7558 = vadd.f32 %v6908, %v7486
        %v7559 = vadd.f32 %v6909, %v7489
        %v7560 = vadd.f32 %v6910, %v7491
        %v7561 = vadd.f32 %v6911, %v7494
        %v7562 = vadd.f32 %v6912, %v7496
        %v7563 = vadd.f32 %v6913, %v7499
        %v7564 = vadd.f32 %v6914, %v7501
        %v7565 = vadd.f32 %v6915, %v7504
        %v7566 = vadd.f32 %v6916, %v7506
        %v7567 = vadd.f32 %v6917, %v7509
        %v7568 = vadd.f32 %v6918, %v7511
        %v7569 = vadd.f32 %v6919, %v7514
        %v7570 = vadd.f32 %v6920, %v7516
        %v7571 = vadd.f32 %v6921, %v7519
        %v7572 = vadd.f32 %v6922, %v7521
        %v7573 = vadd.f32 %v6923, %v7524
        %v7574 = vadd.f32 %v6924, %v7526
        %v7575 = vadd.f32 %v6925, %v7529
        %v7576 = vadd.f32 %v6926, %v7531
        %v7577 = vadd.f32 %v6927, %v7534
        %v7578 = vadd.f32 %v6928, %v7536
        %v7579 = vadd.f32 %v6929, %v7539
        %v7580 = vadd.f32 %v6930, %v7541
        %v7581 = vadd.f32 %v6931, %v7544
        %v7582 = vadd.f32 %v6932, %v7546
        %v7583 = vadd.f32 %v6933, %v7549
        %v7584 = vadd.f32 %v6934, %v7551
        %s7585 = scalar_lea.vmem [#allocation8], 256
        %v7586 = vld [vmem:[%s7585] sm:$0xf]
        %v7587 = vld [vmem:[%s7585 + $0x4] sm:$0xf]
        %v7588 = vld [vmem:[%s7585 + $0x8] sm:$0xf]
        %v7589 = vld [vmem:[%s7585 + $0xc] sm:$0xf]
        %v7590 = vld [vmem:[%s7585 + $0x10] sm:$0xf]
        %v7591 = vld [vmem:[%s7585 + $0x14] sm:$0xf]
        %v7592 = vld [vmem:[%s7585 + $0x18] sm:$0xf]
        %v7593 = vld [vmem:[%s7585 + $0x1c] sm:$0xf]
        %v7594 = vld [vmem:[%s7585 + $0x20] sm:$0xf]
        %v7595 = vld [vmem:[%s7585 + $0x24] sm:$0xf]
        %v7596 = vld [vmem:[%s7585 + $0x28] sm:$0xf]
        %v7597 = vld [vmem:[%s7585 + $0x2c] sm:$0xf]
        %v7598 = vld [vmem:[%s7585 + $0x30] sm:$0xf]
        %v7599 = vld [vmem:[%s7585 + $0x34] sm:$0xf]
        %v7600 = vld [vmem:[%s7585 + $0x38] sm:$0xf]
        %v7601 = vld [vmem:[%s7585 + $0x3c] sm:$0xf]
        %v7634 = vunpack.c.l.b16 %v6936
        %v7635 = vunpack.c.l.b16 %v6937
        %v7636 = vunpack.c.l.b16 %v6939
        %v7637 = vunpack.c.l.b16 %v6940
        %v7638 = vunpack.c.l.b16 %v6942
        %v7639 = vunpack.c.l.b16 %v6943
        %v7640 = vunpack.c.l.b16 %v6945
        %v7641 = vunpack.c.l.b16 %v6946
        %v7642 = vunpack.c.l.b16 %v6948
        %v7643 = vunpack.c.l.b16 %v6949
        %v7644 = vunpack.c.l.b16 %v6951
        %v7645 = vunpack.c.l.b16 %v6952
        %v7646 = vunpack.c.l.b16 %v6954
        %v7647 = vunpack.c.l.b16 %v6955
        %v7648 = vunpack.c.l.b16 %v6957
        %v7649 = vunpack.c.l.b16 %v6958
        %v7650 = vunpack.c.l.b16 %v6960
        %v7651 = vunpack.c.l.b16 %v6961
        %v7652 = vunpack.c.l.b16 %v6963
        %v7653 = vunpack.c.l.b16 %v6964
        %v7654 = vunpack.c.l.b16 %v6966
        %v7655 = vunpack.c.l.b16 %v6967
        %v7656 = vunpack.c.l.b16 %v6969
        %v7657 = vunpack.c.l.b16 %v6970
        %v7658 = vunpack.c.l.b16 %v6972
        %v7659 = vunpack.c.l.b16 %v6973
        %v7660 = vunpack.c.l.b16 %v6975
        %v7661 = vunpack.c.l.b16 %v6976
        %v7662 = vunpack.c.l.b16 %v6978
        %v7663 = vunpack.c.l.b16 %v6979
        %v7664 = vunpack.c.l.b16 %v6981
        %v7665 = vunpack.c.l.b16 %v6982
        %v7666 = vpack.c.b16 %v7635, %v7634
        %v7667 = vpack.c.b16 %v7637, %v7636
        %v7668 = vpack.c.b16 %v7639, %v7638
        %v7669 = vpack.c.b16 %v7641, %v7640
        %v7670 = vpack.c.b16 %v7643, %v7642
        %v7671 = vpack.c.b16 %v7645, %v7644
        %v7672 = vpack.c.b16 %v7647, %v7646
        %v7673 = vpack.c.b16 %v7649, %v7648
        %v7674 = vpack.c.b16 %v7651, %v7650
        %v7675 = vpack.c.b16 %v7653, %v7652
        %v7676 = vpack.c.b16 %v7655, %v7654
        %v7677 = vpack.c.b16 %v7657, %v7656
        %v7678 = vpack.c.b16 %v7659, %v7658
        %v7679 = vpack.c.b16 %v7661, %v7660
        %v7680 = vpack.c.b16 %v7663, %v7662
        %v7681 = vpack.c.b16 %v7665, %v7664
        %v7714 = vunpack.c.l.b16 %v7586
        %v7715 = vunpack.c.l.b16 %v7587
        %v7716 = vunpack.c.l.b16 %v7588
        %v7717 = vunpack.c.l.b16 %v7589
        %v7718 = vunpack.c.l.b16 %v7590
        %v7719 = vunpack.c.l.b16 %v7591
        %v7720 = vunpack.c.l.b16 %v7592
        %v7721 = vunpack.c.l.b16 %v7593
        %v7722 = vunpack.c.l.b16 %v7594
        %v7723 = vunpack.c.l.b16 %v7595
        %v7724 = vunpack.c.l.b16 %v7596
        %v7725 = vunpack.c.l.b16 %v7597
        %v7726 = vunpack.c.l.b16 %v7598
        %v7727 = vunpack.c.l.b16 %v7599
        %v7728 = vunpack.c.l.b16 %v7600
        %v7729 = vunpack.c.l.b16 %v7601
        %v7730 = vpack.c.b16 %v7715, %v7714
        %v7731 = vpack.c.b16 %v7717, %v7716
        %v7732 = vpack.c.b16 %v7719, %v7718
        %v7733 = vpack.c.b16 %v7721, %v7720
        %v7734 = vpack.c.b16 %v7723, %v7722
        %v7735 = vpack.c.b16 %v7725, %v7724
        %v7736 = vpack.c.b16 %v7727, %v7726
        %v7737 = vpack.c.b16 %v7729, %v7728
        %7746 = vmatpush.bf16.msra.mxu0 %v7737
        %7747 = vmatpush.bf16.msra.mxu0 %v7736
        %7748 = vmatpush.bf16.msra.mxu0 %v7735
        %7749 = vmatpush.bf16.msra.mxu0 %v7734
        %7750 = vmatpush.bf16.msra.mxu0 %v7733
        %7751 = vmatpush.bf16.msra.mxu0 %v7732
        %7752 = vmatpush.bf16.msra.mxu0 %v7731
        %7753 = vmatpush.bf16.msra.mxu0 %v7730
        %7754 = vmatmul.bf16.gmra.mxu0 %v7666
        %v7755 = vpop.f32.mrf.mxu0
        %v7756 = vadd.f32 0.0, %v7755
        %v7757 = vpop.f32.mrf.mxu0
        %v7758 = vadd.f32 0.0, %v7757
        %7759 = vmatmul.bf16.gmra.mxu0 %v7667
        %v7760 = vpop.f32.mrf.mxu0
        %v7761 = vadd.f32 0.0, %v7760
        %v7762 = vpop.f32.mrf.mxu0
        %v7763 = vadd.f32 0.0, %v7762
        %7764 = vmatmul.bf16.gmra.mxu0 %v7668
        %v7765 = vpop.f32.mrf.mxu0
        %v7766 = vadd.f32 0.0, %v7765
        %v7767 = vpop.f32.mrf.mxu0
        %v7768 = vadd.f32 0.0, %v7767
        %7769 = vmatmul.bf16.gmra.mxu0 %v7669
        %v7770 = vpop.f32.mrf.mxu0
        %v7771 = vadd.f32 0.0, %v7770
        %v7772 = vpop.f32.mrf.mxu0
        %v7773 = vadd.f32 0.0, %v7772
        %7774 = vmatmul.bf16.gmra.mxu0 %v7670
        %v7775 = vpop.f32.mrf.mxu0
        %v7776 = vadd.f32 0.0, %v7775
        %v7777 = vpop.f32.mrf.mxu0
        %v7778 = vadd.f32 0.0, %v7777
        %7779 = vmatmul.bf16.gmra.mxu0 %v7671
        %v7780 = vpop.f32.mrf.mxu0
        %v7781 = vadd.f32 0.0, %v7780
        %v7782 = vpop.f32.mrf.mxu0
        %v7783 = vadd.f32 0.0, %v7782
        %7784 = vmatmul.bf16.gmra.mxu0 %v7672
        %v7785 = vpop.f32.mrf.mxu0
        %v7786 = vadd.f32 0.0, %v7785
        %v7787 = vpop.f32.mrf.mxu0
        %v7788 = vadd.f32 0.0, %v7787
        %7789 = vmatmul.bf16.gmra.mxu0 %v7673
        %v7790 = vpop.f32.mrf.mxu0
        %v7791 = vadd.f32 0.0, %v7790
        %v7792 = vpop.f32.mrf.mxu0
        %v7793 = vadd.f32 0.0, %v7792
        %7794 = vmatmul.bf16.gmra.mxu0 %v7674
        %v7795 = vpop.f32.mrf.mxu0
        %v7796 = vadd.f32 0.0, %v7795
        %v7797 = vpop.f32.mrf.mxu0
        %v7798 = vadd.f32 0.0, %v7797
        %7799 = vmatmul.bf16.gmra.mxu0 %v7675
        %v7800 = vpop.f32.mrf.mxu0
        %v7801 = vadd.f32 0.0, %v7800
        %v7802 = vpop.f32.mrf.mxu0
        %v7803 = vadd.f32 0.0, %v7802
        %7804 = vmatmul.bf16.gmra.mxu0 %v7676
        %v7805 = vpop.f32.mrf.mxu0
        %v7806 = vadd.f32 0.0, %v7805
        %v7807 = vpop.f32.mrf.mxu0
        %v7808 = vadd.f32 0.0, %v7807
        %7809 = vmatmul.bf16.gmra.mxu0 %v7677
        %v7810 = vpop.f32.mrf.mxu0
        %v7811 = vadd.f32 0.0, %v7810
        %v7812 = vpop.f32.mrf.mxu0
        %v7813 = vadd.f32 0.0, %v7812
        %7814 = vmatmul.bf16.gmra.mxu0 %v7678
        %v7815 = vpop.f32.mrf.mxu0
        %v7816 = vadd.f32 0.0, %v7815
        %v7817 = vpop.f32.mrf.mxu0
        %v7818 = vadd.f32 0.0, %v7817
        %7819 = vmatmul.bf16.gmra.mxu0 %v7679
        %v7820 = vpop.f32.mrf.mxu0
        %v7821 = vadd.f32 0.0, %v7820
        %v7822 = vpop.f32.mrf.mxu0
        %v7823 = vadd.f32 0.0, %v7822
        %7824 = vmatmul.bf16.gmra.mxu0 %v7680
        %v7825 = vpop.f32.mrf.mxu0
        %v7826 = vadd.f32 0.0, %v7825
        %v7827 = vpop.f32.mrf.mxu0
        %v7828 = vadd.f32 0.0, %v7827
        %7829 = vmatmul.bf16.gmra.mxu0 %v7681
        %v7830 = vpop.f32.mrf.mxu0
        %v7831 = vadd.f32 0.0, %v7830
        %v7832 = vpop.f32.mrf.mxu0
        %v7833 = vadd.f32 0.0, %v7832
        %7834 = vdwg.mxu0
        %v7835 = vadd.f32 %v7553, %v7756
        %v7836 = vadd.f32 %v7554, %v7758
        %v7837 = vadd.f32 %v7555, %v7761
        %v7838 = vadd.f32 %v7556, %v7763
        %v7839 = vadd.f32 %v7557, %v7766
        %v7840 = vadd.f32 %v7558, %v7768
        %v7841 = vadd.f32 %v7559, %v7771
        %v7842 = vadd.f32 %v7560, %v7773
        %v7843 = vadd.f32 %v7561, %v7776
        %v7844 = vadd.f32 %v7562, %v7778
        %v7845 = vadd.f32 %v7563, %v7781
        %v7846 = vadd.f32 %v7564, %v7783
        %v7847 = vadd.f32 %v7565, %v7786
        %v7848 = vadd.f32 %v7566, %v7788
        %v7849 = vadd.f32 %v7567, %v7791
        %v7850 = vadd.f32 %v7568, %v7793
        %v7851 = vadd.f32 %v7569, %v7796
        %v7852 = vadd.f32 %v7570, %v7798
        %v7853 = vadd.f32 %v7571, %v7801
        %v7854 = vadd.f32 %v7572, %v7803
        %v7855 = vadd.f32 %v7573, %v7806
        %v7856 = vadd.f32 %v7574, %v7808
        %v7857 = vadd.f32 %v7575, %v7811
        %v7858 = vadd.f32 %v7576, %v7813
        %v7859 = vadd.f32 %v7577, %v7816
        %v7860 = vadd.f32 %v7578, %v7818
        %v7861 = vadd.f32 %v7579, %v7821
        %v7862 = vadd.f32 %v7580, %v7823
        %v7863 = vadd.f32 %v7581, %v7826
        %v7864 = vadd.f32 %v7582, %v7828
        %v7865 = vadd.f32 %v7583, %v7831
        %v7866 = vadd.f32 %v7584, %v7833
        %v7867 = vld [vmem:[%s438 + $0x8] sm:$0xf]
        %v7868 = vld [vmem:[%s438 + $0xc] sm:$0xf]
        %v7869 = vld [vmem:[%s438 + $0x10] sm:$0x1]
        %v7870 = vld [vmem:[%s438 + $0x20] sm:$0xf]
        %v7871 = vld [vmem:[%s438 + $0x24] sm:$0xf]
        %v7872 = vld [vmem:[%s438 + $0x28] sm:$0x1]
        %v7873 = vld [vmem:[%s438 + $0x38] sm:$0xf]
        %v7874 = vld [vmem:[%s438 + $0x3c] sm:$0xf]
        %v7875 = vld [vmem:[%s438 + $0x40] sm:$0x1]
        %v7876 = vld [vmem:[%s438 + $0x50] sm:$0xf]
        %v7877 = vld [vmem:[%s438 + $0x54] sm:$0xf]
        %v7878 = vld [vmem:[%s438 + $0x58] sm:$0x1]
        %v7879 = vld [vmem:[%s438 + $0x68] sm:$0xf]
        %v7880 = vld [vmem:[%s438 + $0x6c] sm:$0xf]
        %v7881 = vld [vmem:[%s438 + $0x70] sm:$0x1]
        %v7882 = vld [vmem:[%s438 + $0x80] sm:$0xf]
        %v7883 = vld [vmem:[%s438 + $0x84] sm:$0xf]
        %v7884 = vld [vmem:[%s438 + $0x88] sm:$0x1]
        %v7885 = vld [vmem:[%s438 + $0x98] sm:$0xf]
        %v7886 = vld [vmem:[%s438 + $0x9c] sm:$0xf]
        %v7887 = vld [vmem:[%s438 + $0xa0] sm:$0x1]
        %v7888 = vld [vmem:[%s438 + $0xb0] sm:$0xf]
        %v7889 = vld [vmem:[%s438 + $0xb4] sm:$0xf]
        %v7890 = vld [vmem:[%s438 + $0xb8] sm:$0x1]
        %v7891 = vld [vmem:[%s438 + $0xc8] sm:$0xf]
        %v7892 = vld [vmem:[%s438 + $0xcc] sm:$0xf]
        %v7893 = vld [vmem:[%s438 + $0xd0] sm:$0x1]
        %v7894 = vld [vmem:[%s438 + $0xe0] sm:$0xf]
        %v7895 = vld [vmem:[%s438 + $0xe4] sm:$0xf]
        %v7896 = vld [vmem:[%s438 + $0xe8] sm:$0x1]
        %v7897 = vld [vmem:[%s438 + $0xf8] sm:$0xf]
        %v7898 = vld [vmem:[%s438 + $0xfc] sm:$0xf]
        %v7899 = vld [vmem:[%s438 + $0x100] sm:$0x1]
        %v7900 = vld [vmem:[%s438 + $0x110] sm:$0xf]
        %v7901 = vld [vmem:[%s438 + $0x114] sm:$0xf]
        %v7902 = vld [vmem:[%s438 + $0x118] sm:$0x1]
        %v7903 = vld [vmem:[%s438 + $0x128] sm:$0xf]
        %v7904 = vld [vmem:[%s438 + $0x12c] sm:$0xf]
        %v7905 = vld [vmem:[%s438 + $0x130] sm:$0x1]
        %v7906 = vld [vmem:[%s438 + $0x140] sm:$0xf]
        %v7907 = vld [vmem:[%s438 + $0x144] sm:$0xf]
        %v7908 = vld [vmem:[%s438 + $0x148] sm:$0x1]
        %v7909 = vld [vmem:[%s438 + $0x158] sm:$0xf]
        %v7910 = vld [vmem:[%s438 + $0x15c] sm:$0xf]
        %v7911 = vld [vmem:[%s438 + $0x160] sm:$0x1]
        %v7912 = vld [vmem:[%s438 + $0x170] sm:$0xf]
        %v7913 = vld [vmem:[%s438 + $0x174] sm:$0xf]
        %v7914 = vld [vmem:[%s438 + $0x178] sm:$0x1]
        %v7916 = vshrl.u32 %v7867, 16
        %v7918 = vrot.slane %v7916, 4
        %v7919 = vshll.u32 %v7867, 16
        %v7921 = vrot.slane %v7919, 5
        %v7922 = vor.u32 %v7918, %v7921
        %v7923 = vrot.slane %v7922, 4
        %v7925 = vshll.u32 %v7868, 16
        %v7927 = vrot.slane %v7925, 5
        %v7928 = vsel %vm1390, %v7923, %v7927
        %v7929 = vshrl.u32 %v7868, 16
        %v7931 = vrot.slane %v7929, 4
        %v7932 = vor.u32 %v7931, %v7927
        %v7933 = vrot.slane %v7932, 4
        %v7935 = vshll.u32 %v7869, 16
        %v7937 = vrot.slane %v7935, 5
        %v7938 = vsel %vm1390, %v7933, %v7937
        %v7940 = vshrl.u32 %v7870, 16
        %v7942 = vrot.slane %v7940, 4
        %v7943 = vshll.u32 %v7870, 16
        %v7945 = vrot.slane %v7943, 5
        %v7946 = vor.u32 %v7942, %v7945
        %v7947 = vrot.slane %v7946, 4
        %v7949 = vshll.u32 %v7871, 16
        %v7951 = vrot.slane %v7949, 5
        %v7952 = vsel %vm1390, %v7947, %v7951
        %v7953 = vshrl.u32 %v7871, 16
        %v7955 = vrot.slane %v7953, 4
        %v7956 = vor.u32 %v7955, %v7951
        %v7957 = vrot.slane %v7956, 4
        %v7959 = vshll.u32 %v7872, 16
        %v7961 = vrot.slane %v7959, 5
        %v7962 = vsel %vm1390, %v7957, %v7961
        %v7964 = vshrl.u32 %v7873, 16
        %v7966 = vrot.slane %v7964, 4
        %v7967 = vshll.u32 %v7873, 16
        %v7969 = vrot.slane %v7967, 5
        %v7970 = vor.u32 %v7966, %v7969
        %v7971 = vrot.slane %v7970, 4
        %v7973 = vshll.u32 %v7874, 16
        %v7975 = vrot.slane %v7973, 5
        %v7976 = vsel %vm1390, %v7971, %v7975
        %v7977 = vshrl.u32 %v7874, 16
        %v7979 = vrot.slane %v7977, 4
        %v7980 = vor.u32 %v7979, %v7975
        %v7981 = vrot.slane %v7980, 4
        %v7983 = vshll.u32 %v7875, 16
        %v7985 = vrot.slane %v7983, 5
        %v7986 = vsel %vm1390, %v7981, %v7985
        %v7988 = vshrl.u32 %v7876, 16
        %v7990 = vrot.slane %v7988, 4
        %v7991 = vshll.u32 %v7876, 16
        %v7993 = vrot.slane %v7991, 5
        %v7994 = vor.u32 %v7990, %v7993
        %v7995 = vrot.slane %v7994, 4
        %v7997 = vshll.u32 %v7877, 16
        %v7999 = vrot.slane %v7997, 5
        %v8000 = vsel %vm1390, %v7995, %v7999
        %v8001 = vshrl.u32 %v7877, 16
        %v8003 = vrot.slane %v8001, 4
        %v8004 = vor.u32 %v8003, %v7999
        %v8005 = vrot.slane %v8004, 4
        %v8007 = vshll.u32 %v7878, 16
        %v8009 = vrot.slane %v8007, 5
        %v8010 = vsel %vm1390, %v8005, %v8009
        %v8012 = vshrl.u32 %v7879, 16
        %v8014 = vrot.slane %v8012, 4
        %v8015 = vshll.u32 %v7879, 16
        %v8017 = vrot.slane %v8015, 5
        %v8018 = vor.u32 %v8014, %v8017
        %v8019 = vrot.slane %v8018, 4
        %v8021 = vshll.u32 %v7880, 16
        %v8023 = vrot.slane %v8021, 5
        %v8024 = vsel %vm1390, %v8019, %v8023
        %v8025 = vshrl.u32 %v7880, 16
        %v8027 = vrot.slane %v8025, 4
        %v8028 = vor.u32 %v8027, %v8023
        %v8029 = vrot.slane %v8028, 4
        %v8031 = vshll.u32 %v7881, 16
        %v8033 = vrot.slane %v8031, 5
        %v8034 = vsel %vm1390, %v8029, %v8033
        %v8036 = vshrl.u32 %v7882, 16
        %v8038 = vrot.slane %v8036, 4
        %v8039 = vshll.u32 %v7882, 16
        %v8041 = vrot.slane %v8039, 5
        %v8042 = vor.u32 %v8038, %v8041
        %v8043 = vrot.slane %v8042, 4
        %v8045 = vshll.u32 %v7883, 16
        %v8047 = vrot.slane %v8045, 5
        %v8048 = vsel %vm1390, %v8043, %v8047
        %v8049 = vshrl.u32 %v7883, 16
        %v8051 = vrot.slane %v8049, 4
        %v8052 = vor.u32 %v8051, %v8047
        %v8053 = vrot.slane %v8052, 4
        %v8055 = vshll.u32 %v7884, 16
        %v8057 = vrot.slane %v8055, 5
        %v8058 = vsel %vm1390, %v8053, %v8057
        %v8060 = vshrl.u32 %v7885, 16
        %v8062 = vrot.slane %v8060, 4
        %v8063 = vshll.u32 %v7885, 16
        %v8065 = vrot.slane %v8063, 5
        %v8066 = vor.u32 %v8062, %v8065
        %v8067 = vrot.slane %v8066, 4
        %v8069 = vshll.u32 %v7886, 16
        %v8071 = vrot.slane %v8069, 5
        %v8072 = vsel %vm1390, %v8067, %v8071
        %v8073 = vshrl.u32 %v7886, 16
        %v8075 = vrot.slane %v8073, 4
        %v8076 = vor.u32 %v8075, %v8071
        %v8077 = vrot.slane %v8076, 4
        %v8079 = vshll.u32 %v7887, 16
        %v8081 = vrot.slane %v8079, 5
        %v8082 = vsel %vm1390, %v8077, %v8081
        %v8084 = vshrl.u32 %v7888, 16
        %v8086 = vrot.slane %v8084, 4
        %v8087 = vshll.u32 %v7888, 16
        %v8089 = vrot.slane %v8087, 5
        %v8090 = vor.u32 %v8086, %v8089
        %v8091 = vrot.slane %v8090, 4
        %v8093 = vshll.u32 %v7889, 16
        %v8095 = vrot.slane %v8093, 5
        %v8096 = vsel %vm1390, %v8091, %v8095
        %v8097 = vshrl.u32 %v7889, 16
        %v8099 = vrot.slane %v8097, 4
        %v8100 = vor.u32 %v8099, %v8095
        %v8101 = vrot.slane %v8100, 4
        %v8103 = vshll.u32 %v7890, 16
        %v8105 = vrot.slane %v8103, 5
        %v8106 = vsel %vm1390, %v8101, %v8105
        %v8108 = vshrl.u32 %v7891, 16
        %v8110 = vrot.slane %v8108, 4
        %v8111 = vshll.u32 %v7891, 16
        %v8113 = vrot.slane %v8111, 5
        %v8114 = vor.u32 %v8110, %v8113
        %v8115 = vrot.slane %v8114, 4
        %v8117 = vshll.u32 %v7892, 16
        %v8119 = vrot.slane %v8117, 5
        %v8120 = vsel %vm1390, %v8115, %v8119
        %v8121 = vshrl.u32 %v7892, 16
        %v8123 = vrot.slane %v8121, 4
        %v8124 = vor.u32 %v8123, %v8119
        %v8125 = vrot.slane %v8124, 4
        %v8127 = vshll.u32 %v7893, 16
        %v8129 = vrot.slane %v8127, 5
        %v8130 = vsel %vm1390, %v8125, %v8129
        %v8132 = vshrl.u32 %v7894, 16
        %v8134 = vrot.slane %v8132, 4
        %v8135 = vshll.u32 %v7894, 16
        %v8137 = vrot.slane %v8135, 5
        %v8138 = vor.u32 %v8134, %v8137
        %v8139 = vrot.slane %v8138, 4
        %v8141 = vshll.u32 %v7895, 16
        %v8143 = vrot.slane %v8141, 5
        %v8144 = vsel %vm1390, %v8139, %v8143
        %v8145 = vshrl.u32 %v7895, 16
        %v8147 = vrot.slane %v8145, 4
        %v8148 = vor.u32 %v8147, %v8143
        %v8149 = vrot.slane %v8148, 4
        %v8151 = vshll.u32 %v7896, 16
        %v8153 = vrot.slane %v8151, 5
        %v8154 = vsel %vm1390, %v8149, %v8153
        %v8156 = vshrl.u32 %v7897, 16
        %v8158 = vrot.slane %v8156, 4
        %v8159 = vshll.u32 %v7897, 16
        %v8161 = vrot.slane %v8159, 5
        %v8162 = vor.u32 %v8158, %v8161
        %v8163 = vrot.slane %v8162, 4
        %v8165 = vshll.u32 %v7898, 16
        %v8167 = vrot.slane %v8165, 5
        %v8168 = vsel %vm1390, %v8163, %v8167
        %v8169 = vshrl.u32 %v7898, 16
        %v8171 = vrot.slane %v8169, 4
        %v8172 = vor.u32 %v8171, %v8167
        %v8173 = vrot.slane %v8172, 4
        %v8175 = vshll.u32 %v7899, 16
        %v8177 = vrot.slane %v8175, 5
        %v8178 = vsel %vm1390, %v8173, %v8177
        %v8180 = vshrl.u32 %v7900, 16
        %v8182 = vrot.slane %v8180, 4
        %v8183 = vshll.u32 %v7900, 16
        %v8185 = vrot.slane %v8183, 5
        %v8186 = vor.u32 %v8182, %v8185
        %v8187 = vrot.slane %v8186, 4
        %v8189 = vshll.u32 %v7901, 16
        %v8191 = vrot.slane %v8189, 5
        %v8192 = vsel %vm1390, %v8187, %v8191
        %v8193 = vshrl.u32 %v7901, 16
        %v8195 = vrot.slane %v8193, 4
        %v8196 = vor.u32 %v8195, %v8191
        %v8197 = vrot.slane %v8196, 4
        %v8199 = vshll.u32 %v7902, 16
        %v8201 = vrot.slane %v8199, 5
        %v8202 = vsel %vm1390, %v8197, %v8201
        %v8204 = vshrl.u32 %v7903, 16
        %v8206 = vrot.slane %v8204, 4
        %v8207 = vshll.u32 %v7903, 16
        %v8209 = vrot.slane %v8207, 5
        %v8210 = vor.u32 %v8206, %v8209
        %v8211 = vrot.slane %v8210, 4
        %v8213 = vshll.u32 %v7904, 16
        %v8215 = vrot.slane %v8213, 5
        %v8216 = vsel %vm1390, %v8211, %v8215
        %v8217 = vshrl.u32 %v7904, 16
        %v8219 = vrot.slane %v8217, 4
        %v8220 = vor.u32 %v8219, %v8215
        %v8221 = vrot.slane %v8220, 4
        %v8223 = vshll.u32 %v7905, 16
        %v8225 = vrot.slane %v8223, 5
        %v8226 = vsel %vm1390, %v8221, %v8225
        %v8228 = vshrl.u32 %v7906, 16
        %v8230 = vrot.slane %v8228, 4
        %v8231 = vshll.u32 %v7906, 16
        %v8233 = vrot.slane %v8231, 5
        %v8234 = vor.u32 %v8230, %v8233
        %v8235 = vrot.slane %v8234, 4
        %v8237 = vshll.u32 %v7907, 16
        %v8239 = vrot.slane %v8237, 5
        %v8240 = vsel %vm1390, %v8235, %v8239
        %v8241 = vshrl.u32 %v7907, 16
        %v8243 = vrot.slane %v8241, 4
        %v8244 = vor.u32 %v8243, %v8239
        %v8245 = vrot.slane %v8244, 4
        %v8247 = vshll.u32 %v7908, 16
        %v8249 = vrot.slane %v8247, 5
        %v8250 = vsel %vm1390, %v8245, %v8249
        %v8252 = vshrl.u32 %v7909, 16
        %v8254 = vrot.slane %v8252, 4
        %v8255 = vshll.u32 %v7909, 16
        %v8257 = vrot.slane %v8255, 5
        %v8258 = vor.u32 %v8254, %v8257
        %v8259 = vrot.slane %v8258, 4
        %v8261 = vshll.u32 %v7910, 16
        %v8263 = vrot.slane %v8261, 5
        %v8264 = vsel %vm1390, %v8259, %v8263
        %v8265 = vshrl.u32 %v7910, 16
        %v8267 = vrot.slane %v8265, 4
        %v8268 = vor.u32 %v8267, %v8263
        %v8269 = vrot.slane %v8268, 4
        %v8271 = vshll.u32 %v7911, 16
        %v8273 = vrot.slane %v8271, 5
        %v8274 = vsel %vm1390, %v8269, %v8273
        %v8276 = vshrl.u32 %v7912, 16
        %v8278 = vrot.slane %v8276, 4
        %v8279 = vshll.u32 %v7912, 16
        %v8281 = vrot.slane %v8279, 5
        %v8282 = vor.u32 %v8278, %v8281
        %v8283 = vrot.slane %v8282, 4
        %v8285 = vshll.u32 %v7913, 16
        %v8287 = vrot.slane %v8285, 5
        %v8288 = vsel %vm1390, %v8283, %v8287
        %v8289 = vshrl.u32 %v7913, 16
        %v8291 = vrot.slane %v8289, 4
        %v8292 = vor.u32 %v8291, %v8287
        %v8293 = vrot.slane %v8292, 4
        %v8295 = vshll.u32 %v7914, 16
        %v8297 = vrot.slane %v8295, 5
        %v8298 = vsel %vm1390, %v8293, %v8297
        %s8299 = scalar_lea.vmem [#allocation8], 320
        %v8300 = vld [vmem:[%s8299] sm:$0xf]
        %v8301 = vld [vmem:[%s8299 + $0x4] sm:$0xf]
        %v8302 = vld [vmem:[%s8299 + $0x8] sm:$0xf]
        %v8303 = vld [vmem:[%s8299 + $0xc] sm:$0xf]
        %v8304 = vld [vmem:[%s8299 + $0x10] sm:$0xf]
        %v8305 = vld [vmem:[%s8299 + $0x14] sm:$0xf]
        %v8306 = vld [vmem:[%s8299 + $0x18] sm:$0xf]
        %v8307 = vld [vmem:[%s8299 + $0x1c] sm:$0xf]
        %v8308 = vld [vmem:[%s8299 + $0x20] sm:$0xf]
        %v8309 = vld [vmem:[%s8299 + $0x24] sm:$0xf]
        %v8310 = vld [vmem:[%s8299 + $0x28] sm:$0xf]
        %v8311 = vld [vmem:[%s8299 + $0x2c] sm:$0xf]
        %v8312 = vld [vmem:[%s8299 + $0x30] sm:$0xf]
        %v8313 = vld [vmem:[%s8299 + $0x34] sm:$0xf]
        %v8314 = vld [vmem:[%s8299 + $0x38] sm:$0xf]
        %v8315 = vld [vmem:[%s8299 + $0x3c] sm:$0xf]
        %v8316 = vunpack.c.l.b16 %v7928
        %v8317 = vunpack.c.l.b16 %v7938
        %v8318 = vunpack.c.l.b16 %v7952
        %v8319 = vunpack.c.l.b16 %v7962
        %v8320 = vunpack.c.l.b16 %v7976
        %v8321 = vunpack.c.l.b16 %v7986
        %v8322 = vunpack.c.l.b16 %v8000
        %v8323 = vunpack.c.l.b16 %v8010
        %v8324 = vunpack.c.l.b16 %v8024
        %v8325 = vunpack.c.l.b16 %v8034
        %v8326 = vunpack.c.l.b16 %v8048
        %v8327 = vunpack.c.l.b16 %v8058
        %v8328 = vunpack.c.l.b16 %v8072
        %v8329 = vunpack.c.l.b16 %v8082
        %v8330 = vunpack.c.l.b16 %v8096
        %v8331 = vunpack.c.l.b16 %v8106
        %v8332 = vunpack.c.l.b16 %v8120
        %v8333 = vunpack.c.l.b16 %v8130
        %v8334 = vunpack.c.l.b16 %v8144
        %v8335 = vunpack.c.l.b16 %v8154
        %v8336 = vunpack.c.l.b16 %v8168
        %v8337 = vunpack.c.l.b16 %v8178
        %v8338 = vunpack.c.l.b16 %v8192
        %v8339 = vunpack.c.l.b16 %v8202
        %v8340 = vunpack.c.l.b16 %v8216
        %v8341 = vunpack.c.l.b16 %v8226
        %v8342 = vunpack.c.l.b16 %v8240
        %v8343 = vunpack.c.l.b16 %v8250
        %v8344 = vunpack.c.l.b16 %v8264
        %v8345 = vunpack.c.l.b16 %v8274
        %v8346 = vunpack.c.l.b16 %v8288
        %v8347 = vunpack.c.l.b16 %v8298
        %v8348 = vpack.c.b16 %v8317, %v8316
        %v8349 = vpack.c.b16 %v8319, %v8318
        %v8350 = vpack.c.b16 %v8321, %v8320
        %v8351 = vpack.c.b16 %v8323, %v8322
        %v8352 = vpack.c.b16 %v8325, %v8324
        %v8353 = vpack.c.b16 %v8327, %v8326
        %v8354 = vpack.c.b16 %v8329, %v8328
        %v8355 = vpack.c.b16 %v8331, %v8330
        %v8356 = vpack.c.b16 %v8333, %v8332
        %v8357 = vpack.c.b16 %v8335, %v8334
        %v8358 = vpack.c.b16 %v8337, %v8336
        %v8359 = vpack.c.b16 %v8339, %v8338
        %v8360 = vpack.c.b16 %v8341, %v8340
        %v8361 = vpack.c.b16 %v8343, %v8342
        %v8362 = vpack.c.b16 %v8345, %v8344
        %v8363 = vpack.c.b16 %v8347, %v8346
        %v8396 = vunpack.c.l.b16 %v8300
        %v8397 = vunpack.c.l.b16 %v8301
        %v8398 = vunpack.c.l.b16 %v8302
        %v8399 = vunpack.c.l.b16 %v8303
        %v8400 = vunpack.c.l.b16 %v8304
        %v8401 = vunpack.c.l.b16 %v8305
        %v8402 = vunpack.c.l.b16 %v8306
        %v8403 = vunpack.c.l.b16 %v8307
        %v8404 = vunpack.c.l.b16 %v8308
        %v8405 = vunpack.c.l.b16 %v8309
        %v8406 = vunpack.c.l.b16 %v8310
        %v8407 = vunpack.c.l.b16 %v8311
        %v8408 = vunpack.c.l.b16 %v8312
        %v8409 = vunpack.c.l.b16 %v8313
        %v8410 = vunpack.c.l.b16 %v8314
        %v8411 = vunpack.c.l.b16 %v8315
        %v8412 = vpack.c.b16 %v8397, %v8396
        %v8413 = vpack.c.b16 %v8399, %v8398
        %v8414 = vpack.c.b16 %v8401, %v8400
        %v8415 = vpack.c.b16 %v8403, %v8402
        %v8416 = vpack.c.b16 %v8405, %v8404
        %v8417 = vpack.c.b16 %v8407, %v8406
        %v8418 = vpack.c.b16 %v8409, %v8408
        %v8419 = vpack.c.b16 %v8411, %v8410
        %8428 = vmatpush.bf16.msra.mxu0 %v8419
        %8429 = vmatpush.bf16.msra.mxu0 %v8418
        %8430 = vmatpush.bf16.msra.mxu0 %v8417
        %8431 = vmatpush.bf16.msra.mxu0 %v8416
        %8432 = vmatpush.bf16.msra.mxu0 %v8415
        %8433 = vmatpush.bf16.msra.mxu0 %v8414
        %8434 = vmatpush.bf16.msra.mxu0 %v8413
        %8435 = vmatpush.bf16.msra.mxu0 %v8412
        %8436 = vmatmul.bf16.gmra.mxu0 %v8348
        %v8437 = vpop.f32.mrf.mxu0
        %v8438 = vadd.f32 0.0, %v8437
        %v8439 = vpop.f32.mrf.mxu0
        %v8440 = vadd.f32 0.0, %v8439
        %8441 = vmatmul.bf16.gmra.mxu0 %v8349
        %v8442 = vpop.f32.mrf.mxu0
        %v8443 = vadd.f32 0.0, %v8442
        %v8444 = vpop.f32.mrf.mxu0
        %v8445 = vadd.f32 0.0, %v8444
        %8446 = vmatmul.bf16.gmra.mxu0 %v8350
        %v8447 = vpop.f32.mrf.mxu0
        %v8448 = vadd.f32 0.0, %v8447
        %v8449 = vpop.f32.mrf.mxu0
        %v8450 = vadd.f32 0.0, %v8449
        %8451 = vmatmul.bf16.gmra.mxu0 %v8351
        %v8452 = vpop.f32.mrf.mxu0
        %v8453 = vadd.f32 0.0, %v8452
        %v8454 = vpop.f32.mrf.mxu0
        %v8455 = vadd.f32 0.0, %v8454
        %8456 = vmatmul.bf16.gmra.mxu0 %v8352
        %v8457 = vpop.f32.mrf.mxu0
        %v8458 = vadd.f32 0.0, %v8457
        %v8459 = vpop.f32.mrf.mxu0
        %v8460 = vadd.f32 0.0, %v8459
        %8461 = vmatmul.bf16.gmra.mxu0 %v8353
        %v8462 = vpop.f32.mrf.mxu0
        %v8463 = vadd.f32 0.0, %v8462
        %v8464 = vpop.f32.mrf.mxu0
        %v8465 = vadd.f32 0.0, %v8464
        %8466 = vmatmul.bf16.gmra.mxu0 %v8354
        %v8467 = vpop.f32.mrf.mxu0
        %v8468 = vadd.f32 0.0, %v8467
        %v8469 = vpop.f32.mrf.mxu0
        %v8470 = vadd.f32 0.0, %v8469
        %8471 = vmatmul.bf16.gmra.mxu0 %v8355
        %v8472 = vpop.f32.mrf.mxu0
        %v8473 = vadd.f32 0.0, %v8472
        %v8474 = vpop.f32.mrf.mxu0
        %v8475 = vadd.f32 0.0, %v8474
        %8476 = vmatmul.bf16.gmra.mxu0 %v8356
        %v8477 = vpop.f32.mrf.mxu0
        %v8478 = vadd.f32 0.0, %v8477
        %v8479 = vpop.f32.mrf.mxu0
        %v8480 = vadd.f32 0.0, %v8479
        %8481 = vmatmul.bf16.gmra.mxu0 %v8357
        %v8482 = vpop.f32.mrf.mxu0
        %v8483 = vadd.f32 0.0, %v8482
        %v8484 = vpop.f32.mrf.mxu0
        %v8485 = vadd.f32 0.0, %v8484
        %8486 = vmatmul.bf16.gmra.mxu0 %v8358
        %v8487 = vpop.f32.mrf.mxu0
        %v8488 = vadd.f32 0.0, %v8487
        %v8489 = vpop.f32.mrf.mxu0
        %v8490 = vadd.f32 0.0, %v8489
        %8491 = vmatmul.bf16.gmra.mxu0 %v8359
        %v8492 = vpop.f32.mrf.mxu0
        %v8493 = vadd.f32 0.0, %v8492
        %v8494 = vpop.f32.mrf.mxu0
        %v8495 = vadd.f32 0.0, %v8494
        %8496 = vmatmul.bf16.gmra.mxu0 %v8360
        %v8497 = vpop.f32.mrf.mxu0
        %v8498 = vadd.f32 0.0, %v8497
        %v8499 = vpop.f32.mrf.mxu0
        %v8500 = vadd.f32 0.0, %v8499
        %8501 = vmatmul.bf16.gmra.mxu0 %v8361
        %v8502 = vpop.f32.mrf.mxu0
        %v8503 = vadd.f32 0.0, %v8502
        %v8504 = vpop.f32.mrf.mxu0
        %v8505 = vadd.f32 0.0, %v8504
        %8506 = vmatmul.bf16.gmra.mxu0 %v8362
        %v8507 = vpop.f32.mrf.mxu0
        %v8508 = vadd.f32 0.0, %v8507
        %v8509 = vpop.f32.mrf.mxu0
        %v8510 = vadd.f32 0.0, %v8509
        %8511 = vmatmul.bf16.gmra.mxu0 %v8363
        %v8512 = vpop.f32.mrf.mxu0
        %v8513 = vadd.f32 0.0, %v8512
        %v8514 = vpop.f32.mrf.mxu0
        %v8515 = vadd.f32 0.0, %v8514
        %8516 = vdwg.mxu0
        %v8517 = vadd.f32 %v7835, %v8438
        %v8518 = vadd.f32 %v7836, %v8440
        %v8519 = vadd.f32 %v7837, %v8443
        %v8520 = vadd.f32 %v7838, %v8445
        %v8521 = vadd.f32 %v7839, %v8448
        %v8522 = vadd.f32 %v7840, %v8450
        %v8523 = vadd.f32 %v7841, %v8453
        %v8524 = vadd.f32 %v7842, %v8455
        %v8525 = vadd.f32 %v7843, %v8458
        %v8526 = vadd.f32 %v7844, %v8460
        %v8527 = vadd.f32 %v7845, %v8463
        %v8528 = vadd.f32 %v7846, %v8465
        %v8529 = vadd.f32 %v7847, %v8468
        %v8530 = vadd.f32 %v7848, %v8470
        %v8531 = vadd.f32 %v7849, %v8473
        %v8532 = vadd.f32 %v7850, %v8475
        %v8533 = vadd.f32 %v7851, %v8478
        %v8534 = vadd.f32 %v7852, %v8480
        %v8535 = vadd.f32 %v7853, %v8483
        %v8536 = vadd.f32 %v7854, %v8485
        %v8537 = vadd.f32 %v7855, %v8488
        %v8538 = vadd.f32 %v7856, %v8490
        %v8539 = vadd.f32 %v7857, %v8493
        %v8540 = vadd.f32 %v7858, %v8495
        %v8541 = vadd.f32 %v7859, %v8498
        %v8542 = vadd.f32 %v7860, %v8500
        %v8543 = vadd.f32 %v7861, %v8503
        %v8544 = vadd.f32 %v7862, %v8505
        %v8545 = vadd.f32 %v7863, %v8508
        %v8546 = vadd.f32 %v7864, %v8510
        %v8547 = vadd.f32 %v7865, %v8513
        %v8548 = vadd.f32 %v7866, %v8515
        %v8549 = vld [vmem:[%s3639 + $0x4] sm:$0x8]
        %v8550 = vld [vmem:[%s3639 + $0x8] sm:$0xf]
        %v8551 = vld [vmem:[%s3639 + $0xc] sm:$0xf]
        %v8552 = vld [vmem:[%s3639 + $0x1c] sm:$0x8]
        %v8553 = vld [vmem:[%s3639 + $0x20] sm:$0xf]
        %v8554 = vld [vmem:[%s3639 + $0x24] sm:$0xf]
        %v8555 = vld [vmem:[%s3639 + $0x34] sm:$0x8]
        %v8556 = vld [vmem:[%s3639 + $0x38] sm:$0xf]
        %v8557 = vld [vmem:[%s3639 + $0x3c] sm:$0xf]
        %v8558 = vld [vmem:[%s3639 + $0x4c] sm:$0x8]
        %v8559 = vld [vmem:[%s3639 + $0x50] sm:$0xf]
        %v8560 = vld [vmem:[%s3639 + $0x54] sm:$0xf]
        %v8561 = vld [vmem:[%s3639 + $0x64] sm:$0x8]
        %v8562 = vld [vmem:[%s3639 + $0x68] sm:$0xf]
        %v8563 = vld [vmem:[%s3639 + $0x6c] sm:$0xf]
        %v8564 = vld [vmem:[%s3639 + $0x7c] sm:$0x8]
        %v8565 = vld [vmem:[%s3639 + $0x80] sm:$0xf]
        %v8566 = vld [vmem:[%s3639 + $0x84] sm:$0xf]
        %v8567 = vld [vmem:[%s3639 + $0x94] sm:$0x8]
        %v8568 = vld [vmem:[%s3639 + $0x98] sm:$0xf]
        %v8569 = vld [vmem:[%s3639 + $0x9c] sm:$0xf]
        %v8570 = vld [vmem:[%s3639 + $0xac] sm:$0x8]
        %v8571 = vld [vmem:[%s3639 + $0xb0] sm:$0xf]
        %v8572 = vld [vmem:[%s3639 + $0xb4] sm:$0xf]
        %v8573 = vld [vmem:[%s3639 + $0xc4] sm:$0x8]
        %v8574 = vld [vmem:[%s3639 + $0xc8] sm:$0xf]
        %v8575 = vld [vmem:[%s3639 + $0xcc] sm:$0xf]
        %v8576 = vld [vmem:[%s3639 + $0xdc] sm:$0x8]
        %v8577 = vld [vmem:[%s3639 + $0xe0] sm:$0xf]
        %v8578 = vld [vmem:[%s3639 + $0xe4] sm:$0xf]
        %v8579 = vld [vmem:[%s3639 + $0xf4] sm:$0x8]
        %v8580 = vld [vmem:[%s3639 + $0xf8] sm:$0xf]
        %v8581 = vld [vmem:[%s3639 + $0xfc] sm:$0xf]
        %v8582 = vld [vmem:[%s3639 + $0x10c] sm:$0x8]
        %v8583 = vld [vmem:[%s3639 + $0x110] sm:$0xf]
        %v8584 = vld [vmem:[%s3639 + $0x114] sm:$0xf]
        %v8585 = vld [vmem:[%s3639 + $0x124] sm:$0x8]
        %v8586 = vld [vmem:[%s3639 + $0x128] sm:$0xf]
        %v8587 = vld [vmem:[%s3639 + $0x12c] sm:$0xf]
        %v8588 = vld [vmem:[%s3639 + $0x13c] sm:$0x8]
        %v8589 = vld [vmem:[%s3639 + $0x140] sm:$0xf]
        %v8590 = vld [vmem:[%s3639 + $0x144] sm:$0xf]
        %v8591 = vld [vmem:[%s3639 + $0x154] sm:$0x8]
        %v8592 = vld [vmem:[%s3639 + $0x158] sm:$0xf]
        %v8593 = vld [vmem:[%s3639 + $0x15c] sm:$0xf]
        %v8594 = vld [vmem:[%s3639 + $0x16c] sm:$0x8]
        %v8595 = vld [vmem:[%s3639 + $0x170] sm:$0xf]
        %v8596 = vld [vmem:[%s3639 + $0x174] sm:$0xf]
        %v8598 = vshrl.u32 %v8549, 16
        %v8600 = vrot.slane %v8598, 7
        %v8601 = vrot.slane %v8600, 4
        %v8603 = vshrl.u32 %v8550, 16
        %v8605 = vrot.slane %v8603, 7
        %v8606 = vshll.u32 %v8550, 16
        %v8608 = vor.u32 %v8605, %v8606
        %v8609 = vsel %vm520, %v8601, %v8608
        %v8610 = vrot.slane %v8605, 4
        %v8612 = vshrl.u32 %v8551, 16
        %v8614 = vrot.slane %v8612, 7
        %v8615 = vshll.u32 %v8551, 16
        %v8617 = vor.u32 %v8614, %v8615
        %v8618 = vsel %vm520, %v8610, %v8617
        %v8620 = vshrl.u32 %v8552, 16
        %v8622 = vrot.slane %v8620, 7
        %v8623 = vrot.slane %v8622, 4
        %v8625 = vshrl.u32 %v8553, 16
        %v8627 = vrot.slane %v8625, 7
        %v8628 = vshll.u32 %v8553, 16
        %v8630 = vor.u32 %v8627, %v8628
        %v8631 = vsel %vm520, %v8623, %v8630
        %v8632 = vrot.slane %v8627, 4
        %v8634 = vshrl.u32 %v8554, 16
        %v8636 = vrot.slane %v8634, 7
        %v8637 = vshll.u32 %v8554, 16
        %v8639 = vor.u32 %v8636, %v8637
        %v8640 = vsel %vm520, %v8632, %v8639
        %v8642 = vshrl.u32 %v8555, 16
        %v8644 = vrot.slane %v8642, 7
        %v8645 = vrot.slane %v8644, 4
        %v8647 = vshrl.u32 %v8556, 16
        %v8649 = vrot.slane %v8647, 7
        %v8650 = vshll.u32 %v8556, 16
        %v8652 = vor.u32 %v8649, %v8650
        %v8653 = vsel %vm520, %v8645, %v8652
        %v8654 = vrot.slane %v8649, 4
        %v8656 = vshrl.u32 %v8557, 16
        %v8658 = vrot.slane %v8656, 7
        %v8659 = vshll.u32 %v8557, 16
        %v8661 = vor.u32 %v8658, %v8659
        %v8662 = vsel %vm520, %v8654, %v8661
        %v8664 = vshrl.u32 %v8558, 16
        %v8666 = vrot.slane %v8664, 7
        %v8667 = vrot.slane %v8666, 4
        %v8669 = vshrl.u32 %v8559, 16
        %v8671 = vrot.slane %v8669, 7
        %v8672 = vshll.u32 %v8559, 16
        %v8674 = vor.u32 %v8671, %v8672
        %v8675 = vsel %vm520, %v8667, %v8674
        %v8676 = vrot.slane %v8671, 4
        %v8678 = vshrl.u32 %v8560, 16
        %v8680 = vrot.slane %v8678, 7
        %v8681 = vshll.u32 %v8560, 16
        %v8683 = vor.u32 %v8680, %v8681
        %v8684 = vsel %vm520, %v8676, %v8683
        %v8686 = vshrl.u32 %v8561, 16
        %v8688 = vrot.slane %v8686, 7
        %v8689 = vrot.slane %v8688, 4
        %v8691 = vshrl.u32 %v8562, 16
        %v8693 = vrot.slane %v8691, 7
        %v8694 = vshll.u32 %v8562, 16
        %v8696 = vor.u32 %v8693, %v8694
        %v8697 = vsel %vm520, %v8689, %v8696
        %v8698 = vrot.slane %v8693, 4
        %v8700 = vshrl.u32 %v8563, 16
        %v8702 = vrot.slane %v8700, 7
        %v8703 = vshll.u32 %v8563, 16
        %v8705 = vor.u32 %v8702, %v8703
        %v8706 = vsel %vm520, %v8698, %v8705
        %v8708 = vshrl.u32 %v8564, 16
        %v8710 = vrot.slane %v8708, 7
        %v8711 = vrot.slane %v8710, 4
        %v8713 = vshrl.u32 %v8565, 16
        %v8715 = vrot.slane %v8713, 7
        %v8716 = vshll.u32 %v8565, 16
        %v8718 = vor.u32 %v8715, %v8716
        %v8719 = vsel %vm520, %v8711, %v8718
        %v8720 = vrot.slane %v8715, 4
        %v8722 = vshrl.u32 %v8566, 16
        %v8724 = vrot.slane %v8722, 7
        %v8725 = vshll.u32 %v8566, 16
        %v8727 = vor.u32 %v8724, %v8725
        %v8728 = vsel %vm520, %v8720, %v8727
        %v8730 = vshrl.u32 %v8567, 16
        %v8732 = vrot.slane %v8730, 7
        %v8733 = vrot.slane %v8732, 4
        %v8735 = vshrl.u32 %v8568, 16
        %v8737 = vrot.slane %v8735, 7
        %v8738 = vshll.u32 %v8568, 16
        %v8740 = vor.u32 %v8737, %v8738
        %v8741 = vsel %vm520, %v8733, %v8740
        %v8742 = vrot.slane %v8737, 4
        %v8744 = vshrl.u32 %v8569, 16
        %v8746 = vrot.slane %v8744, 7
        %v8747 = vshll.u32 %v8569, 16
        %v8749 = vor.u32 %v8746, %v8747
        %v8750 = vsel %vm520, %v8742, %v8749
        %v8752 = vshrl.u32 %v8570, 16
        %v8754 = vrot.slane %v8752, 7
        %v8755 = vrot.slane %v8754, 4
        %v8757 = vshrl.u32 %v8571, 16
        %v8759 = vrot.slane %v8757, 7
        %v8760 = vshll.u32 %v8571, 16
        %v8762 = vor.u32 %v8759, %v8760
        %v8763 = vsel %vm520, %v8755, %v8762
        %v8764 = vrot.slane %v8759, 4
        %v8766 = vshrl.u32 %v8572, 16
        %v8768 = vrot.slane %v8766, 7
        %v8769 = vshll.u32 %v8572, 16
        %v8771 = vor.u32 %v8768, %v8769
        %v8772 = vsel %vm520, %v8764, %v8771
        %v8774 = vshrl.u32 %v8573, 16
        %v8776 = vrot.slane %v8774, 7
        %v8777 = vrot.slane %v8776, 4
        %v8779 = vshrl.u32 %v8574, 16
        %v8781 = vrot.slane %v8779, 7
        %v8782 = vshll.u32 %v8574, 16
        %v8784 = vor.u32 %v8781, %v8782
        %v8785 = vsel %vm520, %v8777, %v8784
        %v8786 = vrot.slane %v8781, 4
        %v8788 = vshrl.u32 %v8575, 16
        %v8790 = vrot.slane %v8788, 7
        %v8791 = vshll.u32 %v8575, 16
        %v8793 = vor.u32 %v8790, %v8791
        %v8794 = vsel %vm520, %v8786, %v8793
        %v8796 = vshrl.u32 %v8576, 16
        %v8798 = vrot.slane %v8796, 7
        %v8799 = vrot.slane %v8798, 4
        %v8801 = vshrl.u32 %v8577, 16
        %v8803 = vrot.slane %v8801, 7
        %v8804 = vshll.u32 %v8577, 16
        %v8806 = vor.u32 %v8803, %v8804
        %v8807 = vsel %vm520, %v8799, %v8806
        %v8808 = vrot.slane %v8803, 4
        %v8810 = vshrl.u32 %v8578, 16
        %v8812 = vrot.slane %v8810, 7
        %v8813 = vshll.u32 %v8578, 16
        %v8815 = vor.u32 %v8812, %v8813
        %v8816 = vsel %vm520, %v8808, %v8815
        %v8818 = vshrl.u32 %v8579, 16
        %v8820 = vrot.slane %v8818, 7
        %v8821 = vrot.slane %v8820, 4
        %v8823 = vshrl.u32 %v8580, 16
        %v8825 = vrot.slane %v8823, 7
        %v8826 = vshll.u32 %v8580, 16
        %v8828 = vor.u32 %v8825, %v8826
        %v8829 = vsel %vm520, %v8821, %v8828
        %v8830 = vrot.slane %v8825, 4
        %v8832 = vshrl.u32 %v8581, 16
        %v8834 = vrot.slane %v8832, 7
        %v8835 = vshll.u32 %v8581, 16
        %v8837 = vor.u32 %v8834, %v8835
        %v8838 = vsel %vm520, %v8830, %v8837
        %v8840 = vshrl.u32 %v8582, 16
        %v8842 = vrot.slane %v8840, 7
        %v8843 = vrot.slane %v8842, 4
        %v8845 = vshrl.u32 %v8583, 16
        %v8847 = vrot.slane %v8845, 7
        %v8848 = vshll.u32 %v8583, 16
        %v8850 = vor.u32 %v8847, %v8848
        %v8851 = vsel %vm520, %v8843, %v8850
        %v8852 = vrot.slane %v8847, 4
        %v8854 = vshrl.u32 %v8584, 16
        %v8856 = vrot.slane %v8854, 7
        %v8857 = vshll.u32 %v8584, 16
        %v8859 = vor.u32 %v8856, %v8857
        %v8860 = vsel %vm520, %v8852, %v8859
        %v8862 = vshrl.u32 %v8585, 16
        %v8864 = vrot.slane %v8862, 7
        %v8865 = vrot.slane %v8864, 4
        %v8867 = vshrl.u32 %v8586, 16
        %v8869 = vrot.slane %v8867, 7
        %v8870 = vshll.u32 %v8586, 16
        %v8872 = vor.u32 %v8869, %v8870
        %v8873 = vsel %vm520, %v8865, %v8872
        %v8874 = vrot.slane %v8869, 4
        %v8876 = vshrl.u32 %v8587, 16
        %v8878 = vrot.slane %v8876, 7
        %v8879 = vshll.u32 %v8587, 16
        %v8881 = vor.u32 %v8878, %v8879
        %v8882 = vsel %vm520, %v8874, %v8881
        %v8884 = vshrl.u32 %v8588, 16
        %v8886 = vrot.slane %v8884, 7
        %v8887 = vrot.slane %v8886, 4
        %v8889 = vshrl.u32 %v8589, 16
        %v8891 = vrot.slane %v8889, 7
        %v8892 = vshll.u32 %v8589, 16
        %v8894 = vor.u32 %v8891, %v8892
        %v8895 = vsel %vm520, %v8887, %v8894
        %v8896 = vrot.slane %v8891, 4
        %v8898 = vshrl.u32 %v8590, 16
        %v8900 = vrot.slane %v8898, 7
        %v8901 = vshll.u32 %v8590, 16
        %v8903 = vor.u32 %v8900, %v8901
        %v8904 = vsel %vm520, %v8896, %v8903
        %v8906 = vshrl.u32 %v8591, 16
        %v8908 = vrot.slane %v8906, 7
        %v8909 = vrot.slane %v8908, 4
        %v8911 = vshrl.u32 %v8592, 16
        %v8913 = vrot.slane %v8911, 7
        %v8914 = vshll.u32 %v8592, 16
        %v8916 = vor.u32 %v8913, %v8914
        %v8917 = vsel %vm520, %v8909, %v8916
        %v8918 = vrot.slane %v8913, 4
        %v8920 = vshrl.u32 %v8593, 16
        %v8922 = vrot.slane %v8920, 7
        %v8923 = vshll.u32 %v8593, 16
        %v8925 = vor.u32 %v8922, %v8923
        %v8926 = vsel %vm520, %v8918, %v8925
        %v8928 = vshrl.u32 %v8594, 16
        %v8930 = vrot.slane %v8928, 7
        %v8931 = vrot.slane %v8930, 4
        %v8933 = vshrl.u32 %v8595, 16
        %v8935 = vrot.slane %v8933, 7
        %v8936 = vshll.u32 %v8595, 16
        %v8938 = vor.u32 %v8935, %v8936
        %v8939 = vsel %vm520, %v8931, %v8938
        %v8940 = vrot.slane %v8935, 4
        %v8942 = vshrl.u32 %v8596, 16
        %v8944 = vrot.slane %v8942, 7
        %v8945 = vshll.u32 %v8596, 16
        %v8947 = vor.u32 %v8944, %v8945
        %v8948 = vsel %vm520, %v8940, %v8947
        %s8949 = scalar_lea.vmem [#allocation8], 384
        %v8950 = vld [vmem:[%s8949] sm:$0xf]
        %v8951 = vld [vmem:[%s8949 + $0x4] sm:$0xf]
        %v8952 = vld [vmem:[%s8949 + $0x8] sm:$0xf]
        %v8953 = vld [vmem:[%s8949 + $0xc] sm:$0xf]
        %v8954 = vld [vmem:[%s8949 + $0x10] sm:$0xf]
        %v8955 = vld [vmem:[%s8949 + $0x14] sm:$0xf]
        %v8956 = vld [vmem:[%s8949 + $0x18] sm:$0xf]
        %v8957 = vld [vmem:[%s8949 + $0x1c] sm:$0xf]
        %v8958 = vld [vmem:[%s8949 + $0x20] sm:$0xf]
        %v8959 = vld [vmem:[%s8949 + $0x24] sm:$0xf]
        %v8960 = vld [vmem:[%s8949 + $0x28] sm:$0xf]
        %v8961 = vld [vmem:[%s8949 + $0x2c] sm:$0xf]
        %v8962 = vld [vmem:[%s8949 + $0x30] sm:$0xf]
        %v8963 = vld [vmem:[%s8949 + $0x34] sm:$0xf]
        %v8964 = vld [vmem:[%s8949 + $0x38] sm:$0xf]
        %v8965 = vld [vmem:[%s8949 + $0x3c] sm:$0xf]
        %v8966 = vunpack.c.l.b16 %v8609
        %v8967 = vunpack.c.l.b16 %v8618
        %v8968 = vunpack.c.l.b16 %v8631
        %v8969 = vunpack.c.l.b16 %v8640
        %v8970 = vunpack.c.l.b16 %v8653
        %v8971 = vunpack.c.l.b16 %v8662
        %v8972 = vunpack.c.l.b16 %v8675
        %v8973 = vunpack.c.l.b16 %v8684
        %v8974 = vunpack.c.l.b16 %v8697
        %v8975 = vunpack.c.l.b16 %v8706
        %v8976 = vunpack.c.l.b16 %v8719
        %v8977 = vunpack.c.l.b16 %v8728
        %v8978 = vunpack.c.l.b16 %v8741
        %v8979 = vunpack.c.l.b16 %v8750
        %v8980 = vunpack.c.l.b16 %v8763
        %v8981 = vunpack.c.l.b16 %v8772
        %v8982 = vunpack.c.l.b16 %v8785
        %v8983 = vunpack.c.l.b16 %v8794
        %v8984 = vunpack.c.l.b16 %v8807
        %v8985 = vunpack.c.l.b16 %v8816
        %v8986 = vunpack.c.l.b16 %v8829
        %v8987 = vunpack.c.l.b16 %v8838
        %v8988 = vunpack.c.l.b16 %v8851
        %v8989 = vunpack.c.l.b16 %v8860
        %v8990 = vunpack.c.l.b16 %v8873
        %v8991 = vunpack.c.l.b16 %v8882
        %v8992 = vunpack.c.l.b16 %v8895
        %v8993 = vunpack.c.l.b16 %v8904
        %v8994 = vunpack.c.l.b16 %v8917
        %v8995 = vunpack.c.l.b16 %v8926
        %v8996 = vunpack.c.l.b16 %v8939
        %v8997 = vunpack.c.l.b16 %v8948
        %v8998 = vpack.c.b16 %v8967, %v8966
        %v8999 = vpack.c.b16 %v8969, %v8968
        %v9000 = vpack.c.b16 %v8971, %v8970
        %v9001 = vpack.c.b16 %v8973, %v8972
        %v9002 = vpack.c.b16 %v8975, %v8974
        %v9003 = vpack.c.b16 %v8977, %v8976
        %v9004 = vpack.c.b16 %v8979, %v8978
        %v9005 = vpack.c.b16 %v8981, %v8980
        %v9006 = vpack.c.b16 %v8983, %v8982
        %v9007 = vpack.c.b16 %v8985, %v8984
        %v9008 = vpack.c.b16 %v8987, %v8986
        %v9009 = vpack.c.b16 %v8989, %v8988
        %v9010 = vpack.c.b16 %v8991, %v8990
        %v9011 = vpack.c.b16 %v8993, %v8992
        %v9012 = vpack.c.b16 %v8995, %v8994
        %v9013 = vpack.c.b16 %v8997, %v8996
        %v9046 = vunpack.c.l.b16 %v8950
        %v9047 = vunpack.c.l.b16 %v8951
        %v9048 = vunpack.c.l.b16 %v8952
        %v9049 = vunpack.c.l.b16 %v8953
        %v9050 = vunpack.c.l.b16 %v8954
        %v9051 = vunpack.c.l.b16 %v8955
        %v9052 = vunpack.c.l.b16 %v8956
        %v9053 = vunpack.c.l.b16 %v8957
        %v9054 = vunpack.c.l.b16 %v8958
        %v9055 = vunpack.c.l.b16 %v8959
        %v9056 = vunpack.c.l.b16 %v8960
        %v9057 = vunpack.c.l.b16 %v8961
        %v9058 = vunpack.c.l.b16 %v8962
        %v9059 = vunpack.c.l.b16 %v8963
        %v9060 = vunpack.c.l.b16 %v8964
        %v9061 = vunpack.c.l.b16 %v8965
        %v9062 = vpack.c.b16 %v9047, %v9046
        %v9063 = vpack.c.b16 %v9049, %v9048
        %v9064 = vpack.c.b16 %v9051, %v9050
        %v9065 = vpack.c.b16 %v9053, %v9052
        %v9066 = vpack.c.b16 %v9055, %v9054
        %v9067 = vpack.c.b16 %v9057, %v9056
        %v9068 = vpack.c.b16 %v9059, %v9058
        %v9069 = vpack.c.b16 %v9061, %v9060
        %9078 = vmatpush.bf16.msra.mxu0 %v9069
        %9079 = vmatpush.bf16.msra.mxu0 %v9068
        %9080 = vmatpush.bf16.msra.mxu0 %v9067
        %9081 = vmatpush.bf16.msra.mxu0 %v9066
        %9082 = vmatpush.bf16.msra.mxu0 %v9065
        %9083 = vmatpush.bf16.msra.mxu0 %v9064
        %9084 = vmatpush.bf16.msra.mxu0 %v9063
        %9085 = vmatpush.bf16.msra.mxu0 %v9062
        %9086 = vmatmul.bf16.gmra.mxu0 %v8998
        %v9087 = vpop.f32.mrf.mxu0
        %v9088 = vadd.f32 0.0, %v9087
        %v9089 = vpop.f32.mrf.mxu0
        %v9090 = vadd.f32 0.0, %v9089
        %9091 = vmatmul.bf16.gmra.mxu0 %v8999
        %v9092 = vpop.f32.mrf.mxu0
        %v9093 = vadd.f32 0.0, %v9092
        %v9094 = vpop.f32.mrf.mxu0
        %v9095 = vadd.f32 0.0, %v9094
        %9096 = vmatmul.bf16.gmra.mxu0 %v9000
        %v9097 = vpop.f32.mrf.mxu0
        %v9098 = vadd.f32 0.0, %v9097
        %v9099 = vpop.f32.mrf.mxu0
        %v9100 = vadd.f32 0.0, %v9099
        %9101 = vmatmul.bf16.gmra.mxu0 %v9001
        %v9102 = vpop.f32.mrf.mxu0
        %v9103 = vadd.f32 0.0, %v9102
        %v9104 = vpop.f32.mrf.mxu0
        %v9105 = vadd.f32 0.0, %v9104
        %9106 = vmatmul.bf16.gmra.mxu0 %v9002
        %v9107 = vpop.f32.mrf.mxu0
        %v9108 = vadd.f32 0.0, %v9107
        %v9109 = vpop.f32.mrf.mxu0
        %v9110 = vadd.f32 0.0, %v9109
        %9111 = vmatmul.bf16.gmra.mxu0 %v9003
        %v9112 = vpop.f32.mrf.mxu0
        %v9113 = vadd.f32 0.0, %v9112
        %v9114 = vpop.f32.mrf.mxu0
        %v9115 = vadd.f32 0.0, %v9114
        %9116 = vmatmul.bf16.gmra.mxu0 %v9004
        %v9117 = vpop.f32.mrf.mxu0
        %v9118 = vadd.f32 0.0, %v9117
        %v9119 = vpop.f32.mrf.mxu0
        %v9120 = vadd.f32 0.0, %v9119
        %9121 = vmatmul.bf16.gmra.mxu0 %v9005
        %v9122 = vpop.f32.mrf.mxu0
        %v9123 = vadd.f32 0.0, %v9122
        %v9124 = vpop.f32.mrf.mxu0
        %v9125 = vadd.f32 0.0, %v9124
        %9126 = vmatmul.bf16.gmra.mxu0 %v9006
        %v9127 = vpop.f32.mrf.mxu0
        %v9128 = vadd.f32 0.0, %v9127
        %v9129 = vpop.f32.mrf.mxu0
        %v9130 = vadd.f32 0.0, %v9129
        %9131 = vmatmul.bf16.gmra.mxu0 %v9007
        %v9132 = vpop.f32.mrf.mxu0
        %v9133 = vadd.f32 0.0, %v9132
        %v9134 = vpop.f32.mrf.mxu0
        %v9135 = vadd.f32 0.0, %v9134
        %9136 = vmatmul.bf16.gmra.mxu0 %v9008
        %v9137 = vpop.f32.mrf.mxu0
        %v9138 = vadd.f32 0.0, %v9137
        %v9139 = vpop.f32.mrf.mxu0
        %v9140 = vadd.f32 0.0, %v9139
        %9141 = vmatmul.bf16.gmra.mxu0 %v9009
        %v9142 = vpop.f32.mrf.mxu0
        %v9143 = vadd.f32 0.0, %v9142
        %v9144 = vpop.f32.mrf.mxu0
        %v9145 = vadd.f32 0.0, %v9144
        %9146 = vmatmul.bf16.gmra.mxu0 %v9010
        %v9147 = vpop.f32.mrf.mxu0
        %v9148 = vadd.f32 0.0, %v9147
        %v9149 = vpop.f32.mrf.mxu0
        %v9150 = vadd.f32 0.0, %v9149
        %9151 = vmatmul.bf16.gmra.mxu0 %v9011
        %v9152 = vpop.f32.mrf.mxu0
        %v9153 = vadd.f32 0.0, %v9152
        %v9154 = vpop.f32.mrf.mxu0
        %v9155 = vadd.f32 0.0, %v9154
        %9156 = vmatmul.bf16.gmra.mxu0 %v9012
        %v9157 = vpop.f32.mrf.mxu0
        %v9158 = vadd.f32 0.0, %v9157
        %v9159 = vpop.f32.mrf.mxu0
        %v9160 = vadd.f32 0.0, %v9159
        %9161 = vmatmul.bf16.gmra.mxu0 %v9013
        %v9162 = vpop.f32.mrf.mxu0
        %v9163 = vadd.f32 0.0, %v9162
        %v9164 = vpop.f32.mrf.mxu0
        %v9165 = vadd.f32 0.0, %v9164
        %9166 = vdwg.mxu0
        %v9167 = vadd.f32 %v8517, %v9088
        %v9168 = vadd.f32 %v8518, %v9090
        %v9169 = vadd.f32 %v8519, %v9093
        %v9170 = vadd.f32 %v8520, %v9095
        %v9171 = vadd.f32 %v8521, %v9098
        %v9172 = vadd.f32 %v8522, %v9100
        %v9173 = vadd.f32 %v8523, %v9103
        %v9174 = vadd.f32 %v8524, %v9105
        %v9175 = vadd.f32 %v8525, %v9108
        %v9176 = vadd.f32 %v8526, %v9110
        %v9177 = vadd.f32 %v8527, %v9113
        %v9178 = vadd.f32 %v8528, %v9115
        %v9179 = vadd.f32 %v8529, %v9118
        %v9180 = vadd.f32 %v8530, %v9120
        %v9181 = vadd.f32 %v8531, %v9123
        %v9182 = vadd.f32 %v8532, %v9125
        %v9183 = vadd.f32 %v8533, %v9128
        %v9184 = vadd.f32 %v8534, %v9130
        %v9185 = vadd.f32 %v8535, %v9133
        %v9186 = vadd.f32 %v8536, %v9135
        %v9187 = vadd.f32 %v8537, %v9138
        %v9188 = vadd.f32 %v8538, %v9140
        %v9189 = vadd.f32 %v8539, %v9143
        %v9190 = vadd.f32 %v8540, %v9145
        %v9191 = vadd.f32 %v8541, %v9148
        %v9192 = vadd.f32 %v8542, %v9150
        %v9193 = vadd.f32 %v8543, %v9153
        %v9194 = vadd.f32 %v8544, %v9155
        %v9195 = vadd.f32 %v8545, %v9158
        %v9196 = vadd.f32 %v8546, %v9160
        %v9197 = vadd.f32 %v8547, %v9163
        %v9198 = vadd.f32 %v8548, %v9165
        %s9199 = scalar_lea.vmem [#allocation8], 448
        %v9200 = vld [vmem:[%s9199] sm:$0xf]
        %v9201 = vld [vmem:[%s9199 + $0x4] sm:$0xf]
        %v9202 = vld [vmem:[%s9199 + $0x8] sm:$0xf]
        %v9203 = vld [vmem:[%s9199 + $0xc] sm:$0xf]
        %v9204 = vld [vmem:[%s9199 + $0x10] sm:$0xf]
        %v9205 = vld [vmem:[%s9199 + $0x14] sm:$0xf]
        %v9206 = vld [vmem:[%s9199 + $0x18] sm:$0xf]
        %v9207 = vld [vmem:[%s9199 + $0x1c] sm:$0xf]
        %v9208 = vld [vmem:[%s9199 + $0x20] sm:$0xf]
        %v9209 = vld [vmem:[%s9199 + $0x24] sm:$0xf]
        %v9210 = vld [vmem:[%s9199 + $0x28] sm:$0xf]
        %v9211 = vld [vmem:[%s9199 + $0x2c] sm:$0xf]
        %v9212 = vld [vmem:[%s9199 + $0x30] sm:$0xf]
        %v9213 = vld [vmem:[%s9199 + $0x34] sm:$0xf]
        %v9214 = vld [vmem:[%s9199 + $0x38] sm:$0xf]
        %v9215 = vld [vmem:[%s9199 + $0x3c] sm:$0xf]
        %v9248 = vunpack.c.l.b16 %v8550
        %v9249 = vunpack.c.l.b16 %v8551
        %v9250 = vunpack.c.l.b16 %v8553
        %v9251 = vunpack.c.l.b16 %v8554
        %v9252 = vunpack.c.l.b16 %v8556
        %v9253 = vunpack.c.l.b16 %v8557
        %v9254 = vunpack.c.l.b16 %v8559
        %v9255 = vunpack.c.l.b16 %v8560
        %v9256 = vunpack.c.l.b16 %v8562
        %v9257 = vunpack.c.l.b16 %v8563
        %v9258 = vunpack.c.l.b16 %v8565
        %v9259 = vunpack.c.l.b16 %v8566
        %v9260 = vunpack.c.l.b16 %v8568
        %v9261 = vunpack.c.l.b16 %v8569
        %v9262 = vunpack.c.l.b16 %v8571
        %v9263 = vunpack.c.l.b16 %v8572
        %v9264 = vunpack.c.l.b16 %v8574
        %v9265 = vunpack.c.l.b16 %v8575
        %v9266 = vunpack.c.l.b16 %v8577
        %v9267 = vunpack.c.l.b16 %v8578
        %v9268 = vunpack.c.l.b16 %v8580
        %v9269 = vunpack.c.l.b16 %v8581
        %v9270 = vunpack.c.l.b16 %v8583
        %v9271 = vunpack.c.l.b16 %v8584
        %v9272 = vunpack.c.l.b16 %v8586
        %v9273 = vunpack.c.l.b16 %v8587
        %v9274 = vunpack.c.l.b16 %v8589
        %v9275 = vunpack.c.l.b16 %v8590
        %v9276 = vunpack.c.l.b16 %v8592
        %v9277 = vunpack.c.l.b16 %v8593
        %v9278 = vunpack.c.l.b16 %v8595
        %v9279 = vunpack.c.l.b16 %v8596
        %v9280 = vpack.c.b16 %v9249, %v9248
        %v9281 = vpack.c.b16 %v9251, %v9250
        %v9282 = vpack.c.b16 %v9253, %v9252
        %v9283 = vpack.c.b16 %v9255, %v9254
        %v9284 = vpack.c.b16 %v9257, %v9256
        %v9285 = vpack.c.b16 %v9259, %v9258
        %v9286 = vpack.c.b16 %v9261, %v9260
        %v9287 = vpack.c.b16 %v9263, %v9262
        %v9288 = vpack.c.b16 %v9265, %v9264
        %v9289 = vpack.c.b16 %v9267, %v9266
        %v9290 = vpack.c.b16 %v9269, %v9268
        %v9291 = vpack.c.b16 %v9271, %v9270
        %v9292 = vpack.c.b16 %v9273, %v9272
        %v9293 = vpack.c.b16 %v9275, %v9274
        %v9294 = vpack.c.b16 %v9277, %v9276
        %v9295 = vpack.c.b16 %v9279, %v9278
        %v9328 = vunpack.c.l.b16 %v9200
        %v9329 = vunpack.c.l.b16 %v9201
        %v9330 = vunpack.c.l.b16 %v9202
        %v9331 = vunpack.c.l.b16 %v9203
        %v9332 = vunpack.c.l.b16 %v9204
        %v9333 = vunpack.c.l.b16 %v9205
        %v9334 = vunpack.c.l.b16 %v9206
        %v9335 = vunpack.c.l.b16 %v9207
        %v9336 = vunpack.c.l.b16 %v9208
        %v9337 = vunpack.c.l.b16 %v9209
        %v9338 = vunpack.c.l.b16 %v9210
        %v9339 = vunpack.c.l.b16 %v9211
        %v9340 = vunpack.c.l.b16 %v9212
        %v9341 = vunpack.c.l.b16 %v9213
        %v9342 = vunpack.c.l.b16 %v9214
        %v9343 = vunpack.c.l.b16 %v9215
        %v9344 = vpack.c.b16 %v9329, %v9328
        %v9345 = vpack.c.b16 %v9331, %v9330
        %v9346 = vpack.c.b16 %v9333, %v9332
        %v9347 = vpack.c.b16 %v9335, %v9334
        %v9348 = vpack.c.b16 %v9337, %v9336
        %v9349 = vpack.c.b16 %v9339, %v9338
        %v9350 = vpack.c.b16 %v9341, %v9340
        %v9351 = vpack.c.b16 %v9343, %v9342
        %9360 = vmatpush.bf16.msra.mxu0 %v9351
        %9361 = vmatpush.bf16.msra.mxu0 %v9350
        %9362 = vmatpush.bf16.msra.mxu0 %v9349
        %9363 = vmatpush.bf16.msra.mxu0 %v9348
        %9364 = vmatpush.bf16.msra.mxu0 %v9347
        %9365 = vmatpush.bf16.msra.mxu0 %v9346
        %9366 = vmatpush.bf16.msra.mxu0 %v9345
        %9367 = vmatpush.bf16.msra.mxu0 %v9344
        %9368 = vmatmul.bf16.gmra.mxu0 %v9280
        %v9369 = vpop.f32.mrf.mxu0
        %v9370 = vadd.f32 0.0, %v9369
        %v9371 = vpop.f32.mrf.mxu0
        %v9372 = vadd.f32 0.0, %v9371
        %9373 = vmatmul.bf16.gmra.mxu0 %v9281
        %v9374 = vpop.f32.mrf.mxu0
        %v9375 = vadd.f32 0.0, %v9374
        %v9376 = vpop.f32.mrf.mxu0
        %v9377 = vadd.f32 0.0, %v9376
        %9378 = vmatmul.bf16.gmra.mxu0 %v9282
        %v9379 = vpop.f32.mrf.mxu0
        %v9380 = vadd.f32 0.0, %v9379
        %v9381 = vpop.f32.mrf.mxu0
        %v9382 = vadd.f32 0.0, %v9381
        %9383 = vmatmul.bf16.gmra.mxu0 %v9283
        %v9384 = vpop.f32.mrf.mxu0
        %v9385 = vadd.f32 0.0, %v9384
        %v9386 = vpop.f32.mrf.mxu0
        %v9387 = vadd.f32 0.0, %v9386
        %9388 = vmatmul.bf16.gmra.mxu0 %v9284
        %v9389 = vpop.f32.mrf.mxu0
        %v9390 = vadd.f32 0.0, %v9389
        %v9391 = vpop.f32.mrf.mxu0
        %v9392 = vadd.f32 0.0, %v9391
        %9393 = vmatmul.bf16.gmra.mxu0 %v9285
        %v9394 = vpop.f32.mrf.mxu0
        %v9395 = vadd.f32 0.0, %v9394
        %v9396 = vpop.f32.mrf.mxu0
        %v9397 = vadd.f32 0.0, %v9396
        %9398 = vmatmul.bf16.gmra.mxu0 %v9286
        %v9399 = vpop.f32.mrf.mxu0
        %v9400 = vadd.f32 0.0, %v9399
        %v9401 = vpop.f32.mrf.mxu0
        %v9402 = vadd.f32 0.0, %v9401
        %9403 = vmatmul.bf16.gmra.mxu0 %v9287
        %v9404 = vpop.f32.mrf.mxu0
        %v9405 = vadd.f32 0.0, %v9404
        %v9406 = vpop.f32.mrf.mxu0
        %v9407 = vadd.f32 0.0, %v9406
        %9408 = vmatmul.bf16.gmra.mxu0 %v9288
        %v9409 = vpop.f32.mrf.mxu0
        %v9410 = vadd.f32 0.0, %v9409
        %v9411 = vpop.f32.mrf.mxu0
        %v9412 = vadd.f32 0.0, %v9411
        %9413 = vmatmul.bf16.gmra.mxu0 %v9289
        %v9414 = vpop.f32.mrf.mxu0
        %v9415 = vadd.f32 0.0, %v9414
        %v9416 = vpop.f32.mrf.mxu0
        %v9417 = vadd.f32 0.0, %v9416
        %9418 = vmatmul.bf16.gmra.mxu0 %v9290
        %v9419 = vpop.f32.mrf.mxu0
        %v9420 = vadd.f32 0.0, %v9419
        %v9421 = vpop.f32.mrf.mxu0
        %v9422 = vadd.f32 0.0, %v9421
        %9423 = vmatmul.bf16.gmra.mxu0 %v9291
        %v9424 = vpop.f32.mrf.mxu0
        %v9425 = vadd.f32 0.0, %v9424
        %v9426 = vpop.f32.mrf.mxu0
        %v9427 = vadd.f32 0.0, %v9426
        %9428 = vmatmul.bf16.gmra.mxu0 %v9292
        %v9429 = vpop.f32.mrf.mxu0
        %v9430 = vadd.f32 0.0, %v9429
        %v9431 = vpop.f32.mrf.mxu0
        %v9432 = vadd.f32 0.0, %v9431
        %9433 = vmatmul.bf16.gmra.mxu0 %v9293
        %v9434 = vpop.f32.mrf.mxu0
        %v9435 = vadd.f32 0.0, %v9434
        %v9436 = vpop.f32.mrf.mxu0
        %v9437 = vadd.f32 0.0, %v9436
        %9438 = vmatmul.bf16.gmra.mxu0 %v9294
        %v9439 = vpop.f32.mrf.mxu0
        %v9440 = vadd.f32 0.0, %v9439
        %v9441 = vpop.f32.mrf.mxu0
        %v9442 = vadd.f32 0.0, %v9441
        %9443 = vmatmul.bf16.gmra.mxu0 %v9295
        %v9444 = vpop.f32.mrf.mxu0
        %v9445 = vadd.f32 0.0, %v9444
        %v9446 = vpop.f32.mrf.mxu0
        %v9447 = vadd.f32 0.0, %v9446
        %9448 = vdwg.mxu0
        %v9449 = vadd.f32 %v9167, %v9370
        %v9450 = vadd.f32 %v9168, %v9372
        %v9451 = vadd.f32 %v9169, %v9375
        %v9452 = vadd.f32 %v9170, %v9377
        %v9453 = vadd.f32 %v9171, %v9380
        %v9454 = vadd.f32 %v9172, %v9382
        %v9455 = vadd.f32 %v9173, %v9385
        %v9456 = vadd.f32 %v9174, %v9387
        %v9457 = vadd.f32 %v9175, %v9390
        %v9458 = vadd.f32 %v9176, %v9392
        %v9459 = vadd.f32 %v9177, %v9395
        %v9460 = vadd.f32 %v9178, %v9397
        %v9461 = vadd.f32 %v9179, %v9400
        %v9462 = vadd.f32 %v9180, %v9402
        %v9463 = vadd.f32 %v9181, %v9405
        %v9464 = vadd.f32 %v9182, %v9407
        %v9465 = vadd.f32 %v9183, %v9410
        %v9466 = vadd.f32 %v9184, %v9412
        %v9467 = vadd.f32 %v9185, %v9415
        %v9468 = vadd.f32 %v9186, %v9417
        %v9469 = vadd.f32 %v9187, %v9420
        %v9470 = vadd.f32 %v9188, %v9422
        %v9471 = vadd.f32 %v9189, %v9425
        %v9472 = vadd.f32 %v9190, %v9427
        %v9473 = vadd.f32 %v9191, %v9430
        %v9474 = vadd.f32 %v9192, %v9432
        %v9475 = vadd.f32 %v9193, %v9435
        %v9476 = vadd.f32 %v9194, %v9437
        %v9477 = vadd.f32 %v9195, %v9440
        %v9478 = vadd.f32 %v9196, %v9442
        %v9479 = vadd.f32 %v9197, %v9445
        %v9480 = vadd.f32 %v9198, %v9447
        %v9481 = vld [vmem:[%s3639 + $0x8] sm:$0xf]
        %v9482 = vld [vmem:[%s3639 + $0xc] sm:$0xf]
        %v9483 = vld [vmem:[%s3639 + $0x10] sm:$0x1]
        %v9484 = vld [vmem:[%s3639 + $0x20] sm:$0xf]
        %v9485 = vld [vmem:[%s3639 + $0x24] sm:$0xf]
        %v9486 = vld [vmem:[%s3639 + $0x28] sm:$0x1]
        %v9487 = vld [vmem:[%s3639 + $0x38] sm:$0xf]
        %v9488 = vld [vmem:[%s3639 + $0x3c] sm:$0xf]
        %v9489 = vld [vmem:[%s3639 + $0x40] sm:$0x1]
        %v9490 = vld [vmem:[%s3639 + $0x50] sm:$0xf]
        %v9491 = vld [vmem:[%s3639 + $0x54] sm:$0xf]
        %v9492 = vld [vmem:[%s3639 + $0x58] sm:$0x1]
        %v9493 = vld [vmem:[%s3639 + $0x68] sm:$0xf]
        %v9494 = vld [vmem:[%s3639 + $0x6c] sm:$0xf]
        %v9495 = vld [vmem:[%s3639 + $0x70] sm:$0x1]
        %v9496 = vld [vmem:[%s3639 + $0x80] sm:$0xf]
        %v9497 = vld [vmem:[%s3639 + $0x84] sm:$0xf]
        %v9498 = vld [vmem:[%s3639 + $0x88] sm:$0x1]
        %v9499 = vld [vmem:[%s3639 + $0x98] sm:$0xf]
        %v9500 = vld [vmem:[%s3639 + $0x9c] sm:$0xf]
        %v9501 = vld [vmem:[%s3639 + $0xa0] sm:$0x1]
        %v9502 = vld [vmem:[%s3639 + $0xb0] sm:$0xf]
        %v9503 = vld [vmem:[%s3639 + $0xb4] sm:$0xf]
        %v9504 = vld [vmem:[%s3639 + $0xb8] sm:$0x1]
        %v9505 = vld [vmem:[%s3639 + $0xc8] sm:$0xf]
        %v9506 = vld [vmem:[%s3639 + $0xcc] sm:$0xf]
        %v9507 = vld [vmem:[%s3639 + $0xd0] sm:$0x1]
        %v9508 = vld [vmem:[%s3639 + $0xe0] sm:$0xf]
        %v9509 = vld [vmem:[%s3639 + $0xe4] sm:$0xf]
        %v9510 = vld [vmem:[%s3639 + $0xe8] sm:$0x1]
        %v9511 = vld [vmem:[%s3639 + $0xf8] sm:$0xf]
        %v9512 = vld [vmem:[%s3639 + $0xfc] sm:$0xf]
        %v9513 = vld [vmem:[%s3639 + $0x100] sm:$0x1]
        %v9514 = vld [vmem:[%s3639 + $0x110] sm:$0xf]
        %v9515 = vld [vmem:[%s3639 + $0x114] sm:$0xf]
        %v9516 = vld [vmem:[%s3639 + $0x118] sm:$0x1]
        %v9517 = vld [vmem:[%s3639 + $0x128] sm:$0xf]
        %v9518 = vld [vmem:[%s3639 + $0x12c] sm:$0xf]
        %v9519 = vld [vmem:[%s3639 + $0x130] sm:$0x1]
        %v9520 = vld [vmem:[%s3639 + $0x140] sm:$0xf]
        %v9521 = vld [vmem:[%s3639 + $0x144] sm:$0xf]
        %v9522 = vld [vmem:[%s3639 + $0x148] sm:$0x1]
        %v9523 = vld [vmem:[%s3639 + $0x158] sm:$0xf]
        %v9524 = vld [vmem:[%s3639 + $0x15c] sm:$0xf]
        %v9525 = vld [vmem:[%s3639 + $0x160] sm:$0x1]
        %v9526 = vld [vmem:[%s3639 + $0x170] sm:$0xf]
        %v9527 = vld [vmem:[%s3639 + $0x174] sm:$0xf]
        %v9528 = vld [vmem:[%s3639 + $0x178] sm:$0x1]
        %v9530 = vshrl.u32 %v9481, 16
        %v9532 = vrot.slane %v9530, 4
        %v9533 = vshll.u32 %v9481, 16
        %v9535 = vrot.slane %v9533, 5
        %v9536 = vor.u32 %v9532, %v9535
        %v9537 = vrot.slane %v9536, 4
        %v9539 = vshll.u32 %v9482, 16
        %v9541 = vrot.slane %v9539, 5
        %v9542 = vsel %vm1390, %v9537, %v9541
        %v9543 = vshrl.u32 %v9482, 16
        %v9545 = vrot.slane %v9543, 4
        %v9546 = vor.u32 %v9545, %v9541
        %v9547 = vrot.slane %v9546, 4
        %v9549 = vshll.u32 %v9483, 16
        %v9551 = vrot.slane %v9549, 5
        %v9552 = vsel %vm1390, %v9547, %v9551
        %v9554 = vshrl.u32 %v9484, 16
        %v9556 = vrot.slane %v9554, 4
        %v9557 = vshll.u32 %v9484, 16
        %v9559 = vrot.slane %v9557, 5
        %v9560 = vor.u32 %v9556, %v9559
        %v9561 = vrot.slane %v9560, 4
        %v9563 = vshll.u32 %v9485, 16
        %v9565 = vrot.slane %v9563, 5
        %v9566 = vsel %vm1390, %v9561, %v9565
        %v9567 = vshrl.u32 %v9485, 16
        %v9569 = vrot.slane %v9567, 4
        %v9570 = vor.u32 %v9569, %v9565
        %v9571 = vrot.slane %v9570, 4
        %v9573 = vshll.u32 %v9486, 16
        %v9575 = vrot.slane %v9573, 5
        %v9576 = vsel %vm1390, %v9571, %v9575
        %v9578 = vshrl.u32 %v9487, 16
        %v9580 = vrot.slane %v9578, 4
        %v9581 = vshll.u32 %v9487, 16
        %v9583 = vrot.slane %v9581, 5
        %v9584 = vor.u32 %v9580, %v9583
        %v9585 = vrot.slane %v9584, 4
        %v9587 = vshll.u32 %v9488, 16
        %v9589 = vrot.slane %v9587, 5
        %v9590 = vsel %vm1390, %v9585, %v9589
        %v9591 = vshrl.u32 %v9488, 16
        %v9593 = vrot.slane %v9591, 4
        %v9594 = vor.u32 %v9593, %v9589
        %v9595 = vrot.slane %v9594, 4
        %v9597 = vshll.u32 %v9489, 16
        %v9599 = vrot.slane %v9597, 5
        %v9600 = vsel %vm1390, %v9595, %v9599
        %v9602 = vshrl.u32 %v9490, 16
        %v9604 = vrot.slane %v9602, 4
        %v9605 = vshll.u32 %v9490, 16
        %v9607 = vrot.slane %v9605, 5
        %v9608 = vor.u32 %v9604, %v9607
        %v9609 = vrot.slane %v9608, 4
        %v9611 = vshll.u32 %v9491, 16
        %v9613 = vrot.slane %v9611, 5
        %v9614 = vsel %vm1390, %v9609, %v9613
        %v9615 = vshrl.u32 %v9491, 16
        %v9617 = vrot.slane %v9615, 4
        %v9618 = vor.u32 %v9617, %v9613
        %v9619 = vrot.slane %v9618, 4
        %v9621 = vshll.u32 %v9492, 16
        %v9623 = vrot.slane %v9621, 5
        %v9624 = vsel %vm1390, %v9619, %v9623
        %v9626 = vshrl.u32 %v9493, 16
        %v9628 = vrot.slane %v9626, 4
        %v9629 = vshll.u32 %v9493, 16
        %v9631 = vrot.slane %v9629, 5
        %v9632 = vor.u32 %v9628, %v9631
        %v9633 = vrot.slane %v9632, 4
        %v9635 = vshll.u32 %v9494, 16
        %v9637 = vrot.slane %v9635, 5
        %v9638 = vsel %vm1390, %v9633, %v9637
        %v9639 = vshrl.u32 %v9494, 16
        %v9641 = vrot.slane %v9639, 4
        %v9642 = vor.u32 %v9641, %v9637
        %v9643 = vrot.slane %v9642, 4
        %v9645 = vshll.u32 %v9495, 16
        %v9647 = vrot.slane %v9645, 5
        %v9648 = vsel %vm1390, %v9643, %v9647
        %v9650 = vshrl.u32 %v9496, 16
        %v9652 = vrot.slane %v9650, 4
        %v9653 = vshll.u32 %v9496, 16
        %v9655 = vrot.slane %v9653, 5
        %v9656 = vor.u32 %v9652, %v9655
        %v9657 = vrot.slane %v9656, 4
        %v9659 = vshll.u32 %v9497, 16
        %v9661 = vrot.slane %v9659, 5
        %v9662 = vsel %vm1390, %v9657, %v9661
        %v9663 = vshrl.u32 %v9497, 16
        %v9665 = vrot.slane %v9663, 4
        %v9666 = vor.u32 %v9665, %v9661
        %v9667 = vrot.slane %v9666, 4
        %v9669 = vshll.u32 %v9498, 16
        %v9671 = vrot.slane %v9669, 5
        %v9672 = vsel %vm1390, %v9667, %v9671
        %v9674 = vshrl.u32 %v9499, 16
        %v9676 = vrot.slane %v9674, 4
        %v9677 = vshll.u32 %v9499, 16
        %v9679 = vrot.slane %v9677, 5
        %v9680 = vor.u32 %v9676, %v9679
        %v9681 = vrot.slane %v9680, 4
        %v9683 = vshll.u32 %v9500, 16
        %v9685 = vrot.slane %v9683, 5
        %v9686 = vsel %vm1390, %v9681, %v9685
        %v9687 = vshrl.u32 %v9500, 16
        %v9689 = vrot.slane %v9687, 4
        %v9690 = vor.u32 %v9689, %v9685
        %v9691 = vrot.slane %v9690, 4
        %v9693 = vshll.u32 %v9501, 16
        %v9695 = vrot.slane %v9693, 5
        %v9696 = vsel %vm1390, %v9691, %v9695
        %v9698 = vshrl.u32 %v9502, 16
        %v9700 = vrot.slane %v9698, 4
        %v9701 = vshll.u32 %v9502, 16
        %v9703 = vrot.slane %v9701, 5
        %v9704 = vor.u32 %v9700, %v9703
        %v9705 = vrot.slane %v9704, 4
        %v9707 = vshll.u32 %v9503, 16
        %v9709 = vrot.slane %v9707, 5
        %v9710 = vsel %vm1390, %v9705, %v9709
        %v9711 = vshrl.u32 %v9503, 16
        %v9713 = vrot.slane %v9711, 4
        %v9714 = vor.u32 %v9713, %v9709
        %v9715 = vrot.slane %v9714, 4
        %v9717 = vshll.u32 %v9504, 16
        %v9719 = vrot.slane %v9717, 5
        %v9720 = vsel %vm1390, %v9715, %v9719
        %v9722 = vshrl.u32 %v9505, 16
        %v9724 = vrot.slane %v9722, 4
        %v9725 = vshll.u32 %v9505, 16
        %v9727 = vrot.slane %v9725, 5
        %v9728 = vor.u32 %v9724, %v9727
        %v9729 = vrot.slane %v9728, 4
        %v9731 = vshll.u32 %v9506, 16
        %v9733 = vrot.slane %v9731, 5
        %v9734 = vsel %vm1390, %v9729, %v9733
        %v9735 = vshrl.u32 %v9506, 16
        %v9737 = vrot.slane %v9735, 4
        %v9738 = vor.u32 %v9737, %v9733
        %v9739 = vrot.slane %v9738, 4
        %v9741 = vshll.u32 %v9507, 16
        %v9743 = vrot.slane %v9741, 5
        %v9744 = vsel %vm1390, %v9739, %v9743
        %v9746 = vshrl.u32 %v9508, 16
        %v9748 = vrot.slane %v9746, 4
        %v9749 = vshll.u32 %v9508, 16
        %v9751 = vrot.slane %v9749, 5
        %v9752 = vor.u32 %v9748, %v9751
        %v9753 = vrot.slane %v9752, 4
        %v9755 = vshll.u32 %v9509, 16
        %v9757 = vrot.slane %v9755, 5
        %v9758 = vsel %vm1390, %v9753, %v9757
        %v9759 = vshrl.u32 %v9509, 16
        %v9761 = vrot.slane %v9759, 4
        %v9762 = vor.u32 %v9761, %v9757
        %v9763 = vrot.slane %v9762, 4
        %v9765 = vshll.u32 %v9510, 16
        %v9767 = vrot.slane %v9765, 5
        %v9768 = vsel %vm1390, %v9763, %v9767
        %v9770 = vshrl.u32 %v9511, 16
        %v9772 = vrot.slane %v9770, 4
        %v9773 = vshll.u32 %v9511, 16
        %v9775 = vrot.slane %v9773, 5
        %v9776 = vor.u32 %v9772, %v9775
        %v9777 = vrot.slane %v9776, 4
        %v9779 = vshll.u32 %v9512, 16
        %v9781 = vrot.slane %v9779, 5
        %v9782 = vsel %vm1390, %v9777, %v9781
        %v9783 = vshrl.u32 %v9512, 16
        %v9785 = vrot.slane %v9783, 4
        %v9786 = vor.u32 %v9785, %v9781
        %v9787 = vrot.slane %v9786, 4
        %v9789 = vshll.u32 %v9513, 16
        %v9791 = vrot.slane %v9789, 5
        %v9792 = vsel %vm1390, %v9787, %v9791
        %v9794 = vshrl.u32 %v9514, 16
        %v9796 = vrot.slane %v9794, 4
        %v9797 = vshll.u32 %v9514, 16
        %v9799 = vrot.slane %v9797, 5
        %v9800 = vor.u32 %v9796, %v9799
        %v9801 = vrot.slane %v9800, 4
        %v9803 = vshll.u32 %v9515, 16
        %v9805 = vrot.slane %v9803, 5
        %v9806 = vsel %vm1390, %v9801, %v9805
        %v9807 = vshrl.u32 %v9515, 16
        %v9809 = vrot.slane %v9807, 4
        %v9810 = vor.u32 %v9809, %v9805
        %v9811 = vrot.slane %v9810, 4
        %v9813 = vshll.u32 %v9516, 16
        %v9815 = vrot.slane %v9813, 5
        %v9816 = vsel %vm1390, %v9811, %v9815
        %v9818 = vshrl.u32 %v9517, 16
        %v9820 = vrot.slane %v9818, 4
        %v9821 = vshll.u32 %v9517, 16
        %v9823 = vrot.slane %v9821, 5
        %v9824 = vor.u32 %v9820, %v9823
        %v9825 = vrot.slane %v9824, 4
        %v9827 = vshll.u32 %v9518, 16
        %v9829 = vrot.slane %v9827, 5
        %v9830 = vsel %vm1390, %v9825, %v9829
        %v9831 = vshrl.u32 %v9518, 16
        %v9833 = vrot.slane %v9831, 4
        %v9834 = vor.u32 %v9833, %v9829
        %v9835 = vrot.slane %v9834, 4
        %v9837 = vshll.u32 %v9519, 16
        %v9839 = vrot.slane %v9837, 5
        %v9840 = vsel %vm1390, %v9835, %v9839
        %v9842 = vshrl.u32 %v9520, 16
        %v9844 = vrot.slane %v9842, 4
        %v9845 = vshll.u32 %v9520, 16
        %v9847 = vrot.slane %v9845, 5
        %v9848 = vor.u32 %v9844, %v9847
        %v9849 = vrot.slane %v9848, 4
        %v9851 = vshll.u32 %v9521, 16
        %v9853 = vrot.slane %v9851, 5
        %v9854 = vsel %vm1390, %v9849, %v9853
        %v9855 = vshrl.u32 %v9521, 16
        %v9857 = vrot.slane %v9855, 4
        %v9858 = vor.u32 %v9857, %v9853
        %v9859 = vrot.slane %v9858, 4
        %v9861 = vshll.u32 %v9522, 16
        %v9863 = vrot.slane %v9861, 5
        %v9864 = vsel %vm1390, %v9859, %v9863
        %v9866 = vshrl.u32 %v9523, 16
        %v9868 = vrot.slane %v9866, 4
        %v9869 = vshll.u32 %v9523, 16
        %v9871 = vrot.slane %v9869, 5
        %v9872 = vor.u32 %v9868, %v9871
        %v9873 = vrot.slane %v9872, 4
        %v9875 = vshll.u32 %v9524, 16
        %v9877 = vrot.slane %v9875, 5
        %v9878 = vsel %vm1390, %v9873, %v9877
        %v9879 = vshrl.u32 %v9524, 16
        %v9881 = vrot.slane %v9879, 4
        %v9882 = vor.u32 %v9881, %v9877
        %v9883 = vrot.slane %v9882, 4
        %v9885 = vshll.u32 %v9525, 16
        %v9887 = vrot.slane %v9885, 5
        %v9888 = vsel %vm1390, %v9883, %v9887
        %v9890 = vshrl.u32 %v9526, 16
        %v9892 = vrot.slane %v9890, 4
        %v9893 = vshll.u32 %v9526, 16
        %v9895 = vrot.slane %v9893, 5
        %v9896 = vor.u32 %v9892, %v9895
        %v9897 = vrot.slane %v9896, 4
        %v9899 = vshll.u32 %v9527, 16
        %v9901 = vrot.slane %v9899, 5
        %v9902 = vsel %vm1390, %v9897, %v9901
        %v9903 = vshrl.u32 %v9527, 16
        %v9905 = vrot.slane %v9903, 4
        %v9906 = vor.u32 %v9905, %v9901
        %v9907 = vrot.slane %v9906, 4
        %v9909 = vshll.u32 %v9528, 16
        %v9911 = vrot.slane %v9909, 5
        %v9912 = vsel %vm1390, %v9907, %v9911
        %s9913 = scalar_lea.vmem [#allocation8], 512
        %v9914 = vld [vmem:[%s9913] sm:$0xf]
        %v9915 = vld [vmem:[%s9913 + $0x4] sm:$0xf]
        %v9916 = vld [vmem:[%s9913 + $0x8] sm:$0xf]
        %v9917 = vld [vmem:[%s9913 + $0xc] sm:$0xf]
        %v9918 = vld [vmem:[%s9913 + $0x10] sm:$0xf]
        %v9919 = vld [vmem:[%s9913 + $0x14] sm:$0xf]
        %v9920 = vld [vmem:[%s9913 + $0x18] sm:$0xf]
        %v9921 = vld [vmem:[%s9913 + $0x1c] sm:$0xf]
        %v9922 = vld [vmem:[%s9913 + $0x20] sm:$0xf]
        %v9923 = vld [vmem:[%s9913 + $0x24] sm:$0xf]
        %v9924 = vld [vmem:[%s9913 + $0x28] sm:$0xf]
        %v9925 = vld [vmem:[%s9913 + $0x2c] sm:$0xf]
        %v9926 = vld [vmem:[%s9913 + $0x30] sm:$0xf]
        %v9927 = vld [vmem:[%s9913 + $0x34] sm:$0xf]
        %v9928 = vld [vmem:[%s9913 + $0x38] sm:$0xf]
        %v9929 = vld [vmem:[%s9913 + $0x3c] sm:$0xf]
        %v9930 = vunpack.c.l.b16 %v9542
        %v9931 = vunpack.c.l.b16 %v9552
        %v9932 = vunpack.c.l.b16 %v9566
        %v9933 = vunpack.c.l.b16 %v9576
        %v9934 = vunpack.c.l.b16 %v9590
        %v9935 = vunpack.c.l.b16 %v9600
        %v9936 = vunpack.c.l.b16 %v9614
        %v9937 = vunpack.c.l.b16 %v9624
        %v9938 = vunpack.c.l.b16 %v9638
        %v9939 = vunpack.c.l.b16 %v9648
        %v9940 = vunpack.c.l.b16 %v9662
        %v9941 = vunpack.c.l.b16 %v9672
        %v9942 = vunpack.c.l.b16 %v9686
        %v9943 = vunpack.c.l.b16 %v9696
        %v9944 = vunpack.c.l.b16 %v9710
        %v9945 = vunpack.c.l.b16 %v9720
        %v9946 = vunpack.c.l.b16 %v9734
        %v9947 = vunpack.c.l.b16 %v9744
        %v9948 = vunpack.c.l.b16 %v9758
        %v9949 = vunpack.c.l.b16 %v9768
        %v9950 = vunpack.c.l.b16 %v9782
        %v9951 = vunpack.c.l.b16 %v9792
        %v9952 = vunpack.c.l.b16 %v9806
        %v9953 = vunpack.c.l.b16 %v9816
        %v9954 = vunpack.c.l.b16 %v9830
        %v9955 = vunpack.c.l.b16 %v9840
        %v9956 = vunpack.c.l.b16 %v9854
        %v9957 = vunpack.c.l.b16 %v9864
        %v9958 = vunpack.c.l.b16 %v9878
        %v9959 = vunpack.c.l.b16 %v9888
        %v9960 = vunpack.c.l.b16 %v9902
        %v9961 = vunpack.c.l.b16 %v9912
        %v9962 = vpack.c.b16 %v9931, %v9930
        %v9963 = vpack.c.b16 %v9933, %v9932
        %v9964 = vpack.c.b16 %v9935, %v9934
        %v9965 = vpack.c.b16 %v9937, %v9936
        %v9966 = vpack.c.b16 %v9939, %v9938
        %v9967 = vpack.c.b16 %v9941, %v9940
        %v9968 = vpack.c.b16 %v9943, %v9942
        %v9969 = vpack.c.b16 %v9945, %v9944
        %v9970 = vpack.c.b16 %v9947, %v9946
        %v9971 = vpack.c.b16 %v9949, %v9948
        %v9972 = vpack.c.b16 %v9951, %v9950
        %v9973 = vpack.c.b16 %v9953, %v9952
        %v9974 = vpack.c.b16 %v9955, %v9954
        %v9975 = vpack.c.b16 %v9957, %v9956
        %v9976 = vpack.c.b16 %v9959, %v9958
        %v9977 = vpack.c.b16 %v9961, %v9960
        %v10010 = vunpack.c.l.b16 %v9914
        %v10011 = vunpack.c.l.b16 %v9915
        %v10012 = vunpack.c.l.b16 %v9916
        %v10013 = vunpack.c.l.b16 %v9917
        %v10014 = vunpack.c.l.b16 %v9918
        %v10015 = vunpack.c.l.b16 %v9919
        %v10016 = vunpack.c.l.b16 %v9920
        %v10017 = vunpack.c.l.b16 %v9921
        %v10018 = vunpack.c.l.b16 %v9922
        %v10019 = vunpack.c.l.b16 %v9923
        %v10020 = vunpack.c.l.b16 %v9924
        %v10021 = vunpack.c.l.b16 %v9925
        %v10022 = vunpack.c.l.b16 %v9926
        %v10023 = vunpack.c.l.b16 %v9927
        %v10024 = vunpack.c.l.b16 %v9928
        %v10025 = vunpack.c.l.b16 %v9929
        %v10026 = vpack.c.b16 %v10011, %v10010
        %v10027 = vpack.c.b16 %v10013, %v10012
        %v10028 = vpack.c.b16 %v10015, %v10014
        %v10029 = vpack.c.b16 %v10017, %v10016
        %v10030 = vpack.c.b16 %v10019, %v10018
        %v10031 = vpack.c.b16 %v10021, %v10020
        %v10032 = vpack.c.b16 %v10023, %v10022
        %v10033 = vpack.c.b16 %v10025, %v10024
        %10042 = vmatpush.bf16.msra.mxu0 %v10033
        %10043 = vmatpush.bf16.msra.mxu0 %v10032
        %10044 = vmatpush.bf16.msra.mxu0 %v10031
        %10045 = vmatpush.bf16.msra.mxu0 %v10030
        %10046 = vmatpush.bf16.msra.mxu0 %v10029
        %10047 = vmatpush.bf16.msra.mxu0 %v10028
        %10048 = vmatpush.bf16.msra.mxu0 %v10027
        %10049 = vmatpush.bf16.msra.mxu0 %v10026
        %10050 = vmatmul.bf16.gmra.mxu0 %v9962
        %v10051 = vpop.f32.mrf.mxu0
        %v10052 = vadd.f32 0.0, %v10051
        %v10053 = vpop.f32.mrf.mxu0
        %v10054 = vadd.f32 0.0, %v10053
        %10055 = vmatmul.bf16.gmra.mxu0 %v9963
        %v10056 = vpop.f32.mrf.mxu0
        %v10057 = vadd.f32 0.0, %v10056
        %v10058 = vpop.f32.mrf.mxu0
        %v10059 = vadd.f32 0.0, %v10058
        %10060 = vmatmul.bf16.gmra.mxu0 %v9964
        %v10061 = vpop.f32.mrf.mxu0
        %v10062 = vadd.f32 0.0, %v10061
        %v10063 = vpop.f32.mrf.mxu0
        %v10064 = vadd.f32 0.0, %v10063
        %10065 = vmatmul.bf16.gmra.mxu0 %v9965
        %v10066 = vpop.f32.mrf.mxu0
        %v10067 = vadd.f32 0.0, %v10066
        %v10068 = vpop.f32.mrf.mxu0
        %v10069 = vadd.f32 0.0, %v10068
        %10070 = vmatmul.bf16.gmra.mxu0 %v9966
        %v10071 = vpop.f32.mrf.mxu0
        %v10072 = vadd.f32 0.0, %v10071
        %v10073 = vpop.f32.mrf.mxu0
        %v10074 = vadd.f32 0.0, %v10073
        %10075 = vmatmul.bf16.gmra.mxu0 %v9967
        %v10076 = vpop.f32.mrf.mxu0
        %v10077 = vadd.f32 0.0, %v10076
        %v10078 = vpop.f32.mrf.mxu0
        %v10079 = vadd.f32 0.0, %v10078
        %10080 = vmatmul.bf16.gmra.mxu0 %v9968
        %v10081 = vpop.f32.mrf.mxu0
        %v10082 = vadd.f32 0.0, %v10081
        %v10083 = vpop.f32.mrf.mxu0
        %v10084 = vadd.f32 0.0, %v10083
        %10085 = vmatmul.bf16.gmra.mxu0 %v9969
        %v10086 = vpop.f32.mrf.mxu0
        %v10087 = vadd.f32 0.0, %v10086
        %v10088 = vpop.f32.mrf.mxu0
        %v10089 = vadd.f32 0.0, %v10088
        %10090 = vmatmul.bf16.gmra.mxu0 %v9970
        %v10091 = vpop.f32.mrf.mxu0
        %v10092 = vadd.f32 0.0, %v10091
        %v10093 = vpop.f32.mrf.mxu0
        %v10094 = vadd.f32 0.0, %v10093
        %10095 = vmatmul.bf16.gmra.mxu0 %v9971
        %v10096 = vpop.f32.mrf.mxu0
        %v10097 = vadd.f32 0.0, %v10096
        %v10098 = vpop.f32.mrf.mxu0
        %v10099 = vadd.f32 0.0, %v10098
        %10100 = vmatmul.bf16.gmra.mxu0 %v9972
        %v10101 = vpop.f32.mrf.mxu0
        %v10102 = vadd.f32 0.0, %v10101
        %v10103 = vpop.f32.mrf.mxu0
        %v10104 = vadd.f32 0.0, %v10103
        %10105 = vmatmul.bf16.gmra.mxu0 %v9973
        %v10106 = vpop.f32.mrf.mxu0
        %v10107 = vadd.f32 0.0, %v10106
        %v10108 = vpop.f32.mrf.mxu0
        %v10109 = vadd.f32 0.0, %v10108
        %10110 = vmatmul.bf16.gmra.mxu0 %v9974
        %v10111 = vpop.f32.mrf.mxu0
        %v10112 = vadd.f32 0.0, %v10111
        %v10113 = vpop.f32.mrf.mxu0
        %v10114 = vadd.f32 0.0, %v10113
        %10115 = vmatmul.bf16.gmra.mxu0 %v9975
        %v10116 = vpop.f32.mrf.mxu0
        %v10117 = vadd.f32 0.0, %v10116
        %v10118 = vpop.f32.mrf.mxu0
        %v10119 = vadd.f32 0.0, %v10118
        %10120 = vmatmul.bf16.gmra.mxu0 %v9976
        %v10121 = vpop.f32.mrf.mxu0
        %v10122 = vadd.f32 0.0, %v10121
        %v10123 = vpop.f32.mrf.mxu0
        %v10124 = vadd.f32 0.0, %v10123
        %10125 = vmatmul.bf16.gmra.mxu0 %v9977
        %v10126 = vpop.f32.mrf.mxu0
        %v10127 = vadd.f32 0.0, %v10126
        %v10128 = vpop.f32.mrf.mxu0
        %v10129 = vadd.f32 0.0, %v10128
        %10130 = vdwg.mxu0
        %v10131 = vadd.f32 %v9449, %v10052
        %v10132 = vadd.f32 %v9450, %v10054
        %v10133 = vadd.f32 %v9451, %v10057
        %v10134 = vadd.f32 %v9452, %v10059
        %v10135 = vadd.f32 %v9453, %v10062
        %v10136 = vadd.f32 %v9454, %v10064
        %v10137 = vadd.f32 %v9455, %v10067
        %v10138 = vadd.f32 %v9456, %v10069
        %v10139 = vadd.f32 %v9457, %v10072
        %v10140 = vadd.f32 %v9458, %v10074
        %v10141 = vadd.f32 %v9459, %v10077
        %v10142 = vadd.f32 %v9460, %v10079
        %v10143 = vadd.f32 %v9461, %v10082
        %v10144 = vadd.f32 %v9462, %v10084
        %v10145 = vadd.f32 %v9463, %v10087
        %v10146 = vadd.f32 %v9464, %v10089
        %v10147 = vadd.f32 %v9465, %v10092
        %v10148 = vadd.f32 %v9466, %v10094
        %v10149 = vadd.f32 %v9467, %v10097
        %v10150 = vadd.f32 %v9468, %v10099
        %v10151 = vadd.f32 %v9469, %v10102
        %v10152 = vadd.f32 %v9470, %v10104
        %v10153 = vadd.f32 %v9471, %v10107
        %v10154 = vadd.f32 %v9472, %v10109
        %v10155 = vadd.f32 %v9473, %v10112
        %v10156 = vadd.f32 %v9474, %v10114
        %v10157 = vadd.f32 %v9475, %v10117
        %v10158 = vadd.f32 %v9476, %v10119
        %v10159 = vadd.f32 %v9477, %v10122
        %v10160 = vadd.f32 %v9478, %v10124
        %v10161 = vadd.f32 %v9479, %v10127
        %v10162 = vadd.f32 %v9480, %v10129
        %v10163 = vld [vmem:[%s4] sm:$0x1]
        %v10165 = vperm.slane %v10163, 0
        %v10167 = vadd.f32 %v10131, %v10165
        %v10168 = vadd.f32 %v10132, %v10165
        %v10169 = vadd.f32 %v10133, %v10165
        %v10170 = vadd.f32 %v10134, %v10165
        %v10171 = vadd.f32 %v10135, %v10165
        %v10172 = vadd.f32 %v10136, %v10165
        %v10173 = vadd.f32 %v10137, %v10165
        %v10174 = vadd.f32 %v10138, %v10165
        %v10175 = vadd.f32 %v10139, %v10165
        %v10176 = vadd.f32 %v10140, %v10165
        %v10177 = vadd.f32 %v10141, %v10165
        %v10178 = vadd.f32 %v10142, %v10165
        %v10179 = vadd.f32 %v10143, %v10165
        %v10180 = vadd.f32 %v10144, %v10165
        %v10181 = vadd.f32 %v10145, %v10165
        %v10182 = vadd.f32 %v10146, %v10165
        %v10183 = vadd.f32 %v10147, %v10165
        %v10184 = vadd.f32 %v10148, %v10165
        %v10185 = vadd.f32 %v10149, %v10165
        %v10186 = vadd.f32 %v10150, %v10165
        %v10187 = vadd.f32 %v10151, %v10165
        %v10188 = vadd.f32 %v10152, %v10165
        %v10189 = vadd.f32 %v10153, %v10165
        %v10190 = vadd.f32 %v10154, %v10165
        %v10191 = vadd.f32 %v10155, %v10165
        %v10192 = vadd.f32 %v10156, %v10165
        %v10193 = vadd.f32 %v10157, %v10165
        %v10194 = vadd.f32 %v10158, %v10165
        %v10195 = vadd.f32 %v10159, %v10165
        %v10196 = vadd.f32 %v10160, %v10165
        %v10197 = vadd.f32 %v10161, %v10165
        %v10198 = vadd.f32 %v10162, %v10165
        %v10199 = vmax.f32 %v10167, 0.0
        %v10200 = vmax.f32 %v10168, 0.0
        %v10201 = vmax.f32 %v10169, 0.0
        %v10202 = vmax.f32 %v10170, 0.0
        %v10203 = vmax.f32 %v10171, 0.0
        %v10204 = vmax.f32 %v10172, 0.0
        %v10205 = vmax.f32 %v10173, 0.0
        %v10206 = vmax.f32 %v10174, 0.0
        %v10207 = vmax.f32 %v10175, 0.0
        %v10208 = vmax.f32 %v10176, 0.0
        %v10209 = vmax.f32 %v10177, 0.0
        %v10210 = vmax.f32 %v10178, 0.0
        %v10211 = vmax.f32 %v10179, 0.0
        %v10212 = vmax.f32 %v10180, 0.0
        %v10213 = vmax.f32 %v10181, 0.0
        %v10214 = vmax.f32 %v10182, 0.0
        %v10215 = vmax.f32 %v10183, 0.0
        %v10216 = vmax.f32 %v10184, 0.0
        %v10217 = vmax.f32 %v10185, 0.0
        %v10218 = vmax.f32 %v10186, 0.0
        %v10219 = vmax.f32 %v10187, 0.0
        %v10220 = vmax.f32 %v10188, 0.0
        %v10221 = vmax.f32 %v10189, 0.0
        %v10222 = vmax.f32 %v10190, 0.0
        %v10223 = vmax.f32 %v10191, 0.0
        %v10224 = vmax.f32 %v10192, 0.0
        %v10225 = vmax.f32 %v10193, 0.0
        %v10226 = vmax.f32 %v10194, 0.0
        %v10227 = vmax.f32 %v10195, 0.0
        %v10228 = vmax.f32 %v10196, 0.0
        %v10229 = vmax.f32 %v10197, 0.0
        %v10230 = vmax.f32 %v10198, 0.0
        %v10231 = vpack.c.bf16 %v10199, %v10199
        %v10232 = vpack.c.bf16 %v10200, %v10200
        %v10233 = vpack.c.bf16 %v10201, %v10201
        %v10234 = vpack.c.bf16 %v10202, %v10202
        %v10235 = vpack.c.bf16 %v10203, %v10203
        %v10236 = vpack.c.bf16 %v10204, %v10204
        %v10237 = vpack.c.bf16 %v10205, %v10205
        %v10238 = vpack.c.bf16 %v10206, %v10206
        %v10239 = vpack.c.bf16 %v10207, %v10207
        %v10240 = vpack.c.bf16 %v10208, %v10208
        %v10241 = vpack.c.bf16 %v10209, %v10209
        %v10242 = vpack.c.bf16 %v10210, %v10210
        %v10243 = vpack.c.bf16 %v10211, %v10211
        %v10244 = vpack.c.bf16 %v10212, %v10212
        %v10245 = vpack.c.bf16 %v10213, %v10213
        %v10246 = vpack.c.bf16 %v10214, %v10214
        %v10247 = vpack.c.bf16 %v10215, %v10215
        %v10248 = vpack.c.bf16 %v10216, %v10216
        %v10249 = vpack.c.bf16 %v10217, %v10217
        %v10250 = vpack.c.bf16 %v10218, %v10218
        %v10251 = vpack.c.bf16 %v10219, %v10219
        %v10252 = vpack.c.bf16 %v10220, %v10220
        %v10253 = vpack.c.bf16 %v10221, %v10221
        %v10254 = vpack.c.bf16 %v10222, %v10222
        %v10255 = vpack.c.bf16 %v10223, %v10223
        %v10256 = vpack.c.bf16 %v10224, %v10224
        %v10257 = vpack.c.bf16 %v10225, %v10225
        %v10258 = vpack.c.bf16 %v10226, %v10226
        %v10259 = vpack.c.bf16 %v10227, %v10227
        %v10260 = vpack.c.bf16 %v10228, %v10228
        %v10261 = vpack.c.bf16 %v10229, %v10229
        %v10262 = vpack.c.bf16 %v10230, %v10230
        %10263 = vst [vmem:[%s277] sm:$0xf] %v10231
        %10264 = vst [vmem:[%s277 + $0x4] sm:$0xf] %v10232
        %10265 = vst [vmem:[%s277 + $0x8] sm:$0xf] %v10233
        %10266 = vst [vmem:[%s277 + $0xc] sm:$0xf] %v10234
        %10267 = vst [vmem:[%s277 + $0x10] sm:$0xf] %v10235
        %10268 = vst [vmem:[%s277 + $0x14] sm:$0xf] %v10236
        %10269 = vst [vmem:[%s277 + $0x18] sm:$0xf] %v10237
        %10270 = vst [vmem:[%s277 + $0x1c] sm:$0xf] %v10238
        %10271 = vst [vmem:[%s277 + $0x20] sm:$0xf] %v10239
        %10272 = vst [vmem:[%s277 + $0x24] sm:$0xf] %v10240
        %10273 = vst [vmem:[%s277 + $0x28] sm:$0xf] %v10241
        %10274 = vst [vmem:[%s277 + $0x2c] sm:$0xf] %v10242
        %10275 = vst [vmem:[%s277 + $0x30] sm:$0xf] %v10243
        %10276 = vst [vmem:[%s277 + $0x34] sm:$0xf] %v10244
        %10277 = vst [vmem:[%s277 + $0x38] sm:$0xf] %v10245
        %10278 = vst [vmem:[%s277 + $0x3c] sm:$0xf] %v10246
        %10279 = vst [vmem:[%s277 + $0x40] sm:$0xf] %v10247
        %10280 = vst [vmem:[%s277 + $0x44] sm:$0xf] %v10248
        %10281 = vst [vmem:[%s277 + $0x48] sm:$0xf] %v10249
        %10282 = vst [vmem:[%s277 + $0x4c] sm:$0xf] %v10250
        %10283 = vst [vmem:[%s277 + $0x50] sm:$0xf] %v10251
        %10284 = vst [vmem:[%s277 + $0x54] sm:$0xf] %v10252
        %10285 = vst [vmem:[%s277 + $0x58] sm:$0xf] %v10253
        %10286 = vst [vmem:[%s277 + $0x5c] sm:$0xf] %v10254
        %10287 = vst [vmem:[%s277 + $0x60] sm:$0xf] %v10255
        %10288 = vst [vmem:[%s277 + $0x64] sm:$0xf] %v10256
        %10289 = vst [vmem:[%s277 + $0x68] sm:$0xf] %v10257
        %10290 = vst [vmem:[%s277 + $0x6c] sm:$0xf] %v10258
        %10291 = vst [vmem:[%s277 + $0x70] sm:$0xf] %v10259
        %10292 = vst [vmem:[%s277 + $0x74] sm:$0xf] %v10260
        %10293 = vst [vmem:[%s277 + $0x78] sm:$0xf] %v10261
        %10294 = vst [vmem:[%s277 + $0x7c] sm:$0xf] %v10262
        %s10295 = sand.u32 %s141, 1
        %s10296 = scalar_lea.sflag [#allocation5], %s10295
        %s10297 = sand.u32 %s141, 1
        %s10298 = smul.addr %s10297, 128
        %s10299 = scalar_lea.vmem [#allocation9], %s10298
        // Predicated region
        $region53: #{tpu_custom_call.1} parent=39 // pred_check
          %p10300 = pneg %p151
        $region54: #{tpu_custom_call.1} parent=39 // pred_check_branch
          %10302 = sbr.rel (%p10300) target = $region56
        $region55: #{tpu_custom_call.1} parent=39 // pred_region
          %10304 = vsyncadd %s10296, 0
          %s10305 = smul.addr %s23, 32
          %s10306 = smul.addr %s10305, 4
          %s10307 = scalar_lea.hbm %s5, %s10306
          %s10308 = sshll.u32 %s10299, 4
          %s10309 = int_to_ptr.vmem [resolvable:$true] %s10308
          %s10310 = sshll.u32 %s10307, 4
          %s10311 = int_to_ptr.hbm [resolvable:$true] %s10310
          %10316 = dma.vmem_to_hbm [thread:$0]  %s10309, 2048, %s10311, %s10296, 64, 64, 4
        $region56: #{tpu_custom_call.1} parent=39 // pred_fallthru
          _
      $region40: #{tpu_custom_call.1} parent=5 // pred_fallthru
        _
      %p10317 = scmp.le.s32.totalorder 2, %s18
      // Predicated region
      $region57: #{tpu_custom_call.1} parent=5 // pred_check
        %p10318 = pneg %p10317
      $region58: #{tpu_custom_call.1} parent=5 // pred_check_branch
        %10320 = sbr.rel (%p10318) target = $region60
      $region59: #{tpu_custom_call.1} parent=5 // pred_region
        %s10321 = ssub.s32 %s18, 2
        // Predicated region
        $region61: #{tpu_custom_call.1} parent=59 // pred_check
          %p10322 = pneg %p157
        $region62: #{tpu_custom_call.1} parent=59 // pred_check_branch
          %10324 = sbr.rel (%p10322) target = $region64
        $region63: #{tpu_custom_call.1} parent=59 // pred_region
          %s10325 = sand.u32 %s142, 1
          %s10326 = scalar_lea.sflag [#allocation5], %s10325
          %s10327 = sand.u32 %s142, 1
          %s10328 = smul.addr %s10327, 128
          %s10329 = scalar_lea.vmem [#allocation9], %s10328
          %10331 = dma.done %s10326, 2048
        $region64: #{tpu_custom_call.1} parent=59 // pred_fallthru
          _
      $region60: #{tpu_custom_call.1} parent=5 // pred_fallthru
        _
    $region6: #{tpu_custom_call.1} parent=1 // loop_footer
      %s22 = sadd.s32 1, %s18
    $region7: #{tpu_custom_call.1} parent=1 // loop_footer_branch
      %17 = sbr.rel target = $region3
    $region8: #{tpu_custom_call.1} parent=1 // loop_exit
      _
    %10332 = vsyncpa [#allocation4], 1
    %s10333 = scalar_lea.sflag [#allocation4], 1
    %10334 = vsyncpa %s10333, 1
    %10335 = vsyncpa [#allocation7], 1
    %10336 = vsyncpa [#allocation5], 1
    %s10337 = scalar_lea.sflag [#allocation5], 1
    %10338 = vsyncpa %s10337, 1

</llo_original>
